<compile_context>
chip_gen: v5e
topology: v5e:2x2
jax: 0.10.0
libtpu: 0.0.40
codegen_flags: <defaults>
</compile_context>

<pallas_src>
import functools
import math

import jax
import jax.numpy as jnp
from jax.experimental import pallas as pl
from jax.experimental.pallas import tpu as pltpu


def _layernorm(x, gamma, beta, eps=1e-5):
    mu = jnp.mean(x, axis=-1, keepdims=True)
    var = jnp.mean((x - mu) ** 2, axis=-1, keepdims=True)
    return (x - mu) * jax.lax.rsqrt(var + eps) * gamma + beta


def _split_heads(y, num_heads, dh, use_einshape):
    """(M, num_heads*dh) f32 -> (num_heads, M, dh) f32 (heads to the batch dim)."""
    m = y.shape[0]
    if use_einshape:
        return pltpu.einshape("mhd->hmd", y.reshape(m, num_heads, dh))
    # compatibility path: static lane slices + leading-axis stack
    return jnp.stack([y[:, h * dh:(h + 1) * dh] for h in range(num_heads)], axis=0)


def _merge_heads(y, use_einshape):
    """(num_heads, M, dh) f32 -> (M, num_heads*dh) f32 (concat-heads layout)."""
    nh, m, dh = y.shape
    if use_einshape:
        return pltpu.einshape("hmd->mhd", y).reshape(m, nh * dh)
    return jnp.concatenate([y[h] for h in range(nh)], axis=-1)


def _mha(q2d, kv2d, wo, bo, mask, num_heads, dh, use_einshape):
    """q2d: (Lq, E) f32 (1/sqrt(dh) already folded in), kv2d: (Lk, 2E) f32 = K|V,
    wo: (E, E) bf16, bo: (1, E) f32, mask broadcastable to (H, Lq, Lk)."""
    qh = _split_heads(q2d, num_heads, dh, use_einshape).astype(jnp.bfloat16)      # (H,Lq,dh)
    kvh = _split_heads(kv2d, 2 * num_heads, dh, use_einshape).astype(jnp.bfloat16)  # (2H,Lk,dh)
    kh, vh = kvh[:num_heads], kvh[num_heads:]
    s = jnp.einsum("hqd,hkd->hqk", qh, kh,
                   preferred_element_type=jnp.float32) + mask                     # (H,Lq,Lk) f32
    s = s - jnp.max(s, axis=-1, keepdims=True)
    p = jnp.exp(s)
    p = p * pl.reciprocal(jnp.sum(p, axis=-1, keepdims=True), approx=True)        # EUP slot
    w_avg = jnp.sum(p, axis=0) * (1.0 / num_heads)                                # single 1/H
    ctx = jnp.einsum("hqk,hkd->hqd", p.astype(jnp.bfloat16), vh,
                     preferred_element_type=jnp.float32)                          # (H,Lq,dh)
    ctx2d = _merge_heads(ctx, use_einshape)                                       # (Lq,E)
    out = jnp.dot(ctx2d.astype(jnp.bfloat16), wo,
                  preferred_element_type=jnp.float32) + bo                        # concat-heads @ Wo
    return out, w_avg


def _decoder_block_kernel(
    num_heads, use_einshape,
    # inputs
    xq_ref, x_ref, enc_ref, tmask_ref, smask_ref,
    wq1_ref, bq1_ref, wkv1_ref, bkv1_ref, wo1_ref, bo1_ref,
    wq2_ref, bq2_ref, wkv2_ref, bkv2_ref, wo2_ref, bo2_ref,
    wf1_ref, bf1_ref, wf2_ref, bf2_ref,
    g1_ref, be1_ref, g2_ref, be2_ref, g3_ref, be3_ref,
    # outputs
    out_ref, saw_ref, caw_ref,
):
    H = num_heads
    xq = xq_ref[0]           # (tq, E) f32 -- query rows of this tile
    xf = x_ref[0]            # (T, E)  f32 -- full sequence (self-attn keys/values)
    enc = enc_ref[0]         # (S, E)  f32
    E = xq.shape[-1]
    dh = E // H
    tmask = tmask_ref[...]   # (tq, T) additive causal-mask rows for this tile
    smask = smask_ref[0]     # (1, S)  additive key-padding mask

    # ---- 1) masked self-attention: full-width 2D projections -------------------
    q1 = jnp.dot(xq.astype(jnp.bfloat16), wq1_ref[...],
                 preferred_element_type=jnp.float32) + bq1_ref[...]          # (tq, E)
    kv1 = jnp.dot(xf.astype(jnp.bfloat16), wkv1_ref[...],
                  preferred_element_type=jnp.float32) + bkv1_ref[...]        # (T, 2E)
    sa, sa_w = _mha(q1, kv1, wo1_ref[...], bo1_ref[...], tmask[None], H, dh, use_einshape)
    x1 = _layernorm(xq + sa, g1_ref[...], be1_ref[...])

    # ---- 2) cross-attention: Q from decoder tile, fused K|V from encoder -------
    q2 = jnp.dot(x1.astype(jnp.bfloat16), wq2_ref[...],
                 preferred_element_type=jnp.float32) + bq2_ref[...]          # (tq, E)
    kv2 = jnp.dot(enc.astype(jnp.bfloat16), wkv2_ref[...],
                  preferred_element_type=jnp.float32) + bkv2_ref[...]        # (S, 2E)
    ca, ca_w = _mha(q2, kv2, wo2_ref[...], bo2_ref[...], smask[None], H, dh, use_einshape)
    x2 = _layernorm(x1 + ca, g2_ref[...], be2_ref[...])

    # ---- 3) feed-forward --------------------------------------------------------
    hdn = jnp.maximum(
        jnp.dot(x2.astype(jnp.bfloat16), wf1_ref[...],
                preferred_element_type=jnp.float32) + bf1_ref[...], 0.0)
    ff = jnp.dot(hdn.astype(jnp.bfloat16), wf2_ref[...],
                 preferred_element_type=jnp.float32) + bf2_ref[...]
    x3 = _layernorm(x2 + ff, g3_ref[...], be3_ref[...])

    out_ref[0] = x3.astype(out_ref.dtype)
    saw_ref[0] = sa_w.astype(saw_ref.dtype)
    caw_ref[0] = ca_w.astype(caw_ref.dtype)


def prepare_decoder_params(p, num_heads):
    """One-time host-side weight re-layout:
       * 1/sqrt(dh) folded into the query projections (weight and bias),
       * K and V fused along the output dim -> (E, 2E) so each projection is a
         single full-width MXU matmul inside the kernel,
       * matmul operands pre-cast to bf16 (kernel accumulates in f32)."""
    E = p["wq1"].shape[0]
    dh = E // num_heads
    scale = 1.0 / math.sqrt(dh)
    bf16, f32 = jnp.bfloat16, jnp.float32
    return {
        # self-attention
        "wq1": (p["wq1"] * scale).astype(bf16), "bq1": (p["bq1"] * scale).astype(f32),
        "wkv1": jnp.concatenate([p["wk1"], p["wv1"]], axis=1).astype(bf16),
        "bkv1": jnp.concatenate([p["bk1"], p["bv1"]], axis=1).astype(f32),
        "wo1": p["wo1"].astype(bf16), "bo1": p["bo1"].astype(f32),
        # cross-attention
        "wq2": (p["wq2"] * scale).astype(bf16), "bq2": (p["bq2"] * scale).astype(f32),
        "wkv2": jnp.concatenate([p["wk2"], p["wv2"]], axis=1).astype(bf16),
        "bkv2": jnp.concatenate([p["bk2"], p["bv2"]], axis=1).astype(f32),
        "wo2": p["wo2"].astype(bf16), "bo2": p["bo2"].astype(f32),
        # feed-forward
        "wf1": p["wf1"].astype(bf16), "bf1": p["bf1"].astype(f32),
        "wf2": p["wf2"].astype(bf16), "bf2": p["bf2"].astype(f32),
        # layer norms (f32)
        "g1": p["g1"].astype(f32), "be1": p["be1"].astype(f32),
        "g2": p["g2"].astype(f32), "be2": p["be2"].astype(f32),
        "g3": p["g3"].astype(f32), "be3": p["be3"].astype(f32),
    }


_WEIGHT_ORDER = [
    "wq1", "bq1", "wkv1", "bkv1", "wo1", "bo1",
    "wq2", "bq2", "wkv2", "bkv2", "wo2", "bo2",
    "wf1", "bf1", "wf2", "bf2",
    "g1", "be1", "g2", "be2", "g3", "be3",
]


def _build_decoder_call(B, T, S, E, tq, num_heads, prep,
                        use_einshape, single_buffer_weights):
    nq = T // tq

    def weight_spec(arr):
        nd = arr.ndim
        idx = lambda b, i: (0,) * nd
        if single_buffer_weights:
            # Grid-invariant weights -> single VMEM buffer (halves weight residency,
            # the item that lets production sizes fit v7x's 64 MiB VMEM).
            return pl.BlockSpec(arr.shape, idx, pipeline_mode=pl.Buffered(1))
        return pl.BlockSpec(arr.shape, idx)

    in_specs = (
        [
            pl.BlockSpec((1, tq, E), lambda b, i: (b, i, 0)),   # query tile of x
            pl.BlockSpec((1, T, E), lambda b, i: (b, 0, 0)),    # full x (self K/V)
            pl.BlockSpec((1, S, E), lambda b, i: (b, 0, 0)),    # encoder output
            pl.BlockSpec((tq, T), lambda b, i: (i, 0)),         # causal-mask rows
            pl.BlockSpec((1, 1, S), lambda b, i: (b, 0, 0)),    # key-padding mask
        ]
        + [weight_spec(prep[k]) for k in _WEIGHT_ORDER]
    )
    out_specs = [
        pl.BlockSpec((1, tq, E), lambda b, i: (b, i, 0)),
        pl.BlockSpec((1, tq, T), lambda b, i: (b, i, 0)),
        pl.BlockSpec((1, tq, S), lambda b, i: (b, i, 0)),
    ]
    out_shape = (
        jax.ShapeDtypeStruct((B, T, E), jnp.float32),
        jax.ShapeDtypeStruct((B, T, T), jnp.float32),
        jax.ShapeDtypeStruct((B, T, S), jnp.float32),
    )
    kernel = functools.partial(_decoder_block_kernel, num_heads, use_einshape)
    return pl.pallas_call(
        kernel,
        out_shape=out_shape,
        grid_spec=pltpu.PrefetchScalarGridSpec(
            num_scalar_prefetch=0,
            grid=(B, nq),                       # batch x query-tiles, both parallel
            in_specs=in_specs,
            out_specs=out_specs,
        ),
        compiler_params=pltpu.CompilerParams(
            dimension_semantics=("parallel", "parallel"),
            vmem_limit_bytes=64 * 1024 * 1024,
        ),
    )


def transformer_decoder_block(x, enc, prep, tgt_mask, src_mask, num_heads):
    """x: (B, T, E) f32, enc: (B, S, E) f32, tgt_mask: additive (T, T),
    src_mask: additive (B, 1, S); prep = prepare_decoder_params(params, H)."""
    B, T, E = x.shape
    S = enc.shape[1]
    tq = 128 if (T % 128 == 0) else T          # query tile (full sequence at demo sizes)
    args = (x, x, enc, tgt_mask, src_mask) + tuple(prep[k] for k in _WEIGHT_ORDER)

    # Preferred config first (einshape head relayout + single-buffered weights);
    # fall back gracefully if this jax/Mosaic version lacks either feature so the
    # kernel always runs.
    configs = (
        (True, True),    # einshape relayout, single-buffered weights
        (True, False),   # einshape relayout, default double-buffered weights
        (False, False),  # slice/concat relayout, default buffering (max compat)
    )
    last_err = None
    for use_einshape, single_buf in configs:
        try:
            call = _build_decoder_call(B, T, S, E, tq, num_heads, prep,
                                       use_einshape=use_einshape,
                                       single_buffer_weights=single_buf)
            return call(*args)
        except Exception as err:  # version-dependent feature fallback
            last_err = err
    raise last_err


# ----------------------- pure-JAX reference (for sanity check) -----------------------
def _ref_block(x, enc, p, tgt_mask, src_mask, num_heads):
    B, T, E = x.shape
    H = num_heads
    dh = E // H
    scale = 1.0 / math.sqrt(dh)

    def mha(q_in, kv_in, wq, bq, wk, bk, wv, bv, wo, bo, mask):
        q = q_in @ wq + bq
        k = kv_in @ wk + bk
        v = kv_in @ wv + bv
        Lq, Lk = q_in.shape[1], kv_in.shape[1]
        qh = q.reshape(B, Lq, H, dh).transpose(0, 2, 1, 3)
        kh = k.reshape(B, Lk, H, dh).transpose(0, 2, 1, 3)
        vh = v.reshape(B, Lk, H, dh).transpose(0, 2, 1, 3)
        s = jnp.einsum("bhqd,bhkd->bhqk", qh * scale, kh) + mask
        pw = jax.nn.softmax(s, axis=-1)
        ctx = jnp.einsum("bhqk,bhkd->bhqd", pw, vh).transpose(0, 2, 1, 3).reshape(B, Lq, E)
        return ctx @ wo + bo, pw.mean(axis=1)

    def ln(v, g, b):
        mu = v.mean(-1, keepdims=True)
        var = ((v - mu) ** 2).mean(-1, keepdims=True)
        return (v - mu) * jax.lax.rsqrt(var + 1e-5) * g + b

    sa, saw = mha(x, x, p["wq1"], p["bq1"], p["wk1"], p["bk1"], p["wv1"], p["bv1"],
                  p["wo1"], p["bo1"], tgt_mask[None, None])
    x1 = ln(x + sa, p["g1"], p["be1"])
    ca, caw = mha(x1, enc, p["wq2"], p["bq2"], p["wk2"], p["bk2"], p["wv2"], p["bv2"],
                  p["wo2"], p["bo2"], src_mask[:, None, :, :])
    x2 = ln(x1 + ca, p["g2"], p["be2"])
    ff = jnp.maximum(x2 @ p["wf1"] + p["bf1"], 0.0) @ p["wf2"] + p["bf2"]
    x3 = ln(x2 + ff, p["g3"], p["be3"])
    return x3, saw, caw


if __name__ == "__main__":
    B, T, S, E, H, FF = 2, 8, 8, 32, 4, 64

    key = jax.random.PRNGKey(0)
    keys = jax.random.split(key, 32)
    ki = iter(keys)

    def rnd(shape, scale=0.05):
        return jax.random.normal(next(ki), shape, jnp.float32) * scale

    x = jax.random.normal(next(ki), (B, T, E), jnp.float32)
    enc = jax.random.normal(next(ki), (B, S, E), jnp.float32)

    params = {
        # attention weights stored as (in, out) so math is x @ W + b
        "wq1": rnd((E, E)), "bq1": rnd((1, E)),
        "wk1": rnd((E, E)), "bk1": rnd((1, E)),
        "wv1": rnd((E, E)), "bv1": rnd((1, E)),
        "wo1": rnd((E, E)), "bo1": rnd((1, E)),
        "wq2": rnd((E, E)), "bq2": rnd((1, E)),
        "wk2": rnd((E, E)), "bk2": rnd((1, E)),
        "wv2": rnd((E, E)), "bv2": rnd((1, E)),
        "wo2": rnd((E, E)), "bo2": rnd((1, E)),
        "wf1": rnd((E, FF)), "bf1": rnd((1, FF)),
        "wf2": rnd((FF, E)), "bf2": rnd((1, E)),
        "g1": jnp.ones((1, E), jnp.float32), "be1": jnp.zeros((1, E), jnp.float32),
        "g2": jnp.ones((1, E), jnp.float32), "be2": jnp.zeros((1, E), jnp.float32),
        "g3": jnp.ones((1, E), jnp.float32), "be3": jnp.zeros((1, E), jnp.float32),
    }

    # causal additive mask for self-attention (PyTorch float attn_mask semantics)
    rows = jnp.arange(T)[:, None]
    cols = jnp.arange(T)[None, :]
    tgt_mask = jnp.where(cols > rows, -1e9, 0.0).astype(jnp.float32)   # (T, T)
    # no padded source tokens -> zero additive key-padding mask
    src_mask = jnp.zeros((B, 1, S), jnp.float32)                       # (B, 1, S)

    prep = prepare_decoder_params(params, H)   # one-time weight re-layout / bf16 cast
    out, saw, caw = transformer_decoder_block(x, enc, prep, tgt_mask, src_mask, H)
    jax.block_until_ready((out, saw, caw))

    # correctness check against a pure-JAX f32 reference of the same math
    # (looser tolerance: kernel uses bf16 MXU operands with f32 accumulation and an
    #  approximate softmax reciprocal)
    ref_out, ref_saw, ref_caw = _ref_block(x, enc, params, tgt_mask, src_mask, H)
    assert jnp.allclose(out, ref_out, rtol=2e-2, atol=2e-2)
    assert jnp.allclose(saw, ref_saw, rtol=2e-2, atol=2e-2)
    assert jnp.allclose(caw, ref_caw, rtol=2e-2, atol=2e-2)

    print("KERNEL_OK")
</pallas_src>

<mosaic_0001>
module attributes {stable_mosaic.version = 11 : i64} {
  func.func @_decoder_block_kernel(%arg0: i32, %arg1: i32, %arg2: memref<1x8x32xf32, #tpu.memory_space<vmem>>, %arg3: memref<1x8x32xf32, #tpu.memory_space<vmem>>, %arg4: memref<1x8x32xf32, #tpu.memory_space<vmem>>, %arg5: memref<8x8xf32, #tpu.memory_space<vmem>>, %arg6: memref<1x1x8xf32, #tpu.memory_space<vmem>>, %arg7: memref<32x32xbf16, #tpu.memory_space<vmem>>, %arg8: memref<1x32xf32, #tpu.memory_space<vmem>>, %arg9: memref<32x64xbf16, #tpu.memory_space<vmem>>, %arg10: memref<1x64xf32, #tpu.memory_space<vmem>>, %arg11: memref<32x32xbf16, #tpu.memory_space<vmem>>, %arg12: memref<1x32xf32, #tpu.memory_space<vmem>>, %arg13: memref<32x32xbf16, #tpu.memory_space<vmem>>, %arg14: memref<1x32xf32, #tpu.memory_space<vmem>>, %arg15: memref<32x64xbf16, #tpu.memory_space<vmem>>, %arg16: memref<1x64xf32, #tpu.memory_space<vmem>>, %arg17: memref<32x32xbf16, #tpu.memory_space<vmem>>, %arg18: memref<1x32xf32, #tpu.memory_space<vmem>>, %arg19: memref<32x64xbf16, #tpu.memory_space<vmem>>, %arg20: memref<1x64xf32, #tpu.memory_space<vmem>>, %arg21: memref<64x32xbf16, #tpu.memory_space<vmem>>, %arg22: memref<1x32xf32, #tpu.memory_space<vmem>>, %arg23: memref<1x32xf32, #tpu.memory_space<vmem>>, %arg24: memref<1x32xf32, #tpu.memory_space<vmem>>, %arg25: memref<1x32xf32, #tpu.memory_space<vmem>>, %arg26: memref<1x32xf32, #tpu.memory_space<vmem>>, %arg27: memref<1x32xf32, #tpu.memory_space<vmem>>, %arg28: memref<1x32xf32, #tpu.memory_space<vmem>>, %arg29: memref<1x8x32xf32, #tpu.memory_space<vmem>>, %arg30: memref<1x8x8xf32, #tpu.memory_space<vmem>>, %arg31: memref<1x8x8xf32, #tpu.memory_space<vmem>>) attributes {dimension_semantics = [#tpu.dimension_semantics<parallel>, #tpu.dimension_semantics<parallel>], iteration_bounds = array<i64: 2, 1>, scalar_prefetch = 0 : i64, scratch_operands = 0 : i64, tpu.core_type = #tpu.core_type<tc>, window_params = [{transform_indices = @transform_0, window_bounds = array<i64: 1, 8, 32>}, {transform_indices = @transform_1, window_bounds = array<i64: 1, 8, 32>}, {transform_indices = @transform_2, window_bounds = array<i64: 1, 8, 32>}, {transform_indices = @transform_3, window_bounds = array<i64: 8, 8>}, {transform_indices = @transform_4, window_bounds = array<i64: 1, 1, 8>}, {pipeline_mode = #tpu.pipeline_mode<synchronous>, transform_indices = @transform_5, window_bounds = array<i64: 32, 32>}, {pipeline_mode = #tpu.pipeline_mode<synchronous>, transform_indices = @transform_6, window_bounds = array<i64: 1, 32>}, {pipeline_mode = #tpu.pipeline_mode<synchronous>, transform_indices = @transform_7, window_bounds = array<i64: 32, 64>}, {pipeline_mode = #tpu.pipeline_mode<synchronous>, transform_indices = @transform_8, window_bounds = array<i64: 1, 64>}, {pipeline_mode = #tpu.pipeline_mode<synchronous>, transform_indices = @transform_9, window_bounds = array<i64: 32, 32>}, {pipeline_mode = #tpu.pipeline_mode<synchronous>, transform_indices = @transform_10, window_bounds = array<i64: 1, 32>}, {pipeline_mode = #tpu.pipeline_mode<synchronous>, transform_indices = @transform_11, window_bounds = array<i64: 32, 32>}, {pipeline_mode = #tpu.pipeline_mode<synchronous>, transform_indices = @transform_12, window_bounds = array<i64: 1, 32>}, {pipeline_mode = #tpu.pipeline_mode<synchronous>, transform_indices = @transform_13, window_bounds = array<i64: 32, 64>}, {pipeline_mode = #tpu.pipeline_mode<synchronous>, transform_indices = @transform_14, window_bounds = array<i64: 1, 64>}, {pipeline_mode = #tpu.pipeline_mode<synchronous>, transform_indices = @transform_15, window_bounds = array<i64: 32, 32>}, {pipeline_mode = #tpu.pipeline_mode<synchronous>, transform_indices = @transform_16, window_bounds = array<i64: 1, 32>}, {pipeline_mode = #tpu.pipeline_mode<synchronous>, transform_indices = @transform_17, window_bounds = array<i64: 32, 64>}, {pipeline_mode = #tpu.pipeline_mode<synchronous>, transform_indices = @transform_18, window_bounds = array<i64: 1, 64>}, {pipeline_mode = #tpu.pipeline_mode<synchronous>, transform_indices = @transform_19, window_bounds = array<i64: 64, 32>}, {pipeline_mode = #tpu.pipeline_mode<synchronous>, transform_indices = @transform_20, window_bounds = array<i64: 1, 32>}, {pipeline_mode = #tpu.pipeline_mode<synchronous>, transform_indices = @transform_21, window_bounds = array<i64: 1, 32>}, {pipeline_mode = #tpu.pipeline_mode<synchronous>, transform_indices = @transform_22, window_bounds = array<i64: 1, 32>}, {pipeline_mode = #tpu.pipeline_mode<synchronous>, transform_indices = @transform_23, window_bounds = array<i64: 1, 32>}, {pipeline_mode = #tpu.pipeline_mode<synchronous>, transform_indices = @transform_24, window_bounds = array<i64: 1, 32>}, {pipeline_mode = #tpu.pipeline_mode<synchronous>, transform_indices = @transform_25, window_bounds = array<i64: 1, 32>}, {pipeline_mode = #tpu.pipeline_mode<synchronous>, transform_indices = @transform_26, window_bounds = array<i64: 1, 32>}, {transform_indices = @transform_27, window_bounds = array<i64: 1, 8, 32>}, {transform_indices = @transform_28, window_bounds = array<i64: 1, 8, 8>}, {transform_indices = @transform_29, window_bounds = array<i64: 1, 8, 8>}]} {
    %c0 = arith.constant 0 : index
    %c0_0 = arith.constant 0 : index
    %c0_1 = arith.constant 0 : index
    %0 = vector.load %arg2[%c0, %c0_0, %c0_1] : memref<1x8x32xf32, #tpu.memory_space<vmem>>, vector<1x8x32xf32>
    %1 = vector.shape_cast %0 : vector<1x8x32xf32> to vector<8x32xf32>
    %c0_2 = arith.constant 0 : index
    %c0_3 = arith.constant 0 : index
    %c0_4 = arith.constant 0 : index
    %2 = vector.load %arg3[%c0_2, %c0_3, %c0_4] : memref<1x8x32xf32, #tpu.memory_space<vmem>>, vector<1x8x32xf32>
    %3 = vector.shape_cast %2 : vector<1x8x32xf32> to vector<8x32xf32>
    %c0_5 = arith.constant 0 : index
    %c0_6 = arith.constant 0 : index
    %c0_7 = arith.constant 0 : index
    %4 = vector.load %arg4[%c0_5, %c0_6, %c0_7] : memref<1x8x32xf32, #tpu.memory_space<vmem>>, vector<1x8x32xf32>
    %5 = vector.shape_cast %4 : vector<1x8x32xf32> to vector<8x32xf32>
    %c0_8 = arith.constant 0 : index
    %c0_9 = arith.constant 0 : index
    %6 = vector.load %arg5[%c0_8, %c0_9] : memref<8x8xf32, #tpu.memory_space<vmem>>, vector<8x8xf32>
    %c0_10 = arith.constant 0 : index
    %c0_11 = arith.constant 0 : index
    %c0_12 = arith.constant 0 : index
    %7 = vector.load %arg6[%c0_10, %c0_11, %c0_12] : memref<1x1x8xf32, #tpu.memory_space<vmem>>, vector<1x1x8xf32>
    %8 = vector.shape_cast %7 : vector<1x1x8xf32> to vector<1x8xf32>
    %9 = arith.truncf %1 : vector<8x32xf32> to vector<8x32xbf16>
    %c0_13 = arith.constant 0 : index
    %c0_14 = arith.constant 0 : index
    %10 = vector.load %arg7[%c0_13, %c0_14] : memref<32x32xbf16, #tpu.memory_space<vmem>>, vector<32x32xbf16>
    %cst = arith.constant dense<0.000000e+00> : vector<8x32xf32>
    %11 = tpu.matmul %9, %10, %cst {dimension_numbers = #tpu.dot_dimension_numbers<[1], [0], [0], [1], [0, 0, 1, 1], [], []>} : vector<8x32xbf16>, vector<32x32xbf16>, vector<8x32xf32> -> vector<8x32xf32>
    %c0_15 = arith.constant 0 : index
    %c0_16 = arith.constant 0 : index
    %12 = vector.load %arg8[%c0_15, %c0_16] : memref<1x32xf32, #tpu.memory_space<vmem>>, vector<1x32xf32>
    %13 = vector.broadcast %12 : vector<1x32xf32> to vector<8x32xf32>
    %14 = arith.addf %11, %13 : vector<8x32xf32>
    %15 = arith.truncf %3 : vector<8x32xf32> to vector<8x32xbf16>
    %c0_17 = arith.constant 0 : index
    %c0_18 = arith.constant 0 : index
    %16 = vector.load %arg9[%c0_17, %c0_18] : memref<32x64xbf16, #tpu.memory_space<vmem>>, vector<32x64xbf16>
    %cst_19 = arith.constant dense<0.000000e+00> : vector<8x64xf32>
    %17 = tpu.matmul %15, %16, %cst_19 {dimension_numbers = #tpu.dot_dimension_numbers<[1], [0], [0], [1], [0, 0, 1, 1], [], []>} : vector<8x32xbf16>, vector<32x64xbf16>, vector<8x64xf32> -> vector<8x64xf32>
    %c0_20 = arith.constant 0 : index
    %c0_21 = arith.constant 0 : index
    %18 = vector.load %arg10[%c0_20, %c0_21] : memref<1x64xf32, #tpu.memory_space<vmem>>, vector<1x64xf32>
    %19 = vector.broadcast %18 : vector<1x64xf32> to vector<8x64xf32>
    %20 = arith.addf %17, %19 : vector<8x64xf32>
    %c0_22 = arith.constant 0 : index
    %c0_23 = arith.constant 0 : index
    %21 = vector.load %arg11[%c0_22, %c0_23] : memref<32x32xbf16, #tpu.memory_space<vmem>>, vector<32x32xbf16>
    %c0_24 = arith.constant 0 : index
    %c0_25 = arith.constant 0 : index
    %22 = vector.load %arg12[%c0_24, %c0_25] : memref<1x32xf32, #tpu.memory_space<vmem>>, vector<1x32xf32>
    %23 = vector.shape_cast %6 : vector<8x8xf32> to vector<1x8x8xf32>
    %24 = vector.shape_cast %14 : vector<8x32xf32> to vector<8x4x8xf32>
    %25 = tpu.transpose %24, [1, 0, 2] : vector<8x4x8xf32> -> vector<4x8x8xf32>
    %26 = arith.truncf %25 : vector<4x8x8xf32> to vector<4x8x8xbf16>
    %27 = vector.shape_cast %20 : vector<8x64xf32> to vector<8x8x8xf32>
    %28 = tpu.transpose %27, [1, 0, 2] : vector<8x8x8xf32> -> vector<8x8x8xf32>
    %29 = arith.truncf %28 : vector<8x8x8xf32> to vector<8x8x8xbf16>
    %30 = vector.extract_strided_slice %29 {offsets = [0, 0, 0], sizes = [4, 8, 8], strides = [1, 1, 1]} : vector<8x8x8xbf16> to vector<4x8x8xbf16>
    %31 = vector.extract_strided_slice %29 {offsets = [4, 0, 0], sizes = [4, 8, 8], strides = [1, 1, 1]} : vector<8x8x8xbf16> to vector<4x8x8xbf16>
    "tpu.trace_start"() <{level = 10 : i32, message = "hqd,hkd->hqk"}> : () -> ()
    %cst_26 = arith.constant dense<0.000000e+00> : vector<4x8x8xf32>
    %32 = tpu.matmul %26, %30, %cst_26 {dimension_numbers = #tpu.dot_dimension_numbers<[2], [2], [1], [1], [0, 0, 0, 1, 1, 1], [0], [0]>} : vector<4x8x8xbf16>, vector<4x8x8xbf16>, vector<4x8x8xf32> -> vector<4x8x8xf32>
    "tpu.trace_stop"() : () -> ()
    %33 = vector.broadcast %23 : vector<1x8x8xf32> to vector<4x8x8xf32>
    %34 = arith.addf %32, %33 : vector<4x8x8xf32>
    %cst_27 = arith.constant dense<0xFF800000> : vector<4x8xf32>
    %35 = vector.multi_reduction <maximumf>, %34, %cst_27 [2] : vector<4x8x8xf32> to vector<4x8xf32>
    %36 = vector.shape_cast %35 : vector<4x8xf32> to vector<4x8x1xf32>
    %37 = vector.broadcast %36 : vector<4x8x1xf32> to vector<4x8x8xf32>
    %38 = arith.subf %34, %37 : vector<4x8x8xf32>
    %39 = math.exp %38 : vector<4x8x8xf32>
    %cst_28 = arith.constant dense<0.000000e+00> : vector<4x8xf32>
    %40 = vector.multi_reduction <add>, %39, %cst_28 [2] : vector<4x8x8xf32> to vector<4x8xf32>
    %41 = vector.shape_cast %40 : vector<4x8xf32> to vector<4x8x1xf32>
    %42 = tpu.reciprocal %41 {approx = true} : vector<4x8x1xf32> -> vector<4x8x1xf32>
    %43 = vector.broadcast %42 : vector<4x8x1xf32> to vector<4x8x8xf32>
    %44 = arith.mulf %39, %43 : vector<4x8x8xf32>
    %cst_29 = arith.constant dense<0.000000e+00> : vector<8x8xf32>
    %45 = vector.multi_reduction <add>, %44, %cst_29 [0] : vector<4x8x8xf32> to vector<8x8xf32>
    %cst_30 = arith.constant 2.500000e-01 : f32
    %46 = vector.broadcast %cst_30 : f32 to vector<8x8xf32>
    %47 = arith.mulf %45, %46 : vector<8x8xf32>
    %48 = arith.truncf %44 : vector<4x8x8xf32> to vector<4x8x8xbf16>
    "tpu.trace_start"() <{level = 10 : i32, message = "hqk,hkd->hqd"}> : () -> ()
    %cst_31 = arith.constant dense<0.000000e+00> : vector<4x8x8xf32>
    %49 = tpu.matmul %48, %31, %cst_31 {dimension_numbers = #tpu.dot_dimension_numbers<[2], [1], [1], [2], [0, 0, 0, 1, 1, 2], [0], [0]>} : vector<4x8x8xbf16>, vector<4x8x8xbf16>, vector<4x8x8xf32> -> vector<4x8x8xf32>
    "tpu.trace_stop"() : () -> ()
    %50 = tpu.transpose %49, [1, 0, 2] : vector<4x8x8xf32> -> vector<8x4x8xf32>
    %51 = vector.shape_cast %50 : vector<8x4x8xf32> to vector<8x32xf32>
    %52 = arith.truncf %51 : vector<8x32xf32> to vector<8x32xbf16>
    %cst_32 = arith.constant dense<0.000000e+00> : vector<8x32xf32>
    %53 = tpu.matmul %52, %21, %cst_32 {dimension_numbers = #tpu.dot_dimension_numbers<[1], [0], [0], [1], [0, 0, 1, 1], [], []>} : vector<8x32xbf16>, vector<32x32xbf16>, vector<8x32xf32> -> vector<8x32xf32>
    %54 = vector.broadcast %22 : vector<1x32xf32> to vector<8x32xf32>
    %55 = arith.addf %53, %54 : vector<8x32xf32>
    %56 = arith.addf %1, %55 : vector<8x32xf32>
    %c0_33 = arith.constant 0 : index
    %c0_34 = arith.constant 0 : index
    %57 = vector.load %arg23[%c0_33, %c0_34] : memref<1x32xf32, #tpu.memory_space<vmem>>, vector<1x32xf32>
    %c0_35 = arith.constant 0 : index
    %c0_36 = arith.constant 0 : index
    %58 = vector.load %arg24[%c0_35, %c0_36] : memref<1x32xf32, #tpu.memory_space<vmem>>, vector<1x32xf32>
    %cst_37 = arith.constant dense<0.000000e+00> : vector<8xf32>
    %59 = vector.multi_reduction <add>, %56, %cst_37 [1] : vector<8x32xf32> to vector<8xf32>
    %60 = vector.shape_cast %59 : vector<8xf32> to vector<8x1xf32>
    %cst_38 = arith.constant 3.200000e+01 : f32
    %61 = vector.broadcast %cst_38 : f32 to vector<8x1xf32>
    %62 = arith.divf %60, %61 : vector<8x1xf32>
    %63 = vector.broadcast %62 : vector<8x1xf32> to vector<8x32xf32>
    %64 = arith.subf %56, %63 : vector<8x32xf32>
    %65 = arith.mulf %64, %64 : vector<8x32xf32>
    %cst_39 = arith.constant dense<0.000000e+00> : vector<8xf32>
    %66 = vector.multi_reduction <add>, %65, %cst_39 [1] : vector<8x32xf32> to vector<8xf32>
    %67 = vector.shape_cast %66 : vector<8xf32> to vector<8x1xf32>
    %cst_40 = arith.constant 3.200000e+01 : f32
    %68 = vector.broadcast %cst_40 : f32 to vector<8x1xf32>
    %69 = arith.divf %67, %68 : vector<8x1xf32>
    %70 = vector.broadcast %62 : vector<8x1xf32> to vector<8x32xf32>
    %71 = arith.subf %56, %70 : vector<8x32xf32>
    %cst_41 = arith.constant 9.99999974E-6 : f32
    %72 = vector.broadcast %cst_41 : f32 to vector<8x1xf32>
    %73 = arith.addf %69, %72 : vector<8x1xf32>
    %74 = math.rsqrt %73 : vector<8x1xf32>
    %75 = vector.broadcast %74 : vector<8x1xf32> to vector<8x32xf32>
    %76 = arith.mulf %71, %75 : vector<8x32xf32>
    %77 = vector.broadcast %57 : vector<1x32xf32> to vector<8x32xf32>
    %78 = arith.mulf %76, %77 : vector<8x32xf32>
    %79 = vector.broadcast %58 : vector<1x32xf32> to vector<8x32xf32>
    %80 = arith.addf %78, %79 : vector<8x32xf32>
    %81 = arith.truncf %80 : vector<8x32xf32> to vector<8x32xbf16>
    %c0_42 = arith.constant 0 : index
    %c0_43 = arith.constant 0 : index
    %82 = vector.load %arg13[%c0_42, %c0_43] : memref<32x32xbf16, #tpu.memory_space<vmem>>, vector<32x32xbf16>
    %cst_44 = arith.constant dense<0.000000e+00> : vector<8x32xf32>
    %83 = tpu.matmul %81, %82, %cst_44 {dimension_numbers = #tpu.dot_dimension_numbers<[1], [0], [0], [1], [0, 0, 1, 1], [], []>} : vector<8x32xbf16>, vector<32x32xbf16>, vector<8x32xf32> -> vector<8x32xf32>
    %c0_45 = arith.constant 0 : index
    %c0_46 = arith.constant 0 : index
    %84 = vector.load %arg14[%c0_45, %c0_46] : memref<1x32xf32, #tpu.memory_space<vmem>>, vector<1x32xf32>
    %85 = vector.broadcast %84 : vector<1x32xf32> to vector<8x32xf32>
    %86 = arith.addf %83, %85 : vector<8x32xf32>
    %87 = arith.truncf %5 : vector<8x32xf32> to vector<8x32xbf16>
    %c0_47 = arith.constant 0 : index
    %c0_48 = arith.constant 0 : index
    %88 = vector.load %arg15[%c0_47, %c0_48] : memref<32x64xbf16, #tpu.memory_space<vmem>>, vector<32x64xbf16>
    %cst_49 = arith.constant dense<0.000000e+00> : vector<8x64xf32>
    %89 = tpu.matmul %87, %88, %cst_49 {dimension_numbers = #tpu.dot_dimension_numbers<[1], [0], [0], [1], [0, 0, 1, 1], [], []>} : vector<8x32xbf16>, vector<32x64xbf16>, vector<8x64xf32> -> vector<8x64xf32>
    %c0_50 = arith.constant 0 : index
    %c0_51 = arith.constant 0 : index
    %90 = vector.load %arg16[%c0_50, %c0_51] : memref<1x64xf32, #tpu.memory_space<vmem>>, vector<1x64xf32>
    %91 = vector.broadcast %90 : vector<1x64xf32> to vector<8x64xf32>
    %92 = arith.addf %89, %91 : vector<8x64xf32>
    %c0_52 = arith.constant 0 : index
    %c0_53 = arith.constant 0 : index
    %93 = vector.load %arg17[%c0_52, %c0_53] : memref<32x32xbf16, #tpu.memory_space<vmem>>, vector<32x32xbf16>
    %c0_54 = arith.constant 0 : index
    %c0_55 = arith.constant 0 : index
    %94 = vector.load %arg18[%c0_54, %c0_55] : memref<1x32xf32, #tpu.memory_space<vmem>>, vector<1x32xf32>
    %95 = vector.shape_cast %8 : vector<1x8xf32> to vector<1x1x8xf32>
    %96 = vector.shape_cast %86 : vector<8x32xf32> to vector<8x4x8xf32>
    %97 = tpu.transpose %96, [1, 0, 2] : vector<8x4x8xf32> -> vector<4x8x8xf32>
    %98 = arith.truncf %97 : vector<4x8x8xf32> to vector<4x8x8xbf16>
    %99 = vector.shape_cast %92 : vector<8x64xf32> to vector<8x8x8xf32>
    %100 = tpu.transpose %99, [1, 0, 2] : vector<8x8x8xf32> -> vector<8x8x8xf32>
    %101 = arith.truncf %100 : vector<8x8x8xf32> to vector<8x8x8xbf16>
    %102 = vector.extract_strided_slice %101 {offsets = [0, 0, 0], sizes = [4, 8, 8], strides = [1, 1, 1]} : vector<8x8x8xbf16> to vector<4x8x8xbf16>
    %103 = vector.extract_strided_slice %101 {offsets = [4, 0, 0], sizes = [4, 8, 8], strides = [1, 1, 1]} : vector<8x8x8xbf16> to vector<4x8x8xbf16>
    "tpu.trace_start"() <{level = 10 : i32, message = "hqd,hkd->hqk"}> : () -> ()
    %cst_56 = arith.constant dense<0.000000e+00> : vector<4x8x8xf32>
    %104 = tpu.matmul %98, %102, %cst_56 {dimension_numbers = #tpu.dot_dimension_numbers<[2], [2], [1], [1], [0, 0, 0, 1, 1, 1], [0], [0]>} : vector<4x8x8xbf16>, vector<4x8x8xbf16>, vector<4x8x8xf32> -> vector<4x8x8xf32>
    "tpu.trace_stop"() : () -> ()
    %105 = vector.broadcast %95 : vector<1x1x8xf32> to vector<4x8x8xf32>
    %106 = arith.addf %104, %105 : vector<4x8x8xf32>
    %cst_57 = arith.constant dense<0xFF800000> : vector<4x8xf32>
    %107 = vector.multi_reduction <maximumf>, %106, %cst_57 [2] : vector<4x8x8xf32> to vector<4x8xf32>
    %108 = vector.shape_cast %107 : vector<4x8xf32> to vector<4x8x1xf32>
    %109 = vector.broadcast %108 : vector<4x8x1xf32> to vector<4x8x8xf32>
    %110 = arith.subf %106, %109 : vector<4x8x8xf32>
    %111 = math.exp %110 : vector<4x8x8xf32>
    %cst_58 = arith.constant dense<0.000000e+00> : vector<4x8xf32>
    %112 = vector.multi_reduction <add>, %111, %cst_58 [2] : vector<4x8x8xf32> to vector<4x8xf32>
    %113 = vector.shape_cast %112 : vector<4x8xf32> to vector<4x8x1xf32>
    %114 = tpu.reciprocal %113 {approx = true} : vector<4x8x1xf32> -> vector<4x8x1xf32>
    %115 = vector.broadcast %114 : vector<4x8x1xf32> to vector<4x8x8xf32>
    %116 = arith.mulf %111, %115 : vector<4x8x8xf32>
    %cst_59 = arith.constant dense<0.000000e+00> : vector<8x8xf32>
    %117 = vector.multi_reduction <add>, %116, %cst_59 [0] : vector<4x8x8xf32> to vector<8x8xf32>
    %cst_60 = arith.constant 2.500000e-01 : f32
    %118 = vector.broadcast %cst_60 : f32 to vector<8x8xf32>
    %119 = arith.mulf %117, %118 : vector<8x8xf32>
    %120 = arith.truncf %116 : vector<4x8x8xf32> to vector<4x8x8xbf16>
    "tpu.trace_start"() <{level = 10 : i32, message = "hqk,hkd->hqd"}> : () -> ()
    %cst_61 = arith.constant dense<0.000000e+00> : vector<4x8x8xf32>
    %121 = tpu.matmul %120, %103, %cst_61 {dimension_numbers = #tpu.dot_dimension_numbers<[2], [1], [1], [2], [0, 0, 0, 1, 1, 2], [0], [0]>} : vector<4x8x8xbf16>, vector<4x8x8xbf16>, vector<4x8x8xf32> -> vector<4x8x8xf32>
    "tpu.trace_stop"() : () -> ()
    %122 = tpu.transpose %121, [1, 0, 2] : vector<4x8x8xf32> -> vector<8x4x8xf32>
    %123 = vector.shape_cast %122 : vector<8x4x8xf32> to vector<8x32xf32>
    %124 = arith.truncf %123 : vector<8x32xf32> to vector<8x32xbf16>
    %cst_62 = arith.constant dense<0.000000e+00> : vector<8x32xf32>
    %125 = tpu.matmul %124, %93, %cst_62 {dimension_numbers = #tpu.dot_dimension_numbers<[1], [0], [0], [1], [0, 0, 1, 1], [], []>} : vector<8x32xbf16>, vector<32x32xbf16>, vector<8x32xf32> -> vector<8x32xf32>
    %126 = vector.broadcast %94 : vector<1x32xf32> to vector<8x32xf32>
    %127 = arith.addf %125, %126 : vector<8x32xf32>
    %128 = arith.addf %80, %127 : vector<8x32xf32>
    %c0_63 = arith.constant 0 : index
    %c0_64 = arith.constant 0 : index
    %129 = vector.load %arg25[%c0_63, %c0_64] : memref<1x32xf32, #tpu.memory_space<vmem>>, vector<1x32xf32>
    %c0_65 = arith.constant 0 : index
    %c0_66 = arith.constant 0 : index
    %130 = vector.load %arg26[%c0_65, %c0_66] : memref<1x32xf32, #tpu.memory_space<vmem>>, vector<1x32xf32>
    %cst_67 = arith.constant dense<0.000000e+00> : vector<8xf32>
    %131 = vector.multi_reduction <add>, %128, %cst_67 [1] : vector<8x32xf32> to vector<8xf32>
    %132 = vector.shape_cast %131 : vector<8xf32> to vector<8x1xf32>
    %cst_68 = arith.constant 3.200000e+01 : f32
    %133 = vector.broadcast %cst_68 : f32 to vector<8x1xf32>
    %134 = arith.divf %132, %133 : vector<8x1xf32>
    %135 = vector.broadcast %134 : vector<8x1xf32> to vector<8x32xf32>
    %136 = arith.subf %128, %135 : vector<8x32xf32>
    %137 = arith.mulf %136, %136 : vector<8x32xf32>
    %cst_69 = arith.constant dense<0.000000e+00> : vector<8xf32>
    %138 = vector.multi_reduction <add>, %137, %cst_69 [1] : vector<8x32xf32> to vector<8xf32>
    %139 = vector.shape_cast %138 : vector<8xf32> to vector<8x1xf32>
    %cst_70 = arith.constant 3.200000e+01 : f32
    %140 = vector.broadcast %cst_70 : f32 to vector<8x1xf32>
    %141 = arith.divf %139, %140 : vector<8x1xf32>
    %142 = vector.broadcast %134 : vector<8x1xf32> to vector<8x32xf32>
    %143 = arith.subf %128, %142 : vector<8x32xf32>
    %cst_71 = arith.constant 9.99999974E-6 : f32
    %144 = vector.broadcast %cst_71 : f32 to vector<8x1xf32>
    %145 = arith.addf %141, %144 : vector<8x1xf32>
    %146 = math.rsqrt %145 : vector<8x1xf32>
    %147 = vector.broadcast %146 : vector<8x1xf32> to vector<8x32xf32>
    %148 = arith.mulf %143, %147 : vector<8x32xf32>
    %149 = vector.broadcast %129 : vector<1x32xf32> to vector<8x32xf32>
    %150 = arith.mulf %148, %149 : vector<8x32xf32>
    %151 = vector.broadcast %130 : vector<1x32xf32> to vector<8x32xf32>
    %152 = arith.addf %150, %151 : vector<8x32xf32>
    %153 = arith.truncf %152 : vector<8x32xf32> to vector<8x32xbf16>
    %c0_72 = arith.constant 0 : index
    %c0_73 = arith.constant 0 : index
    %154 = vector.load %arg19[%c0_72, %c0_73] : memref<32x64xbf16, #tpu.memory_space<vmem>>, vector<32x64xbf16>
    %cst_74 = arith.constant dense<0.000000e+00> : vector<8x64xf32>
    %155 = tpu.matmul %153, %154, %cst_74 {dimension_numbers = #tpu.dot_dimension_numbers<[1], [0], [0], [1], [0, 0, 1, 1], [], []>} : vector<8x32xbf16>, vector<32x64xbf16>, vector<8x64xf32> -> vector<8x64xf32>
    %c0_75 = arith.constant 0 : index
    %c0_76 = arith.constant 0 : index
    %156 = vector.load %arg20[%c0_75, %c0_76] : memref<1x64xf32, #tpu.memory_space<vmem>>, vector<1x64xf32>
    %157 = vector.broadcast %156 : vector<1x64xf32> to vector<8x64xf32>
    %158 = arith.addf %155, %157 : vector<8x64xf32>
    %cst_77 = arith.constant 0.000000e+00 : f32
    %159 = vector.broadcast %cst_77 : f32 to vector<8x64xf32>
    %160 = arith.maximumf %158, %159 : vector<8x64xf32>
    %161 = arith.truncf %160 : vector<8x64xf32> to vector<8x64xbf16>
    %c0_78 = arith.constant 0 : index
    %c0_79 = arith.constant 0 : index
    %162 = vector.load %arg21[%c0_78, %c0_79] : memref<64x32xbf16, #tpu.memory_space<vmem>>, vector<64x32xbf16>
    %cst_80 = arith.constant dense<0.000000e+00> : vector<8x32xf32>
    %163 = tpu.matmul %161, %162, %cst_80 {dimension_numbers = #tpu.dot_dimension_numbers<[1], [0], [0], [1], [0, 0, 1, 1], [], []>} : vector<8x64xbf16>, vector<64x32xbf16>, vector<8x32xf32> -> vector<8x32xf32>
    %c0_81 = arith.constant 0 : index
    %c0_82 = arith.constant 0 : index
    %164 = vector.load %arg22[%c0_81, %c0_82] : memref<1x32xf32, #tpu.memory_space<vmem>>, vector<1x32xf32>
    %165 = vector.broadcast %164 : vector<1x32xf32> to vector<8x32xf32>
    %166 = arith.addf %163, %165 : vector<8x32xf32>
    %167 = arith.addf %152, %166 : vector<8x32xf32>
    %c0_83 = arith.constant 0 : index
    %c0_84 = arith.constant 0 : index
    %168 = vector.load %arg27[%c0_83, %c0_84] : memref<1x32xf32, #tpu.memory_space<vmem>>, vector<1x32xf32>
    %c0_85 = arith.constant 0 : index
    %c0_86 = arith.constant 0 : index
    %169 = vector.load %arg28[%c0_85, %c0_86] : memref<1x32xf32, #tpu.memory_space<vmem>>, vector<1x32xf32>
    %cst_87 = arith.constant dense<0.000000e+00> : vector<8xf32>
    %170 = vector.multi_reduction <add>, %167, %cst_87 [1] : vector<8x32xf32> to vector<8xf32>
    %171 = vector.shape_cast %170 : vector<8xf32> to vector<8x1xf32>
    %cst_88 = arith.constant 3.200000e+01 : f32
    %172 = vector.broadcast %cst_88 : f32 to vector<8x1xf32>
    %173 = arith.divf %171, %172 : vector<8x1xf32>
    %174 = vector.broadcast %173 : vector<8x1xf32> to vector<8x32xf32>
    %175 = arith.subf %167, %174 : vector<8x32xf32>
    %176 = arith.mulf %175, %175 : vector<8x32xf32>
    %cst_89 = arith.constant dense<0.000000e+00> : vector<8xf32>
    %177 = vector.multi_reduction <add>, %176, %cst_89 [1] : vector<8x32xf32> to vector<8xf32>
    %178 = vector.shape_cast %177 : vector<8xf32> to vector<8x1xf32>
    %cst_90 = arith.constant 3.200000e+01 : f32
    %179 = vector.broadcast %cst_90 : f32 to vector<8x1xf32>
    %180 = arith.divf %178, %179 : vector<8x1xf32>
    %181 = vector.broadcast %173 : vector<8x1xf32> to vector<8x32xf32>
    %182 = arith.subf %167, %181 : vector<8x32xf32>
    %cst_91 = arith.constant 9.99999974E-6 : f32
    %183 = vector.broadcast %cst_91 : f32 to vector<8x1xf32>
    %184 = arith.addf %180, %183 : vector<8x1xf32>
    %185 = math.rsqrt %184 : vector<8x1xf32>
    %186 = vector.broadcast %185 : vector<8x1xf32> to vector<8x32xf32>
    %187 = arith.mulf %182, %186 : vector<8x32xf32>
    %188 = vector.broadcast %168 : vector<1x32xf32> to vector<8x32xf32>
    %189 = arith.mulf %187, %188 : vector<8x32xf32>
    %190 = vector.broadcast %169 : vector<1x32xf32> to vector<8x32xf32>
    %191 = arith.addf %189, %190 : vector<8x32xf32>
    %c0_92 = arith.constant 0 : index
    %c0_93 = arith.constant 0 : index
    %c0_94 = arith.constant 0 : index
    %192 = vector.load %arg29[%c0_92, %c0_93, %c0_94] : memref<1x8x32xf32, #tpu.memory_space<vmem>>, vector<1x8x32xf32>
    %193 = vector.shape_cast %192 : vector<1x8x32xf32> to vector<8x32xf32>
    %194 = vector.shape_cast %191 : vector<8x32xf32> to vector<1x8x32xf32>
    tpu.vector_store %arg29[%c0_92, %c0_93, %c0_94], %194 {strides = array<i32>} : memref<1x8x32xf32, #tpu.memory_space<vmem>>, vector<1x8x32xf32>,
    %c0_95 = arith.constant 0 : index
    %c0_96 = arith.constant 0 : index
    %c0_97 = arith.constant 0 : index
    %195 = vector.load %arg30[%c0_95, %c0_96, %c0_97] : memref<1x8x8xf32, #tpu.memory_space<vmem>>, vector<1x8x8xf32>
    %196 = vector.shape_cast %195 : vector<1x8x8xf32> to vector<8x8xf32>
    %197 = vector.shape_cast %47 : vector<8x8xf32> to vector<1x8x8xf32>
    tpu.vector_store %arg30[%c0_95, %c0_96, %c0_97], %197 {strides = array<i32>} : memref<1x8x8xf32, #tpu.memory_space<vmem>>, vector<1x8x8xf32>,
    %c0_98 = arith.constant 0 : index
    %c0_99 = arith.constant 0 : index
    %c0_100 = arith.constant 0 : index
    %198 = vector.load %arg31[%c0_98, %c0_99, %c0_100] : memref<1x8x8xf32, #tpu.memory_space<vmem>>, vector<1x8x8xf32>
    %199 = vector.shape_cast %198 : vector<1x8x8xf32> to vector<8x8xf32>
    %200 = vector.shape_cast %119 : vector<8x8xf32> to vector<1x8x8xf32>
    tpu.vector_store %arg31[%c0_98, %c0_99, %c0_100], %200 {strides = array<i32>} : memref<1x8x8xf32, #tpu.memory_space<vmem>>, vector<1x8x8xf32>,
    return
  }
  func.func @transform_0(%arg0: i32, %arg1: i32) -> (i32, i32, i32) {
    %c0_i32 = arith.constant 0 : i32
    %c0_i32_0 = arith.constant 0 : i32
    return %arg0, %arg1, %c0_i32 : i32, i32, i32
  }
  func.func @transform_1(%arg0: i32, %arg1: i32) -> (i32, i32, i32) {
    %c0_i32 = arith.constant 0 : i32
    %c0_i32_0 = arith.constant 0 : i32
    %c0_i32_1 = arith.constant 0 : i32
    return %arg0, %c0_i32, %c0_i32_0 : i32, i32, i32
  }
  func.func @transform_2(%arg0: i32, %arg1: i32) -> (i32, i32, i32) {
    %c0_i32 = arith.constant 0 : i32
    %c0_i32_0 = arith.constant 0 : i32
    %c0_i32_1 = arith.constant 0 : i32
    return %arg0, %c0_i32, %c0_i32_0 : i32, i32, i32
  }
  func.func @transform_3(%arg0: i32, %arg1: i32) -> (i32, i32) {
    %c0_i32 = arith.constant 0 : i32
    %c0_i32_0 = arith.constant 0 : i32
    return %arg1, %c0_i32 : i32, i32
  }
  func.func @transform_4(%arg0: i32, %arg1: i32) -> (i32, i32, i32) {
    %c0_i32 = arith.constant 0 : i32
    %c0_i32_0 = arith.constant 0 : i32
    %c0_i32_1 = arith.constant 0 : i32
    return %arg0, %c0_i32, %c0_i32_0 : i32, i32, i32
  }
  func.func @transform_5(%arg0: i32, %arg1: i32) -> (i32, i32) {
    %c0_i32 = arith.constant 0 : i32
    %c0_i32_0 = arith.constant 0 : i32
    %c0_i32_1 = arith.constant 0 : i32
    return %c0_i32, %c0_i32_0 : i32, i32
  }
  func.func @transform_6(%arg0: i32, %arg1: i32) -> (i32, i32) {
    %c0_i32 = arith.constant 0 : i32
    %c0_i32_0 = arith.constant 0 : i32
    %c0_i32_1 = arith.constant 0 : i32
    return %c0_i32, %c0_i32_0 : i32, i32
  }
  func.func @transform_7(%arg0: i32, %arg1: i32) -> (i32, i32) {
    %c0_i32 = arith.constant 0 : i32
    %c0_i32_0 = arith.constant 0 : i32
    %c0_i32_1 = arith.constant 0 : i32
    return %c0_i32, %c0_i32_0 : i32, i32
  }
  func.func @transform_8(%arg0: i32, %arg1: i32) -> (i32, i32) {
    %c0_i32 = arith.constant 0 : i32
    %c0_i32_0 = arith.constant 0 : i32
    %c0_i32_1 = arith.constant 0 : i32
    return %c0_i32, %c0_i32_0 : i32, i32
  }
  func.func @transform_9(%arg0: i32, %arg1: i32) -> (i32, i32) {
    %c0_i32 = arith.constant 0 : i32
    %c0_i32_0 = arith.constant 0 : i32
    %c0_i32_1 = arith.constant 0 : i32
    return %c0_i32, %c0_i32_0 : i32, i32
  }
  func.func @transform_10(%arg0: i32, %arg1: i32) -> (i32, i32) {
    %c0_i32 = arith.constant 0 : i32
    %c0_i32_0 = arith.constant 0 : i32
    %c0_i32_1 = arith.constant 0 : i32
    return %c0_i32, %c0_i32_0 : i32, i32
  }
  func.func @transform_11(%arg0: i32, %arg1: i32) -> (i32, i32) {
    %c0_i32 = arith.constant 0 : i32
    %c0_i32_0 = arith.constant 0 : i32
    %c0_i32_1 = arith.constant 0 : i32
    return %c0_i32, %c0_i32_0 : i32, i32
  }
  func.func @transform_12(%arg0: i32, %arg1: i32) -> (i32, i32) {
    %c0_i32 = arith.constant 0 : i32
    %c0_i32_0 = arith.constant 0 : i32
    %c0_i32_1 = arith.constant 0 : i32
    return %c0_i32, %c0_i32_0 : i32, i32
  }
  func.func @transform_13(%arg0: i32, %arg1: i32) -> (i32, i32) {
    %c0_i32 = arith.constant 0 : i32
    %c0_i32_0 = arith.constant 0 : i32
    %c0_i32_1 = arith.constant 0 : i32
    return %c0_i32, %c0_i32_0 : i32, i32
  }
  func.func @transform_14(%arg0: i32, %arg1: i32) -> (i32, i32) {
    %c0_i32 = arith.constant 0 : i32
    %c0_i32_0 = arith.constant 0 : i32
    %c0_i32_1 = arith.constant 0 : i32
    return %c0_i32, %c0_i32_0 : i32, i32
  }
  func.func @transform_15(%arg0: i32, %arg1: i32) -> (i32, i32) {
    %c0_i32 = arith.constant 0 : i32
    %c0_i32_0 = arith.constant 0 : i32
    %c0_i32_1 = arith.constant 0 : i32
    return %c0_i32, %c0_i32_0 : i32, i32
  }
  func.func @transform_16(%arg0: i32, %arg1: i32) -> (i32, i32) {
    %c0_i32 = arith.constant 0 : i32
    %c0_i32_0 = arith.constant 0 : i32
    %c0_i32_1 = arith.constant 0 : i32
    return %c0_i32, %c0_i32_0 : i32, i32
  }
  func.func @transform_17(%arg0: i32, %arg1: i32) -> (i32, i32) {
    %c0_i32 = arith.constant 0 : i32
    %c0_i32_0 = arith.constant 0 : i32
    %c0_i32_1 = arith.constant 0 : i32
    return %c0_i32, %c0_i32_0 : i32, i32
  }
  func.func @transform_18(%arg0: i32, %arg1: i32) -> (i32, i32) {
    %c0_i32 = arith.constant 0 : i32
    %c0_i32_0 = arith.constant 0 : i32
    %c0_i32_1 = arith.constant 0 : i32
    return %c0_i32, %c0_i32_0 : i32, i32
  }
  func.func @transform_19(%arg0: i32, %arg1: i32) -> (i32, i32) {
    %c0_i32 = arith.constant 0 : i32
    %c0_i32_0 = arith.constant 0 : i32
    %c0_i32_1 = arith.constant 0 : i32
    return %c0_i32, %c0_i32_0 : i32, i32
  }
  func.func @transform_20(%arg0: i32, %arg1: i32) -> (i32, i32) {
    %c0_i32 = arith.constant 0 : i32
    %c0_i32_0 = arith.constant 0 : i32
    %c0_i32_1 = arith.constant 0 : i32
    return %c0_i32, %c0_i32_0 : i32, i32
  }
  func.func @transform_21(%arg0: i32, %arg1: i32) -> (i32, i32) {
    %c0_i32 = arith.constant 0 : i32
    %c0_i32_0 = arith.constant 0 : i32
    %c0_i32_1 = arith.constant 0 : i32
    return %c0_i32, %c0_i32_0 : i32, i32
  }
  func.func @transform_22(%arg0: i32, %arg1: i32) -> (i32, i32) {
    %c0_i32 = arith.constant 0 : i32
    %c0_i32_0 = arith.constant 0 : i32
    %c0_i32_1 = arith.constant 0 : i32
    return %c0_i32, %c0_i32_0 : i32, i32
  }
  func.func @transform_23(%arg0: i32, %arg1: i32) -> (i32, i32) {
    %c0_i32 = arith.constant 0 : i32
    %c0_i32_0 = arith.constant 0 : i32
    %c0_i32_1 = arith.constant 0 : i32
    return %c0_i32, %c0_i32_0 : i32, i32
  }
  func.func @transform_24(%arg0: i32, %arg1: i32) -> (i32, i32) {
    %c0_i32 = arith.constant 0 : i32
    %c0_i32_0 = arith.constant 0 : i32
    %c0_i32_1 = arith.constant 0 : i32
    return %c0_i32, %c0_i32_0 : i32, i32
  }
  func.func @transform_25(%arg0: i32, %arg1: i32) -> (i32, i32) {
    %c0_i32 = arith.constant 0 : i32
    %c0_i32_0 = arith.constant 0 : i32
    %c0_i32_1 = arith.constant 0 : i32
    return %c0_i32, %c0_i32_0 : i32, i32
  }
  func.func @transform_26(%arg0: i32, %arg1: i32) -> (i32, i32) {
    %c0_i32 = arith.constant 0 : i32
    %c0_i32_0 = arith.constant 0 : i32
    %c0_i32_1 = arith.constant 0 : i32
    return %c0_i32, %c0_i32_0 : i32, i32
  }
  func.func @transform_27(%arg0: i32, %arg1: i32) -> (i32, i32, i32) {
    %c0_i32 = arith.constant 0 : i32
    %c0_i32_0 = arith.constant 0 : i32
    return %arg0, %arg1, %c0_i32 : i32, i32, i32
  }
  func.func @transform_28(%arg0: i32, %arg1: i32) -> (i32, i32, i32) {
    %c0_i32 = arith.constant 0 : i32
    %c0_i32_0 = arith.constant 0 : i32
    return %arg0, %arg1, %c0_i32 : i32, i32, i32
  }
  func.func @transform_29(%arg0: i32, %arg1: i32) -> (i32, i32, i32) {
    %c0_i32 = arith.constant 0 : i32
    %c0_i32_0 = arith.constant 0 : i32
    return %arg0, %arg1, %c0_i32 : i32, i32, i32
  }
}

module attributes {stable_mosaic.version = 11 : i64} {
  func.func @_decoder_block_kernel(%arg0: i32, %arg1: i32, %arg2: memref<1x8x32xf32, #tpu.memory_space<vmem>>, %arg3: memref<1x8x32xf32, #tpu.memory_space<vmem>>, %arg4: memref<1x8x32xf32, #tpu.memory_space<vmem>>, %arg5: memref<8x8xf32, #tpu.memory_space<vmem>>, %arg6: memref<1x1x8xf32, #tpu.memory_space<vmem>>, %arg7: memref<32x32xbf16, #tpu.memory_space<vmem>>, %arg8: memref<1x32xf32, #tpu.memory_space<vmem>>, %arg9: memref<32x64xbf16, #tpu.memory_space<vmem>>, %arg10: memref<1x64xf32, #tpu.memory_space<vmem>>, %arg11: memref<32x32xbf16, #tpu.memory_space<vmem>>, %arg12: memref<1x32xf32, #tpu.memory_space<vmem>>, %arg13: memref<32x32xbf16, #tpu.memory_space<vmem>>, %arg14: memref<1x32xf32, #tpu.memory_space<vmem>>, %arg15: memref<32x64xbf16, #tpu.memory_space<vmem>>, %arg16: memref<1x64xf32, #tpu.memory_space<vmem>>, %arg17: memref<32x32xbf16, #tpu.memory_space<vmem>>, %arg18: memref<1x32xf32, #tpu.memory_space<vmem>>, %arg19: memref<32x64xbf16, #tpu.memory_space<vmem>>, %arg20: memref<1x64xf32, #tpu.memory_space<vmem>>, %arg21: memref<64x32xbf16, #tpu.memory_space<vmem>>, %arg22: memref<1x32xf32, #tpu.memory_space<vmem>>, %arg23: memref<1x32xf32, #tpu.memory_space<vmem>>, %arg24: memref<1x32xf32, #tpu.memory_space<vmem>>, %arg25: memref<1x32xf32, #tpu.memory_space<vmem>>, %arg26: memref<1x32xf32, #tpu.memory_space<vmem>>, %arg27: memref<1x32xf32, #tpu.memory_space<vmem>>, %arg28: memref<1x32xf32, #tpu.memory_space<vmem>>, %arg29: memref<1x8x32xf32, #tpu.memory_space<vmem>>, %arg30: memref<1x8x8xf32, #tpu.memory_space<vmem>>, %arg31: memref<1x8x8xf32, #tpu.memory_space<vmem>>) attributes {dimension_semantics = [#tpu.dimension_semantics<parallel>, #tpu.dimension_semantics<parallel>], iteration_bounds = array<i64: 2, 1>, scalar_prefetch = 0 : i64, scratch_operands = 0 : i64, tpu.core_type = #tpu.core_type<tc>, window_params = [{transform_indices = @transform_0, window_bounds = array<i64: 1, 8, 32>}, {transform_indices = @transform_1, window_bounds = array<i64: 1, 8, 32>}, {transform_indices = @transform_2, window_bounds = array<i64: 1, 8, 32>}, {transform_indices = @transform_3, window_bounds = array<i64: 8, 8>}, {transform_indices = @transform_4, window_bounds = array<i64: 1, 1, 8>}, {pipeline_mode = #tpu.pipeline_mode<synchronous>, transform_indices = @transform_5, window_bounds = array<i64: 32, 32>}, {pipeline_mode = #tpu.pipeline_mode<synchronous>, transform_indices = @transform_6, window_bounds = array<i64: 1, 32>}, {pipeline_mode = #tpu.pipeline_mode<synchronous>, transform_indices = @transform_7, window_bounds = array<i64: 32, 64>}, {pipeline_mode = #tpu.pipeline_mode<synchronous>, transform_indices = @transform_8, window_bounds = array<i64: 1, 64>}, {pipeline_mode = #tpu.pipeline_mode<synchronous>, transform_indices = @transform_9, window_bounds = array<i64: 32, 32>}, {pipeline_mode = #tpu.pipeline_mode<synchronous>, transform_indices = @transform_10, window_bounds = array<i64: 1, 32>}, {pipeline_mode = #tpu.pipeline_mode<synchronous>, transform_indices = @transform_11, window_bounds = array<i64: 32, 32>}, {pipeline_mode = #tpu.pipeline_mode<synchronous>, transform_indices = @transform_12, window_bounds = array<i64: 1, 32>}, {pipeline_mode = #tpu.pipeline_mode<synchronous>, transform_indices = @transform_13, window_bounds = array<i64: 32, 64>}, {pipeline_mode = #tpu.pipeline_mode<synchronous>, transform_indices = @transform_14, window_bounds = array<i64: 1, 64>}, {pipeline_mode = #tpu.pipeline_mode<synchronous>, transform_indices = @transform_15, window_bounds = array<i64: 32, 32>}, {pipeline_mode = #tpu.pipeline_mode<synchronous>, transform_indices = @transform_16, window_bounds = array<i64: 1, 32>}, {pipeline_mode = #tpu.pipeline_mode<synchronous>, transform_indices = @transform_17, window_bounds = array<i64: 32, 64>}, {pipeline_mode = #tpu.pipeline_mode<synchronous>, transform_indices = @transform_18, window_bounds = array<i64: 1, 64>}, {pipeline_mode = #tpu.pipeline_mode<synchronous>, transform_indices = @transform_19, window_bounds = array<i64: 64, 32>}, {pipeline_mode = #tpu.pipeline_mode<synchronous>, transform_indices = @transform_20, window_bounds = array<i64: 1, 32>}, {pipeline_mode = #tpu.pipeline_mode<synchronous>, transform_indices = @transform_21, window_bounds = array<i64: 1, 32>}, {pipeline_mode = #tpu.pipeline_mode<synchronous>, transform_indices = @transform_22, window_bounds = array<i64: 1, 32>}, {pipeline_mode = #tpu.pipeline_mode<synchronous>, transform_indices = @transform_23, window_bounds = array<i64: 1, 32>}, {pipeline_mode = #tpu.pipeline_mode<synchronous>, transform_indices = @transform_24, window_bounds = array<i64: 1, 32>}, {pipeline_mode = #tpu.pipeline_mode<synchronous>, transform_indices = @transform_25, window_bounds = array<i64: 1, 32>}, {pipeline_mode = #tpu.pipeline_mode<synchronous>, transform_indices = @transform_26, window_bounds = array<i64: 1, 32>}, {transform_indices = @transform_27, window_bounds = array<i64: 1, 8, 32>}, {transform_indices = @transform_28, window_bounds = array<i64: 1, 8, 8>}, {transform_indices = @transform_29, window_bounds = array<i64: 1, 8, 8>}]} {
    %c0 = arith.constant 0 : index
    %c0_0 = arith.constant 0 : index
    %c0_1 = arith.constant 0 : index
    %0 = vector.load %arg2[%c0, %c0_0, %c0_1] : memref<1x8x32xf32, #tpu.memory_space<vmem>>, vector<1x8x32xf32>
    %1 = vector.shape_cast %0 : vector<1x8x32xf32> to vector<8x32xf32>
    %c0_2 = arith.constant 0 : index
    %c0_3 = arith.constant 0 : index
    %c0_4 = arith.constant 0 : index
    %2 = vector.load %arg3[%c0_2, %c0_3, %c0_4] : memref<1x8x32xf32, #tpu.memory_space<vmem>>, vector<1x8x32xf32>
    %3 = vector.shape_cast %2 : vector<1x8x32xf32> to vector<8x32xf32>
    %c0_5 = arith.constant 0 : index
    %c0_6 = arith.constant 0 : index
    %c0_7 = arith.constant 0 : index
    %4 = vector.load %arg4[%c0_5, %c0_6, %c0_7] : memref<1x8x32xf32, #tpu.memory_space<vmem>>, vector<1x8x32xf32>
    %5 = vector.shape_cast %4 : vector<1x8x32xf32> to vector<8x32xf32>
    %c0_8 = arith.constant 0 : index
    %c0_9 = arith.constant 0 : index
    %6 = vector.load %arg5[%c0_8, %c0_9] : memref<8x8xf32, #tpu.memory_space<vmem>>, vector<8x8xf32>
    %c0_10 = arith.constant 0 : index
    %c0_11 = arith.constant 0 : index
    %c0_12 = arith.constant 0 : index
    %7 = vector.load %arg6[%c0_10, %c0_11, %c0_12] : memref<1x1x8xf32, #tpu.memory_space<vmem>>, vector<1x1x8xf32>
    %8 = vector.shape_cast %7 : vector<1x1x8xf32> to vector<1x8xf32>
    %9 = arith.truncf %1 : vector<8x32xf32> to vector<8x32xbf16>
    %c0_13 = arith.constant 0 : index
    %c0_14 = arith.constant 0 : index
    %10 = vector.load %arg7[%c0_13, %c0_14] : memref<32x32xbf16, #tpu.memory_space<vmem>>, vector<32x32xbf16>
    %cst = arith.constant dense<0.000000e+00> : vector<8x32xf32>
    %11 = tpu.matmul %9, %10, %cst {dimension_numbers = #tpu.dot_dimension_numbers<[1], [0], [0], [1], [0, 0, 1, 1], [], []>} : vector<8x32xbf16>, vector<32x32xbf16>, vector<8x32xf32> -> vector<8x32xf32>
    %c0_15 = arith.constant 0 : index
    %c0_16 = arith.constant 0 : index
    %12 = vector.load %arg8[%c0_15, %c0_16] : memref<1x32xf32, #tpu.memory_space<vmem>>, vector<1x32xf32>
    %13 = vector.broadcast %12 : vector<1x32xf32> to vector<8x32xf32>
    %14 = arith.addf %11, %13 : vector<8x32xf32>
    %15 = arith.truncf %3 : vector<8x32xf32> to vector<8x32xbf16>
    %c0_17 = arith.constant 0 : index
    %c0_18 = arith.constant 0 : index
    %16 = vector.load %arg9[%c0_17, %c0_18] : memref<32x64xbf16, #tpu.memory_space<vmem>>, vector<32x64xbf16>
    %cst_19 = arith.constant dense<0.000000e+00> : vector<8x64xf32>
    %17 = tpu.matmul %15, %16, %cst_19 {dimension_numbers = #tpu.dot_dimension_numbers<[1], [0], [0], [1], [0, 0, 1, 1], [], []>} : vector<8x32xbf16>, vector<32x64xbf16>, vector<8x64xf32> -> vector<8x64xf32>
    %c0_20 = arith.constant 0 : index
    %c0_21 = arith.constant 0 : index
    %18 = vector.load %arg10[%c0_20, %c0_21] : memref<1x64xf32, #tpu.memory_space<vmem>>, vector<1x64xf32>
    %19 = vector.broadcast %18 : vector<1x64xf32> to vector<8x64xf32>
    %20 = arith.addf %17, %19 : vector<8x64xf32>
    %c0_22 = arith.constant 0 : index
    %c0_23 = arith.constant 0 : index
    %21 = vector.load %arg11[%c0_22, %c0_23] : memref<32x32xbf16, #tpu.memory_space<vmem>>, vector<32x32xbf16>
    %c0_24 = arith.constant 0 : index
    %c0_25 = arith.constant 0 : index
    %22 = vector.load %arg12[%c0_24, %c0_25] : memref<1x32xf32, #tpu.memory_space<vmem>>, vector<1x32xf32>
    %23 = vector.shape_cast %6 : vector<8x8xf32> to vector<1x8x8xf32>
    %24 = vector.shape_cast %14 : vector<8x32xf32> to vector<8x4x8xf32>
    %25 = tpu.transpose %24, [1, 0, 2] : vector<8x4x8xf32> -> vector<4x8x8xf32>
    %26 = arith.truncf %25 : vector<4x8x8xf32> to vector<4x8x8xbf16>
    %27 = vector.shape_cast %20 : vector<8x64xf32> to vector<8x8x8xf32>
    %28 = tpu.transpose %27, [1, 0, 2] : vector<8x8x8xf32> -> vector<8x8x8xf32>
    %29 = arith.truncf %28 : vector<8x8x8xf32> to vector<8x8x8xbf16>
    %30 = vector.extract_strided_slice %29 {offsets = [0, 0, 0], sizes = [4, 8, 8], strides = [1, 1, 1]} : vector<8x8x8xbf16> to vector<4x8x8xbf16>
    %31 = vector.extract_strided_slice %29 {offsets = [4, 0, 0], sizes = [4, 8, 8], strides = [1, 1, 1]} : vector<8x8x8xbf16> to vector<4x8x8xbf16>
    "tpu.trace_start"() <{level = 10 : i32, message = "hqd,hkd->hqk"}> : () -> ()
    %cst_26 = arith.constant dense<0.000000e+00> : vector<4x8x8xf32>
    %32 = tpu.matmul %26, %30, %cst_26 {dimension_numbers = #tpu.dot_dimension_numbers<[2], [2], [1], [1], [0, 0, 0, 1, 1, 1], [0], [0]>} : vector<4x8x8xbf16>, vector<4x8x8xbf16>, vector<4x8x8xf32> -> vector<4x8x8xf32>
    "tpu.trace_stop"() : () -> ()
    %33 = vector.broadcast %23 : vector<1x8x8xf32> to vector<4x8x8xf32>
    %34 = arith.addf %32, %33 : vector<4x8x8xf32>
    %cst_27 = arith.constant dense<0xFF800000> : vector<4x8xf32>
    %35 = vector.multi_reduction <maximumf>, %34, %cst_27 [2] : vector<4x8x8xf32> to vector<4x8xf32>
    %36 = vector.shape_cast %35 : vector<4x8xf32> to vector<4x8x1xf32>
    %37 = vector.broadcast %36 : vector<4x8x1xf32> to vector<4x8x8xf32>
    %38 = arith.subf %34, %37 : vector<4x8x8xf32>
    %39 = math.exp %38 : vector<4x8x8xf32>
    %cst_28 = arith.constant dense<0.000000e+00> : vector<4x8xf32>
    %40 = vector.multi_reduction <add>, %39, %cst_28 [2] : vector<4x8x8xf32> to vector<4x8xf32>
    %41 = vector.shape_cast %40 : vector<4x8xf32> to vector<4x8x1xf32>
    %42 = tpu.reciprocal %41 {approx = true} : vector<4x8x1xf32> -> vector<4x8x1xf32>
    %43 = vector.broadcast %42 : vector<4x8x1xf32> to vector<4x8x8xf32>
    %44 = arith.mulf %39, %43 : vector<4x8x8xf32>
    %cst_29 = arith.constant dense<0.000000e+00> : vector<8x8xf32>
    %45 = vector.multi_reduction <add>, %44, %cst_29 [0] : vector<4x8x8xf32> to vector<8x8xf32>
    %cst_30 = arith.constant 2.500000e-01 : f32
    %46 = vector.broadcast %cst_30 : f32 to vector<8x8xf32>
    %47 = arith.mulf %45, %46 : vector<8x8xf32>
    %48 = arith.truncf %44 : vector<4x8x8xf32> to vector<4x8x8xbf16>
    "tpu.trace_start"() <{level = 10 : i32, message = "hqk,hkd->hqd"}> : () -> ()
    %cst_31 = arith.constant dense<0.000000e+00> : vector<4x8x8xf32>
    %49 = tpu.matmul %48, %31, %cst_31 {dimension_numbers = #tpu.dot_dimension_numbers<[2], [1], [1], [2], [0, 0, 0, 1, 1, 2], [0], [0]>} : vector<4x8x8xbf16>, vector<4x8x8xbf16>, vector<4x8x8xf32> -> vector<4x8x8xf32>
    "tpu.trace_stop"() : () -> ()
    %50 = tpu.transpose %49, [1, 0, 2] : vector<4x8x8xf32> -> vector<8x4x8xf32>
    %51 = vector.shape_cast %50 : vector<8x4x8xf32> to vector<8x32xf32>
    %52 = arith.truncf %51 : vector<8x32xf32> to vector<8x32xbf16>
    %cst_32 = arith.constant dense<0.000000e+00> : vector<8x32xf32>
    %53 = tpu.matmul %52, %21, %cst_32 {dimension_numbers = #tpu.dot_dimension_numbers<[1], [0], [0], [1], [0, 0, 1, 1], [], []>} : vector<8x32xbf16>, vector<32x32xbf16>, vector<8x32xf32> -> vector<8x32xf32>
    %54 = vector.broadcast %22 : vector<1x32xf32> to vector<8x32xf32>
    %55 = arith.addf %53, %54 : vector<8x32xf32>
    %56 = arith.addf %1, %55 : vector<8x32xf32>
    %c0_33 = arith.constant 0 : index
    %c0_34 = arith.constant 0 : index
    %57 = vector.load %arg23[%c0_33, %c0_34] : memref<1x32xf32, #tpu.memory_space<vmem>>, vector<1x32xf32>
    %c0_35 = arith.constant 0 : index
    %c0_36 = arith.constant 0 : index
    %58 = vector.load %arg24[%c0_35, %c0_36] : memref<1x32xf32, #tpu.memory_space<vmem>>, vector<1x32xf32>
    %cst_37 = arith.constant dense<0.000000e+00> : vector<8xf32>
    %59 = vector.multi_reduction <add>, %56, %cst_37 [1] : vector<8x32xf32> to vector<8xf32>
    %60 = vector.shape_cast %59 : vector<8xf32> to vector<8x1xf32>
    %cst_38 = arith.constant 3.200000e+01 : f32
    %61 = vector.broadcast %cst_38 : f32 to vector<8x1xf32>
    %62 = arith.divf %60, %61 : vector<8x1xf32>
    %63 = vector.broadcast %62 : vector<8x1xf32> to vector<8x32xf32>
    %64 = arith.subf %56, %63 : vector<8x32xf32>
    %65 = arith.mulf %64, %64 : vector<8x32xf32>
    %cst_39 = arith.constant dense<0.000000e+00> : vector<8xf32>
    %66 = vector.multi_reduction <add>, %65, %cst_39 [1] : vector<8x32xf32> to vector<8xf32>
    %67 = vector.shape_cast %66 : vector<8xf32> to vector<8x1xf32>
    %cst_40 = arith.constant 3.200000e+01 : f32
    %68 = vector.broadcast %cst_40 : f32 to vector<8x1xf32>
    %69 = arith.divf %67, %68 : vector<8x1xf32>
    %70 = vector.broadcast %62 : vector<8x1xf32> to vector<8x32xf32>
    %71 = arith.subf %56, %70 : vector<8x32xf32>
    %cst_41 = arith.constant 9.99999974E-6 : f32
    %72 = vector.broadcast %cst_41 : f32 to vector<8x1xf32>
    %73 = arith.addf %69, %72 : vector<8x1xf32>
    %74 = math.rsqrt %73 : vector<8x1xf32>
    %75 = vector.broadcast %74 : vector<8x1xf32> to vector<8x32xf32>
    %76 = arith.mulf %71, %75 : vector<8x32xf32>
    %77 = vector.broadcast %57 : vector<1x32xf32> to vector<8x32xf32>
    %78 = arith.mulf %76, %77 : vector<8x32xf32>
    %79 = vector.broadcast %58 : vector<1x32xf32> to vector<8x32xf32>
    %80 = arith.addf %78, %79 : vector<8x32xf32>
    %81 = arith.truncf %80 : vector<8x32xf32> to vector<8x32xbf16>
    %c0_42 = arith.constant 0 : index
    %c0_43 = arith.constant 0 : index
    %82 = vector.load %arg13[%c0_42, %c0_43] : memref<32x32xbf16, #tpu.memory_space<vmem>>, vector<32x32xbf16>
    %cst_44 = arith.constant dense<0.000000e+00> : vector<8x32xf32>
    %83 = tpu.matmul %81, %82, %cst_44 {dimension_numbers = #tpu.dot_dimension_numbers<[1], [0], [0], [1], [0, 0, 1, 1], [], []>} : vector<8x32xbf16>, vector<32x32xbf16>, vector<8x32xf32> -> vector<8x32xf32>
    %c0_45 = arith.constant 0 : index
    %c0_46 = arith.constant 0 : index
    %84 = vector.load %arg14[%c0_45, %c0_46] : memref<1x32xf32, #tpu.memory_space<vmem>>, vector<1x32xf32>
    %85 = vector.broadcast %84 : vector<1x32xf32> to vector<8x32xf32>
    %86 = arith.addf %83, %85 : vector<8x32xf32>
    %87 = arith.truncf %5 : vector<8x32xf32> to vector<8x32xbf16>
    %c0_47 = arith.constant 0 : index
    %c0_48 = arith.constant 0 : index
    %88 = vector.load %arg15[%c0_47, %c0_48] : memref<32x64xbf16, #tpu.memory_space<vmem>>, vector<32x64xbf16>
    %cst_49 = arith.constant dense<0.000000e+00> : vector<8x64xf32>
    %89 = tpu.matmul %87, %88, %cst_49 {dimension_numbers = #tpu.dot_dimension_numbers<[1], [0], [0], [1], [0, 0, 1, 1], [], []>} : vector<8x32xbf16>, vector<32x64xbf16>, vector<8x64xf32> -> vector<8x64xf32>
    %c0_50 = arith.constant 0 : index
    %c0_51 = arith.constant 0 : index
    %90 = vector.load %arg16[%c0_50, %c0_51] : memref<1x64xf32, #tpu.memory_space<vmem>>, vector<1x64xf32>
    %91 = vector.broadcast %90 : vector<1x64xf32> to vector<8x64xf32>
    %92 = arith.addf %89, %91 : vector<8x64xf32>
    %c0_52 = arith.constant 0 : index
    %c0_53 = arith.constant 0 : index
    %93 = vector.load %arg17[%c0_52, %c0_53] : memref<32x32xbf16, #tpu.memory_space<vmem>>, vector<32x32xbf16>
    %c0_54 = arith.constant 0 : index
    %c0_55 = arith.constant 0 : index
    %94 = vector.load %arg18[%c0_54, %c0_55] : memref<1x32xf32, #tpu.memory_space<vmem>>, vector<1x32xf32>
    %95 = vector.shape_cast %8 : vector<1x8xf32> to vector<1x1x8xf32>
    %96 = vector.shape_cast %86 : vector<8x32xf32> to vector<8x4x8xf32>
    %97 = tpu.transpose %96, [1, 0, 2] : vector<8x4x8xf32> -> vector<4x8x8xf32>
    %98 = arith.truncf %97 : vector<4x8x8xf32> to vector<4x8x8xbf16>
    %99 = vector.shape_cast %92 : vector<8x64xf32> to vector<8x8x8xf32>
    %100 = tpu.transpose %99, [1, 0, 2] : vector<8x8x8xf32> -> vector<8x8x8xf32>
    %101 = arith.truncf %100 : vector<8x8x8xf32> to vector<8x8x8xbf16>
    %102 = vector.extract_strided_slice %101 {offsets = [0, 0, 0], sizes = [4, 8, 8], strides = [1, 1, 1]} : vector<8x8x8xbf16> to vector<4x8x8xbf16>
    %103 = vector.extract_strided_slice %101 {offsets = [4, 0, 0], sizes = [4, 8, 8], strides = [1, 1, 1]} : vector<8x8x8xbf16> to vector<4x8x8xbf16>
    "tpu.trace_start"() <{level = 10 : i32, message = "hqd,hkd->hqk"}> : () -> ()
    %cst_56 = arith.constant dense<0.000000e+00> : vector<4x8x8xf32>
    %104 = tpu.matmul %98, %102, %cst_56 {dimension_numbers = #tpu.dot_dimension_numbers<[2], [2], [1], [1], [0, 0, 0, 1, 1, 1], [0], [0]>} : vector<4x8x8xbf16>, vector<4x8x8xbf16>, vector<4x8x8xf32> -> vector<4x8x8xf32>
    "tpu.trace_stop"() : () -> ()
    %105 = vector.broadcast %95 : vector<1x1x8xf32> to vector<4x8x8xf32>
    %106 = arith.addf %104, %105 : vector<4x8x8xf32>
    %cst_57 = arith.constant dense<0xFF800000> : vector<4x8xf32>
    %107 = vector.multi_reduction <maximumf>, %106, %cst_57 [2] : vector<4x8x8xf32> to vector<4x8xf32>
    %108 = vector.shape_cast %107 : vector<4x8xf32> to vector<4x8x1xf32>
    %109 = vector.broadcast %108 : vector<4x8x1xf32> to vector<4x8x8xf32>
    %110 = arith.subf %106, %109 : vector<4x8x8xf32>
    %111 = math.exp %110 : vector<4x8x8xf32>
    %cst_58 = arith.constant dense<0.000000e+00> : vector<4x8xf32>
    %112 = vector.multi_reduction <add>, %111, %cst_58 [2] : vector<4x8x8xf32> to vector<4x8xf32>
    %113 = vector.shape_cast %112 : vector<4x8xf32> to vector<4x8x1xf32>
    %114 = tpu.reciprocal %113 {approx = true} : vector<4x8x1xf32> -> vector<4x8x1xf32>
    %115 = vector.broadcast %114 : vector<4x8x1xf32> to vector<4x8x8xf32>
    %116 = arith.mulf %111, %115 : vector<4x8x8xf32>
    %cst_59 = arith.constant dense<0.000000e+00> : vector<8x8xf32>
    %117 = vector.multi_reduction <add>, %116, %cst_59 [0] : vector<4x8x8xf32> to vector<8x8xf32>
    %cst_60 = arith.constant 2.500000e-01 : f32
    %118 = vector.broadcast %cst_60 : f32 to vector<8x8xf32>
    %119 = arith.mulf %117, %118 : vector<8x8xf32>
    %120 = arith.truncf %116 : vector<4x8x8xf32> to vector<4x8x8xbf16>
    "tpu.trace_start"() <{level = 10 : i32, message = "hqk,hkd->hqd"}> : () -> ()
    %cst_61 = arith.constant dense<0.000000e+00> : vector<4x8x8xf32>
    %121 = tpu.matmul %120, %103, %cst_61 {dimension_numbers = #tpu.dot_dimension_numbers<[2], [1], [1], [2], [0, 0, 0, 1, 1, 2], [0], [0]>} : vector<4x8x8xbf16>, vector<4x8x8xbf16>, vector<4x8x8xf32> -> vector<4x8x8xf32>
    "tpu.trace_stop"() : () -> ()
    %122 = tpu.transpose %121, [1, 0, 2] : vector<4x8x8xf32> -> vector<8x4x8xf32>
    %123 = vector.shape_cast %122 : vector<8x4x8xf32> to vector<8x32xf32>
    %124 = arith.truncf %123 : vector<8x32xf32> to vector<8x32xbf16>
    %cst_62 = arith.constant dense<0.000000e+00> : vector<8x32xf32>
    %125 = tpu.matmul %124, %93, %cst_62 {dimension_numbers = #tpu.dot_dimension_numbers<[1], [0], [0], [1], [0, 0, 1, 1], [], []>} : vector<8x32xbf16>, vector<32x32xbf16>, vector<8x32xf32> -> vector<8x32xf32>
    %126 = vector.broadcast %94 : vector<1x32xf32> to vector<8x32xf32>
    %127 = arith.addf %125, %126 : vector<8x32xf32>
    %128 = arith.addf %80, %127 : vector<8x32xf32>
    %c0_63 = arith.constant 0 : index
    %c0_64 = arith.constant 0 : index
    %129 = vector.load %arg25[%c0_63, %c0_64] : memref<1x32xf32, #tpu.memory_space<vmem>>, vector<1x32xf32>
    %c0_65 = arith.constant 0 : index
    %c0_66 = arith.constant 0 : index
    %130 = vector.load %arg26[%c0_65, %c0_66] : memref<1x32xf32, #tpu.memory_space<vmem>>, vector<1x32xf32>
    %cst_67 = arith.constant dense<0.000000e+00> : vector<8xf32>
    %131 = vector.multi_reduction <add>, %128, %cst_67 [1] : vector<8x32xf32> to vector<8xf32>
    %132 = vector.shape_cast %131 : vector<8xf32> to vector<8x1xf32>
    %cst_68 = arith.constant 3.200000e+01 : f32
    %133 = vector.broadcast %cst_68 : f32 to vector<8x1xf32>
    %134 = arith.divf %132, %133 : vector<8x1xf32>
    %135 = vector.broadcast %134 : vector<8x1xf32> to vector<8x32xf32>
    %136 = arith.subf %128, %135 : vector<8x32xf32>
    %137 = arith.mulf %136, %136 : vector<8x32xf32>
    %cst_69 = arith.constant dense<0.000000e+00> : vector<8xf32>
    %138 = vector.multi_reduction <add>, %137, %cst_69 [1] : vector<8x32xf32> to vector<8xf32>
    %139 = vector.shape_cast %138 : vector<8xf32> to vector<8x1xf32>
    %cst_70 = arith.constant 3.200000e+01 : f32
    %140 = vector.broadcast %cst_70 : f32 to vector<8x1xf32>
    %141 = arith.divf %139, %140 : vector<8x1xf32>
    %142 = vector.broadcast %134 : vector<8x1xf32> to vector<8x32xf32>
    %143 = arith.subf %128, %142 : vector<8x32xf32>
    %cst_71 = arith.constant 9.99999974E-6 : f32
    %144 = vector.broadcast %cst_71 : f32 to vector<8x1xf32>
    %145 = arith.addf %141, %144 : vector<8x1xf32>
    %146 = math.rsqrt %145 : vector<8x1xf32>
    %147 = vector.broadcast %146 : vector<8x1xf32> to vector<8x32xf32>
    %148 = arith.mulf %143, %147 : vector<8x32xf32>
    %149 = vector.broadcast %129 : vector<1x32xf32> to vector<8x32xf32>
    %150 = arith.mulf %148, %149 : vector<8x32xf32>
    %151 = vector.broadcast %130 : vector<1x32xf32> to vector<8x32xf32>
    %152 = arith.addf %150, %151 : vector<8x32xf32>
    %153 = arith.truncf %152 : vector<8x32xf32> to vector<8x32xbf16>
    %c0_72 = arith.constant 0 : index
    %c0_73 = arith.constant 0 : index
    %154 = vector.load %arg19[%c0_72, %c0_73] : memref<32x64xbf16, #tpu.memory_space<vmem>>, vector<32x64xbf16>
    %cst_74 = arith.constant dense<0.000000e+00> : vector<8x64xf32>
    %155 = tpu.matmul %153, %154, %cst_74 {dimension_numbers = #tpu.dot_dimension_numbers<[1], [0], [0], [1], [0, 0, 1, 1], [], []>} : vector<8x32xbf16>, vector<32x64xbf16>, vector<8x64xf32> -> vector<8x64xf32>
    %c0_75 = arith.constant 0 : index
    %c0_76 = arith.constant 0 : index
    %156 = vector.load %arg20[%c0_75, %c0_76] : memref<1x64xf32, #tpu.memory_space<vmem>>, vector<1x64xf32>
    %157 = vector.broadcast %156 : vector<1x64xf32> to vector<8x64xf32>
    %158 = arith.addf %155, %157 : vector<8x64xf32>
    %cst_77 = arith.constant 0.000000e+00 : f32
    %159 = vector.broadcast %cst_77 : f32 to vector<8x64xf32>
    %160 = arith.maximumf %158, %159 : vector<8x64xf32>
    %161 = arith.truncf %160 : vector<8x64xf32> to vector<8x64xbf16>
    %c0_78 = arith.constant 0 : index
    %c0_79 = arith.constant 0 : index
    %162 = vector.load %arg21[%c0_78, %c0_79] : memref<64x32xbf16, #tpu.memory_space<vmem>>, vector<64x32xbf16>
    %cst_80 = arith.constant dense<0.000000e+00> : vector<8x32xf32>
    %163 = tpu.matmul %161, %162, %cst_80 {dimension_numbers = #tpu.dot_dimension_numbers<[1], [0], [0], [1], [0, 0, 1, 1], [], []>} : vector<8x64xbf16>, vector<64x32xbf16>, vector<8x32xf32> -> vector<8x32xf32>
    %c0_81 = arith.constant 0 : index
    %c0_82 = arith.constant 0 : index
    %164 = vector.load %arg22[%c0_81, %c0_82] : memref<1x32xf32, #tpu.memory_space<vmem>>, vector<1x32xf32>
    %165 = vector.broadcast %164 : vector<1x32xf32> to vector<8x32xf32>
    %166 = arith.addf %163, %165 : vector<8x32xf32>
    %167 = arith.addf %152, %166 : vector<8x32xf32>
    %c0_83 = arith.constant 0 : index
    %c0_84 = arith.constant 0 : index
    %168 = vector.load %arg27[%c0_83, %c0_84] : memref<1x32xf32, #tpu.memory_space<vmem>>, vector<1x32xf32>
    %c0_85 = arith.constant 0 : index
    %c0_86 = arith.constant 0 : index
    %169 = vector.load %arg28[%c0_85, %c0_86] : memref<1x32xf32, #tpu.memory_space<vmem>>, vector<1x32xf32>
    %cst_87 = arith.constant dense<0.000000e+00> : vector<8xf32>
    %170 = vector.multi_reduction <add>, %167, %cst_87 [1] : vector<8x32xf32> to vector<8xf32>
    %171 = vector.shape_cast %170 : vector<8xf32> to vector<8x1xf32>
    %cst_88 = arith.constant 3.200000e+01 : f32
    %172 = vector.broadcast %cst_88 : f32 to vector<8x1xf32>
    %173 = arith.divf %171, %172 : vector<8x1xf32>
    %174 = vector.broadcast %173 : vector<8x1xf32> to vector<8x32xf32>
    %175 = arith.subf %167, %174 : vector<8x32xf32>
    %176 = arith.mulf %175, %175 : vector<8x32xf32>
    %cst_89 = arith.constant dense<0.000000e+00> : vector<8xf32>
    %177 = vector.multi_reduction <add>, %176, %cst_89 [1] : vector<8x32xf32> to vector<8xf32>
    %178 = vector.shape_cast %177 : vector<8xf32> to vector<8x1xf32>
    %cst_90 = arith.constant 3.200000e+01 : f32
    %179 = vector.broadcast %cst_90 : f32 to vector<8x1xf32>
    %180 = arith.divf %178, %179 : vector<8x1xf32>
    %181 = vector.broadcast %173 : vector<8x1xf32> to vector<8x32xf32>
    %182 = arith.subf %167, %181 : vector<8x32xf32>
    %cst_91 = arith.constant 9.99999974E-6 : f32
    %183 = vector.broadcast %cst_91 : f32 to vector<8x1xf32>
    %184 = arith.addf %180, %183 : vector<8x1xf32>
    %185 = math.rsqrt %184 : vector<8x1xf32>
    %186 = vector.broadcast %185 : vector<8x1xf32> to vector<8x32xf32>
    %187 = arith.mulf %182, %186 : vector<8x32xf32>
    %188 = vector.broadcast %168 : vector<1x32xf32> to vector<8x32xf32>
    %189 = arith.mulf %187, %188 : vector<8x32xf32>
    %190 = vector.broadcast %169 : vector<1x32xf32> to vector<8x32xf32>
    %191 = arith.addf %189, %190 : vector<8x32xf32>
    %c0_92 = arith.constant 0 : index
    %c0_93 = arith.constant 0 : index
    %c0_94 = arith.constant 0 : index
    %192 = vector.load %arg29[%c0_92, %c0_93, %c0_94] : memref<1x8x32xf32, #tpu.memory_space<vmem>>, vector<1x8x32xf32>
    %193 = vector.shape_cast %192 : vector<1x8x32xf32> to vector<8x32xf32>
    %194 = vector.shape_cast %191 : vector<8x32xf32> to vector<1x8x32xf32>
    tpu.vector_store %arg29[%c0_92, %c0_93, %c0_94], %194 {strides = array<i32>} : memref<1x8x32xf32, #tpu.memory_space<vmem>>, vector<1x8x32xf32>,
    %c0_95 = arith.constant 0 : index
    %c0_96 = arith.constant 0 : index
    %c0_97 = arith.constant 0 : index
    %195 = vector.load %arg30[%c0_95, %c0_96, %c0_97] : memref<1x8x8xf32, #tpu.memory_space<vmem>>, vector<1x8x8xf32>
    %196 = vector.shape_cast %195 : vector<1x8x8xf32> to vector<8x8xf32>
    %197 = vector.shape_cast %47 : vector<8x8xf32> to vector<1x8x8xf32>
    tpu.vector_store %arg30[%c0_95, %c0_96, %c0_97], %197 {strides = array<i32>} : memref<1x8x8xf32, #tpu.memory_space<vmem>>, vector<1x8x8xf32>,
    %c0_98 = arith.constant 0 : index
    %c0_99 = arith.constant 0 : index
    %c0_100 = arith.constant 0 : index
    %198 = vector.load %arg31[%c0_98, %c0_99, %c0_100] : memref<1x8x8xf32, #tpu.memory_space<vmem>>, vector<1x8x8xf32>
    %199 = vector.shape_cast %198 : vector<1x8x8xf32> to vector<8x8xf32>
    %200 = vector.shape_cast %119 : vector<8x8xf32> to vector<1x8x8xf32>
    tpu.vector_store %arg31[%c0_98, %c0_99, %c0_100], %200 {strides = array<i32>} : memref<1x8x8xf32, #tpu.memory_space<vmem>>, vector<1x8x8xf32>,
    return
  }
  func.func @transform_0(%arg0: i32, %arg1: i32) -> (i32, i32, i32) {
    %c0_i32 = arith.constant 0 : i32
    %c0_i32_0 = arith.constant 0 : i32
    return %arg0, %arg1, %c0_i32 : i32, i32, i32
  }
  func.func @transform_1(%arg0: i32, %arg1: i32) -> (i32, i32, i32) {
    %c0_i32 = arith.constant 0 : i32
    %c0_i32_0 = arith.constant 0 : i32
    %c0_i32_1 = arith.constant 0 : i32
    return %arg0, %c0_i32, %c0_i32_0 : i32, i32, i32
  }
  func.func @transform_2(%arg0: i32, %arg1: i32) -> (i32, i32, i32) {
    %c0_i32 = arith.constant 0 : i32
    %c0_i32_0 = arith.constant 0 : i32
    %c0_i32_1 = arith.constant 0 : i32
    return %arg0, %c0_i32, %c0_i32_0 : i32, i32, i32
  }
  func.func @transform_3(%arg0: i32, %arg1: i32) -> (i32, i32) {
    %c0_i32 = arith.constant 0 : i32
    %c0_i32_0 = arith.constant 0 : i32
    return %arg1, %c0_i32 : i32, i32
  }
  func.func @transform_4(%arg0: i32, %arg1: i32) -> (i32, i32, i32) {
    %c0_i32 = arith.constant 0 : i32
    %c0_i32_0 = arith.constant 0 : i32
    %c0_i32_1 = arith.constant 0 : i32
    return %arg0, %c0_i32, %c0_i32_0 : i32, i32, i32
  }
  func.func @transform_5(%arg0: i32, %arg1: i32) -> (i32, i32) {
    %c0_i32 = arith.constant 0 : i32
    %c0_i32_0 = arith.constant 0 : i32
    %c0_i32_1 = arith.constant 0 : i32
    return %c0_i32, %c0_i32_0 : i32, i32
  }
  func.func @transform_6(%arg0: i32, %arg1: i32) -> (i32, i32) {
    %c0_i32 = arith.constant 0 : i32
    %c0_i32_0 = arith.constant 0 : i32
    %c0_i32_1 = arith.constant 0 : i32
    return %c0_i32, %c0_i32_0 : i32, i32
  }
  func.func @transform_7(%arg0: i32, %arg1: i32) -> (i32, i32) {
    %c0_i32 = arith.constant 0 : i32
    %c0_i32_0 = arith.constant 0 : i32
    %c0_i32_1 = arith.constant 0 : i32
    return %c0_i32, %c0_i32_0 : i32, i32
  }
  func.func @transform_8(%arg0: i32, %arg1: i32) -> (i32, i32) {
    %c0_i32 = arith.constant 0 : i32
    %c0_i32_0 = arith.constant 0 : i32
    %c0_i32_1 = arith.constant 0 : i32
    return %c0_i32, %c0_i32_0 : i32, i32
  }
  func.func @transform_9(%arg0: i32, %arg1: i32) -> (i32, i32) {
    %c0_i32 = arith.constant 0 : i32
    %c0_i32_0 = arith.constant 0 : i32
    %c0_i32_1 = arith.constant 0 : i32
    return %c0_i32, %c0_i32_0 : i32, i32
  }
  func.func @transform_10(%arg0: i32, %arg1: i32) -> (i32, i32) {
    %c0_i32 = arith.constant 0 : i32
    %c0_i32_0 = arith.constant 0 : i32
    %c0_i32_1 = arith.constant 0 : i32
    return %c0_i32, %c0_i32_0 : i32, i32
  }
  func.func @transform_11(%arg0: i32, %arg1: i32) -> (i32, i32) {
    %c0_i32 = arith.constant 0 : i32
    %c0_i32_0 = arith.constant 0 : i32
    %c0_i32_1 = arith.constant 0 : i32
    return %c0_i32, %c0_i32_0 : i32, i32
  }
  func.func @transform_12(%arg0: i32, %arg1: i32) -> (i32, i32) {
    %c0_i32 = arith.constant 0 : i32
    %c0_i32_0 = arith.constant 0 : i32
    %c0_i32_1 = arith.constant 0 : i32
    return %c0_i32, %c0_i32_0 : i32, i32
  }
  func.func @transform_13(%arg0: i32, %arg1: i32) -> (i32, i32) {
    %c0_i32 = arith.constant 0 : i32
    %c0_i32_0 = arith.constant 0 : i32
    %c0_i32_1 = arith.constant 0 : i32
    return %c0_i32, %c0_i32_0 : i32, i32
  }
  func.func @transform_14(%arg0: i32, %arg1: i32) -> (i32, i32) {
    %c0_i32 = arith.constant 0 : i32
    %c0_i32_0 = arith.constant 0 : i32
    %c0_i32_1 = arith.constant 0 : i32
    return %c0_i32, %c0_i32_0 : i32, i32
  }
  func.func @transform_15(%arg0: i32, %arg1: i32) -> (i32, i32) {
    %c0_i32 = arith.constant 0 : i32
    %c0_i32_0 = arith.constant 0 : i32
    %c0_i32_1 = arith.constant 0 : i32
    return %c0_i32, %c0_i32_0 : i32, i32
  }
  func.func @transform_16(%arg0: i32, %arg1: i32) -> (i32, i32) {
    %c0_i32 = arith.constant 0 : i32
    %c0_i32_0 = arith.constant 0 : i32
    %c0_i32_1 = arith.constant 0 : i32
    return %c0_i32, %c0_i32_0 : i32, i32
  }
  func.func @transform_17(%arg0: i32, %arg1: i32) -> (i32, i32) {
    %c0_i32 = arith.constant 0 : i32
    %c0_i32_0 = arith.constant 0 : i32
    %c0_i32_1 = arith.constant 0 : i32
    return %c0_i32, %c0_i32_0 : i32, i32
  }
  func.func @transform_18(%arg0: i32, %arg1: i32) -> (i32, i32) {
    %c0_i32 = arith.constant 0 : i32
    %c0_i32_0 = arith.constant 0 : i32
    %c0_i32_1 = arith.constant 0 : i32
    return %c0_i32, %c0_i32_0 : i32, i32
  }
  func.func @transform_19(%arg0: i32, %arg1: i32) -> (i32, i32) {
    %c0_i32 = arith.constant 0 : i32
    %c0_i32_0 = arith.constant 0 : i32
    %c0_i32_1 = arith.constant 0 : i32
    return %c0_i32, %c0_i32_0 : i32, i32
  }
  func.func @transform_20(%arg0: i32, %arg1: i32) -> (i32, i32) {
    %c0_i32 = arith.constant 0 : i32
    %c0_i32_0 = arith.constant 0 : i32
    %c0_i32_1 = arith.constant 0 : i32
    return %c0_i32, %c0_i32_0 : i32, i32
  }
  func.func @transform_21(%arg0: i32, %arg1: i32) -> (i32, i32) {
    %c0_i32 = arith.constant 0 : i32
    %c0_i32_0 = arith.constant 0 : i32
    %c0_i32_1 = arith.constant 0 : i32
    return %c0_i32, %c0_i32_0 : i32, i32
  }
  func.func @transform_22(%arg0: i32, %arg1: i32) -> (i32, i32) {
    %c0_i32 = arith.constant 0 : i32
    %c0_i32_0 = arith.constant 0 : i32
    %c0_i32_1 = arith.constant 0 : i32
    return %c0_i32, %c0_i32_0 : i32, i32
  }
  func.func @transform_23(%arg0: i32, %arg1: i32) -> (i32, i32) {
    %c0_i32 = arith.constant 0 : i32
    %c0_i32_0 = arith.constant 0 : i32
    %c0_i32_1 = arith.constant 0 : i32
    return %c0_i32, %c0_i32_0 : i32, i32
  }
  func.func @transform_24(%arg0: i32, %arg1: i32) -> (i32, i32) {
    %c0_i32 = arith.constant 0 : i32
    %c0_i32_0 = arith.constant 0 : i32
    %c0_i32_1 = arith.constant 0 : i32
    return %c0_i32, %c0_i32_0 : i32, i32
  }
  func.func @transform_25(%arg0: i32, %arg1: i32) -> (i32, i32) {
    %c0_i32 = arith.constant 0 : i32
    %c0_i32_0 = arith.constant 0 : i32
    %c0_i32_1 = arith.constant 0 : i32
    return %c0_i32, %c0_i32_0 : i32, i32
  }
  func.func @transform_26(%arg0: i32, %arg1: i32) -> (i32, i32) {
    %c0_i32 = arith.constant 0 : i32
    %c0_i32_0 = arith.constant 0 : i32
    %c0_i32_1 = arith.constant 0 : i32
    return %c0_i32, %c0_i32_0 : i32, i32
  }
  func.func @transform_27(%arg0: i32, %arg1: i32) -> (i32, i32, i32) {
    %c0_i32 = arith.constant 0 : i32
    %c0_i32_0 = arith.constant 0 : i32
    return %arg0, %arg1, %c0_i32 : i32, i32, i32
  }
  func.func @transform_28(%arg0: i32, %arg1: i32) -> (i32, i32, i32) {
    %c0_i32 = arith.constant 0 : i32
    %c0_i32_0 = arith.constant 0 : i32
    return %arg0, %arg1, %c0_i32 : i32, i32, i32
  }
  func.func @transform_29(%arg0: i32, %arg1: i32) -> (i32, i32, i32) {
    %c0_i32 = arith.constant 0 : i32
    %c0_i32_0 = arith.constant 0 : i32
    return %arg0, %arg1, %c0_i32 : i32, i32, i32
  }
}

module attributes {stable_mosaic.version = 11 : i64} {
  func.func @_decoder_block_kernel(%arg0: i32, %arg1: i32, %arg2: memref<1x8x32xf32, #tpu.memory_space<vmem>>, %arg3: memref<1x8x32xf32, #tpu.memory_space<vmem>>, %arg4: memref<1x8x32xf32, #tpu.memory_space<vmem>>, %arg5: memref<8x8xf32, #tpu.memory_space<vmem>>, %arg6: memref<1x1x8xf32, #tpu.memory_space<vmem>>, %arg7: memref<32x32xbf16, #tpu.memory_space<vmem>>, %arg8: memref<1x32xf32, #tpu.memory_space<vmem>>, %arg9: memref<32x64xbf16, #tpu.memory_space<vmem>>, %arg10: memref<1x64xf32, #tpu.memory_space<vmem>>, %arg11: memref<32x32xbf16, #tpu.memory_space<vmem>>, %arg12: memref<1x32xf32, #tpu.memory_space<vmem>>, %arg13: memref<32x32xbf16, #tpu.memory_space<vmem>>, %arg14: memref<1x32xf32, #tpu.memory_space<vmem>>, %arg15: memref<32x64xbf16, #tpu.memory_space<vmem>>, %arg16: memref<1x64xf32, #tpu.memory_space<vmem>>, %arg17: memref<32x32xbf16, #tpu.memory_space<vmem>>, %arg18: memref<1x32xf32, #tpu.memory_space<vmem>>, %arg19: memref<32x64xbf16, #tpu.memory_space<vmem>>, %arg20: memref<1x64xf32, #tpu.memory_space<vmem>>, %arg21: memref<64x32xbf16, #tpu.memory_space<vmem>>, %arg22: memref<1x32xf32, #tpu.memory_space<vmem>>, %arg23: memref<1x32xf32, #tpu.memory_space<vmem>>, %arg24: memref<1x32xf32, #tpu.memory_space<vmem>>, %arg25: memref<1x32xf32, #tpu.memory_space<vmem>>, %arg26: memref<1x32xf32, #tpu.memory_space<vmem>>, %arg27: memref<1x32xf32, #tpu.memory_space<vmem>>, %arg28: memref<1x32xf32, #tpu.memory_space<vmem>>, %arg29: memref<1x8x32xf32, #tpu.memory_space<vmem>>, %arg30: memref<1x8x8xf32, #tpu.memory_space<vmem>>, %arg31: memref<1x8x8xf32, #tpu.memory_space<vmem>>) attributes {dimension_semantics = [#tpu.dimension_semantics<parallel>, #tpu.dimension_semantics<parallel>], iteration_bounds = array<i64: 2, 1>, scalar_prefetch = 0 : i64, scratch_operands = 0 : i64, tpu.core_type = #tpu.core_type<tc>, window_params = [{transform_indices = @transform_0, window_bounds = array<i64: 1, 8, 32>}, {transform_indices = @transform_1, window_bounds = array<i64: 1, 8, 32>}, {transform_indices = @transform_2, window_bounds = array<i64: 1, 8, 32>}, {transform_indices = @transform_3, window_bounds = array<i64: 8, 8>}, {transform_indices = @transform_4, window_bounds = array<i64: 1, 1, 8>}, {pipeline_mode = #tpu.pipeline_mode<synchronous>, transform_indices = @transform_5, window_bounds = array<i64: 32, 32>}, {pipeline_mode = #tpu.pipeline_mode<synchronous>, transform_indices = @transform_6, window_bounds = array<i64: 1, 32>}, {pipeline_mode = #tpu.pipeline_mode<synchronous>, transform_indices = @transform_7, window_bounds = array<i64: 32, 64>}, {pipeline_mode = #tpu.pipeline_mode<synchronous>, transform_indices = @transform_8, window_bounds = array<i64: 1, 64>}, {pipeline_mode = #tpu.pipeline_mode<synchronous>, transform_indices = @transform_9, window_bounds = array<i64: 32, 32>}, {pipeline_mode = #tpu.pipeline_mode<synchronous>, transform_indices = @transform_10, window_bounds = array<i64: 1, 32>}, {pipeline_mode = #tpu.pipeline_mode<synchronous>, transform_indices = @transform_11, window_bounds = array<i64: 32, 32>}, {pipeline_mode = #tpu.pipeline_mode<synchronous>, transform_indices = @transform_12, window_bounds = array<i64: 1, 32>}, {pipeline_mode = #tpu.pipeline_mode<synchronous>, transform_indices = @transform_13, window_bounds = array<i64: 32, 64>}, {pipeline_mode = #tpu.pipeline_mode<synchronous>, transform_indices = @transform_14, window_bounds = array<i64: 1, 64>}, {pipeline_mode = #tpu.pipeline_mode<synchronous>, transform_indices = @transform_15, window_bounds = array<i64: 32, 32>}, {pipeline_mode = #tpu.pipeline_mode<synchronous>, transform_indices = @transform_16, window_bounds = array<i64: 1, 32>}, {pipeline_mode = #tpu.pipeline_mode<synchronous>, transform_indices = @transform_17, window_bounds = array<i64: 32, 64>}, {pipeline_mode = #tpu.pipeline_mode<synchronous>, transform_indices = @transform_18, window_bounds = array<i64: 1, 64>}, {pipeline_mode = #tpu.pipeline_mode<synchronous>, transform_indices = @transform_19, window_bounds = array<i64: 64, 32>}, {pipeline_mode = #tpu.pipeline_mode<synchronous>, transform_indices = @transform_20, window_bounds = array<i64: 1, 32>}, {pipeline_mode = #tpu.pipeline_mode<synchronous>, transform_indices = @transform_21, window_bounds = array<i64: 1, 32>}, {pipeline_mode = #tpu.pipeline_mode<synchronous>, transform_indices = @transform_22, window_bounds = array<i64: 1, 32>}, {pipeline_mode = #tpu.pipeline_mode<synchronous>, transform_indices = @transform_23, window_bounds = array<i64: 1, 32>}, {pipeline_mode = #tpu.pipeline_mode<synchronous>, transform_indices = @transform_24, window_bounds = array<i64: 1, 32>}, {pipeline_mode = #tpu.pipeline_mode<synchronous>, transform_indices = @transform_25, window_bounds = array<i64: 1, 32>}, {pipeline_mode = #tpu.pipeline_mode<synchronous>, transform_indices = @transform_26, window_bounds = array<i64: 1, 32>}, {transform_indices = @transform_27, window_bounds = array<i64: 1, 8, 32>}, {transform_indices = @transform_28, window_bounds = array<i64: 1, 8, 8>}, {transform_indices = @transform_29, window_bounds = array<i64: 1, 8, 8>}]} {
    %c0 = arith.constant 0 : index
    %c0_0 = arith.constant 0 : index
    %c0_1 = arith.constant 0 : index
    %0 = vector.load %arg2[%c0, %c0_0, %c0_1] : memref<1x8x32xf32, #tpu.memory_space<vmem>>, vector<1x8x32xf32>
    %1 = vector.shape_cast %0 : vector<1x8x32xf32> to vector<8x32xf32>
    %c0_2 = arith.constant 0 : index
    %c0_3 = arith.constant 0 : index
    %c0_4 = arith.constant 0 : index
    %2 = vector.load %arg3[%c0_2, %c0_3, %c0_4] : memref<1x8x32xf32, #tpu.memory_space<vmem>>, vector<1x8x32xf32>
    %3 = vector.shape_cast %2 : vector<1x8x32xf32> to vector<8x32xf32>
    %c0_5 = arith.constant 0 : index
    %c0_6 = arith.constant 0 : index
    %c0_7 = arith.constant 0 : index
    %4 = vector.load %arg4[%c0_5, %c0_6, %c0_7] : memref<1x8x32xf32, #tpu.memory_space<vmem>>, vector<1x8x32xf32>
    %5 = vector.shape_cast %4 : vector<1x8x32xf32> to vector<8x32xf32>
    %c0_8 = arith.constant 0 : index
    %c0_9 = arith.constant 0 : index
    %6 = vector.load %arg5[%c0_8, %c0_9] : memref<8x8xf32, #tpu.memory_space<vmem>>, vector<8x8xf32>
    %c0_10 = arith.constant 0 : index
    %c0_11 = arith.constant 0 : index
    %c0_12 = arith.constant 0 : index
    %7 = vector.load %arg6[%c0_10, %c0_11, %c0_12] : memref<1x1x8xf32, #tpu.memory_space<vmem>>, vector<1x1x8xf32>
    %8 = vector.shape_cast %7 : vector<1x1x8xf32> to vector<1x8xf32>
    %9 = arith.truncf %1 : vector<8x32xf32> to vector<8x32xbf16>
    %c0_13 = arith.constant 0 : index
    %c0_14 = arith.constant 0 : index
    %10 = vector.load %arg7[%c0_13, %c0_14] : memref<32x32xbf16, #tpu.memory_space<vmem>>, vector<32x32xbf16>
    %cst = arith.constant dense<0.000000e+00> : vector<8x32xf32>
    %11 = tpu.matmul %9, %10, %cst {dimension_numbers = #tpu.dot_dimension_numbers<[1], [0], [0], [1], [0, 0, 1, 1], [], []>} : vector<8x32xbf16>, vector<32x32xbf16>, vector<8x32xf32> -> vector<8x32xf32>
    %c0_15 = arith.constant 0 : index
    %c0_16 = arith.constant 0 : index
    %12 = vector.load %arg8[%c0_15, %c0_16] : memref<1x32xf32, #tpu.memory_space<vmem>>, vector<1x32xf32>
    %13 = vector.broadcast %12 : vector<1x32xf32> to vector<8x32xf32>
    %14 = arith.addf %11, %13 : vector<8x32xf32>
    %15 = arith.truncf %3 : vector<8x32xf32> to vector<8x32xbf16>
    %c0_17 = arith.constant 0 : index
    %c0_18 = arith.constant 0 : index
    %16 = vector.load %arg9[%c0_17, %c0_18] : memref<32x64xbf16, #tpu.memory_space<vmem>>, vector<32x64xbf16>
    %cst_19 = arith.constant dense<0.000000e+00> : vector<8x64xf32>
    %17 = tpu.matmul %15, %16, %cst_19 {dimension_numbers = #tpu.dot_dimension_numbers<[1], [0], [0], [1], [0, 0, 1, 1], [], []>} : vector<8x32xbf16>, vector<32x64xbf16>, vector<8x64xf32> -> vector<8x64xf32>
    %c0_20 = arith.constant 0 : index
    %c0_21 = arith.constant 0 : index
    %18 = vector.load %arg10[%c0_20, %c0_21] : memref<1x64xf32, #tpu.memory_space<vmem>>, vector<1x64xf32>
    %19 = vector.broadcast %18 : vector<1x64xf32> to vector<8x64xf32>
    %20 = arith.addf %17, %19 : vector<8x64xf32>
    %c0_22 = arith.constant 0 : index
    %c0_23 = arith.constant 0 : index
    %21 = vector.load %arg11[%c0_22, %c0_23] : memref<32x32xbf16, #tpu.memory_space<vmem>>, vector<32x32xbf16>
    %c0_24 = arith.constant 0 : index
    %c0_25 = arith.constant 0 : index
    %22 = vector.load %arg12[%c0_24, %c0_25] : memref<1x32xf32, #tpu.memory_space<vmem>>, vector<1x32xf32>
    %23 = vector.shape_cast %6 : vector<8x8xf32> to vector<1x8x8xf32>
    %24 = vector.extract_strided_slice %14 {offsets = [0, 0], sizes = [8, 8], strides = [1, 1]} : vector<8x32xf32> to vector<8x8xf32>
    %25 = vector.extract_strided_slice %14 {offsets = [0, 8], sizes = [8, 8], strides = [1, 1]} : vector<8x32xf32> to vector<8x8xf32>
    %26 = vector.extract_strided_slice %14 {offsets = [0, 16], sizes = [8, 8], strides = [1, 1]} : vector<8x32xf32> to vector<8x8xf32>
    %27 = vector.extract_strided_slice %14 {offsets = [0, 24], sizes = [8, 8], strides = [1, 1]} : vector<8x32xf32> to vector<8x8xf32>
    %28 = vector.shape_cast %24 : vector<8x8xf32> to vector<1x8x8xf32>
    %29 = vector.shape_cast %25 : vector<8x8xf32> to vector<1x8x8xf32>
    %30 = vector.shape_cast %26 : vector<8x8xf32> to vector<1x8x8xf32>
    %31 = vector.shape_cast %27 : vector<8x8xf32> to vector<1x8x8xf32>
    %32 = tpu.concatenate %28, %29, %30, %31 in 0 : vector<1x8x8xf32>, vector<1x8x8xf32>, vector<1x8x8xf32>, vector<1x8x8xf32> -> vector<4x8x8xf32>
    %33 = arith.truncf %32 : vector<4x8x8xf32> to vector<4x8x8xbf16>
    %34 = vector.extract_strided_slice %20 {offsets = [0, 0], sizes = [8, 8], strides = [1, 1]} : vector<8x64xf32> to vector<8x8xf32>
    %35 = vector.extract_strided_slice %20 {offsets = [0, 8], sizes = [8, 8], strides = [1, 1]} : vector<8x64xf32> to vector<8x8xf32>
    %36 = vector.extract_strided_slice %20 {offsets = [0, 16], sizes = [8, 8], strides = [1, 1]} : vector<8x64xf32> to vector<8x8xf32>
    %37 = vector.extract_strided_slice %20 {offsets = [0, 24], sizes = [8, 8], strides = [1, 1]} : vector<8x64xf32> to vector<8x8xf32>
    %38 = vector.extract_strided_slice %20 {offsets = [0, 32], sizes = [8, 8], strides = [1, 1]} : vector<8x64xf32> to vector<8x8xf32>
    %39 = vector.extract_strided_slice %20 {offsets = [0, 40], sizes = [8, 8], strides = [1, 1]} : vector<8x64xf32> to vector<8x8xf32>
    %40 = vector.extract_strided_slice %20 {offsets = [0, 48], sizes = [8, 8], strides = [1, 1]} : vector<8x64xf32> to vector<8x8xf32>
    %41 = vector.extract_strided_slice %20 {offsets = [0, 56], sizes = [8, 8], strides = [1, 1]} : vector<8x64xf32> to vector<8x8xf32>
    %42 = vector.shape_cast %34 : vector<8x8xf32> to vector<1x8x8xf32>
    %43 = vector.shape_cast %35 : vector<8x8xf32> to vector<1x8x8xf32>
    %44 = vector.shape_cast %36 : vector<8x8xf32> to vector<1x8x8xf32>
    %45 = vector.shape_cast %37 : vector<8x8xf32> to vector<1x8x8xf32>
    %46 = vector.shape_cast %38 : vector<8x8xf32> to vector<1x8x8xf32>
    %47 = vector.shape_cast %39 : vector<8x8xf32> to vector<1x8x8xf32>
    %48 = vector.shape_cast %40 : vector<8x8xf32> to vector<1x8x8xf32>
    %49 = vector.shape_cast %41 : vector<8x8xf32> to vector<1x8x8xf32>
    %50 = tpu.concatenate %42, %43, %44, %45, %46, %47, %48, %49 in 0 : vector<1x8x8xf32>, vector<1x8x8xf32>, vector<1x8x8xf32>, vector<1x8x8xf32>, vector<1x8x8xf32>, vector<1x8x8xf32>, vector<1x8x8xf32>, vector<1x8x8xf32> -> vector<8x8x8xf32>
    %51 = arith.truncf %50 : vector<8x8x8xf32> to vector<8x8x8xbf16>
    %52 = vector.extract_strided_slice %51 {offsets = [0, 0, 0], sizes = [4, 8, 8], strides = [1, 1, 1]} : vector<8x8x8xbf16> to vector<4x8x8xbf16>
    %53 = vector.extract_strided_slice %51 {offsets = [4, 0, 0], sizes = [4, 8, 8], strides = [1, 1, 1]} : vector<8x8x8xbf16> to vector<4x8x8xbf16>
    "tpu.trace_start"() <{level = 10 : i32, message = "hqd,hkd->hqk"}> : () -> ()
    %cst_26 = arith.constant dense<0.000000e+00> : vector<4x8x8xf32>
    %54 = tpu.matmul %33, %52, %cst_26 {dimension_numbers = #tpu.dot_dimension_numbers<[2], [2], [1], [1], [0, 0, 0, 1, 1, 1], [0], [0]>} : vector<4x8x8xbf16>, vector<4x8x8xbf16>, vector<4x8x8xf32> -> vector<4x8x8xf32>
    "tpu.trace_stop"() : () -> ()
    %55 = vector.broadcast %23 : vector<1x8x8xf32> to vector<4x8x8xf32>
    %56 = arith.addf %54, %55 : vector<4x8x8xf32>
    %cst_27 = arith.constant dense<0xFF800000> : vector<4x8xf32>
    %57 = vector.multi_reduction <maximumf>, %56, %cst_27 [2] : vector<4x8x8xf32> to vector<4x8xf32>
    %58 = vector.shape_cast %57 : vector<4x8xf32> to vector<4x8x1xf32>
    %59 = vector.broadcast %58 : vector<4x8x1xf32> to vector<4x8x8xf32>
    %60 = arith.subf %56, %59 : vector<4x8x8xf32>
    %61 = math.exp %60 : vector<4x8x8xf32>
    %cst_28 = arith.constant dense<0.000000e+00> : vector<4x8xf32>
    %62 = vector.multi_reduction <add>, %61, %cst_28 [2] : vector<4x8x8xf32> to vector<4x8xf32>
    %63 = vector.shape_cast %62 : vector<4x8xf32> to vector<4x8x1xf32>
    %64 = tpu.reciprocal %63 {approx = true} : vector<4x8x1xf32> -> vector<4x8x1xf32>
    %65 = vector.broadcast %64 : vector<4x8x1xf32> to vector<4x8x8xf32>
    %66 = arith.mulf %61, %65 : vector<4x8x8xf32>
    %cst_29 = arith.constant dense<0.000000e+00> : vector<8x8xf32>
    %67 = vector.multi_reduction <add>, %66, %cst_29 [0] : vector<4x8x8xf32> to vector<8x8xf32>
    %cst_30 = arith.constant 2.500000e-01 : f32
    %68 = vector.broadcast %cst_30 : f32 to vector<8x8xf32>
    %69 = arith.mulf %67, %68 : vector<8x8xf32>
    %70 = arith.truncf %66 : vector<4x8x8xf32> to vector<4x8x8xbf16>
    "tpu.trace_start"() <{level = 10 : i32, message = "hqk,hkd->hqd"}> : () -> ()
    %cst_31 = arith.constant dense<0.000000e+00> : vector<4x8x8xf32>
    %71 = tpu.matmul %70, %53, %cst_31 {dimension_numbers = #tpu.dot_dimension_numbers<[2], [1], [1], [2], [0, 0, 0, 1, 1, 2], [0], [0]>} : vector<4x8x8xbf16>, vector<4x8x8xbf16>, vector<4x8x8xf32> -> vector<4x8x8xf32>
    "tpu.trace_stop"() : () -> ()
    %72 = vector.extract_strided_slice %71 {offsets = [0, 0, 0], sizes = [1, 8, 8], strides = [1, 1, 1]} : vector<4x8x8xf32> to vector<1x8x8xf32>
    %73 = vector.shape_cast %72 : vector<1x8x8xf32> to vector<8x8xf32>
    %74 = vector.extract_strided_slice %71 {offsets = [1, 0, 0], sizes = [1, 8, 8], strides = [1, 1, 1]} : vector<4x8x8xf32> to vector<1x8x8xf32>
    %75 = vector.shape_cast %74 : vector<1x8x8xf32> to vector<8x8xf32>
    %76 = vector.extract_strided_slice %71 {offsets = [2, 0, 0], sizes = [1, 8, 8], strides = [1, 1, 1]} : vector<4x8x8xf32> to vector<1x8x8xf32>
    %77 = vector.shape_cast %76 : vector<1x8x8xf32> to vector<8x8xf32>
    %78 = vector.extract_strided_slice %71 {offsets = [3, 0, 0], sizes = [1, 8, 8], strides = [1, 1, 1]} : vector<4x8x8xf32> to vector<1x8x8xf32>
    %79 = vector.shape_cast %78 : vector<1x8x8xf32> to vector<8x8xf32>
    %80 = tpu.concatenate %73, %75, %77, %79 in 1 : vector<8x8xf32>, vector<8x8xf32>, vector<8x8xf32>, vector<8x8xf32> -> vector<8x32xf32>
    %81 = arith.truncf %80 : vector<8x32xf32> to vector<8x32xbf16>
    %cst_32 = arith.constant dense<0.000000e+00> : vector<8x32xf32>
    %82 = tpu.matmul %81, %21, %cst_32 {dimension_numbers = #tpu.dot_dimension_numbers<[1], [0], [0], [1], [0, 0, 1, 1], [], []>} : vector<8x32xbf16>, vector<32x32xbf16>, vector<8x32xf32> -> vector<8x32xf32>
    %83 = vector.broadcast %22 : vector<1x32xf32> to vector<8x32xf32>
    %84 = arith.addf %82, %83 : vector<8x32xf32>
    %85 = arith.addf %1, %84 : vector<8x32xf32>
    %c0_33 = arith.constant 0 : index
    %c0_34 = arith.constant 0 : index
    %86 = vector.load %arg23[%c0_33, %c0_34] : memref<1x32xf32, #tpu.memory_space<vmem>>, vector<1x32xf32>
    %c0_35 = arith.constant 0 : index
    %c0_36 = arith.constant 0 : index
    %87 = vector.load %arg24[%c0_35, %c0_36] : memref<1x32xf32, #tpu.memory_space<vmem>>, vector<1x32xf32>
    %cst_37 = arith.constant dense<0.000000e+00> : vector<8xf32>
    %88 = vector.multi_reduction <add>, %85, %cst_37 [1] : vector<8x32xf32> to vector<8xf32>
    %89 = vector.shape_cast %88 : vector<8xf32> to vector<8x1xf32>
    %cst_38 = arith.constant 3.200000e+01 : f32
    %90 = vector.broadcast %cst_38 : f32 to vector<8x1xf32>
    %91 = arith.divf %89, %90 : vector<8x1xf32>
    %92 = vector.broadcast %91 : vector<8x1xf32> to vector<8x32xf32>
    %93 = arith.subf %85, %92 : vector<8x32xf32>
    %94 = arith.mulf %93, %93 : vector<8x32xf32>
    %cst_39 = arith.constant dense<0.000000e+00> : vector<8xf32>
    %95 = vector.multi_reduction <add>, %94, %cst_39 [1] : vector<8x32xf32> to vector<8xf32>
    %96 = vector.shape_cast %95 : vector<8xf32> to vector<8x1xf32>
    %cst_40 = arith.constant 3.200000e+01 : f32
    %97 = vector.broadcast %cst_40 : f32 to vector<8x1xf32>
    %98 = arith.divf %96, %97 : vector<8x1xf32>
    %99 = vector.broadcast %91 : vector<8x1xf32> to vector<8x32xf32>
    %100 = arith.subf %85, %99 : vector<8x32xf32>
    %cst_41 = arith.constant 9.99999974E-6 : f32
    %101 = vector.broadcast %cst_41 : f32 to vector<8x1xf32>
    %102 = arith.addf %98, %101 : vector<8x1xf32>
    %103 = math.rsqrt %102 : vector<8x1xf32>
    %104 = vector.broadcast %103 : vector<8x1xf32> to vector<8x32xf32>
    %105 = arith.mulf %100, %104 : vector<8x32xf32>
    %106 = vector.broadcast %86 : vector<1x32xf32> to vector<8x32xf32>
    %107 = arith.mulf %105, %106 : vector<8x32xf32>
    %108 = vector.broadcast %87 : vector<1x32xf32> to vector<8x32xf32>
    %109 = arith.addf %107, %108 : vector<8x32xf32>
    %110 = arith.truncf %109 : vector<8x32xf32> to vector<8x32xbf16>
    %c0_42 = arith.constant 0 : index
    %c0_43 = arith.constant 0 : index
    %111 = vector.load %arg13[%c0_42, %c0_43] : memref<32x32xbf16, #tpu.memory_space<vmem>>, vector<32x32xbf16>
    %cst_44 = arith.constant dense<0.000000e+00> : vector<8x32xf32>
    %112 = tpu.matmul %110, %111, %cst_44 {dimension_numbers = #tpu.dot_dimension_numbers<[1], [0], [0], [1], [0, 0, 1, 1], [], []>} : vector<8x32xbf16>, vector<32x32xbf16>, vector<8x32xf32> -> vector<8x32xf32>
    %c0_45 = arith.constant 0 : index
    %c0_46 = arith.constant 0 : index
    %113 = vector.load %arg14[%c0_45, %c0_46] : memref<1x32xf32, #tpu.memory_space<vmem>>, vector<1x32xf32>
    %114 = vector.broadcast %113 : vector<1x32xf32> to vector<8x32xf32>
    %115 = arith.addf %112, %114 : vector<8x32xf32>
    %116 = arith.truncf %5 : vector<8x32xf32> to vector<8x32xbf16>
    %c0_47 = arith.constant 0 : index
    %c0_48 = arith.constant 0 : index
    %117 = vector.load %arg15[%c0_47, %c0_48] : memref<32x64xbf16, #tpu.memory_space<vmem>>, vector<32x64xbf16>
    %cst_49 = arith.constant dense<0.000000e+00> : vector<8x64xf32>
    %118 = tpu.matmul %116, %117, %cst_49 {dimension_numbers = #tpu.dot_dimension_numbers<[1], [0], [0], [1], [0, 0, 1, 1], [], []>} : vector<8x32xbf16>, vector<32x64xbf16>, vector<8x64xf32> -> vector<8x64xf32>
    %c0_50 = arith.constant 0 : index
    %c0_51 = arith.constant 0 : index
    %119 = vector.load %arg16[%c0_50, %c0_51] : memref<1x64xf32, #tpu.memory_space<vmem>>, vector<1x64xf32>
    %120 = vector.broadcast %119 : vector<1x64xf32> to vector<8x64xf32>
    %121 = arith.addf %118, %120 : vector<8x64xf32>
    %c0_52 = arith.constant 0 : index
    %c0_53 = arith.constant 0 : index
    %122 = vector.load %arg17[%c0_52, %c0_53] : memref<32x32xbf16, #tpu.memory_space<vmem>>, vector<32x32xbf16>
    %c0_54 = arith.constant 0 : index
    %c0_55 = arith.constant 0 : index
    %123 = vector.load %arg18[%c0_54, %c0_55] : memref<1x32xf32, #tpu.memory_space<vmem>>, vector<1x32xf32>
    %124 = vector.shape_cast %8 : vector<1x8xf32> to vector<1x1x8xf32>
    %125 = vector.extract_strided_slice %115 {offsets = [0, 0], sizes = [8, 8], strides = [1, 1]} : vector<8x32xf32> to vector<8x8xf32>
    %126 = vector.extract_strided_slice %115 {offsets = [0, 8], sizes = [8, 8], strides = [1, 1]} : vector<8x32xf32> to vector<8x8xf32>
    %127 = vector.extract_strided_slice %115 {offsets = [0, 16], sizes = [8, 8], strides = [1, 1]} : vector<8x32xf32> to vector<8x8xf32>
    %128 = vector.extract_strided_slice %115 {offsets = [0, 24], sizes = [8, 8], strides = [1, 1]} : vector<8x32xf32> to vector<8x8xf32>
    %129 = vector.shape_cast %125 : vector<8x8xf32> to vector<1x8x8xf32>
    %130 = vector.shape_cast %126 : vector<8x8xf32> to vector<1x8x8xf32>
    %131 = vector.shape_cast %127 : vector<8x8xf32> to vector<1x8x8xf32>
    %132 = vector.shape_cast %128 : vector<8x8xf32> to vector<1x8x8xf32>
    %133 = tpu.concatenate %129, %130, %131, %132 in 0 : vector<1x8x8xf32>, vector<1x8x8xf32>, vector<1x8x8xf32>, vector<1x8x8xf32> -> vector<4x8x8xf32>
    %134 = arith.truncf %133 : vector<4x8x8xf32> to vector<4x8x8xbf16>
    %135 = vector.extract_strided_slice %121 {offsets = [0, 0], sizes = [8, 8], strides = [1, 1]} : vector<8x64xf32> to vector<8x8xf32>
    %136 = vector.extract_strided_slice %121 {offsets = [0, 8], sizes = [8, 8], strides = [1, 1]} : vector<8x64xf32> to vector<8x8xf32>
    %137 = vector.extract_strided_slice %121 {offsets = [0, 16], sizes = [8, 8], strides = [1, 1]} : vector<8x64xf32> to vector<8x8xf32>
    %138 = vector.extract_strided_slice %121 {offsets = [0, 24], sizes = [8, 8], strides = [1, 1]} : vector<8x64xf32> to vector<8x8xf32>
    %139 = vector.extract_strided_slice %121 {offsets = [0, 32], sizes = [8, 8], strides = [1, 1]} : vector<8x64xf32> to vector<8x8xf32>
    %140 = vector.extract_strided_slice %121 {offsets = [0, 40], sizes = [8, 8], strides = [1, 1]} : vector<8x64xf32> to vector<8x8xf32>
    %141 = vector.extract_strided_slice %121 {offsets = [0, 48], sizes = [8, 8], strides = [1, 1]} : vector<8x64xf32> to vector<8x8xf32>
    %142 = vector.extract_strided_slice %121 {offsets = [0, 56], sizes = [8, 8], strides = [1, 1]} : vector<8x64xf32> to vector<8x8xf32>
    %143 = vector.shape_cast %135 : vector<8x8xf32> to vector<1x8x8xf32>
    %144 = vector.shape_cast %136 : vector<8x8xf32> to vector<1x8x8xf32>
    %145 = vector.shape_cast %137 : vector<8x8xf32> to vector<1x8x8xf32>
    %146 = vector.shape_cast %138 : vector<8x8xf32> to vector<1x8x8xf32>
    %147 = vector.shape_cast %139 : vector<8x8xf32> to vector<1x8x8xf32>
    %148 = vector.shape_cast %140 : vector<8x8xf32> to vector<1x8x8xf32>
    %149 = vector.shape_cast %141 : vector<8x8xf32> to vector<1x8x8xf32>
    %150 = vector.shape_cast %142 : vector<8x8xf32> to vector<1x8x8xf32>
    %151 = tpu.concatenate %143, %144, %145, %146, %147, %148, %149, %150 in 0 : vector<1x8x8xf32>, vector<1x8x8xf32>, vector<1x8x8xf32>, vector<1x8x8xf32>, vector<1x8x8xf32>, vector<1x8x8xf32>, vector<1x8x8xf32>, vector<1x8x8xf32> -> vector<8x8x8xf32>
    %152 = arith.truncf %151 : vector<8x8x8xf32> to vector<8x8x8xbf16>
    %153 = vector.extract_strided_slice %152 {offsets = [0, 0, 0], sizes = [4, 8, 8], strides = [1, 1, 1]} : vector<8x8x8xbf16> to vector<4x8x8xbf16>
    %154 = vector.extract_strided_slice %152 {offsets = [4, 0, 0], sizes = [4, 8, 8], strides = [1, 1, 1]} : vector<8x8x8xbf16> to vector<4x8x8xbf16>
    "tpu.trace_start"() <{level = 10 : i32, message = "hqd,hkd->hqk"}> : () -> ()
    %cst_56 = arith.constant dense<0.000000e+00> : vector<4x8x8xf32>
    %155 = tpu.matmul %134, %153, %cst_56 {dimension_numbers = #tpu.dot_dimension_numbers<[2], [2], [1], [1], [0, 0, 0, 1, 1, 1], [0], [0]>} : vector<4x8x8xbf16>, vector<4x8x8xbf16>, vector<4x8x8xf32> -> vector<4x8x8xf32>
    "tpu.trace_stop"() : () -> ()
    %156 = vector.broadcast %124 : vector<1x1x8xf32> to vector<4x8x8xf32>
    %157 = arith.addf %155, %156 : vector<4x8x8xf32>
    %cst_57 = arith.constant dense<0xFF800000> : vector<4x8xf32>
    %158 = vector.multi_reduction <maximumf>, %157, %cst_57 [2] : vector<4x8x8xf32> to vector<4x8xf32>
    %159 = vector.shape_cast %158 : vector<4x8xf32> to vector<4x8x1xf32>
    %160 = vector.broadcast %159 : vector<4x8x1xf32> to vector<4x8x8xf32>
    %161 = arith.subf %157, %160 : vector<4x8x8xf32>
    %162 = math.exp %161 : vector<4x8x8xf32>
    %cst_58 = arith.constant dense<0.000000e+00> : vector<4x8xf32>
    %163 = vector.multi_reduction <add>, %162, %cst_58 [2] : vector<4x8x8xf32> to vector<4x8xf32>
    %164 = vector.shape_cast %163 : vector<4x8xf32> to vector<4x8x1xf32>
    %165 = tpu.reciprocal %164 {approx = true} : vector<4x8x1xf32> -> vector<4x8x1xf32>
    %166 = vector.broadcast %165 : vector<4x8x1xf32> to vector<4x8x8xf32>
    %167 = arith.mulf %162, %166 : vector<4x8x8xf32>
    %cst_59 = arith.constant dense<0.000000e+00> : vector<8x8xf32>
    %168 = vector.multi_reduction <add>, %167, %cst_59 [0] : vector<4x8x8xf32> to vector<8x8xf32>
    %cst_60 = arith.constant 2.500000e-01 : f32
    %169 = vector.broadcast %cst_60 : f32 to vector<8x8xf32>
    %170 = arith.mulf %168, %169 : vector<8x8xf32>
    %171 = arith.truncf %167 : vector<4x8x8xf32> to vector<4x8x8xbf16>
    "tpu.trace_start"() <{level = 10 : i32, message = "hqk,hkd->hqd"}> : () -> ()
    %cst_61 = arith.constant dense<0.000000e+00> : vector<4x8x8xf32>
    %172 = tpu.matmul %171, %154, %cst_61 {dimension_numbers = #tpu.dot_dimension_numbers<[2], [1], [1], [2], [0, 0, 0, 1, 1, 2], [0], [0]>} : vector<4x8x8xbf16>, vector<4x8x8xbf16>, vector<4x8x8xf32> -> vector<4x8x8xf32>
    "tpu.trace_stop"() : () -> ()
    %173 = vector.extract_strided_slice %172 {offsets = [0, 0, 0], sizes = [1, 8, 8], strides = [1, 1, 1]} : vector<4x8x8xf32> to vector<1x8x8xf32>
    %174 = vector.shape_cast %173 : vector<1x8x8xf32> to vector<8x8xf32>
    %175 = vector.extract_strided_slice %172 {offsets = [1, 0, 0], sizes = [1, 8, 8], strides = [1, 1, 1]} : vector<4x8x8xf32> to vector<1x8x8xf32>
    %176 = vector.shape_cast %175 : vector<1x8x8xf32> to vector<8x8xf32>
    %177 = vector.extract_strided_slice %172 {offsets = [2, 0, 0], sizes = [1, 8, 8], strides = [1, 1, 1]} : vector<4x8x8xf32> to vector<1x8x8xf32>
    %178 = vector.shape_cast %177 : vector<1x8x8xf32> to vector<8x8xf32>
    %179 = vector.extract_strided_slice %172 {offsets = [3, 0, 0], sizes = [1, 8, 8], strides = [1, 1, 1]} : vector<4x8x8xf32> to vector<1x8x8xf32>
    %180 = vector.shape_cast %179 : vector<1x8x8xf32> to vector<8x8xf32>
    %181 = tpu.concatenate %174, %176, %178, %180 in 1 : vector<8x8xf32>, vector<8x8xf32>, vector<8x8xf32>, vector<8x8xf32> -> vector<8x32xf32>
    %182 = arith.truncf %181 : vector<8x32xf32> to vector<8x32xbf16>
    %cst_62 = arith.constant dense<0.000000e+00> : vector<8x32xf32>
    %183 = tpu.matmul %182, %122, %cst_62 {dimension_numbers = #tpu.dot_dimension_numbers<[1], [0], [0], [1], [0, 0, 1, 1], [], []>} : vector<8x32xbf16>, vector<32x32xbf16>, vector<8x32xf32> -> vector<8x32xf32>
    %184 = vector.broadcast %123 : vector<1x32xf32> to vector<8x32xf32>
    %185 = arith.addf %183, %184 : vector<8x32xf32>
    %186 = arith.addf %109, %185 : vector<8x32xf32>
    %c0_63 = arith.constant 0 : index
    %c0_64 = arith.constant 0 : index
    %187 = vector.load %arg25[%c0_63, %c0_64] : memref<1x32xf32, #tpu.memory_space<vmem>>, vector<1x32xf32>
    %c0_65 = arith.constant 0 : index
    %c0_66 = arith.constant 0 : index
    %188 = vector.load %arg26[%c0_65, %c0_66] : memref<1x32xf32, #tpu.memory_space<vmem>>, vector<1x32xf32>
    %cst_67 = arith.constant dense<0.000000e+00> : vector<8xf32>
    %189 = vector.multi_reduction <add>, %186, %cst_67 [1] : vector<8x32xf32> to vector<8xf32>
    %190 = vector.shape_cast %189 : vector<8xf32> to vector<8x1xf32>
    %cst_68 = arith.constant 3.200000e+01 : f32
    %191 = vector.broadcast %cst_68 : f32 to vector<8x1xf32>
    %192 = arith.divf %190, %191 : vector<8x1xf32>
    %193 = vector.broadcast %192 : vector<8x1xf32> to vector<8x32xf32>
    %194 = arith.subf %186, %193 : vector<8x32xf32>
    %195 = arith.mulf %194, %194 : vector<8x32xf32>
    %cst_69 = arith.constant dense<0.000000e+00> : vector<8xf32>
    %196 = vector.multi_reduction <add>, %195, %cst_69 [1] : vector<8x32xf32> to vector<8xf32>
    %197 = vector.shape_cast %196 : vector<8xf32> to vector<8x1xf32>
    %cst_70 = arith.constant 3.200000e+01 : f32
    %198 = vector.broadcast %cst_70 : f32 to vector<8x1xf32>
    %199 = arith.divf %197, %198 : vector<8x1xf32>
    %200 = vector.broadcast %192 : vector<8x1xf32> to vector<8x32xf32>
    %201 = arith.subf %186, %200 : vector<8x32xf32>
    %cst_71 = arith.constant 9.99999974E-6 : f32
    %202 = vector.broadcast %cst_71 : f32 to vector<8x1xf32>
    %203 = arith.addf %199, %202 : vector<8x1xf32>
    %204 = math.rsqrt %203 : vector<8x1xf32>
    %205 = vector.broadcast %204 : vector<8x1xf32> to vector<8x32xf32>
    %206 = arith.mulf %201, %205 : vector<8x32xf32>
    %207 = vector.broadcast %187 : vector<1x32xf32> to vector<8x32xf32>
    %208 = arith.mulf %206, %207 : vector<8x32xf32>
    %209 = vector.broadcast %188 : vector<1x32xf32> to vector<8x32xf32>
    %210 = arith.addf %208, %209 : vector<8x32xf32>
    %211 = arith.truncf %210 : vector<8x32xf32> to vector<8x32xbf16>
    %c0_72 = arith.constant 0 : index
    %c0_73 = arith.constant 0 : index
    %212 = vector.load %arg19[%c0_72, %c0_73] : memref<32x64xbf16, #tpu.memory_space<vmem>>, vector<32x64xbf16>
    %cst_74 = arith.constant dense<0.000000e+00> : vector<8x64xf32>
    %213 = tpu.matmul %211, %212, %cst_74 {dimension_numbers = #tpu.dot_dimension_numbers<[1], [0], [0], [1], [0, 0, 1, 1], [], []>} : vector<8x32xbf16>, vector<32x64xbf16>, vector<8x64xf32> -> vector<8x64xf32>
    %c0_75 = arith.constant 0 : index
    %c0_76 = arith.constant 0 : index
    %214 = vector.load %arg20[%c0_75, %c0_76] : memref<1x64xf32, #tpu.memory_space<vmem>>, vector<1x64xf32>
    %215 = vector.broadcast %214 : vector<1x64xf32> to vector<8x64xf32>
    %216 = arith.addf %213, %215 : vector<8x64xf32>
    %cst_77 = arith.constant 0.000000e+00 : f32
    %217 = vector.broadcast %cst_77 : f32 to vector<8x64xf32>
    %218 = arith.maximumf %216, %217 : vector<8x64xf32>
    %219 = arith.truncf %218 : vector<8x64xf32> to vector<8x64xbf16>
    %c0_78 = arith.constant 0 : index
    %c0_79 = arith.constant 0 : index
    %220 = vector.load %arg21[%c0_78, %c0_79] : memref<64x32xbf16, #tpu.memory_space<vmem>>, vector<64x32xbf16>
    %cst_80 = arith.constant dense<0.000000e+00> : vector<8x32xf32>
    %221 = tpu.matmul %219, %220, %cst_80 {dimension_numbers = #tpu.dot_dimension_numbers<[1], [0], [0], [1], [0, 0, 1, 1], [], []>} : vector<8x64xbf16>, vector<64x32xbf16>, vector<8x32xf32> -> vector<8x32xf32>
    %c0_81 = arith.constant 0 : index
    %c0_82 = arith.constant 0 : index
    %222 = vector.load %arg22[%c0_81, %c0_82] : memref<1x32xf32, #tpu.memory_space<vmem>>, vector<1x32xf32>
    %223 = vector.broadcast %222 : vector<1x32xf32> to vector<8x32xf32>
    %224 = arith.addf %221, %223 : vector<8x32xf32>
    %225 = arith.addf %210, %224 : vector<8x32xf32>
    %c0_83 = arith.constant 0 : index
    %c0_84 = arith.constant 0 : index
    %226 = vector.load %arg27[%c0_83, %c0_84] : memref<1x32xf32, #tpu.memory_space<vmem>>, vector<1x32xf32>
    %c0_85 = arith.constant 0 : index
    %c0_86 = arith.constant 0 : index
    %227 = vector.load %arg28[%c0_85, %c0_86] : memref<1x32xf32, #tpu.memory_space<vmem>>, vector<1x32xf32>
    %cst_87 = arith.constant dense<0.000000e+00> : vector<8xf32>
    %228 = vector.multi_reduction <add>, %225, %cst_87 [1] : vector<8x32xf32> to vector<8xf32>
    %229 = vector.shape_cast %228 : vector<8xf32> to vector<8x1xf32>
    %cst_88 = arith.constant 3.200000e+01 : f32
    %230 = vector.broadcast %cst_88 : f32 to vector<8x1xf32>
    %231 = arith.divf %229, %230 : vector<8x1xf32>
    %232 = vector.broadcast %231 : vector<8x1xf32> to vector<8x32xf32>
    %233 = arith.subf %225, %232 : vector<8x32xf32>
    %234 = arith.mulf %233, %233 : vector<8x32xf32>
    %cst_89 = arith.constant dense<0.000000e+00> : vector<8xf32>
    %235 = vector.multi_reduction <add>, %234, %cst_89 [1] : vector<8x32xf32> to vector<8xf32>
    %236 = vector.shape_cast %235 : vector<8xf32> to vector<8x1xf32>
    %cst_90 = arith.constant 3.200000e+01 : f32
    %237 = vector.broadcast %cst_90 : f32 to vector<8x1xf32>
    %238 = arith.divf %236, %237 : vector<8x1xf32>
    %239 = vector.broadcast %231 : vector<8x1xf32> to vector<8x32xf32>
    %240 = arith.subf %225, %239 : vector<8x32xf32>
    %cst_91 = arith.constant 9.99999974E-6 : f32
    %241 = vector.broadcast %cst_91 : f32 to vector<8x1xf32>
    %242 = arith.addf %238, %241 : vector<8x1xf32>
    %243 = math.rsqrt %242 : vector<8x1xf32>
    %244 = vector.broadcast %243 : vector<8x1xf32> to vector<8x32xf32>
    %245 = arith.mulf %240, %244 : vector<8x32xf32>
    %246 = vector.broadcast %226 : vector<1x32xf32> to vector<8x32xf32>
    %247 = arith.mulf %245, %246 : vector<8x32xf32>
    %248 = vector.broadcast %227 : vector<1x32xf32> to vector<8x32xf32>
    %249 = arith.addf %247, %248 : vector<8x32xf32>
    %c0_92 = arith.constant 0 : index
    %c0_93 = arith.constant 0 : index
    %c0_94 = arith.constant 0 : index
    %250 = vector.load %arg29[%c0_92, %c0_93, %c0_94] : memref<1x8x32xf32, #tpu.memory_space<vmem>>, vector<1x8x32xf32>
    %251 = vector.shape_cast %250 : vector<1x8x32xf32> to vector<8x32xf32>
    %252 = vector.shape_cast %249 : vector<8x32xf32> to vector<1x8x32xf32>
    tpu.vector_store %arg29[%c0_92, %c0_93, %c0_94], %252 {strides = array<i32>} : memref<1x8x32xf32, #tpu.memory_space<vmem>>, vector<1x8x32xf32>,
    %c0_95 = arith.constant 0 : index
    %c0_96 = arith.constant 0 : index
    %c0_97 = arith.constant 0 : index
    %253 = vector.load %arg30[%c0_95, %c0_96, %c0_97] : memref<1x8x8xf32, #tpu.memory_space<vmem>>, vector<1x8x8xf32>
    %254 = vector.shape_cast %253 : vector<1x8x8xf32> to vector<8x8xf32>
    %255 = vector.shape_cast %69 : vector<8x8xf32> to vector<1x8x8xf32>
    tpu.vector_store %arg30[%c0_95, %c0_96, %c0_97], %255 {strides = array<i32>} : memref<1x8x8xf32, #tpu.memory_space<vmem>>, vector<1x8x8xf32>,
    %c0_98 = arith.constant 0 : index
    %c0_99 = arith.constant 0 : index
    %c0_100 = arith.constant 0 : index
    %256 = vector.load %arg31[%c0_98, %c0_99, %c0_100] : memref<1x8x8xf32, #tpu.memory_space<vmem>>, vector<1x8x8xf32>
    %257 = vector.shape_cast %256 : vector<1x8x8xf32> to vector<8x8xf32>
    %258 = vector.shape_cast %170 : vector<8x8xf32> to vector<1x8x8xf32>
    tpu.vector_store %arg31[%c0_98, %c0_99, %c0_100], %258 {strides = array<i32>} : memref<1x8x8xf32, #tpu.memory_space<vmem>>, vector<1x8x8xf32>,
    return
  }
  func.func @transform_0(%arg0: i32, %arg1: i32) -> (i32, i32, i32) {
    %c0_i32 = arith.constant 0 : i32
    %c0_i32_0 = arith.constant 0 : i32
    return %arg0, %arg1, %c0_i32 : i32, i32, i32
  }
  func.func @transform_1(%arg0: i32, %arg1: i32) -> (i32, i32, i32) {
    %c0_i32 = arith.constant 0 : i32
    %c0_i32_0 = arith.constant 0 : i32
    %c0_i32_1 = arith.constant 0 : i32
    return %arg0, %c0_i32, %c0_i32_0 : i32, i32, i32
  }
  func.func @transform_2(%arg0: i32, %arg1: i32) -> (i32, i32, i32) {
    %c0_i32 = arith.constant 0 : i32
    %c0_i32_0 = arith.constant 0 : i32
    %c0_i32_1 = arith.constant 0 : i32
    return %arg0, %c0_i32, %c0_i32_0 : i32, i32, i32
  }
  func.func @transform_3(%arg0: i32, %arg1: i32) -> (i32, i32) {
    %c0_i32 = arith.constant 0 : i32
    %c0_i32_0 = arith.constant 0 : i32
    return %arg1, %c0_i32 : i32, i32
  }
  func.func @transform_4(%arg0: i32, %arg1: i32) -> (i32, i32, i32) {
    %c0_i32 = arith.constant 0 : i32
    %c0_i32_0 = arith.constant 0 : i32
    %c0_i32_1 = arith.constant 0 : i32
    return %arg0, %c0_i32, %c0_i32_0 : i32, i32, i32
  }
  func.func @transform_5(%arg0: i32, %arg1: i32) -> (i32, i32) {
    %c0_i32 = arith.constant 0 : i32
    %c0_i32_0 = arith.constant 0 : i32
    %c0_i32_1 = arith.constant 0 : i32
    return %c0_i32, %c0_i32_0 : i32, i32
  }
  func.func @transform_6(%arg0: i32, %arg1: i32) -> (i32, i32) {
    %c0_i32 = arith.constant 0 : i32
    %c0_i32_0 = arith.constant 0 : i32
    %c0_i32_1 = arith.constant 0 : i32
    return %c0_i32, %c0_i32_0 : i32, i32
  }
  func.func @transform_7(%arg0: i32, %arg1: i32) -> (i32, i32) {
    %c0_i32 = arith.constant 0 : i32
    %c0_i32_0 = arith.constant 0 : i32
    %c0_i32_1 = arith.constant 0 : i32
    return %c0_i32, %c0_i32_0 : i32, i32
  }
  func.func @transform_8(%arg0: i32, %arg1: i32) -> (i32, i32) {
    %c0_i32 = arith.constant 0 : i32
    %c0_i32_0 = arith.constant 0 : i32
    %c0_i32_1 = arith.constant 0 : i32
    return %c0_i32, %c0_i32_0 : i32, i32
  }
  func.func @transform_9(%arg0: i32, %arg1: i32) -> (i32, i32) {
    %c0_i32 = arith.constant 0 : i32
    %c0_i32_0 = arith.constant 0 : i32
    %c0_i32_1 = arith.constant 0 : i32
    return %c0_i32, %c0_i32_0 : i32, i32
  }
  func.func @transform_10(%arg0: i32, %arg1: i32) -> (i32, i32) {
    %c0_i32 = arith.constant 0 : i32
    %c0_i32_0 = arith.constant 0 : i32
    %c0_i32_1 = arith.constant 0 : i32
    return %c0_i32, %c0_i32_0 : i32, i32
  }
  func.func @transform_11(%arg0: i32, %arg1: i32) -> (i32, i32) {
    %c0_i32 = arith.constant 0 : i32
    %c0_i32_0 = arith.constant 0 : i32
    %c0_i32_1 = arith.constant 0 : i32
    return %c0_i32, %c0_i32_0 : i32, i32
  }
  func.func @transform_12(%arg0: i32, %arg1: i32) -> (i32, i32) {
    %c0_i32 = arith.constant 0 : i32
    %c0_i32_0 = arith.constant 0 : i32
    %c0_i32_1 = arith.constant 0 : i32
    return %c0_i32, %c0_i32_0 : i32, i32
  }
  func.func @transform_13(%arg0: i32, %arg1: i32) -> (i32, i32) {
    %c0_i32 = arith.constant 0 : i32
    %c0_i32_0 = arith.constant 0 : i32
    %c0_i32_1 = arith.constant 0 : i32
    return %c0_i32, %c0_i32_0 : i32, i32
  }
  func.func @transform_14(%arg0: i32, %arg1: i32) -> (i32, i32) {
    %c0_i32 = arith.constant 0 : i32
    %c0_i32_0 = arith.constant 0 : i32
    %c0_i32_1 = arith.constant 0 : i32
    return %c0_i32, %c0_i32_0 : i32, i32
  }
  func.func @transform_15(%arg0: i32, %arg1: i32) -> (i32, i32) {
    %c0_i32 = arith.constant 0 : i32
    %c0_i32_0 = arith.constant 0 : i32
    %c0_i32_1 = arith.constant 0 : i32
    return %c0_i32, %c0_i32_0 : i32, i32
  }
  func.func @transform_16(%arg0: i32, %arg1: i32) -> (i32, i32) {
    %c0_i32 = arith.constant 0 : i32
    %c0_i32_0 = arith.constant 0 : i32
    %c0_i32_1 = arith.constant 0 : i32
    return %c0_i32, %c0_i32_0 : i32, i32
  }
  func.func @transform_17(%arg0: i32, %arg1: i32) -> (i32, i32) {
    %c0_i32 = arith.constant 0 : i32
    %c0_i32_0 = arith.constant 0 : i32
    %c0_i32_1 = arith.constant 0 : i32
    return %c0_i32, %c0_i32_0 : i32, i32
  }
  func.func @transform_18(%arg0: i32, %arg1: i32) -> (i32, i32) {
    %c0_i32 = arith.constant 0 : i32
    %c0_i32_0 = arith.constant 0 : i32
    %c0_i32_1 = arith.constant 0 : i32
    return %c0_i32, %c0_i32_0 : i32, i32
  }
  func.func @transform_19(%arg0: i32, %arg1: i32) -> (i32, i32) {
    %c0_i32 = arith.constant 0 : i32
    %c0_i32_0 = arith.constant 0 : i32
    %c0_i32_1 = arith.constant 0 : i32
    return %c0_i32, %c0_i32_0 : i32, i32
  }
  func.func @transform_20(%arg0: i32, %arg1: i32) -> (i32, i32) {
    %c0_i32 = arith.constant 0 : i32
    %c0_i32_0 = arith.constant 0 : i32
    %c0_i32_1 = arith.constant 0 : i32
    return %c0_i32, %c0_i32_0 : i32, i32
  }
  func.func @transform_21(%arg0: i32, %arg1: i32) -> (i32, i32) {
    %c0_i32 = arith.constant 0 : i32
    %c0_i32_0 = arith.constant 0 : i32
    %c0_i32_1 = arith.constant 0 : i32
    return %c0_i32, %c0_i32_0 : i32, i32
  }
  func.func @transform_22(%arg0: i32, %arg1: i32) -> (i32, i32) {
    %c0_i32 = arith.constant 0 : i32
    %c0_i32_0 = arith.constant 0 : i32
    %c0_i32_1 = arith.constant 0 : i32
    return %c0_i32, %c0_i32_0 : i32, i32
  }
  func.func @transform_23(%arg0: i32, %arg1: i32) -> (i32, i32) {
    %c0_i32 = arith.constant 0 : i32
    %c0_i32_0 = arith.constant 0 : i32
    %c0_i32_1 = arith.constant 0 : i32
    return %c0_i32, %c0_i32_0 : i32, i32
  }
  func.func @transform_24(%arg0: i32, %arg1: i32) -> (i32, i32) {
    %c0_i32 = arith.constant 0 : i32
    %c0_i32_0 = arith.constant 0 : i32
    %c0_i32_1 = arith.constant 0 : i32
    return %c0_i32, %c0_i32_0 : i32, i32
  }
  func.func @transform_25(%arg0: i32, %arg1: i32) -> (i32, i32) {
    %c0_i32 = arith.constant 0 : i32
    %c0_i32_0 = arith.constant 0 : i32
    %c0_i32_1 = arith.constant 0 : i32
    return %c0_i32, %c0_i32_0 : i32, i32
  }
  func.func @transform_26(%arg0: i32, %arg1: i32) -> (i32, i32) {
    %c0_i32 = arith.constant 0 : i32
    %c0_i32_0 = arith.constant 0 : i32
    %c0_i32_1 = arith.constant 0 : i32
    return %c0_i32, %c0_i32_0 : i32, i32
  }
  func.func @transform_27(%arg0: i32, %arg1: i32) -> (i32, i32, i32) {
    %c0_i32 = arith.constant 0 : i32
    %c0_i32_0 = arith.constant 0 : i32
    return %arg0, %arg1, %c0_i32 : i32, i32, i32
  }
  func.func @transform_28(%arg0: i32, %arg1: i32) -> (i32, i32, i32) {
    %c0_i32 = arith.constant 0 : i32
    %c0_i32_0 = arith.constant 0 : i32
    return %arg0, %arg1, %c0_i32 : i32, i32, i32
  }
  func.func @transform_29(%arg0: i32, %arg1: i32) -> (i32, i32, i32) {
    %c0_i32 = arith.constant 0 : i32
    %c0_i32_0 = arith.constant 0 : i32
    return %arg0, %arg1, %c0_i32 : i32, i32, i32
  }
}

</mosaic_0001>

<llo_original>
// kernel: tpu_custom_call.1
$region0: #{tpu_custom_call.1}
  #allocation0 [shape = 'u32[]', space=smem, size = 0x4, offset = 0x4, fixed_abs, tag = 'smem constant byte address 0x4 - core index']
  #allocation1 [shape = 'u32[72,128]{1,0:T(1,128)}', space=vmem, size = 0x9000, scoped, tag = 'internal scratch']
  %s0 = inlined_call_operand.smem [shape: u32[30], index: -1, kind: input, shape index: {}]
  %s1 = sld [smem:[%s0]]
  %s2 = scalar_lea.smem %s0, 1
  %s3 = sld [smem:[%s2]]
  %s4 = scalar_lea.smem %s0, 2
  %s5 = sld [smem:[%s4]]
  %s6 = scalar_lea.smem %s0, 3
  %s7 = sld [smem:[%s6]]
  %s8 = scalar_lea.smem %s0, 4
  %s9 = sld [smem:[%s8]]
  %s10 = scalar_lea.smem %s0, 5
  %s11 = sld [smem:[%s10]]
  %s12 = scalar_lea.smem %s0, 6
  %s13 = sld [smem:[%s12]]
  %s14 = scalar_lea.smem %s0, 7
  %s15 = sld [smem:[%s14]]
  %s16 = scalar_lea.smem %s0, 8
  %s17 = sld [smem:[%s16]]
  %s18 = scalar_lea.smem %s0, 9
  %s19 = sld [smem:[%s18]]
  %s20 = scalar_lea.smem %s0, 10
  %s21 = sld [smem:[%s20]]
  %s22 = scalar_lea.smem %s0, 11
  %s23 = sld [smem:[%s22]]
  %s24 = scalar_lea.smem %s0, 12
  %s25 = sld [smem:[%s24]]
  %s26 = scalar_lea.smem %s0, 13
  %s27 = sld [smem:[%s26]]
  %s28 = scalar_lea.smem %s0, 14
  %s29 = sld [smem:[%s28]]
  %s30 = scalar_lea.smem %s0, 15
  %s31 = sld [smem:[%s30]]
  %s32 = scalar_lea.smem %s0, 16
  %s33 = sld [smem:[%s32]]
  %s34 = scalar_lea.smem %s0, 17
  %s35 = sld [smem:[%s34]]
  %s36 = scalar_lea.smem %s0, 18
  %s37 = sld [smem:[%s36]]
  %s38 = scalar_lea.smem %s0, 19
  %s39 = sld [smem:[%s38]]
  %s40 = scalar_lea.smem %s0, 20
  %s41 = sld [smem:[%s40]]
  %s42 = scalar_lea.smem %s0, 21
  %s43 = sld [smem:[%s42]]
  %s44 = scalar_lea.smem %s0, 22
  %s45 = sld [smem:[%s44]]
  %s46 = scalar_lea.smem %s0, 23
  %s47 = sld [smem:[%s46]]
  %s48 = scalar_lea.smem %s0, 24
  %s49 = sld [smem:[%s48]]
  %s50 = scalar_lea.smem %s0, 25
  %s51 = sld [smem:[%s50]]
  %s52 = scalar_lea.smem %s0, 26
  %s53 = sld [smem:[%s52]]
  %s54 = scalar_lea.smem %s0, 27
  %s55 = sld [smem:[%s54]]
  %s56 = scalar_lea.smem %s0, 28
  %s57 = sld [smem:[%s56]]
  %s58 = scalar_lea.smem %s0, 29
  %s59 = sld [smem:[%s58]]
  %60 = xla_tuple %s55, %s57, %s59
  %s61 = sld [smem:[#allocation0]]
  $region221: #{tpu_custom_call.1} parent=0
    _
  %s63 = ssub.s32 1, %s61
  %s64 = scalar_select 0, %s63, %s61
  $region1: #{tpu_custom_call.1} parent=0
    #allocation2 [shape = 'u8[4096]{0}', space=vmem, size = 0x1000, scoped, tag = 'input window, operand 3, single buffered']
    #allocation3 [shape = 's32[2]{0}', space=sflag, size = 0x8, scoped, tag = 'scoped memory for tpu_custom_call.1']
    #allocation4 [shape = 's32[2]{0}', space=sflag, size = 0x8, scoped, tag = 'scoped memory for tpu_custom_call.1']
    #allocation5 [shape = 'u8[8192]{0}', space=vmem, size = 0x2000, scoped, tag = 'input window, operand 5, single buffered']
    #allocation6 [shape = 's32[1]{0}', space=sflag, size = 0x4, scoped, tag = 'scoped memory for tpu_custom_call.1']
    #allocation7 [shape = 'u8[512]{0}', space=vmem, size = 0x400, scoped, tag = 'input window, operand 6, single buffered']
    #allocation8 [shape = 'u8[8192]{0}', space=vmem, size = 0x2000, scoped, tag = 'input window, operand 7, single buffered']
    #allocation9 [shape = 's32[1]{0}', space=sflag, size = 0x4, scoped, tag = 'scoped memory for tpu_custom_call.1']
    #allocation10 [shape = 'u8[512]{0}', space=vmem, size = 0x400, scoped, tag = 'input window, operand 8, single buffered']
    #allocation11 [shape = 'u8[8192]{0}', space=vmem, size = 0x2000, scoped, tag = 'input window, operand 9, single buffered']
    #allocation12 [shape = 's32[1]{0}', space=sflag, size = 0x4, scoped, tag = 'scoped memory for tpu_custom_call.1']
    #allocation13 [shape = 'u8[512]{0}', space=vmem, size = 0x400, scoped, tag = 'input window, operand 10, single buffered']
    #allocation14 [shape = 'u8[8192]{0}', space=vmem, size = 0x2000, scoped, tag = 'input window, operand 11, single buffered']
    #allocation15 [shape = 's32[1]{0}', space=sflag, size = 0x4, scoped, tag = 'scoped memory for tpu_custom_call.1']
    #allocation16 [shape = 'u8[512]{0}', space=vmem, size = 0x400, scoped, tag = 'input window, operand 12, single buffered']
    #allocation17 [shape = 'u8[8192]{0}', space=vmem, size = 0x2000, scoped, tag = 'input window, operand 13, single buffered']
    #allocation18 [shape = 's32[1]{0}', space=sflag, size = 0x4, scoped, tag = 'scoped memory for tpu_custom_call.1']
    #allocation19 [shape = 'u8[512]{0}', space=vmem, size = 0x400, scoped, tag = 'input window, operand 14, single buffered']
    #allocation20 [shape = 'u8[8192]{0}', space=vmem, size = 0x2000, scoped, tag = 'input window, operand 15, single buffered']
    #allocation21 [shape = 's32[1]{0}', space=sflag, size = 0x4, scoped, tag = 'scoped memory for tpu_custom_call.1']
    #allocation22 [shape = 'u8[512]{0}', space=vmem, size = 0x400, scoped, tag = 'input window, operand 16, single buffered']
    #allocation23 [shape = 'u8[8192]{0}', space=vmem, size = 0x2000, scoped, tag = 'input window, operand 17, single buffered']
    #allocation24 [shape = 's32[1]{0}', space=sflag, size = 0x4, scoped, tag = 'scoped memory for tpu_custom_call.1']
    #allocation25 [shape = 'u8[512]{0}', space=vmem, size = 0x400, scoped, tag = 'input window, operand 18, single buffered']
    #allocation26 [shape = 'u8[512]{0}', space=vmem, size = 0x400, scoped, tag = 'input window, operand 26, single buffered']
    #allocation27 [shape = 's32[1]{0}', space=sflag, size = 0x4, scoped, tag = 'scoped memory for tpu_custom_call.1']
    #allocation28 [shape = 'u8[8192]{0}', space=vmem, size = 0x2000, scoped, tag = 'output window, operand 0']
    #allocation29 [shape = 'u8[8192]{0}', space=vmem, size = 0x2000, scoped, tag = 'output window, operand 1']
    #allocation30 [shape = 's32[2]{0}', space=sflag, size = 0x8, scoped, tag = 'scoped memory for tpu_custom_call.1']
    #allocation31 [shape = 'u8[8192]{0}', space=vmem, size = 0x2000, scoped, tag = 'output window, operand 2']
    %65 = vsyncpa [#allocation3], 0
    %66 = vsyncpa [#allocation6], 0
    %67 = vsyncpa [#allocation9], 0
    %68 = vsyncpa [#allocation12], 0
    %69 = vsyncpa [#allocation15], 0
    %70 = vsyncpa [#allocation18], 0
    %71 = vsyncpa [#allocation21], 0
    %72 = vsyncpa [#allocation24], 0
    %73 = vsyncpa [#allocation27], 0
    %74 = vsyncpa [#allocation4], 0
    %s75 = scalar_lea.sflag [#allocation4], 1
    %76 = vsyncpa %s75, 0
    %77 = vsyncpa [#allocation30], 0
    %s78 = scalar_lea.sflag [#allocation30], 1
    %79 = vsyncpa %s78, 0
    loop: start=0, step=1, limit=4
    $region2: #{tpu_custom_call.1} parent=1 // loop_pre_header
      _
    $region3: #{tpu_custom_call.1} parent=1 // loop_header
      %s81 = sphi 0, %s85
      %p82 = scmp.ge.s32.totalorder %s81, 4
      %s88 = sphi 0, %s100
      %s89 = sphi 0, %s96
      %s90 = sphi 0, %s88
      %s91 = sphi 0, %s89
      %s92 = sphi 0, %s90
      %s93 = sphi 0, %s91
      %s105 = sphi 0, %s107
      %s108 = sphi 0, %s105
      %s109 = sphi 0, %s108
      %s125 = sphi 0, %s109
      %s131 = sphi 0, %s133
      %s134 = sphi 0, %s131
      %s135 = sphi 0, %s134
      %s151 = sphi 0, %s135
      %s157 = sphi 0, %s159
      %s160 = sphi 0, %s157
      %s161 = sphi 0, %s160
      %s177 = sphi 0, %s161
      %s183 = sphi 0, %s185
      %s186 = sphi 0, %s183
      %s187 = sphi 0, %s186
      %s203 = sphi 0, %s187
      %s209 = sphi 0, %s211
      %s212 = sphi 0, %s209
      %s213 = sphi 0, %s212
      %s229 = sphi 0, %s213
      %s233 = sphi 0, %s233
      %s235 = sphi 0, %s233
      %s236 = sphi 0, %s235
      %s250 = sphi 0, %s236
      %s254 = sphi 0, %s254
      %s256 = sphi 0, %s254
      %s257 = sphi 0, %s256
      %s271 = sphi 0, %s257
      %s275 = sphi 0, %s275
      %s277 = sphi 0, %s275
      %s278 = sphi 0, %s277
      %s292 = sphi 0, %s278
      %s296 = sphi 0, %s296
      %s298 = sphi 0, %s296
      %s299 = sphi 0, %s298
      %s313 = sphi 0, %s299
      %s317 = sphi 0, %s317
      %s319 = sphi 0, %s317
      %s320 = sphi 0, %s319
      %s334 = sphi 0, %s320
      %s338 = sphi 0, %s338
      %s340 = sphi 0, %s338
      %s341 = sphi 0, %s340
      %s355 = sphi 0, %s341
      %s359 = sphi 0, %s359
      %s361 = sphi 0, %s359
      %s362 = sphi 0, %s361
      %s376 = sphi 0, %s362
      %s380 = sphi 0, %s380
      %s382 = sphi 0, %s380
      %s383 = sphi 0, %s382
      %s397 = sphi 0, %s383
      %s401 = sphi 0, %s401
      %s403 = sphi 0, %s401
      %s404 = sphi 0, %s403
      %s418 = sphi 0, %s404
      %s422 = sphi 0, %s422
      %s424 = sphi 0, %s422
      %s425 = sphi 0, %s424
      %s439 = sphi 0, %s425
      %s443 = sphi 0, %s443
      %s445 = sphi 0, %s443
      %s446 = sphi 0, %s445
      %s460 = sphi 0, %s446
      %s464 = sphi 0, %s464
      %s466 = sphi 0, %s464
      %s467 = sphi 0, %s466
      %s481 = sphi 0, %s467
      %s485 = sphi 0, %s485
      %s487 = sphi 0, %s485
      %s488 = sphi 0, %s487
      %s502 = sphi 0, %s488
      %s506 = sphi 0, %s506
      %s508 = sphi 0, %s506
      %s509 = sphi 0, %s508
      %s523 = sphi 0, %s509
      %s527 = sphi 0, %s527
      %s529 = sphi 0, %s527
      %s530 = sphi 0, %s529
      %s544 = sphi 0, %s530
      %s548 = sphi 0, %s548
      %s550 = sphi 0, %s548
      %s551 = sphi 0, %s550
      %s565 = sphi 0, %s551
      %s569 = sphi 0, %s569
      %s571 = sphi 0, %s569
      %s572 = sphi 0, %s571
      %s586 = sphi 0, %s572
      %s590 = sphi 0, %s590
      %s592 = sphi 0, %s590
      %s593 = sphi 0, %s592
      %s607 = sphi 0, %s593
      %s611 = sphi 0, %s611
      %s613 = sphi 0, %s611
      %s614 = sphi 0, %s613
      %s628 = sphi 0, %s614
      %s632 = sphi 0, %s632
      %s634 = sphi 0, %s632
      %s635 = sphi 0, %s634
      %s649 = sphi 0, %s635
      %s653 = sphi 0, %s653
      %s655 = sphi 0, %s653
      %s656 = sphi 0, %s655
      %s670 = sphi 0, %s656
      %s674 = sphi 0, %s674
      %s676 = sphi 0, %s674
      %s677 = sphi 0, %s676
      %s691 = sphi 0, %s677
      %s699 = sphi 0, %s701
      %s702 = sphi 0, %s699
      %s703 = sphi 0, %s702
      %s719 = sphi 0, %s703
      %s727 = sphi 0, %s729
      %s730 = sphi 0, %s727
      %s731 = sphi 0, %s730
      %s747 = sphi 0, %s731
      %s755 = sphi 0, %s757
      %s758 = sphi 0, %s755
      %s759 = sphi 0, %s758
      %s775 = sphi 0, %s759
    $region4: #{tpu_custom_call.1} parent=1 // loop_header_branch
      %84 = sbr.rel (%p82) target = $region8
    $region5: #{tpu_custom_call.1} parent=1 // loop_body
      %s86 = ssub.s32 %s81, 1
      %s87 = ssub.s32 %s81, 2
      %s94 = sadd.s32 1, %s89
      %p95 = scmp.ge.s32.totalorder %s94, 1
      %s96 = scalar_select %p95, 0, %s94
      %s97 = sadd.s32 1, %s88
      %s98 = scalar_select %p95, %s97, %s88
      %p99 = scmp.ge.s32.totalorder %s98, 2
      %s100 = scalar_select %p99, 0, %s98
      %s101 = ssub.s32 %s88, %s100
      %s102 = ssub.s32 %s89, %s96
      %s103 = sor.u32 %s101, %s102
      %p104 = scmp.eq.s32.totalorder %s103, 0
      %s106 = sadd.s32 %s105, 1
      %s107 = scalar_select %p104, %s105, %s106
      %p110 = pneg %p104
      %p111 = scmp.eq.s32.totalorder %s81, 1
      %p112 = por %p110, %p111
      %p113 = scmp.ne.s32.totalorder %s105, %s108
      %p114 = scmp.eq.s32.totalorder %s81, 0
      %p115 = por %p113, %p114
      %p116 = scmp.ne.s32.totalorder %s105, %s108
      %p117 = scmp.eq.s32.totalorder %s86, 1
      %p118 = por %p116, %p117
      %p119 = scmp.ne.s32.totalorder %s108, %s109
      %p120 = scmp.eq.s32.totalorder %s86, 0
      %p121 = por %p119, %p120
      %p122 = scmp.ne.s32.totalorder %s108, %s109
      %p123 = scmp.eq.s32.totalorder %s87, 1
      %p124 = por %p122, %p123
      %p126 = scmp.ne.s32.totalorder %s109, %s125
      %p127 = scmp.eq.s32.totalorder %s87, 0
      %p128 = por %p126, %p127
      %s129 = ssub.s32 %s88, %s100
      %p130 = scmp.eq.s32.totalorder %s129, 0
      %s132 = sadd.s32 %s131, 1
      %s133 = scalar_select %p130, %s131, %s132
      %p136 = pneg %p130
      %p137 = scmp.eq.s32.totalorder %s81, 1
      %p138 = por %p136, %p137
      %p139 = scmp.ne.s32.totalorder %s131, %s134
      %p140 = scmp.eq.s32.totalorder %s81, 0
      %p141 = por %p139, %p140
      %p142 = scmp.ne.s32.totalorder %s131, %s134
      %p143 = scmp.eq.s32.totalorder %s86, 1
      %p144 = por %p142, %p143
      %p145 = scmp.ne.s32.totalorder %s134, %s135
      %p146 = scmp.eq.s32.totalorder %s86, 0
      %p147 = por %p145, %p146
      %p148 = scmp.ne.s32.totalorder %s134, %s135
      %p149 = scmp.eq.s32.totalorder %s87, 1
      %p150 = por %p148, %p149
      %p152 = scmp.ne.s32.totalorder %s135, %s151
      %p153 = scmp.eq.s32.totalorder %s87, 0
      %p154 = por %p152, %p153
      %s155 = ssub.s32 %s88, %s100
      %p156 = scmp.eq.s32.totalorder %s155, 0
      %s158 = sadd.s32 %s157, 1
      %s159 = scalar_select %p156, %s157, %s158
      %p162 = pneg %p156
      %p163 = scmp.eq.s32.totalorder %s81, 1
      %p164 = por %p162, %p163
      %p165 = scmp.ne.s32.totalorder %s157, %s160
      %p166 = scmp.eq.s32.totalorder %s81, 0
      %p167 = por %p165, %p166
      %p168 = scmp.ne.s32.totalorder %s157, %s160
      %p169 = scmp.eq.s32.totalorder %s86, 1
      %p170 = por %p168, %p169
      %p171 = scmp.ne.s32.totalorder %s160, %s161
      %p172 = scmp.eq.s32.totalorder %s86, 0
      %p173 = por %p171, %p172
      %p174 = scmp.ne.s32.totalorder %s160, %s161
      %p175 = scmp.eq.s32.totalorder %s87, 1
      %p176 = por %p174, %p175
      %p178 = scmp.ne.s32.totalorder %s161, %s177
      %p179 = scmp.eq.s32.totalorder %s87, 0
      %p180 = por %p178, %p179
      %s181 = ssub.s32 %s89, %s96
      %p182 = scmp.eq.s32.totalorder %s181, 0
      %s184 = sadd.s32 %s183, 1
      %s185 = scalar_select %p182, %s183, %s184
      %p188 = pneg %p182
      %p189 = scmp.eq.s32.totalorder %s81, 1
      %p190 = por %p188, %p189
      %p191 = scmp.ne.s32.totalorder %s183, %s186
      %p192 = scmp.eq.s32.totalorder %s81, 0
      %p193 = por %p191, %p192
      %p194 = scmp.ne.s32.totalorder %s183, %s186
      %p195 = scmp.eq.s32.totalorder %s86, 1
      %p196 = por %p194, %p195
      %p197 = scmp.ne.s32.totalorder %s186, %s187
      %p198 = scmp.eq.s32.totalorder %s86, 0
      %p199 = por %p197, %p198
      %p200 = scmp.ne.s32.totalorder %s186, %s187
      %p201 = scmp.eq.s32.totalorder %s87, 1
      %p202 = por %p200, %p201
      %p204 = scmp.ne.s32.totalorder %s187, %s203
      %p205 = scmp.eq.s32.totalorder %s87, 0
      %p206 = por %p204, %p205
      %s207 = ssub.s32 %s88, %s100
      %p208 = scmp.eq.s32.totalorder %s207, 0
      %s210 = sadd.s32 %s209, 1
      %s211 = scalar_select %p208, %s209, %s210
      %p214 = pneg %p208
      %p215 = scmp.eq.s32.totalorder %s81, 1
      %p216 = por %p214, %p215
      %p217 = scmp.ne.s32.totalorder %s209, %s212
      %p218 = scmp.eq.s32.totalorder %s81, 0
      %p219 = por %p217, %p218
      %p220 = scmp.ne.s32.totalorder %s209, %s212
      %p221 = scmp.eq.s32.totalorder %s86, 1
      %p222 = por %p220, %p221
      %p223 = scmp.ne.s32.totalorder %s212, %s213
      %p224 = scmp.eq.s32.totalorder %s86, 0
      %p225 = por %p223, %p224
      %p226 = scmp.ne.s32.totalorder %s212, %s213
      %p227 = scmp.eq.s32.totalorder %s87, 1
      %p228 = por %p226, %p227
      %p230 = scmp.ne.s32.totalorder %s213, %s229
      %p231 = scmp.eq.s32.totalorder %s87, 0
      %p232 = por %p230, %p231
      %s234 = sadd.s32 %s233, 1
      %p237 = scmp.eq.s32.totalorder %s81, 1
      %p238 = scmp.ne.s32.totalorder %s233, %s235
      %p239 = scmp.eq.s32.totalorder %s81, 0
      %p240 = por %p238, %p239
      %p241 = scmp.ne.s32.totalorder %s233, %s235
      %p242 = scmp.eq.s32.totalorder %s86, 1
      %p243 = por %p241, %p242
      %p244 = scmp.ne.s32.totalorder %s235, %s236
      %p245 = scmp.eq.s32.totalorder %s86, 0
      %p246 = por %p244, %p245
      %p247 = scmp.ne.s32.totalorder %s235, %s236
      %p248 = scmp.eq.s32.totalorder %s87, 1
      %p249 = por %p247, %p248
      %p251 = scmp.ne.s32.totalorder %s236, %s250
      %p252 = scmp.eq.s32.totalorder %s87, 0
      %p253 = por %p251, %p252
      %s255 = sadd.s32 %s254, 1
      %p258 = scmp.eq.s32.totalorder %s81, 1
      %p259 = scmp.ne.s32.totalorder %s254, %s256
      %p260 = scmp.eq.s32.totalorder %s81, 0
      %p261 = por %p259, %p260
      %p262 = scmp.ne.s32.totalorder %s254, %s256
      %p263 = scmp.eq.s32.totalorder %s86, 1
      %p264 = por %p262, %p263
      %p265 = scmp.ne.s32.totalorder %s256, %s257
      %p266 = scmp.eq.s32.totalorder %s86, 0
      %p267 = por %p265, %p266
      %p268 = scmp.ne.s32.totalorder %s256, %s257
      %p269 = scmp.eq.s32.totalorder %s87, 1
      %p270 = por %p268, %p269
      %p272 = scmp.ne.s32.totalorder %s257, %s271
      %p273 = scmp.eq.s32.totalorder %s87, 0
      %p274 = por %p272, %p273
      %s276 = sadd.s32 %s275, 1
      %p279 = scmp.eq.s32.totalorder %s81, 1
      %p280 = scmp.ne.s32.totalorder %s275, %s277
      %p281 = scmp.eq.s32.totalorder %s81, 0
      %p282 = por %p280, %p281
      %p283 = scmp.ne.s32.totalorder %s275, %s277
      %p284 = scmp.eq.s32.totalorder %s86, 1
      %p285 = por %p283, %p284
      %p286 = scmp.ne.s32.totalorder %s277, %s278
      %p287 = scmp.eq.s32.totalorder %s86, 0
      %p288 = por %p286, %p287
      %p289 = scmp.ne.s32.totalorder %s277, %s278
      %p290 = scmp.eq.s32.totalorder %s87, 1
      %p291 = por %p289, %p290
      %p293 = scmp.ne.s32.totalorder %s278, %s292
      %p294 = scmp.eq.s32.totalorder %s87, 0
      %p295 = por %p293, %p294
      %s297 = sadd.s32 %s296, 1
      %p300 = scmp.eq.s32.totalorder %s81, 1
      %p301 = scmp.ne.s32.totalorder %s296, %s298
      %p302 = scmp.eq.s32.totalorder %s81, 0
      %p303 = por %p301, %p302
      %p304 = scmp.ne.s32.totalorder %s296, %s298
      %p305 = scmp.eq.s32.totalorder %s86, 1
      %p306 = por %p304, %p305
      %p307 = scmp.ne.s32.totalorder %s298, %s299
      %p308 = scmp.eq.s32.totalorder %s86, 0
      %p309 = por %p307, %p308
      %p310 = scmp.ne.s32.totalorder %s298, %s299
      %p311 = scmp.eq.s32.totalorder %s87, 1
      %p312 = por %p310, %p311
      %p314 = scmp.ne.s32.totalorder %s299, %s313
      %p315 = scmp.eq.s32.totalorder %s87, 0
      %p316 = por %p314, %p315
      %s318 = sadd.s32 %s317, 1
      %p321 = scmp.eq.s32.totalorder %s81, 1
      %p322 = scmp.ne.s32.totalorder %s317, %s319
      %p323 = scmp.eq.s32.totalorder %s81, 0
      %p324 = por %p322, %p323
      %p325 = scmp.ne.s32.totalorder %s317, %s319
      %p326 = scmp.eq.s32.totalorder %s86, 1
      %p327 = por %p325, %p326
      %p328 = scmp.ne.s32.totalorder %s319, %s320
      %p329 = scmp.eq.s32.totalorder %s86, 0
      %p330 = por %p328, %p329
      %p331 = scmp.ne.s32.totalorder %s319, %s320
      %p332 = scmp.eq.s32.totalorder %s87, 1
      %p333 = por %p331, %p332
      %p335 = scmp.ne.s32.totalorder %s320, %s334
      %p336 = scmp.eq.s32.totalorder %s87, 0
      %p337 = por %p335, %p336
      %s339 = sadd.s32 %s338, 1
      %p342 = scmp.eq.s32.totalorder %s81, 1
      %p343 = scmp.ne.s32.totalorder %s338, %s340
      %p344 = scmp.eq.s32.totalorder %s81, 0
      %p345 = por %p343, %p344
      %p346 = scmp.ne.s32.totalorder %s338, %s340
      %p347 = scmp.eq.s32.totalorder %s86, 1
      %p348 = por %p346, %p347
      %p349 = scmp.ne.s32.totalorder %s340, %s341
      %p350 = scmp.eq.s32.totalorder %s86, 0
      %p351 = por %p349, %p350
      %p352 = scmp.ne.s32.totalorder %s340, %s341
      %p353 = scmp.eq.s32.totalorder %s87, 1
      %p354 = por %p352, %p353
      %p356 = scmp.ne.s32.totalorder %s341, %s355
      %p357 = scmp.eq.s32.totalorder %s87, 0
      %p358 = por %p356, %p357
      %s360 = sadd.s32 %s359, 1
      %p363 = scmp.eq.s32.totalorder %s81, 1
      %p364 = scmp.ne.s32.totalorder %s359, %s361
      %p365 = scmp.eq.s32.totalorder %s81, 0
      %p366 = por %p364, %p365
      %p367 = scmp.ne.s32.totalorder %s359, %s361
      %p368 = scmp.eq.s32.totalorder %s86, 1
      %p369 = por %p367, %p368
      %p370 = scmp.ne.s32.totalorder %s361, %s362
      %p371 = scmp.eq.s32.totalorder %s86, 0
      %p372 = por %p370, %p371
      %p373 = scmp.ne.s32.totalorder %s361, %s362
      %p374 = scmp.eq.s32.totalorder %s87, 1
      %p375 = por %p373, %p374
      %p377 = scmp.ne.s32.totalorder %s362, %s376
      %p378 = scmp.eq.s32.totalorder %s87, 0
      %p379 = por %p377, %p378
      %s381 = sadd.s32 %s380, 1
      %p384 = scmp.eq.s32.totalorder %s81, 1
      %p385 = scmp.ne.s32.totalorder %s380, %s382
      %p386 = scmp.eq.s32.totalorder %s81, 0
      %p387 = por %p385, %p386
      %p388 = scmp.ne.s32.totalorder %s380, %s382
      %p389 = scmp.eq.s32.totalorder %s86, 1
      %p390 = por %p388, %p389
      %p391 = scmp.ne.s32.totalorder %s382, %s383
      %p392 = scmp.eq.s32.totalorder %s86, 0
      %p393 = por %p391, %p392
      %p394 = scmp.ne.s32.totalorder %s382, %s383
      %p395 = scmp.eq.s32.totalorder %s87, 1
      %p396 = por %p394, %p395
      %p398 = scmp.ne.s32.totalorder %s383, %s397
      %p399 = scmp.eq.s32.totalorder %s87, 0
      %p400 = por %p398, %p399
      %s402 = sadd.s32 %s401, 1
      %p405 = scmp.eq.s32.totalorder %s81, 1
      %p406 = scmp.ne.s32.totalorder %s401, %s403
      %p407 = scmp.eq.s32.totalorder %s81, 0
      %p408 = por %p406, %p407
      %p409 = scmp.ne.s32.totalorder %s401, %s403
      %p410 = scmp.eq.s32.totalorder %s86, 1
      %p411 = por %p409, %p410
      %p412 = scmp.ne.s32.totalorder %s403, %s404
      %p413 = scmp.eq.s32.totalorder %s86, 0
      %p414 = por %p412, %p413
      %p415 = scmp.ne.s32.totalorder %s403, %s404
      %p416 = scmp.eq.s32.totalorder %s87, 1
      %p417 = por %p415, %p416
      %p419 = scmp.ne.s32.totalorder %s404, %s418
      %p420 = scmp.eq.s32.totalorder %s87, 0
      %p421 = por %p419, %p420
      %s423 = sadd.s32 %s422, 1
      %p426 = scmp.eq.s32.totalorder %s81, 1
      %p427 = scmp.ne.s32.totalorder %s422, %s424
      %p428 = scmp.eq.s32.totalorder %s81, 0
      %p429 = por %p427, %p428
      %p430 = scmp.ne.s32.totalorder %s422, %s424
      %p431 = scmp.eq.s32.totalorder %s86, 1
      %p432 = por %p430, %p431
      %p433 = scmp.ne.s32.totalorder %s424, %s425
      %p434 = scmp.eq.s32.totalorder %s86, 0
      %p435 = por %p433, %p434
      %p436 = scmp.ne.s32.totalorder %s424, %s425
      %p437 = scmp.eq.s32.totalorder %s87, 1
      %p438 = por %p436, %p437
      %p440 = scmp.ne.s32.totalorder %s425, %s439
      %p441 = scmp.eq.s32.totalorder %s87, 0
      %p442 = por %p440, %p441
      %s444 = sadd.s32 %s443, 1
      %p447 = scmp.eq.s32.totalorder %s81, 1
      %p448 = scmp.ne.s32.totalorder %s443, %s445
      %p449 = scmp.eq.s32.totalorder %s81, 0
      %p450 = por %p448, %p449
      %p451 = scmp.ne.s32.totalorder %s443, %s445
      %p452 = scmp.eq.s32.totalorder %s86, 1
      %p453 = por %p451, %p452
      %p454 = scmp.ne.s32.totalorder %s445, %s446
      %p455 = scmp.eq.s32.totalorder %s86, 0
      %p456 = por %p454, %p455
      %p457 = scmp.ne.s32.totalorder %s445, %s446
      %p458 = scmp.eq.s32.totalorder %s87, 1
      %p459 = por %p457, %p458
      %p461 = scmp.ne.s32.totalorder %s446, %s460
      %p462 = scmp.eq.s32.totalorder %s87, 0
      %p463 = por %p461, %p462
      %s465 = sadd.s32 %s464, 1
      %p468 = scmp.eq.s32.totalorder %s81, 1
      %p469 = scmp.ne.s32.totalorder %s464, %s466
      %p470 = scmp.eq.s32.totalorder %s81, 0
      %p471 = por %p469, %p470
      %p472 = scmp.ne.s32.totalorder %s464, %s466
      %p473 = scmp.eq.s32.totalorder %s86, 1
      %p474 = por %p472, %p473
      %p475 = scmp.ne.s32.totalorder %s466, %s467
      %p476 = scmp.eq.s32.totalorder %s86, 0
      %p477 = por %p475, %p476
      %p478 = scmp.ne.s32.totalorder %s466, %s467
      %p479 = scmp.eq.s32.totalorder %s87, 1
      %p480 = por %p478, %p479
      %p482 = scmp.ne.s32.totalorder %s467, %s481
      %p483 = scmp.eq.s32.totalorder %s87, 0
      %p484 = por %p482, %p483
      %s486 = sadd.s32 %s485, 1
      %p489 = scmp.eq.s32.totalorder %s81, 1
      %p490 = scmp.ne.s32.totalorder %s485, %s487
      %p491 = scmp.eq.s32.totalorder %s81, 0
      %p492 = por %p490, %p491
      %p493 = scmp.ne.s32.totalorder %s485, %s487
      %p494 = scmp.eq.s32.totalorder %s86, 1
      %p495 = por %p493, %p494
      %p496 = scmp.ne.s32.totalorder %s487, %s488
      %p497 = scmp.eq.s32.totalorder %s86, 0
      %p498 = por %p496, %p497
      %p499 = scmp.ne.s32.totalorder %s487, %s488
      %p500 = scmp.eq.s32.totalorder %s87, 1
      %p501 = por %p499, %p500
      %p503 = scmp.ne.s32.totalorder %s488, %s502
      %p504 = scmp.eq.s32.totalorder %s87, 0
      %p505 = por %p503, %p504
      %s507 = sadd.s32 %s506, 1
      %p510 = scmp.eq.s32.totalorder %s81, 1
      %p511 = scmp.ne.s32.totalorder %s506, %s508
      %p512 = scmp.eq.s32.totalorder %s81, 0
      %p513 = por %p511, %p512
      %p514 = scmp.ne.s32.totalorder %s506, %s508
      %p515 = scmp.eq.s32.totalorder %s86, 1
      %p516 = por %p514, %p515
      %p517 = scmp.ne.s32.totalorder %s508, %s509
      %p518 = scmp.eq.s32.totalorder %s86, 0
      %p519 = por %p517, %p518
      %p520 = scmp.ne.s32.totalorder %s508, %s509
      %p521 = scmp.eq.s32.totalorder %s87, 1
      %p522 = por %p520, %p521
      %p524 = scmp.ne.s32.totalorder %s509, %s523
      %p525 = scmp.eq.s32.totalorder %s87, 0
      %p526 = por %p524, %p525
      %s528 = sadd.s32 %s527, 1
      %p531 = scmp.eq.s32.totalorder %s81, 1
      %p532 = scmp.ne.s32.totalorder %s527, %s529
      %p533 = scmp.eq.s32.totalorder %s81, 0
      %p534 = por %p532, %p533
      %p535 = scmp.ne.s32.totalorder %s527, %s529
      %p536 = scmp.eq.s32.totalorder %s86, 1
      %p537 = por %p535, %p536
      %p538 = scmp.ne.s32.totalorder %s529, %s530
      %p539 = scmp.eq.s32.totalorder %s86, 0
      %p540 = por %p538, %p539
      %p541 = scmp.ne.s32.totalorder %s529, %s530
      %p542 = scmp.eq.s32.totalorder %s87, 1
      %p543 = por %p541, %p542
      %p545 = scmp.ne.s32.totalorder %s530, %s544
      %p546 = scmp.eq.s32.totalorder %s87, 0
      %p547 = por %p545, %p546
      %s549 = sadd.s32 %s548, 1
      %p552 = scmp.eq.s32.totalorder %s81, 1
      %p553 = scmp.ne.s32.totalorder %s548, %s550
      %p554 = scmp.eq.s32.totalorder %s81, 0
      %p555 = por %p553, %p554
      %p556 = scmp.ne.s32.totalorder %s548, %s550
      %p557 = scmp.eq.s32.totalorder %s86, 1
      %p558 = por %p556, %p557
      %p559 = scmp.ne.s32.totalorder %s550, %s551
      %p560 = scmp.eq.s32.totalorder %s86, 0
      %p561 = por %p559, %p560
      %p562 = scmp.ne.s32.totalorder %s550, %s551
      %p563 = scmp.eq.s32.totalorder %s87, 1
      %p564 = por %p562, %p563
      %p566 = scmp.ne.s32.totalorder %s551, %s565
      %p567 = scmp.eq.s32.totalorder %s87, 0
      %p568 = por %p566, %p567
      %s570 = sadd.s32 %s569, 1
      %p573 = scmp.eq.s32.totalorder %s81, 1
      %p574 = scmp.ne.s32.totalorder %s569, %s571
      %p575 = scmp.eq.s32.totalorder %s81, 0
      %p576 = por %p574, %p575
      %p577 = scmp.ne.s32.totalorder %s569, %s571
      %p578 = scmp.eq.s32.totalorder %s86, 1
      %p579 = por %p577, %p578
      %p580 = scmp.ne.s32.totalorder %s571, %s572
      %p581 = scmp.eq.s32.totalorder %s86, 0
      %p582 = por %p580, %p581
      %p583 = scmp.ne.s32.totalorder %s571, %s572
      %p584 = scmp.eq.s32.totalorder %s87, 1
      %p585 = por %p583, %p584
      %p587 = scmp.ne.s32.totalorder %s572, %s586
      %p588 = scmp.eq.s32.totalorder %s87, 0
      %p589 = por %p587, %p588
      %s591 = sadd.s32 %s590, 1
      %p594 = scmp.eq.s32.totalorder %s81, 1
      %p595 = scmp.ne.s32.totalorder %s590, %s592
      %p596 = scmp.eq.s32.totalorder %s81, 0
      %p597 = por %p595, %p596
      %p598 = scmp.ne.s32.totalorder %s590, %s592
      %p599 = scmp.eq.s32.totalorder %s86, 1
      %p600 = por %p598, %p599
      %p601 = scmp.ne.s32.totalorder %s592, %s593
      %p602 = scmp.eq.s32.totalorder %s86, 0
      %p603 = por %p601, %p602
      %p604 = scmp.ne.s32.totalorder %s592, %s593
      %p605 = scmp.eq.s32.totalorder %s87, 1
      %p606 = por %p604, %p605
      %p608 = scmp.ne.s32.totalorder %s593, %s607
      %p609 = scmp.eq.s32.totalorder %s87, 0
      %p610 = por %p608, %p609
      %s612 = sadd.s32 %s611, 1
      %p615 = scmp.eq.s32.totalorder %s81, 1
      %p616 = scmp.ne.s32.totalorder %s611, %s613
      %p617 = scmp.eq.s32.totalorder %s81, 0
      %p618 = por %p616, %p617
      %p619 = scmp.ne.s32.totalorder %s611, %s613
      %p620 = scmp.eq.s32.totalorder %s86, 1
      %p621 = por %p619, %p620
      %p622 = scmp.ne.s32.totalorder %s613, %s614
      %p623 = scmp.eq.s32.totalorder %s86, 0
      %p624 = por %p622, %p623
      %p625 = scmp.ne.s32.totalorder %s613, %s614
      %p626 = scmp.eq.s32.totalorder %s87, 1
      %p627 = por %p625, %p626
      %p629 = scmp.ne.s32.totalorder %s614, %s628
      %p630 = scmp.eq.s32.totalorder %s87, 0
      %p631 = por %p629, %p630
      %s633 = sadd.s32 %s632, 1
      %p636 = scmp.eq.s32.totalorder %s81, 1
      %p637 = scmp.ne.s32.totalorder %s632, %s634
      %p638 = scmp.eq.s32.totalorder %s81, 0
      %p639 = por %p637, %p638
      %p640 = scmp.ne.s32.totalorder %s632, %s634
      %p641 = scmp.eq.s32.totalorder %s86, 1
      %p642 = por %p640, %p641
      %p643 = scmp.ne.s32.totalorder %s634, %s635
      %p644 = scmp.eq.s32.totalorder %s86, 0
      %p645 = por %p643, %p644
      %p646 = scmp.ne.s32.totalorder %s634, %s635
      %p647 = scmp.eq.s32.totalorder %s87, 1
      %p648 = por %p646, %p647
      %p650 = scmp.ne.s32.totalorder %s635, %s649
      %p651 = scmp.eq.s32.totalorder %s87, 0
      %p652 = por %p650, %p651
      %s654 = sadd.s32 %s653, 1
      %p657 = scmp.eq.s32.totalorder %s81, 1
      %p658 = scmp.ne.s32.totalorder %s653, %s655
      %p659 = scmp.eq.s32.totalorder %s81, 0
      %p660 = por %p658, %p659
      %p661 = scmp.ne.s32.totalorder %s653, %s655
      %p662 = scmp.eq.s32.totalorder %s86, 1
      %p663 = por %p661, %p662
      %p664 = scmp.ne.s32.totalorder %s655, %s656
      %p665 = scmp.eq.s32.totalorder %s86, 0
      %p666 = por %p664, %p665
      %p667 = scmp.ne.s32.totalorder %s655, %s656
      %p668 = scmp.eq.s32.totalorder %s87, 1
      %p669 = por %p667, %p668
      %p671 = scmp.ne.s32.totalorder %s656, %s670
      %p672 = scmp.eq.s32.totalorder %s87, 0
      %p673 = por %p671, %p672
      %s675 = sadd.s32 %s674, 1
      %p678 = scmp.eq.s32.totalorder %s81, 1
      %p679 = scmp.ne.s32.totalorder %s674, %s676
      %p680 = scmp.eq.s32.totalorder %s81, 0
      %p681 = por %p679, %p680
      %p682 = scmp.ne.s32.totalorder %s674, %s676
      %p683 = scmp.eq.s32.totalorder %s86, 1
      %p684 = por %p682, %p683
      %p685 = scmp.ne.s32.totalorder %s676, %s677
      %p686 = scmp.eq.s32.totalorder %s86, 0
      %p687 = por %p685, %p686
      %p688 = scmp.ne.s32.totalorder %s676, %s677
      %p689 = scmp.eq.s32.totalorder %s87, 1
      %p690 = por %p688, %p689
      %p692 = scmp.ne.s32.totalorder %s677, %s691
      %p693 = scmp.eq.s32.totalorder %s87, 0
      %p694 = por %p692, %p693
      %s695 = ssub.s32 %s88, %s100
      %s696 = ssub.s32 %s89, %s96
      %s697 = sor.u32 %s695, %s696
      %p698 = scmp.eq.s32.totalorder %s697, 0
      %s700 = sadd.s32 %s699, 1
      %s701 = scalar_select %p698, %s699, %s700
      %p704 = pneg %p698
      %p705 = scmp.eq.s32.totalorder %s81, 1
      %p706 = por %p704, %p705
      %p707 = scmp.ne.s32.totalorder %s699, %s702
      %p708 = scmp.eq.s32.totalorder %s81, 0
      %p709 = por %p707, %p708
      %p710 = scmp.ne.s32.totalorder %s699, %s702
      %p711 = scmp.eq.s32.totalorder %s86, 1
      %p712 = por %p710, %p711
      %p713 = scmp.ne.s32.totalorder %s702, %s703
      %p714 = scmp.eq.s32.totalorder %s86, 0
      %p715 = por %p713, %p714
      %p716 = scmp.ne.s32.totalorder %s702, %s703
      %p717 = scmp.eq.s32.totalorder %s87, 1
      %p718 = por %p716, %p717
      %p720 = scmp.ne.s32.totalorder %s703, %s719
      %p721 = scmp.eq.s32.totalorder %s87, 0
      %p722 = por %p720, %p721
      %s723 = ssub.s32 %s88, %s100
      %s724 = ssub.s32 %s89, %s96
      %s725 = sor.u32 %s723, %s724
      %p726 = scmp.eq.s32.totalorder %s725, 0
      %s728 = sadd.s32 %s727, 1
      %s729 = scalar_select %p726, %s727, %s728
      %p732 = pneg %p726
      %p733 = scmp.eq.s32.totalorder %s81, 1
      %p734 = por %p732, %p733
      %p735 = scmp.ne.s32.totalorder %s727, %s730
      %p736 = scmp.eq.s32.totalorder %s81, 0
      %p737 = por %p735, %p736
      %p738 = scmp.ne.s32.totalorder %s727, %s730
      %p739 = scmp.eq.s32.totalorder %s86, 1
      %p740 = por %p738, %p739
      %p741 = scmp.ne.s32.totalorder %s730, %s731
      %p742 = scmp.eq.s32.totalorder %s86, 0
      %p743 = por %p741, %p742
      %p744 = scmp.ne.s32.totalorder %s730, %s731
      %p745 = scmp.eq.s32.totalorder %s87, 1
      %p746 = por %p744, %p745
      %p748 = scmp.ne.s32.totalorder %s731, %s747
      %p749 = scmp.eq.s32.totalorder %s87, 0
      %p750 = por %p748, %p749
      %s751 = ssub.s32 %s88, %s100
      %s752 = ssub.s32 %s89, %s96
      %s753 = sor.u32 %s751, %s752
      %p754 = scmp.eq.s32.totalorder %s753, 0
      %s756 = sadd.s32 %s755, 1
      %s757 = scalar_select %p754, %s755, %s756
      %p760 = pneg %p754
      %p761 = scmp.eq.s32.totalorder %s81, 1
      %p762 = por %p760, %p761
      %p763 = scmp.ne.s32.totalorder %s755, %s758
      %p764 = scmp.eq.s32.totalorder %s81, 0
      %p765 = por %p763, %p764
      %p766 = scmp.ne.s32.totalorder %s755, %s758
      %p767 = scmp.eq.s32.totalorder %s86, 1
      %p768 = por %p766, %p767
      %p769 = scmp.ne.s32.totalorder %s758, %s759
      %p770 = scmp.eq.s32.totalorder %s86, 0
      %p771 = por %p769, %p770
      %p772 = scmp.ne.s32.totalorder %s758, %s759
      %p773 = scmp.eq.s32.totalorder %s87, 1
      %p774 = por %p772, %p773
      %p776 = scmp.ne.s32.totalorder %s759, %s775
      %p777 = scmp.eq.s32.totalorder %s87, 0
      %p778 = por %p776, %p777
      %p779 = scmp.le.s32.totalorder 1, %s81
      %p780 = scmp.lt.s32.totalorder %s81, 3
      %p781 = pnand %p779, %p780
      %p782 = pneg %p781
      // Predicated region
      $region9: #{tpu_custom_call.1} parent=5 // pred_check
        _
      $region10: #{tpu_custom_call.1} parent=5 // pred_check_branch
        %784 = sbr.rel (%p781) target = $region12
      $region11: #{tpu_custom_call.1} parent=5 // pred_region
        %s785 = ssub.s32 %s81, 1
        // Predicated region
        $region13: #{tpu_custom_call.1} parent=11 // pred_check
          %p786 = pneg %p199
        $region14: #{tpu_custom_call.1} parent=11 // pred_check_branch
          %788 = sbr.rel (%p786) target = $region16
        $region15: #{tpu_custom_call.1} parent=11 // pred_region
          %790 = vsyncadd [#allocation3], 0
          %s791 = smul.addr %s91, 8
          %s792 = scalar_lea.hbm %s7, %s791
          %s794 = sshll.u32 %s792, 4
          %s795 = int_to_ptr.hbm [resolvable:$true] %s794
          %s796 = sshll.u32 [#allocation2], 4
          %s797 = int_to_ptr.vmem [resolvable:$true] %s796
          %799 = dma.hbm_to_vmem [thread:$0]  %s795, 128, %s797, [#allocation3]
        $region16: #{tpu_custom_call.1} parent=11 // pred_fallthru
          _
        // Predicated region
        $region17: #{tpu_custom_call.1} parent=11 // pred_check
          %p800 = pneg %p246
        $region18: #{tpu_custom_call.1} parent=11 // pred_check_branch
          %802 = sbr.rel (%p800) target = $region20
        $region19: #{tpu_custom_call.1} parent=11 // pred_region
          %804 = vsyncadd [#allocation6], 0
          %s805 = sshll.u32 %s11, 4
          %s806 = int_to_ptr.hbm [resolvable:$true] %s805
          %s807 = sshll.u32 [#allocation5], 4
          %s808 = int_to_ptr.vmem [resolvable:$true] %s807
          %813 = dma.hbm_to_vmem [thread:$0]  %s806, 256, %s808, [#allocation6], 64, 64, 4
        $region20: #{tpu_custom_call.1} parent=11 // pred_fallthru
          _
        // Predicated region
        $region21: #{tpu_custom_call.1} parent=11 // pred_check
          %p814 = pneg %p267
        $region22: #{tpu_custom_call.1} parent=11 // pred_check_branch
          %816 = sbr.rel (%p814) target = $region24
        $region23: #{tpu_custom_call.1} parent=11 // pred_region
          %818 = vsyncadd [#allocation6], 0
          %s820 = sshll.u32 %s13, 4
          %s821 = int_to_ptr.hbm [resolvable:$true] %s820
          %s822 = sshll.u32 [#allocation7], 4
          %s823 = int_to_ptr.vmem [resolvable:$true] %s822
          %825 = dma.hbm_to_vmem [thread:$0]  %s821, 16, %s823, [#allocation6]
        $region24: #{tpu_custom_call.1} parent=11 // pred_fallthru
          _
        // Predicated region
        $region25: #{tpu_custom_call.1} parent=11 // pred_check
          %p826 = pneg %p288
        $region26: #{tpu_custom_call.1} parent=11 // pred_check_branch
          %828 = sbr.rel (%p826) target = $region28
        $region27: #{tpu_custom_call.1} parent=11 // pred_region
          %830 = vsyncadd [#allocation9], 0
          %s831 = sshll.u32 %s15, 4
          %s832 = int_to_ptr.hbm [resolvable:$true] %s831
          %s833 = sshll.u32 [#allocation8], 4
          %s834 = int_to_ptr.vmem [resolvable:$true] %s833
          %839 = dma.hbm_to_vmem [thread:$0]  %s832, 256, %s834, [#allocation9], 64, 64, 4
        $region28: #{tpu_custom_call.1} parent=11 // pred_fallthru
          _
        // Predicated region
        $region29: #{tpu_custom_call.1} parent=11 // pred_check
          %p840 = pneg %p309
        $region30: #{tpu_custom_call.1} parent=11 // pred_check_branch
          %842 = sbr.rel (%p840) target = $region32
        $region31: #{tpu_custom_call.1} parent=11 // pred_region
          %844 = vsyncadd [#allocation9], 0
          %s846 = sshll.u32 %s17, 4
          %s847 = int_to_ptr.hbm [resolvable:$true] %s846
          %s848 = sshll.u32 [#allocation10], 4
          %s849 = int_to_ptr.vmem [resolvable:$true] %s848
          %851 = dma.hbm_to_vmem [thread:$0]  %s847, 16, %s849, [#allocation9]
        $region32: #{tpu_custom_call.1} parent=11 // pred_fallthru
          _
        // Predicated region
        $region33: #{tpu_custom_call.1} parent=11 // pred_check
          %p852 = pneg %p330
        $region34: #{tpu_custom_call.1} parent=11 // pred_check_branch
          %854 = sbr.rel (%p852) target = $region36
        $region35: #{tpu_custom_call.1} parent=11 // pred_region
          %856 = vsyncadd [#allocation12], 0
          %s857 = sshll.u32 %s19, 4
          %s858 = int_to_ptr.hbm [resolvable:$true] %s857
          %s859 = sshll.u32 [#allocation11], 4
          %s860 = int_to_ptr.vmem [resolvable:$true] %s859
          %865 = dma.hbm_to_vmem [thread:$0]  %s858, 256, %s860, [#allocation12], 64, 64, 4
        $region36: #{tpu_custom_call.1} parent=11 // pred_fallthru
          _
        // Predicated region
        $region37: #{tpu_custom_call.1} parent=11 // pred_check
          %p866 = pneg %p351
        $region38: #{tpu_custom_call.1} parent=11 // pred_check_branch
          %868 = sbr.rel (%p866) target = $region40
        $region39: #{tpu_custom_call.1} parent=11 // pred_region
          %870 = vsyncadd [#allocation12], 0
          %s872 = sshll.u32 %s21, 4
          %s873 = int_to_ptr.hbm [resolvable:$true] %s872
          %s874 = sshll.u32 [#allocation13], 4
          %s875 = int_to_ptr.vmem [resolvable:$true] %s874
          %877 = dma.hbm_to_vmem [thread:$0]  %s873, 16, %s875, [#allocation12]
        $region40: #{tpu_custom_call.1} parent=11 // pred_fallthru
          _
        // Predicated region
        $region41: #{tpu_custom_call.1} parent=11 // pred_check
          %p878 = pneg %p372
        $region42: #{tpu_custom_call.1} parent=11 // pred_check_branch
          %880 = sbr.rel (%p878) target = $region44
        $region43: #{tpu_custom_call.1} parent=11 // pred_region
          %882 = vsyncadd [#allocation15], 0
          %s883 = sshll.u32 %s23, 4
          %s884 = int_to_ptr.hbm [resolvable:$true] %s883
          %s885 = sshll.u32 [#allocation14], 4
          %s886 = int_to_ptr.vmem [resolvable:$true] %s885
          %891 = dma.hbm_to_vmem [thread:$0]  %s884, 256, %s886, [#allocation15], 64, 64, 4
        $region44: #{tpu_custom_call.1} parent=11 // pred_fallthru
          _
        // Predicated region
        $region45: #{tpu_custom_call.1} parent=11 // pred_check
          %p892 = pneg %p393
        $region46: #{tpu_custom_call.1} parent=11 // pred_check_branch
          %894 = sbr.rel (%p892) target = $region48
        $region47: #{tpu_custom_call.1} parent=11 // pred_region
          %896 = vsyncadd [#allocation15], 0
          %s898 = sshll.u32 %s25, 4
          %s899 = int_to_ptr.hbm [resolvable:$true] %s898
          %s900 = sshll.u32 [#allocation16], 4
          %s901 = int_to_ptr.vmem [resolvable:$true] %s900
          %903 = dma.hbm_to_vmem [thread:$0]  %s899, 16, %s901, [#allocation15]
        $region48: #{tpu_custom_call.1} parent=11 // pred_fallthru
          _
        // Predicated region
        $region49: #{tpu_custom_call.1} parent=11 // pred_check
          %p904 = pneg %p414
        $region50: #{tpu_custom_call.1} parent=11 // pred_check_branch
          %906 = sbr.rel (%p904) target = $region52
        $region51: #{tpu_custom_call.1} parent=11 // pred_region
          %908 = vsyncadd [#allocation18], 0
          %s909 = sshll.u32 %s27, 4
          %s910 = int_to_ptr.hbm [resolvable:$true] %s909
          %s911 = sshll.u32 [#allocation17], 4
          %s912 = int_to_ptr.vmem [resolvable:$true] %s911
          %917 = dma.hbm_to_vmem [thread:$0]  %s910, 256, %s912, [#allocation18], 64, 64, 4
        $region52: #{tpu_custom_call.1} parent=11 // pred_fallthru
          _
        // Predicated region
        $region53: #{tpu_custom_call.1} parent=11 // pred_check
          %p918 = pneg %p435
        $region54: #{tpu_custom_call.1} parent=11 // pred_check_branch
          %920 = sbr.rel (%p918) target = $region56
        $region55: #{tpu_custom_call.1} parent=11 // pred_region
          %922 = vsyncadd [#allocation18], 0
          %s924 = sshll.u32 %s29, 4
          %s925 = int_to_ptr.hbm [resolvable:$true] %s924
          %s926 = sshll.u32 [#allocation19], 4
          %s927 = int_to_ptr.vmem [resolvable:$true] %s926
          %929 = dma.hbm_to_vmem [thread:$0]  %s925, 16, %s927, [#allocation18]
        $region56: #{tpu_custom_call.1} parent=11 // pred_fallthru
          _
        // Predicated region
        $region57: #{tpu_custom_call.1} parent=11 // pred_check
          %p930 = pneg %p456
        $region58: #{tpu_custom_call.1} parent=11 // pred_check_branch
          %932 = sbr.rel (%p930) target = $region60
        $region59: #{tpu_custom_call.1} parent=11 // pred_region
          %934 = vsyncadd [#allocation21], 0
          %s935 = sshll.u32 %s31, 4
          %s936 = int_to_ptr.hbm [resolvable:$true] %s935
          %s937 = sshll.u32 [#allocation20], 4
          %s938 = int_to_ptr.vmem [resolvable:$true] %s937
          %943 = dma.hbm_to_vmem [thread:$0]  %s936, 256, %s938, [#allocation21], 64, 64, 4
        $region60: #{tpu_custom_call.1} parent=11 // pred_fallthru
          _
        // Predicated region
        $region61: #{tpu_custom_call.1} parent=11 // pred_check
          %p944 = pneg %p477
        $region62: #{tpu_custom_call.1} parent=11 // pred_check_branch
          %946 = sbr.rel (%p944) target = $region64
        $region63: #{tpu_custom_call.1} parent=11 // pred_region
          %948 = vsyncadd [#allocation21], 0
          %s950 = sshll.u32 %s33, 4
          %s951 = int_to_ptr.hbm [resolvable:$true] %s950
          %s952 = sshll.u32 [#allocation22], 4
          %s953 = int_to_ptr.vmem [resolvable:$true] %s952
          %955 = dma.hbm_to_vmem [thread:$0]  %s951, 16, %s953, [#allocation21]
        $region64: #{tpu_custom_call.1} parent=11 // pred_fallthru
          _
        // Predicated region
        $region65: #{tpu_custom_call.1} parent=11 // pred_check
          %p956 = pneg %p498
        $region66: #{tpu_custom_call.1} parent=11 // pred_check_branch
          %958 = sbr.rel (%p956) target = $region68
        $region67: #{tpu_custom_call.1} parent=11 // pred_region
          %960 = vsyncadd [#allocation24], 0
          %s961 = sshll.u32 %s35, 4
          %s962 = int_to_ptr.hbm [resolvable:$true] %s961
          %s963 = sshll.u32 [#allocation23], 4
          %s964 = int_to_ptr.vmem [resolvable:$true] %s963
          %969 = dma.hbm_to_vmem [thread:$0]  %s962, 256, %s964, [#allocation24], 64, 64, 4
        $region68: #{tpu_custom_call.1} parent=11 // pred_fallthru
          _
        // Predicated region
        $region69: #{tpu_custom_call.1} parent=11 // pred_check
          %p970 = pneg %p519
        $region70: #{tpu_custom_call.1} parent=11 // pred_check_branch
          %972 = sbr.rel (%p970) target = $region72
        $region71: #{tpu_custom_call.1} parent=11 // pred_region
          %974 = vsyncadd [#allocation24], 0
          %s976 = sshll.u32 %s37, 4
          %s977 = int_to_ptr.hbm [resolvable:$true] %s976
          %s978 = sshll.u32 [#allocation25], 4
          %s979 = int_to_ptr.vmem [resolvable:$true] %s978
          %981 = dma.hbm_to_vmem [thread:$0]  %s977, 16, %s979, [#allocation24]
        $region72: #{tpu_custom_call.1} parent=11 // pred_fallthru
          _
        // Predicated region
        $region73: #{tpu_custom_call.1} parent=11 // pred_check
          %p982 = pneg %p540
        $region74: #{tpu_custom_call.1} parent=11 // pred_check_branch
          %984 = sbr.rel (%p982) target = $region76
        $region75: #{tpu_custom_call.1} parent=11 // pred_region
          _
        $region76: #{tpu_custom_call.1} parent=11 // pred_fallthru
          _
        // Predicated region
        $region77: #{tpu_custom_call.1} parent=11 // pred_check
          %p985 = pneg %p561
        $region78: #{tpu_custom_call.1} parent=11 // pred_check_branch
          %987 = sbr.rel (%p985) target = $region80
        $region79: #{tpu_custom_call.1} parent=11 // pred_region
          _
        $region80: #{tpu_custom_call.1} parent=11 // pred_fallthru
          _
        // Predicated region
        $region81: #{tpu_custom_call.1} parent=11 // pred_check
          %p988 = pneg %p582
        $region82: #{tpu_custom_call.1} parent=11 // pred_check_branch
          %990 = sbr.rel (%p988) target = $region84
        $region83: #{tpu_custom_call.1} parent=11 // pred_region
          _
        $region84: #{tpu_custom_call.1} parent=11 // pred_fallthru
          _
        // Predicated region
        $region85: #{tpu_custom_call.1} parent=11 // pred_check
          %p991 = pneg %p603
        $region86: #{tpu_custom_call.1} parent=11 // pred_check_branch
          %993 = sbr.rel (%p991) target = $region88
        $region87: #{tpu_custom_call.1} parent=11 // pred_region
          _
        $region88: #{tpu_custom_call.1} parent=11 // pred_fallthru
          _
        // Predicated region
        $region89: #{tpu_custom_call.1} parent=11 // pred_check
          %p994 = pneg %p624
        $region90: #{tpu_custom_call.1} parent=11 // pred_check_branch
          %996 = sbr.rel (%p994) target = $region92
        $region91: #{tpu_custom_call.1} parent=11 // pred_region
          _
        $region92: #{tpu_custom_call.1} parent=11 // pred_fallthru
          _
        // Predicated region
        $region93: #{tpu_custom_call.1} parent=11 // pred_check
          %p997 = pneg %p645
        $region94: #{tpu_custom_call.1} parent=11 // pred_check_branch
          %999 = sbr.rel (%p997) target = $region96
        $region95: #{tpu_custom_call.1} parent=11 // pred_region
          _
        $region96: #{tpu_custom_call.1} parent=11 // pred_fallthru
          _
        // Predicated region
        $region97: #{tpu_custom_call.1} parent=11 // pred_check
          %p1000 = pneg %p666
        $region98: #{tpu_custom_call.1} parent=11 // pred_check_branch
          %1002 = sbr.rel (%p1000) target = $region100
        $region99: #{tpu_custom_call.1} parent=11 // pred_region
          _
        $region100: #{tpu_custom_call.1} parent=11 // pred_fallthru
          _
        // Predicated region
        $region101: #{tpu_custom_call.1} parent=11 // pred_check
          %p1003 = pneg %p687
        $region102: #{tpu_custom_call.1} parent=11 // pred_check_branch
          %1005 = sbr.rel (%p1003) target = $region104
        $region103: #{tpu_custom_call.1} parent=11 // pred_region
          %1007 = vsyncadd [#allocation27], 0
          %s1009 = sshll.u32 %s53, 4
          %s1010 = int_to_ptr.hbm [resolvable:$true] %s1009
          %s1011 = sshll.u32 [#allocation26], 4
          %s1012 = int_to_ptr.vmem [resolvable:$true] %s1011
          %1014 = dma.hbm_to_vmem [thread:$0]  %s1010, 16, %s1012, [#allocation27]
        $region104: #{tpu_custom_call.1} parent=11 // pred_fallthru
          _
      $region12: #{tpu_custom_call.1} parent=5 // pred_fallthru
        _
      %p1015 = scmp.lt.s32.totalorder %s81, 2
      // Predicated region
      $region105: #{tpu_custom_call.1} parent=5 // pred_check
        %p1016 = pneg %p1015
      $region106: #{tpu_custom_call.1} parent=5 // pred_check_branch
        %1018 = sbr.rel (%p1016) target = $region108
      $region107: #{tpu_custom_call.1} parent=5 // pred_region
        // Predicated region
        $region109: #{tpu_custom_call.1} parent=107 // pred_check
          %p1019 = pneg %p115
        $region110: #{tpu_custom_call.1} parent=107 // pred_check_branch
          %1021 = sbr.rel (%p1019) target = $region112
        $region111: #{tpu_custom_call.1} parent=107 // pred_region
          %p1022 = scmp.lt.s32.totalorder %s88, 1
          %s1023 = scalar_select %p1022, %s88, 1
          %p1024 = scmp.lt.s32.totalorder %s89, 0
          %s1025 = scalar_select %p1024, %s89, 0
          %s1026 = sadd.s32 %s1025, %s1023
          %s1027 = smul.addr %s1026, 8
          %s1028 = scalar_lea.vmem %s1, %s1027
        $region112: #{tpu_custom_call.1} parent=107 // pred_fallthru
          _
        // Predicated region
        $region113: #{tpu_custom_call.1} parent=107 // pred_check
          %p1029 = pneg %p141
        $region114: #{tpu_custom_call.1} parent=107 // pred_check_branch
          %1031 = sbr.rel (%p1029) target = $region116
        $region115: #{tpu_custom_call.1} parent=107 // pred_region
          %p1032 = scmp.lt.s32.totalorder %s88, 1
          %s1033 = scalar_select %p1032, %s88, 1
          %s1034 = smul.addr %s1033, 8
          %s1035 = scalar_lea.vmem %s3, %s1034
        $region116: #{tpu_custom_call.1} parent=107 // pred_fallthru
          _
        // Predicated region
        $region117: #{tpu_custom_call.1} parent=107 // pred_check
          %p1036 = pneg %p167
        $region118: #{tpu_custom_call.1} parent=107 // pred_check_branch
          %1038 = sbr.rel (%p1036) target = $region120
        $region119: #{tpu_custom_call.1} parent=107 // pred_region
          %p1039 = scmp.lt.s32.totalorder %s88, 1
          %s1040 = scalar_select %p1039, %s88, 1
          %s1041 = smul.addr %s1040, 8
          %s1042 = scalar_lea.vmem %s5, %s1041
        $region120: #{tpu_custom_call.1} parent=107 // pred_fallthru
          _
        // Predicated region
        $region121: #{tpu_custom_call.1} parent=107 // pred_check
          %p1043 = pneg %p219
        $region122: #{tpu_custom_call.1} parent=107 // pred_check_branch
          %1045 = sbr.rel (%p1043) target = $region124
        $region123: #{tpu_custom_call.1} parent=107 // pred_region
          %p1046 = scmp.lt.s32.totalorder %s88, 1
          %s1047 = scalar_select %p1046, %s88, 1
          %s1048 = scalar_lea.vmem %s9, %s1047
        $region124: #{tpu_custom_call.1} parent=107 // pred_fallthru
          _
      $region108: #{tpu_custom_call.1} parent=5 // pred_fallthru
        _
      %p1049 = scmp.le.s32.totalorder 1, %s81
      %p1050 = scmp.lt.s32.totalorder %s81, 3
      %p1051 = pnand %p1049, %p1050
      %p1052 = pneg %p1051
      // Predicated region
      $region125: #{tpu_custom_call.1} parent=5 // pred_check
        _
      $region126: #{tpu_custom_call.1} parent=5 // pred_check_branch
        %1054 = sbr.rel (%p1051) target = $region128
      $region127: #{tpu_custom_call.1} parent=5 // pred_region
        %s1055 = ssub.s32 %s81, 1
        // Predicated region
        $region129: #{tpu_custom_call.1} parent=127 // pred_check
          %p1056 = pneg %p199
        $region130: #{tpu_custom_call.1} parent=127 // pred_check_branch
          %1058 = sbr.rel (%p1056) target = $region132
        $region131: #{tpu_custom_call.1} parent=127 // pred_region
          %1060 = dma.done [#allocation3], 128
        $region132: #{tpu_custom_call.1} parent=127 // pred_fallthru
          _
        // Predicated region
        $region133: #{tpu_custom_call.1} parent=127 // pred_check
          %p1061 = pneg %p246
        $region134: #{tpu_custom_call.1} parent=127 // pred_check_branch
          %1063 = sbr.rel (%p1061) target = $region136
        $region135: #{tpu_custom_call.1} parent=127 // pred_region
          %1065 = dma.done [#allocation6], 256
        $region136: #{tpu_custom_call.1} parent=127 // pred_fallthru
          _
        // Predicated region
        $region137: #{tpu_custom_call.1} parent=127 // pred_check
          %p1066 = pneg %p267
        $region138: #{tpu_custom_call.1} parent=127 // pred_check_branch
          %1068 = sbr.rel (%p1066) target = $region140
        $region139: #{tpu_custom_call.1} parent=127 // pred_region
          %1070 = dma.done [#allocation6], 16
        $region140: #{tpu_custom_call.1} parent=127 // pred_fallthru
          _
        // Predicated region
        $region141: #{tpu_custom_call.1} parent=127 // pred_check
          %p1071 = pneg %p288
        $region142: #{tpu_custom_call.1} parent=127 // pred_check_branch
          %1073 = sbr.rel (%p1071) target = $region144
        $region143: #{tpu_custom_call.1} parent=127 // pred_region
          %1075 = dma.done [#allocation9], 256
        $region144: #{tpu_custom_call.1} parent=127 // pred_fallthru
          _
        // Predicated region
        $region145: #{tpu_custom_call.1} parent=127 // pred_check
          %p1076 = pneg %p309
        $region146: #{tpu_custom_call.1} parent=127 // pred_check_branch
          %1078 = sbr.rel (%p1076) target = $region148
        $region147: #{tpu_custom_call.1} parent=127 // pred_region
          %1080 = dma.done [#allocation9], 16
        $region148: #{tpu_custom_call.1} parent=127 // pred_fallthru
          _
        // Predicated region
        $region149: #{tpu_custom_call.1} parent=127 // pred_check
          %p1081 = pneg %p330
        $region150: #{tpu_custom_call.1} parent=127 // pred_check_branch
          %1083 = sbr.rel (%p1081) target = $region152
        $region151: #{tpu_custom_call.1} parent=127 // pred_region
          %1085 = dma.done [#allocation12], 256
        $region152: #{tpu_custom_call.1} parent=127 // pred_fallthru
          _
        // Predicated region
        $region153: #{tpu_custom_call.1} parent=127 // pred_check
          %p1086 = pneg %p351
        $region154: #{tpu_custom_call.1} parent=127 // pred_check_branch
          %1088 = sbr.rel (%p1086) target = $region156
        $region155: #{tpu_custom_call.1} parent=127 // pred_region
          %1090 = dma.done [#allocation12], 16
        $region156: #{tpu_custom_call.1} parent=127 // pred_fallthru
          _
        // Predicated region
        $region157: #{tpu_custom_call.1} parent=127 // pred_check
          %p1091 = pneg %p372
        $region158: #{tpu_custom_call.1} parent=127 // pred_check_branch
          %1093 = sbr.rel (%p1091) target = $region160
        $region159: #{tpu_custom_call.1} parent=127 // pred_region
          %1095 = dma.done [#allocation15], 256
        $region160: #{tpu_custom_call.1} parent=127 // pred_fallthru
          _
        // Predicated region
        $region161: #{tpu_custom_call.1} parent=127 // pred_check
          %p1096 = pneg %p393
        $region162: #{tpu_custom_call.1} parent=127 // pred_check_branch
          %1098 = sbr.rel (%p1096) target = $region164
        $region163: #{tpu_custom_call.1} parent=127 // pred_region
          %1100 = dma.done [#allocation15], 16
        $region164: #{tpu_custom_call.1} parent=127 // pred_fallthru
          _
        // Predicated region
        $region165: #{tpu_custom_call.1} parent=127 // pred_check
          %p1101 = pneg %p414
        $region166: #{tpu_custom_call.1} parent=127 // pred_check_branch
          %1103 = sbr.rel (%p1101) target = $region168
        $region167: #{tpu_custom_call.1} parent=127 // pred_region
          %1105 = dma.done [#allocation18], 256
        $region168: #{tpu_custom_call.1} parent=127 // pred_fallthru
          _
        // Predicated region
        $region169: #{tpu_custom_call.1} parent=127 // pred_check
          %p1106 = pneg %p435
        $region170: #{tpu_custom_call.1} parent=127 // pred_check_branch
          %1108 = sbr.rel (%p1106) target = $region172
        $region171: #{tpu_custom_call.1} parent=127 // pred_region
          %1110 = dma.done [#allocation18], 16
        $region172: #{tpu_custom_call.1} parent=127 // pred_fallthru
          _
        // Predicated region
        $region173: #{tpu_custom_call.1} parent=127 // pred_check
          %p1111 = pneg %p456
        $region174: #{tpu_custom_call.1} parent=127 // pred_check_branch
          %1113 = sbr.rel (%p1111) target = $region176
        $region175: #{tpu_custom_call.1} parent=127 // pred_region
          %1115 = dma.done [#allocation21], 256
        $region176: #{tpu_custom_call.1} parent=127 // pred_fallthru
          _
        // Predicated region
        $region177: #{tpu_custom_call.1} parent=127 // pred_check
          %p1116 = pneg %p477
        $region178: #{tpu_custom_call.1} parent=127 // pred_check_branch
          %1118 = sbr.rel (%p1116) target = $region180
        $region179: #{tpu_custom_call.1} parent=127 // pred_region
          %1120 = dma.done [#allocation21], 16
        $region180: #{tpu_custom_call.1} parent=127 // pred_fallthru
          _
        // Predicated region
        $region181: #{tpu_custom_call.1} parent=127 // pred_check
          %p1121 = pneg %p498
        $region182: #{tpu_custom_call.1} parent=127 // pred_check_branch
          %1123 = sbr.rel (%p1121) target = $region184
        $region183: #{tpu_custom_call.1} parent=127 // pred_region
          %1125 = dma.done [#allocation24], 256
        $region184: #{tpu_custom_call.1} parent=127 // pred_fallthru
          _
        // Predicated region
        $region185: #{tpu_custom_call.1} parent=127 // pred_check
          %p1126 = pneg %p519
        $region186: #{tpu_custom_call.1} parent=127 // pred_check_branch
          %1128 = sbr.rel (%p1126) target = $region188
        $region187: #{tpu_custom_call.1} parent=127 // pred_region
          %1130 = dma.done [#allocation24], 16
        $region188: #{tpu_custom_call.1} parent=127 // pred_fallthru
          _
        // Predicated region
        $region189: #{tpu_custom_call.1} parent=127 // pred_check
          %p1131 = pneg %p687
        $region190: #{tpu_custom_call.1} parent=127 // pred_check_branch
          %1133 = sbr.rel (%p1131) target = $region192
        $region191: #{tpu_custom_call.1} parent=127 // pred_region
          %1135 = dma.done [#allocation27], 16
        $region192: #{tpu_custom_call.1} parent=127 // pred_fallthru
          _
        %p1136 = scmp.lt.s32.totalorder %s90, 1
        %s1137 = scalar_select %p1136, %s90, 1
        %p1138 = scmp.lt.s32.totalorder %s91, 0
        %s1139 = scalar_select %p1138, %s91, 0
        %s1140 = sadd.s32 %s1139, %s1137
        %s1141 = smul.addr %s1140, 8
        %s1142 = scalar_lea.vmem %s1, %s1141
        %p1143 = pneg %p121
        %p1144 = pneg %p118
        %p1145 = scmp.lt.s32.totalorder %s90, 1
        %s1146 = scalar_select %p1145, %s90, 1
        %s1147 = smul.addr %s1146, 8
        %s1148 = scalar_lea.vmem %s3, %s1147
        %p1149 = pneg %p147
        %p1150 = pneg %p144
        %p1151 = scmp.lt.s32.totalorder %s90, 1
        %s1152 = scalar_select %p1151, %s90, 1
        %s1153 = smul.addr %s1152, 8
        %s1154 = scalar_lea.vmem %s5, %s1153
        %p1155 = pneg %p173
        %p1156 = pneg %p170
        %p1157 = pneg %p199
        %p1158 = pneg %p196
        %p1159 = scmp.lt.s32.totalorder %s90, 1
        %s1160 = scalar_select %p1159, %s90, 1
        %s1161 = scalar_lea.vmem %s9, %s1160
        %p1162 = pneg %p225
        %p1163 = pneg %p222
        %p1164 = pneg %p246
        %p1165 = pneg %p243
        %p1166 = pneg %p267
        %p1167 = pneg %p264
        %p1168 = pneg %p288
        %p1169 = pneg %p285
        %p1170 = pneg %p309
        %p1171 = pneg %p306
        %p1172 = pneg %p330
        %p1173 = pneg %p327
        %p1174 = pneg %p351
        %p1175 = pneg %p348
        %p1176 = pneg %p372
        %p1177 = pneg %p369
        %p1178 = pneg %p393
        %p1179 = pneg %p390
        %p1180 = pneg %p414
        %p1181 = pneg %p411
        %p1182 = pneg %p435
        %p1183 = pneg %p432
        %p1184 = pneg %p456
        %p1185 = pneg %p453
        %p1186 = pneg %p477
        %p1187 = pneg %p474
        %p1188 = pneg %p498
        %p1189 = pneg %p495
        %p1190 = pneg %p519
        %p1191 = pneg %p516
        %p1192 = pneg %p540
        %p1193 = pneg %p537
        %p1194 = pneg %p561
        %p1195 = pneg %p558
        %p1196 = pneg %p582
        %p1197 = pneg %p579
        %p1198 = pneg %p603
        %p1199 = pneg %p600
        %p1200 = pneg %p624
        %p1201 = pneg %p621
        %p1202 = pneg %p645
        %p1203 = pneg %p642
        %p1204 = pneg %p666
        %p1205 = pneg %p663
        %p1206 = pneg %p687
        %p1207 = pneg %p684
        %p1208 = pneg %p715
        %p1209 = pneg %p712
        %s1210 = sand.u32 %s702, 1
        %s1211 = scalar_lea.sflag [#allocation4], %s1210
        %s1212 = sand.u32 %s702, 1
        %s1213 = smul.addr %s1212, 8
        %s1214 = scalar_lea.vmem [#allocation28], %s1213
        %p1215 = pneg %p743
        %p1216 = pneg %p740
        %s1217 = sand.u32 %s86, 1
        %s1218 = scalar_lea.sflag [#allocation30], %s1217
        %s1219 = sand.u32 %s730, 1
        %s1220 = smul.addr %s1219, 8
        %s1221 = scalar_lea.vmem [#allocation29], %s1220
        %p1222 = pneg %p771
        %p1223 = pneg %p768
        %s1224 = sand.u32 %s86, 1
        %s1225 = scalar_lea.sflag [#allocation30], %s1224
        %s1226 = sand.u32 %s758, 1
        %s1227 = smul.addr %s1226, 8
        %s1228 = scalar_lea.vmem [#allocation31], %s1227
        %p1229 = scmp.lt.s32.totalorder %s90, 1
        %s1230 = scalar_select %p1229, %s90, 1
        %p1231 = scmp.lt.s32.totalorder %s91, 0
        %s1232 = scalar_select %p1231, %s91, 0
        %s1233 = sadd.s32 %s1232, %s1230
        %s1234 = smul.addr %s1233, 8
        %s1235 = scalar_lea.vmem %s1, %s1234
        %p1236 = scmp.lt.s32.totalorder %s90, 1
        %s1237 = scalar_select %p1236, %s90, 1
        %s1238 = smul.addr %s1237, 8
        %s1239 = scalar_lea.vmem %s3, %s1238
        %p1240 = scmp.lt.s32.totalorder %s90, 1
        %s1241 = scalar_select %p1240, %s90, 1
        %s1242 = smul.addr %s1241, 8
        %s1243 = scalar_lea.vmem %s5, %s1242
        %p1244 = scmp.lt.s32.totalorder %s90, 1
        %s1245 = scalar_select %p1244, %s90, 1
        %s1246 = scalar_lea.vmem %s9, %s1245
        %v1248 = vld [vmem:[%s1235] sm:$0xff]
        %v1249 = vld [vmem:[%s1239] sm:$0xff]
        %v1250 = vld [vmem:[%s1243] sm:$0xff]
        %v1251 = vld [vmem:[#allocation2] sm:$0xff]
        %v1252 = vld [vmem:[%s1246] sm:$0x1]
        %v1253 = vpack.c.bf16 %v1248, %v1248
        %v1254 = vld [vmem:[#allocation5] sm:$0xf]
        %v1255 = vld [vmem:[#allocation5 + $0x4] sm:$0xf]
        %v1256 = vld [vmem:[#allocation5 + $0x8] sm:$0xf]
        %v1257 = vld [vmem:[#allocation5 + $0xc] sm:$0xf]
        %v1258 = vld [vmem:[#allocation7] sm:$0x1]
        %v1260 = vperm.slane %v1258, 0
        %v1266 = vunpack.c.l.b16 %v1254
        %v1267 = vunpack.c.l.b16 %v1255
        %v1268 = vunpack.c.l.b16 %v1256
        %v1269 = vunpack.c.l.b16 %v1257
        %v1270 = vpack.c.b16 %v1267, %v1266
        %v1271 = vpack.c.b16 %v1269, %v1268
        %vm1274 = vcmask 261120
        %v1276 = vsel %vm1274, %v1253, 0
        %1278 = vmatpush.bf16.msra.mxu0 0
        %1279 = vmatpush.bf16.msra.mxu0 0
        %1280 = vmatpush.bf16.msra.mxu0 0
        %1281 = vmatpush.bf16.msra.mxu0 0
        %1282 = vmatpush.bf16.msra.mxu0 0
        %1283 = vmatpush.bf16.msra.mxu0 0
        %1284 = vmatpush.bf16.msra.mxu0 %v1271
        %1285 = vmatpush.bf16.msra.mxu0 %v1270
        %1286 = vmatmul.bf16.gmra.mxu0 %v1276
        %v1287 = vpop.f32.mrf.mxu0
        %v1288 = vadd.f32 %v1260, %v1287
        %v1289 = vpop.f32.mrf.mxu0
        %1290 = vdwg.mxu0
        %v1291 = vpack.c.bf16 %v1249, %v1249
        %v1292 = vld [vmem:[#allocation8] sm:$0xf]
        %v1293 = vld [vmem:[#allocation8 + $0x4] sm:$0xf]
        %v1294 = vld [vmem:[#allocation8 + $0x8] sm:$0xf]
        %v1295 = vld [vmem:[#allocation8 + $0xc] sm:$0xf]
        %v1296 = vld [vmem:[#allocation10] sm:$0x1]
        %v1298 = vperm.slane %v1296, 0
        %v1304 = vunpack.c.l.b16 %v1292
        %v1305 = vunpack.c.l.b16 %v1293
        %v1306 = vunpack.c.l.b16 %v1294
        %v1307 = vunpack.c.l.b16 %v1295
        %v1308 = vpack.c.b16 %v1305, %v1304
        %v1309 = vpack.c.b16 %v1307, %v1306
        %v1313 = vsel %vm1274, %v1291, 0
        %1315 = vmatpush.bf16.msra.mxu0 0
        %1316 = vmatpush.bf16.msra.mxu0 0
        %1317 = vmatpush.bf16.msra.mxu0 0
        %1318 = vmatpush.bf16.msra.mxu0 0
        %1319 = vmatpush.bf16.msra.mxu0 0
        %1320 = vmatpush.bf16.msra.mxu0 0
        %1321 = vmatpush.bf16.msra.mxu0 %v1309
        %1322 = vmatpush.bf16.msra.mxu0 %v1308
        %1323 = vmatmul.bf16.gmra.mxu0 %v1313
        %v1324 = vpop.f32.mrf.mxu0
        %v1325 = vadd.f32 %v1298, %v1324
        %v1326 = vpop.f32.mrf.mxu0
        %1327 = vdwg.mxu0
        %v1328 = vld [vmem:[#allocation11] sm:$0xf]
        %v1329 = vld [vmem:[#allocation11 + $0x4] sm:$0xf]
        %v1330 = vld [vmem:[#allocation11 + $0x8] sm:$0xf]
        %v1331 = vld [vmem:[#allocation11 + $0xc] sm:$0xf]
        %v1332 = vld [vmem:[#allocation13] sm:$0x1]
        %1334 = vrot.lane.b32.xlu0 %v1288, 120
        %v1335 = vpop.permute.xlu0 %1334
        %1337 = vrot.lane.b32.xlu0 %v1288, 112
        %v1338 = vpop.permute.xlu0 %1337
        %1340 = vrot.lane.b32.xlu0 %v1288, 104
        %v1341 = vpop.permute.xlu0 %1340
        %v1343 = vrot.slane %v1338, 4
        %vm1344 = vcmask 1047556
        %v1345 = vsel %vm1344, %v1343, %v1288
        %v1346 = vrot.slane %v1288, 4
        %v1347 = vsel %vm1344, %v1338, %v1346
        %v1349 = vunpack.c.l.s4 1983009808
        %v1350 = vunpack.c.0.s8 %v1349
        %v1351 = vperm.slane %v1345, %v1350
        %v1353 = vunpack.c.l.s4 1983009808
        %v1354 = vunpack.c.0.s8 %v1353
        %v1355 = vperm.slane %v1347, %v1354
        %v1356 = vrot.slane %v1341, 4
        %v1357 = vsel %vm1344, %v1356, %v1335
        %v1358 = vrot.slane %v1335, 4
        %v1359 = vsel %vm1344, %v1341, %v1358
        %v1361 = vunpack.c.l.s4 1983009808
        %v1362 = vunpack.c.0.s8 %v1361
        %v1363 = vperm.slane %v1357, %v1362
        %v1365 = vunpack.c.l.s4 1983009808
        %v1366 = vunpack.c.0.s8 %v1365
        %v1367 = vperm.slane %v1359, %v1366
        %v1368 = vrot.slane %v1363, 4
        %v1369 = vsel %vm1344, %v1368, %v1351
        %v1370 = vrot.slane %v1351, 4
        %v1371 = vsel %vm1344, %v1363, %v1370
        %v1373 = vunpack.c.l.s4 1934713408
        %v1374 = vunpack.c.0.s8 %v1373
        %v1375 = vperm.slane %v1369, %v1374
        %v1377 = vunpack.c.l.s4 1934713408
        %v1378 = vunpack.c.0.s8 %v1377
        %v1379 = vperm.slane %v1371, %v1378
        %v1380 = vrot.slane %v1367, 4
        %v1381 = vsel %vm1344, %v1380, %v1355
        %v1382 = vrot.slane %v1355, 4
        %v1383 = vsel %vm1344, %v1367, %v1382
        %v1385 = vunpack.c.l.s4 1934713408
        %v1386 = vunpack.c.0.s8 %v1385
        %v1387 = vperm.slane %v1381, %v1386
        %v1389 = vunpack.c.l.s4 1934713408
        %v1390 = vunpack.c.0.s8 %v1389
        %v1391 = vperm.slane %v1383, %v1390
        %v1392 = vrot.slane %v1375, 4
        %v1393 = vsel %vm1344, 0.0, %v1392
        %v1394 = vrot.slane %v1379, 4
        %v1395 = vsel %vm1344, 0.0, %v1394
        %v1396 = vrot.slane %v1387, 4
        %v1397 = vsel %vm1344, 0.0, %v1396
        %v1398 = vrot.slane %v1391, 4
        %v1399 = vsel %vm1344, 0.0, %v1398
        %v1400 = vsel %vm1344, %v1394, %v1375
        %v1402 = vunpack.c.l.s4 1983009808
        %v1403 = vunpack.c.0.s8 %v1402
        %v1404 = vperm.slane %v1400, %v1403
        %v1405 = vrot.slane %v1395, 4
        %v1406 = vsel %vm1344, %v1405, %v1393
        %v1408 = vunpack.c.l.s4 1983009808
        %v1409 = vunpack.c.0.s8 %v1408
        %v1410 = vperm.slane %v1406, %v1409
        %v1411 = vsel %vm1344, %v1398, %v1387
        %v1413 = vunpack.c.l.s4 1983009808
        %v1414 = vunpack.c.0.s8 %v1413
        %v1415 = vperm.slane %v1411, %v1414
        %v1416 = vrot.slane %v1399, 4
        %v1417 = vsel %vm1344, %v1416, %v1397
        %v1419 = vunpack.c.l.s4 1983009808
        %v1420 = vunpack.c.0.s8 %v1419
        %v1421 = vperm.slane %v1417, %v1420
        %v1422 = vrot.slane %v1410, 4
        %v1423 = vsel %vm1344, %v1422, %v1404
        %v1424 = vrot.slane %v1404, 4
        %v1425 = vsel %vm1344, %v1410, %v1424
        %v1427 = vunpack.c.l.s4 1934713408
        %v1428 = vunpack.c.0.s8 %v1427
        %v1429 = vperm.slane %v1423, %v1428
        %v1431 = vunpack.c.l.s4 1934713408
        %v1432 = vunpack.c.0.s8 %v1431
        %v1433 = vperm.slane %v1425, %v1432
        %v1434 = vrot.slane %v1421, 4
        %v1435 = vsel %vm1344, %v1434, %v1415
        %v1436 = vrot.slane %v1415, 4
        %v1437 = vsel %vm1344, %v1421, %v1436
        %v1439 = vunpack.c.l.s4 1934713408
        %v1440 = vunpack.c.0.s8 %v1439
        %v1441 = vperm.slane %v1435, %v1440
        %v1443 = vunpack.c.l.s4 1934713408
        %v1444 = vunpack.c.0.s8 %v1443
        %v1445 = vperm.slane %v1437, %v1444
        %v1446 = vrot.slane %v1441, 4
        %v1447 = vsel %vm1344, %v1446, %v1429
        %v1448 = vrot.slane %v1429, 4
        %v1449 = vsel %vm1344, %v1441, %v1448
        %v1450 = vrot.slane %v1445, 4
        %v1451 = vsel %vm1344, %v1450, %v1433
        %v1452 = vrot.slane %v1433, 4
        %v1453 = vsel %vm1344, %v1445, %v1452
        %v1454 = vpack.c.bf16 %v1447, %v1447
        %v1455 = vpack.c.bf16 %v1449, %v1449
        %v1456 = vpack.c.bf16 %v1451, %v1451
        %v1457 = vpack.c.bf16 %v1453, %v1453
        %1459 = vrot.lane.b32.xlu0 %v1325, 120
        %v1460 = vpop.permute.xlu0 %1459
        %1462 = vrot.lane.b32.xlu0 %v1325, 112
        %v1463 = vpop.permute.xlu0 %1462
        %1465 = vrot.lane.b32.xlu0 %v1325, 104
        %v1466 = vpop.permute.xlu0 %1465
        %1468 = vrot.lane.b32.xlu0 %v1325, 96
        %v1469 = vpop.permute.xlu0 %1468
        %1471 = vrot.lane.b32.xlu0 %v1325, 88
        %v1472 = vpop.permute.xlu0 %1471
        %1474 = vrot.lane.b32.xlu0 %v1325, 80
        %v1475 = vpop.permute.xlu0 %1474
        %1477 = vrot.lane.b32.xlu0 %v1325, 72
        %v1478 = vpop.permute.xlu0 %1477
        %v1480 = vrot.slane %v1463, 4
        %v1481 = vsel %vm1344, %v1480, %v1325
        %v1482 = vrot.slane %v1325, 4
        %v1483 = vsel %vm1344, %v1463, %v1482
        %v1485 = vunpack.c.l.s4 1983009808
        %v1486 = vunpack.c.0.s8 %v1485
        %v1487 = vperm.slane %v1481, %v1486
        %v1489 = vunpack.c.l.s4 1983009808
        %v1490 = vunpack.c.0.s8 %v1489
        %v1491 = vperm.slane %v1483, %v1490
        %v1492 = vrot.slane %v1466, 4
        %v1493 = vsel %vm1344, %v1492, %v1460
        %v1494 = vrot.slane %v1460, 4
        %v1495 = vsel %vm1344, %v1466, %v1494
        %v1497 = vunpack.c.l.s4 1983009808
        %v1498 = vunpack.c.0.s8 %v1497
        %v1499 = vperm.slane %v1493, %v1498
        %v1501 = vunpack.c.l.s4 1983009808
        %v1502 = vunpack.c.0.s8 %v1501
        %v1503 = vperm.slane %v1495, %v1502
        %v1504 = vrot.slane %v1475, 4
        %v1505 = vsel %vm1344, %v1504, %v1469
        %v1506 = vrot.slane %v1469, 4
        %v1507 = vsel %vm1344, %v1475, %v1506
        %v1509 = vunpack.c.l.s4 1983009808
        %v1510 = vunpack.c.0.s8 %v1509
        %v1511 = vperm.slane %v1505, %v1510
        %v1513 = vunpack.c.l.s4 1983009808
        %v1514 = vunpack.c.0.s8 %v1513
        %v1515 = vperm.slane %v1507, %v1514
        %v1516 = vrot.slane %v1478, 4
        %v1517 = vsel %vm1344, %v1516, %v1472
        %v1518 = vrot.slane %v1472, 4
        %v1519 = vsel %vm1344, %v1478, %v1518
        %v1521 = vunpack.c.l.s4 1983009808
        %v1522 = vunpack.c.0.s8 %v1521
        %v1523 = vperm.slane %v1517, %v1522
        %v1525 = vunpack.c.l.s4 1983009808
        %v1526 = vunpack.c.0.s8 %v1525
        %v1527 = vperm.slane %v1519, %v1526
        %v1528 = vrot.slane %v1499, 4
        %v1529 = vsel %vm1344, %v1528, %v1487
        %v1530 = vrot.slane %v1487, 4
        %v1531 = vsel %vm1344, %v1499, %v1530
        %v1533 = vunpack.c.l.s4 1934713408
        %v1534 = vunpack.c.0.s8 %v1533
        %v1535 = vperm.slane %v1529, %v1534
        %v1537 = vunpack.c.l.s4 1934713408
        %v1538 = vunpack.c.0.s8 %v1537
        %v1539 = vperm.slane %v1531, %v1538
        %v1540 = vrot.slane %v1503, 4
        %v1541 = vsel %vm1344, %v1540, %v1491
        %v1542 = vrot.slane %v1491, 4
        %v1543 = vsel %vm1344, %v1503, %v1542
        %v1545 = vunpack.c.l.s4 1934713408
        %v1546 = vunpack.c.0.s8 %v1545
        %v1547 = vperm.slane %v1541, %v1546
        %v1549 = vunpack.c.l.s4 1934713408
        %v1550 = vunpack.c.0.s8 %v1549
        %v1551 = vperm.slane %v1543, %v1550
        %v1552 = vrot.slane %v1523, 4
        %v1553 = vsel %vm1344, %v1552, %v1511
        %v1554 = vrot.slane %v1511, 4
        %v1555 = vsel %vm1344, %v1523, %v1554
        %v1557 = vunpack.c.l.s4 1934713408
        %v1558 = vunpack.c.0.s8 %v1557
        %v1559 = vperm.slane %v1553, %v1558
        %v1561 = vunpack.c.l.s4 1934713408
        %v1562 = vunpack.c.0.s8 %v1561
        %v1563 = vperm.slane %v1555, %v1562
        %v1564 = vrot.slane %v1527, 4
        %v1565 = vsel %vm1344, %v1564, %v1515
        %v1566 = vrot.slane %v1515, 4
        %v1567 = vsel %vm1344, %v1527, %v1566
        %v1569 = vunpack.c.l.s4 1934713408
        %v1570 = vunpack.c.0.s8 %v1569
        %v1571 = vperm.slane %v1565, %v1570
        %v1573 = vunpack.c.l.s4 1934713408
        %v1574 = vunpack.c.0.s8 %v1573
        %v1575 = vperm.slane %v1567, %v1574
        %v1576 = vrot.slane %v1559, 4
        %v1577 = vsel %vm1344, %v1576, %v1535
        %v1578 = vrot.slane %v1535, 4
        %v1579 = vsel %vm1344, %v1559, %v1578
        %v1580 = vrot.slane %v1563, 4
        %v1581 = vsel %vm1344, %v1580, %v1539
        %v1582 = vrot.slane %v1539, 4
        %v1583 = vsel %vm1344, %v1563, %v1582
        %v1584 = vrot.slane %v1571, 4
        %v1585 = vsel %vm1344, %v1584, %v1547
        %v1586 = vrot.slane %v1547, 4
        %v1587 = vsel %vm1344, %v1571, %v1586
        %v1588 = vrot.slane %v1575, 4
        %v1589 = vsel %vm1344, %v1588, %v1551
        %v1590 = vrot.slane %v1551, 4
        %v1591 = vsel %vm1344, %v1575, %v1590
        %v1592 = vrot.slane %v1581, 4
        %v1593 = vsel %vm1344, %v1592, %v1577
        %v1594 = vrot.slane %v1577, 4
        %v1595 = vsel %vm1344, %v1581, %v1594
        %v1597 = vunpack.c.l.s4 1983009808
        %v1598 = vunpack.c.0.s8 %v1597
        %v1599 = vperm.slane %v1593, %v1598
        %v1601 = vunpack.c.l.s4 1983009808
        %v1602 = vunpack.c.0.s8 %v1601
        %v1603 = vperm.slane %v1595, %v1602
        %v1604 = vrot.slane %v1583, 4
        %v1605 = vsel %vm1344, %v1604, %v1579
        %v1606 = vrot.slane %v1579, 4
        %v1607 = vsel %vm1344, %v1583, %v1606
        %v1609 = vunpack.c.l.s4 1983009808
        %v1610 = vunpack.c.0.s8 %v1609
        %v1611 = vperm.slane %v1605, %v1610
        %v1613 = vunpack.c.l.s4 1983009808
        %v1614 = vunpack.c.0.s8 %v1613
        %v1615 = vperm.slane %v1607, %v1614
        %v1616 = vrot.slane %v1589, 4
        %v1617 = vsel %vm1344, %v1616, %v1585
        %v1618 = vrot.slane %v1585, 4
        %v1619 = vsel %vm1344, %v1589, %v1618
        %v1621 = vunpack.c.l.s4 1983009808
        %v1622 = vunpack.c.0.s8 %v1621
        %v1623 = vperm.slane %v1617, %v1622
        %v1625 = vunpack.c.l.s4 1983009808
        %v1626 = vunpack.c.0.s8 %v1625
        %v1627 = vperm.slane %v1619, %v1626
        %v1628 = vrot.slane %v1591, 4
        %v1629 = vsel %vm1344, %v1628, %v1587
        %v1630 = vrot.slane %v1587, 4
        %v1631 = vsel %vm1344, %v1591, %v1630
        %v1633 = vunpack.c.l.s4 1983009808
        %v1634 = vunpack.c.0.s8 %v1633
        %v1635 = vperm.slane %v1629, %v1634
        %v1637 = vunpack.c.l.s4 1983009808
        %v1638 = vunpack.c.0.s8 %v1637
        %v1639 = vperm.slane %v1631, %v1638
        %v1640 = vrot.slane %v1611, 4
        %v1641 = vsel %vm1344, %v1640, %v1599
        %v1642 = vrot.slane %v1599, 4
        %v1643 = vsel %vm1344, %v1611, %v1642
        %v1645 = vunpack.c.l.s4 1934713408
        %v1646 = vunpack.c.0.s8 %v1645
        %v1647 = vperm.slane %v1641, %v1646
        %v1649 = vunpack.c.l.s4 1934713408
        %v1650 = vunpack.c.0.s8 %v1649
        %v1651 = vperm.slane %v1643, %v1650
        %v1652 = vrot.slane %v1615, 4
        %v1653 = vsel %vm1344, %v1652, %v1603
        %v1654 = vrot.slane %v1603, 4
        %v1655 = vsel %vm1344, %v1615, %v1654
        %v1657 = vunpack.c.l.s4 1934713408
        %v1658 = vunpack.c.0.s8 %v1657
        %v1659 = vperm.slane %v1653, %v1658
        %v1661 = vunpack.c.l.s4 1934713408
        %v1662 = vunpack.c.0.s8 %v1661
        %v1663 = vperm.slane %v1655, %v1662
        %v1664 = vrot.slane %v1635, 4
        %v1665 = vsel %vm1344, %v1664, %v1623
        %v1666 = vrot.slane %v1623, 4
        %v1667 = vsel %vm1344, %v1635, %v1666
        %v1669 = vunpack.c.l.s4 1934713408
        %v1670 = vunpack.c.0.s8 %v1669
        %v1671 = vperm.slane %v1665, %v1670
        %v1673 = vunpack.c.l.s4 1934713408
        %v1674 = vunpack.c.0.s8 %v1673
        %v1675 = vperm.slane %v1667, %v1674
        %v1676 = vrot.slane %v1639, 4
        %v1677 = vsel %vm1344, %v1676, %v1627
        %v1678 = vrot.slane %v1627, 4
        %v1679 = vsel %vm1344, %v1639, %v1678
        %v1681 = vunpack.c.l.s4 1934713408
        %v1682 = vunpack.c.0.s8 %v1681
        %v1683 = vperm.slane %v1677, %v1682
        %v1685 = vunpack.c.l.s4 1934713408
        %v1686 = vunpack.c.0.s8 %v1685
        %v1687 = vperm.slane %v1679, %v1686
        %v1688 = vrot.slane %v1671, 4
        %v1689 = vsel %vm1344, %v1688, %v1647
        %v1690 = vrot.slane %v1647, 4
        %v1691 = vsel %vm1344, %v1671, %v1690
        %v1692 = vrot.slane %v1675, 4
        %v1693 = vsel %vm1344, %v1692, %v1651
        %v1694 = vrot.slane %v1651, 4
        %v1695 = vsel %vm1344, %v1675, %v1694
        %v1696 = vrot.slane %v1683, 4
        %v1697 = vsel %vm1344, %v1696, %v1659
        %v1698 = vrot.slane %v1659, 4
        %v1699 = vsel %vm1344, %v1683, %v1698
        %v1700 = vrot.slane %v1687, 4
        %v1701 = vsel %vm1344, %v1700, %v1663
        %v1702 = vrot.slane %v1663, 4
        %v1703 = vsel %vm1344, %v1687, %v1702
        %v1704 = vpack.c.bf16 %v1689, %v1689
        %v1705 = vpack.c.bf16 %v1691, %v1691
        %v1706 = vpack.c.bf16 %v1693, %v1693
        %v1707 = vpack.c.bf16 %v1695, %v1695
        %v1708 = vpack.c.bf16 %v1697, %v1697
        %v1709 = vpack.c.bf16 %v1699, %v1699
        %v1710 = vpack.c.bf16 %v1701, %v1701
        %v1711 = vpack.c.bf16 %v1703, %v1703
        %vm1712 = vcmask 64512
        %v1714 = vsel %vm1712, %v1454, 0
        %v1717 = vsel %vm1712, %v1704, 0
        %1719 = vmatpush.bf16.xpose.msra.mxu0 0
        %1720 = vmatpush.bf16.xpose.msra.mxu0 0
        %1721 = vmatpush.bf16.xpose.msra.mxu0 0
        %1722 = vmatpush.bf16.xpose.msra.mxu0 0
        %1723 = vmatpush.bf16.xpose.msra.mxu0 0
        %1724 = vmatpush.bf16.xpose.msra.mxu0 0
        %1725 = vmatpush.bf16.xpose.msra.mxu0 0
        %1726 = vmatpush.bf16.xpose.msra.mxu0 %v1717
        %1727 = vmatmul.bf16.gmra.mxu0 %v1714
        %v1728 = vpop.f32.mrf.mxu0
        %v1729 = vadd.f32 %v1251, %v1728
        %v1730 = vpop.f32.mrf.mxu0
        %1731 = vdwg.mxu0
        %v1733 = vsel %vm1712, %v1455, 0
        %v1736 = vsel %vm1712, %v1705, 0
        %1738 = vmatpush.bf16.xpose.msra.mxu0 0
        %1739 = vmatpush.bf16.xpose.msra.mxu0 0
        %1740 = vmatpush.bf16.xpose.msra.mxu0 0
        %1741 = vmatpush.bf16.xpose.msra.mxu0 0
        %1742 = vmatpush.bf16.xpose.msra.mxu0 0
        %1743 = vmatpush.bf16.xpose.msra.mxu0 0
        %1744 = vmatpush.bf16.xpose.msra.mxu0 0
        %1745 = vmatpush.bf16.xpose.msra.mxu0 %v1736
        %1746 = vmatmul.bf16.gmra.mxu0 %v1733
        %v1747 = vpop.f32.mrf.mxu0
        %v1748 = vadd.f32 %v1251, %v1747
        %v1749 = vpop.f32.mrf.mxu0
        %1750 = vdwg.mxu0
        %v1752 = vsel %vm1712, %v1456, 0
        %v1755 = vsel %vm1712, %v1706, 0
        %1757 = vmatpush.bf16.xpose.msra.mxu0 0
        %1758 = vmatpush.bf16.xpose.msra.mxu0 0
        %1759 = vmatpush.bf16.xpose.msra.mxu0 0
        %1760 = vmatpush.bf16.xpose.msra.mxu0 0
        %1761 = vmatpush.bf16.xpose.msra.mxu0 0
        %1762 = vmatpush.bf16.xpose.msra.mxu0 0
        %1763 = vmatpush.bf16.xpose.msra.mxu0 0
        %1764 = vmatpush.bf16.xpose.msra.mxu0 %v1755
        %1765 = vmatmul.bf16.gmra.mxu0 %v1752
        %v1766 = vpop.f32.mrf.mxu0
        %v1767 = vadd.f32 %v1251, %v1766
        %v1768 = vpop.f32.mrf.mxu0
        %1769 = vdwg.mxu0
        %v1771 = vsel %vm1712, %v1457, 0
        %v1774 = vsel %vm1712, %v1707, 0
        %1776 = vmatpush.bf16.xpose.msra.mxu0 0
        %1777 = vmatpush.bf16.xpose.msra.mxu0 0
        %1778 = vmatpush.bf16.xpose.msra.mxu0 0
        %1779 = vmatpush.bf16.xpose.msra.mxu0 0
        %1780 = vmatpush.bf16.xpose.msra.mxu0 0
        %1781 = vmatpush.bf16.xpose.msra.mxu0 0
        %1782 = vmatpush.bf16.xpose.msra.mxu0 0
        %1783 = vmatpush.bf16.xpose.msra.mxu0 %v1774
        %1784 = vmatmul.bf16.gmra.mxu0 %v1771
        %v1785 = vpop.f32.mrf.mxu0
        %v1786 = vadd.f32 %v1251, %v1785
        %v1787 = vpop.f32.mrf.mxu0
        %1788 = vdwg.mxu0
        %v1789 = vsel %vm1712, %v1729, -inf
        %1790 = vmax.xlane.f32.xlu0 %v1789
        %v1791 = vpop.xlane.xlu0 %1790
        %v1792 = vsel %vm1712, %v1748, -inf
        %1793 = vmax.xlane.f32.xlu0 %v1792
        %v1794 = vpop.xlane.xlu0 %1793
        %v1795 = vsel %vm1712, %v1767, -inf
        %1796 = vmax.xlane.f32.xlu0 %v1795
        %v1797 = vpop.xlane.xlu0 %1796
        %v1798 = vsel %vm1712, %v1786, -inf
        %1799 = vmax.xlane.f32.xlu0 %v1798
        %v1800 = vpop.xlane.xlu0 %1799
        %v1801 = vsub.f32 %v1729, %v1791
        %v1802 = vsub.f32 %v1748, %v1794
        %v1803 = vsub.f32 %v1767, %v1797
        %v1804 = vsub.f32 %v1786, %v1800
        %v1805 = vmul.f32 %v1801, 1.442695
        %v1806 = vpow.pop %v1805
        %v1807 = vmul.f32 %v1802, 1.442695
        %v1808 = vpow.pop %v1807
        %v1809 = vmul.f32 %v1803, 1.442695
        %v1810 = vpow.pop %v1809
        %v1811 = vmul.f32 %v1804, 1.442695
        %v1812 = vpow.pop %v1811
        %v1813 = vsel %vm1712, %v1806, 0.0
        %1814 = vadd.xlane.f32.xlu0 %v1813
        %v1815 = vpop.xlane.xlu0 %1814
        %v1816 = vsel %vm1712, %v1808, 0.0
        %1817 = vadd.xlane.f32.xlu0 %v1816
        %v1818 = vpop.xlane.xlu0 %1817
        %v1819 = vsel %vm1712, %v1810, 0.0
        %1820 = vadd.xlane.f32.xlu0 %v1819
        %v1821 = vpop.xlane.xlu0 %1820
        %v1822 = vsel %vm1712, %v1812, 0.0
        %1823 = vadd.xlane.f32.xlu0 %v1822
        %v1824 = vpop.xlane.xlu0 %1823
        %v1825 = vrcp.pop %v1815
        %v1826 = vrcp.pop %v1818
        %v1827 = vrcp.pop %v1821
        %v1828 = vrcp.pop %v1824
        %v1829 = vmul.f32 %v1806, %v1825
        %v1830 = vmul.f32 %v1808, %v1826
        %v1831 = vmul.f32 %v1810, %v1827
        %v1832 = vmul.f32 %v1812, %v1828
        %v1833 = vsel %vm1712, %v1829, 0.0
        %v1834 = vsel %vm1712, %v1830, 0.0
        %v1835 = vadd.f32 %v1833, %v1834
        %v1836 = vsel %vm1712, %v1831, 0.0
        %v1837 = vadd.f32 %v1835, %v1836
        %v1838 = vsel %vm1712, %v1832, 0.0
        %v1839 = vadd.f32 %v1837, %v1838
        %v1840 = vmul.f32 %v1839, 0.25
        %v1841 = vpack.c.bf16 %v1829, %v1829
        %v1842 = vpack.c.bf16 %v1830, %v1830
        %v1843 = vpack.c.bf16 %v1831, %v1831
        %v1844 = vpack.c.bf16 %v1832, %v1832
        %v1846 = vsel %vm1712, %v1841, 0
        %vm1848 = vcmask 1043456
        %v1850 = vsel %vm1848, %v1708, 0
        %1852 = vmatpush.bf16.msra.mxu0 0
        %1853 = vmatpush.bf16.msra.mxu0 0
        %1854 = vmatpush.bf16.msra.mxu0 0
        %1855 = vmatpush.bf16.msra.mxu0 0
        %1856 = vmatpush.bf16.msra.mxu0 0
        %1857 = vmatpush.bf16.msra.mxu0 0
        %1858 = vmatpush.bf16.msra.mxu0 0
        %1859 = vmatpush.bf16.msra.mxu0 %v1850
        %1860 = vmatmul.bf16.gmra.mxu0 %v1846
        %v1861 = vpop.f32.mrf.mxu0
        %v1862 = vadd.f32 0.0, %v1861
        %v1863 = vpop.f32.mrf.mxu0
        %1864 = vdwg.mxu0
        %v1866 = vsel %vm1712, %v1842, 0
        %v1869 = vsel %vm1848, %v1709, 0
        %1871 = vmatpush.bf16.msra.mxu0 0
        %1872 = vmatpush.bf16.msra.mxu0 0
        %1873 = vmatpush.bf16.msra.mxu0 0
        %1874 = vmatpush.bf16.msra.mxu0 0
        %1875 = vmatpush.bf16.msra.mxu0 0
        %1876 = vmatpush.bf16.msra.mxu0 0
        %1877 = vmatpush.bf16.msra.mxu0 0
        %1878 = vmatpush.bf16.msra.mxu0 %v1869
        %1879 = vmatmul.bf16.gmra.mxu0 %v1866
        %v1880 = vpop.f32.mrf.mxu0
        %v1881 = vadd.f32 0.0, %v1880
        %v1882 = vpop.f32.mrf.mxu0
        %1883 = vdwg.mxu0
        %v1885 = vsel %vm1712, %v1843, 0
        %v1888 = vsel %vm1848, %v1710, 0
        %1890 = vmatpush.bf16.msra.mxu0 0
        %1891 = vmatpush.bf16.msra.mxu0 0
        %1892 = vmatpush.bf16.msra.mxu0 0
        %1893 = vmatpush.bf16.msra.mxu0 0
        %1894 = vmatpush.bf16.msra.mxu0 0
        %1895 = vmatpush.bf16.msra.mxu0 0
        %1896 = vmatpush.bf16.msra.mxu0 0
        %1897 = vmatpush.bf16.msra.mxu0 %v1888
        %1898 = vmatmul.bf16.gmra.mxu0 %v1885
        %v1899 = vpop.f32.mrf.mxu0
        %v1900 = vadd.f32 0.0, %v1899
        %v1901 = vpop.f32.mrf.mxu0
        %1902 = vdwg.mxu0
        %v1904 = vsel %vm1712, %v1844, 0
        %v1907 = vsel %vm1848, %v1711, 0
        %1909 = vmatpush.bf16.msra.mxu0 0
        %1910 = vmatpush.bf16.msra.mxu0 0
        %1911 = vmatpush.bf16.msra.mxu0 0
        %1912 = vmatpush.bf16.msra.mxu0 0
        %1913 = vmatpush.bf16.msra.mxu0 0
        %1914 = vmatpush.bf16.msra.mxu0 0
        %1915 = vmatpush.bf16.msra.mxu0 0
        %1916 = vmatpush.bf16.msra.mxu0 %v1907
        %1917 = vmatmul.bf16.gmra.mxu0 %v1904
        %v1918 = vpop.f32.mrf.mxu0
        %v1919 = vadd.f32 0.0, %v1918
        %v1920 = vpop.f32.mrf.mxu0
        %1921 = vdwg.mxu0
        %v1922 = vrot.slane %v1900, 4
        %v1923 = vsel %vm1344, %v1922, %v1862
        %v1924 = vrot.slane %v1862, 4
        %v1925 = vsel %vm1344, %v1900, %v1924
        %v1927 = vunpack.c.l.s4 1983009808
        %v1928 = vunpack.c.0.s8 %v1927
        %v1929 = vperm.slane %v1923, %v1928
        %v1931 = vunpack.c.l.s4 1983009808
        %v1932 = vunpack.c.0.s8 %v1931
        %v1933 = vperm.slane %v1925, %v1932
        %v1934 = vrot.slane %v1919, 4
        %v1935 = vsel %vm1344, %v1934, %v1881
        %v1936 = vrot.slane %v1881, 4
        %v1937 = vsel %vm1344, %v1919, %v1936
        %v1939 = vunpack.c.l.s4 1983009808
        %v1940 = vunpack.c.0.s8 %v1939
        %v1941 = vperm.slane %v1935, %v1940
        %v1943 = vunpack.c.l.s4 1983009808
        %v1944 = vunpack.c.0.s8 %v1943
        %v1945 = vperm.slane %v1937, %v1944
        %v1946 = vrot.slane %v1941, 4
        %v1947 = vsel %vm1344, %v1946, %v1929
        %v1948 = vrot.slane %v1929, 4
        %v1949 = vsel %vm1344, %v1941, %v1948
        %v1951 = vunpack.c.l.s4 1934713408
        %v1952 = vunpack.c.0.s8 %v1951
        %v1953 = vperm.slane %v1947, %v1952
        %v1955 = vunpack.c.l.s4 1934713408
        %v1956 = vunpack.c.0.s8 %v1955
        %v1957 = vperm.slane %v1949, %v1956
        %v1958 = vrot.slane %v1945, 4
        %v1959 = vsel %vm1344, %v1958, %v1933
        %v1960 = vrot.slane %v1933, 4
        %v1961 = vsel %vm1344, %v1945, %v1960
        %v1963 = vunpack.c.l.s4 1934713408
        %v1964 = vunpack.c.0.s8 %v1963
        %v1965 = vperm.slane %v1959, %v1964
        %v1967 = vunpack.c.l.s4 1934713408
        %v1968 = vunpack.c.0.s8 %v1967
        %v1969 = vperm.slane %v1961, %v1968
        %v1970 = vrot.slane %v1953, 4
        %v1971 = vsel %vm1344, 0.0, %v1970
        %v1972 = vrot.slane %v1957, 4
        %v1973 = vsel %vm1344, 0.0, %v1972
        %v1974 = vrot.slane %v1965, 4
        %v1975 = vsel %vm1344, 0.0, %v1974
        %v1976 = vrot.slane %v1969, 4
        %v1977 = vsel %vm1344, 0.0, %v1976
        %v1978 = vsel %vm1344, %v1972, %v1953
        %v1980 = vunpack.c.l.s4 1983009808
        %v1981 = vunpack.c.0.s8 %v1980
        %v1982 = vperm.slane %v1978, %v1981
        %v1983 = vrot.slane %v1973, 4
        %v1984 = vsel %vm1344, %v1983, %v1971
        %v1986 = vunpack.c.l.s4 1983009808
        %v1987 = vunpack.c.0.s8 %v1986
        %v1988 = vperm.slane %v1984, %v1987
        %v1989 = vsel %vm1344, %v1976, %v1965
        %v1991 = vunpack.c.l.s4 1983009808
        %v1992 = vunpack.c.0.s8 %v1991
        %v1993 = vperm.slane %v1989, %v1992
        %v1994 = vrot.slane %v1977, 4
        %v1995 = vsel %vm1344, %v1994, %v1975
        %v1997 = vunpack.c.l.s4 1983009808
        %v1998 = vunpack.c.0.s8 %v1997
        %v1999 = vperm.slane %v1995, %v1998
        %v2000 = vrot.slane %v1988, 4
        %v2001 = vsel %vm1344, %v2000, %v1982
        %v2002 = vrot.slane %v1982, 4
        %v2003 = vsel %vm1344, %v1988, %v2002
        %v2005 = vunpack.c.l.s4 1934713408
        %v2006 = vunpack.c.0.s8 %v2005
        %v2007 = vperm.slane %v2001, %v2006
        %v2009 = vunpack.c.l.s4 1934713408
        %v2010 = vunpack.c.0.s8 %v2009
        %v2011 = vperm.slane %v2003, %v2010
        %v2012 = vrot.slane %v1999, 4
        %v2013 = vsel %vm1344, %v2012, %v1993
        %v2014 = vrot.slane %v1993, 4
        %v2015 = vsel %vm1344, %v1999, %v2014
        %v2017 = vunpack.c.l.s4 1934713408
        %v2018 = vunpack.c.0.s8 %v2017
        %v2019 = vperm.slane %v2013, %v2018
        %v2021 = vunpack.c.l.s4 1934713408
        %v2022 = vunpack.c.0.s8 %v2021
        %v2023 = vperm.slane %v2015, %v2022
        %v2024 = vrot.slane %v2019, 4
        %v2025 = vsel %vm1344, %v2024, %v2007
        %v2026 = vrot.slane %v2007, 4
        %v2027 = vsel %vm1344, %v2019, %v2026
        %v2028 = vrot.slane %v2023, 4
        %v2029 = vsel %vm1344, %v2028, %v2011
        %v2030 = vrot.slane %v2011, 4
        %v2031 = vsel %vm1344, %v2023, %v2030
        %2033 = vrot.lane.b32.xlu0 %v2027, 8
        %v2034 = vpop.permute.xlu0 %2033
        %2037 = vrot.lane.b32.xlu0 %v2029, 16
        %v2038 = vpop.permute.xlu0 %2037
        %2041 = vrot.lane.b32.xlu0 %v2031, 24
        %v2042 = vpop.permute.xlu0 %2041
        %v2044 = vsel %vm1712, %v2025, %v2034
        %vm2045 = vcmask 130048
        %v2046 = vsel %vm2045, %v2044, %v2038
        %vm2047 = vcmask 195584
        %v2048 = vsel %vm2047, %v2046, %v2042
        %v2049 = vpack.c.bf16 %v2048, %v2048
        %v2051 = vperm.slane %v1332, 0
        %v2057 = vunpack.c.l.b16 %v1328
        %v2058 = vunpack.c.l.b16 %v1329
        %v2059 = vunpack.c.l.b16 %v1330
        %v2060 = vunpack.c.l.b16 %v1331
        %v2061 = vpack.c.b16 %v2058, %v2057
        %v2062 = vpack.c.b16 %v2060, %v2059
        %v2066 = vsel %vm1274, %v2049, 0
        %2068 = vmatpush.bf16.msra.mxu0 0
        %2069 = vmatpush.bf16.msra.mxu0 0
        %2070 = vmatpush.bf16.msra.mxu0 0
        %2071 = vmatpush.bf16.msra.mxu0 0
        %2072 = vmatpush.bf16.msra.mxu0 0
        %2073 = vmatpush.bf16.msra.mxu0 0
        %2074 = vmatpush.bf16.msra.mxu0 %v2062
        %2075 = vmatpush.bf16.msra.mxu0 %v2061
        %2076 = vmatmul.bf16.gmra.mxu0 %v2066
        %v2077 = vpop.f32.mrf.mxu0
        %v2078 = vadd.f32 %v2051, %v2077
        %v2079 = vpop.f32.mrf.mxu0
        %2080 = vdwg.mxu0
        %v2081 = vadd.f32 %v1248, %v2078
        %v2082 = vld [vmem:[%s43] sm:$0x1]
        %v2083 = vld [vmem:[%s45] sm:$0x1]
        %v2084 = vsel %vm1274, %v2081, 0.0
        %2085 = vadd.xlane.f32.xlu0 %v2084
        %v2086 = vpop.xlane.xlu0 %2085
        %v2087 = vrcp.pop 32.0
        %v2088 = vmul.f32 32.0, %v2087
        %v2089 = vsub.f32 1.0, %v2088
        %v2090 = vmul.f32 %v2087, %v2089
        %v2091 = vadd.f32 %v2087, %v2090
        %vm2092 = vweird.f32 %v2087
        %v2093 = vsel %vm2092, %v2087, %v2091
        %v2094 = vmul.f32 %v2086, %v2093
        %v2095 = vsub.f32 %v2081, %v2094
        %v2096 = vmul.f32 %v2095, %v2095
        %v2097 = vsel %vm1274, %v2096, 0.0
        %2098 = vadd.xlane.f32.xlu0 %v2097
        %v2099 = vpop.xlane.xlu0 %2098
        %v2100 = vmul.f32 %v2099, %v2093
        %v2101 = vadd.f32 %v2100, 1e-05
        %v2102 = vrsqrt.pop %v2101
        %v2103 = vmul.f32 %v2102, %v2101
        %v2104 = vmul.f32 %v2103, %v2102
        %v2105 = vmul.f32 0.5, %v2104
        %v2106 = vsub.f32 1.5, %v2105
        %v2107 = vmul.f32 %v2102, %v2106
        %vm2108 = vweird.f32 %v2101
        %vm2109 = vweird.f32 %v2102
        %vm2110 = vmor %vm2108, %vm2109
        %v2111 = vsel %vm2110, %v2102, %v2107
        %v2112 = vmul.f32 %v2095, %v2111
        %v2114 = vperm.slane %v2082, 0
        %v2116 = vmul.f32 %v2112, %v2114
        %v2118 = vperm.slane %v2083, 0
        %v2120 = vadd.f32 %v2116, %v2118
        %v2121 = vpack.c.bf16 %v2120, %v2120
        %v2122 = vld [vmem:[#allocation14] sm:$0xf]
        %v2123 = vld [vmem:[#allocation14 + $0x4] sm:$0xf]
        %v2124 = vld [vmem:[#allocation14 + $0x8] sm:$0xf]
        %v2125 = vld [vmem:[#allocation14 + $0xc] sm:$0xf]
        %v2126 = vld [vmem:[#allocation16] sm:$0x1]
        %v2128 = vperm.slane %v2126, 0
        %v2134 = vunpack.c.l.b16 %v2122
        %v2135 = vunpack.c.l.b16 %v2123
        %v2136 = vunpack.c.l.b16 %v2124
        %v2137 = vunpack.c.l.b16 %v2125
        %v2138 = vpack.c.b16 %v2135, %v2134
        %v2139 = vpack.c.b16 %v2137, %v2136
        %v2143 = vsel %vm1274, %v2121, 0
        %2145 = vmatpush.bf16.msra.mxu0 0
        %2146 = vmatpush.bf16.msra.mxu0 0
        %2147 = vmatpush.bf16.msra.mxu0 0
        %2148 = vmatpush.bf16.msra.mxu0 0
        %2149 = vmatpush.bf16.msra.mxu0 0
        %2150 = vmatpush.bf16.msra.mxu0 0
        %2151 = vmatpush.bf16.msra.mxu0 %v2139
        %2152 = vmatpush.bf16.msra.mxu0 %v2138
        %2153 = vmatmul.bf16.gmra.mxu0 %v2143
        %v2154 = vpop.f32.mrf.mxu0
        %v2155 = vadd.f32 %v2128, %v2154
        %v2156 = vpop.f32.mrf.mxu0
        %2157 = vdwg.mxu0
        %v2158 = vpack.c.bf16 %v1250, %v1250
        %v2159 = vld [vmem:[#allocation17] sm:$0xf]
        %v2160 = vld [vmem:[#allocation17 + $0x4] sm:$0xf]
        %v2161 = vld [vmem:[#allocation17 + $0x8] sm:$0xf]
        %v2162 = vld [vmem:[#allocation17 + $0xc] sm:$0xf]
        %v2163 = vld [vmem:[#allocation19] sm:$0x1]
        %v2165 = vperm.slane %v2163, 0
        %v2171 = vunpack.c.l.b16 %v2159
        %v2172 = vunpack.c.l.b16 %v2160
        %v2173 = vunpack.c.l.b16 %v2161
        %v2174 = vunpack.c.l.b16 %v2162
        %v2175 = vpack.c.b16 %v2172, %v2171
        %v2176 = vpack.c.b16 %v2174, %v2173
        %v2180 = vsel %vm1274, %v2158, 0
        %2182 = vmatpush.bf16.msra.mxu0 0
        %2183 = vmatpush.bf16.msra.mxu0 0
        %2184 = vmatpush.bf16.msra.mxu0 0
        %2185 = vmatpush.bf16.msra.mxu0 0
        %2186 = vmatpush.bf16.msra.mxu0 0
        %2187 = vmatpush.bf16.msra.mxu0 0
        %2188 = vmatpush.bf16.msra.mxu0 %v2176
        %2189 = vmatpush.bf16.msra.mxu0 %v2175
        %2190 = vmatmul.bf16.gmra.mxu0 %v2180
        %v2191 = vpop.f32.mrf.mxu0
        %v2192 = vadd.f32 %v2165, %v2191
        %v2193 = vpop.f32.mrf.mxu0
        %2194 = vdwg.mxu0
        %v2195 = vld [vmem:[#allocation20] sm:$0xf]
        %v2196 = vld [vmem:[#allocation20 + $0x4] sm:$0xf]
        %v2197 = vld [vmem:[#allocation20 + $0x8] sm:$0xf]
        %v2198 = vld [vmem:[#allocation20 + $0xc] sm:$0xf]
        %v2199 = vld [vmem:[#allocation22] sm:$0x1]
        %2201 = vrot.lane.b32.xlu0 %v2155, 120
        %v2202 = vpop.permute.xlu0 %2201
        %2204 = vrot.lane.b32.xlu0 %v2155, 112
        %v2205 = vpop.permute.xlu0 %2204
        %2207 = vrot.lane.b32.xlu0 %v2155, 104
        %v2208 = vpop.permute.xlu0 %2207
        %v2210 = vrot.slane %v2205, 4
        %v2211 = vsel %vm1344, %v2210, %v2155
        %v2212 = vrot.slane %v2155, 4
        %v2213 = vsel %vm1344, %v2205, %v2212
        %v2215 = vunpack.c.l.s4 1983009808
        %v2216 = vunpack.c.0.s8 %v2215
        %v2217 = vperm.slane %v2211, %v2216
        %v2219 = vunpack.c.l.s4 1983009808
        %v2220 = vunpack.c.0.s8 %v2219
        %v2221 = vperm.slane %v2213, %v2220
        %v2222 = vrot.slane %v2208, 4
        %v2223 = vsel %vm1344, %v2222, %v2202
        %v2224 = vrot.slane %v2202, 4
        %v2225 = vsel %vm1344, %v2208, %v2224
        %v2227 = vunpack.c.l.s4 1983009808
        %v2228 = vunpack.c.0.s8 %v2227
        %v2229 = vperm.slane %v2223, %v2228
        %v2231 = vunpack.c.l.s4 1983009808
        %v2232 = vunpack.c.0.s8 %v2231
        %v2233 = vperm.slane %v2225, %v2232
        %v2234 = vrot.slane %v2229, 4
        %v2235 = vsel %vm1344, %v2234, %v2217
        %v2236 = vrot.slane %v2217, 4
        %v2237 = vsel %vm1344, %v2229, %v2236
        %v2239 = vunpack.c.l.s4 1934713408
        %v2240 = vunpack.c.0.s8 %v2239
        %v2241 = vperm.slane %v2235, %v2240
        %v2243 = vunpack.c.l.s4 1934713408
        %v2244 = vunpack.c.0.s8 %v2243
        %v2245 = vperm.slane %v2237, %v2244
        %v2246 = vrot.slane %v2233, 4
        %v2247 = vsel %vm1344, %v2246, %v2221
        %v2248 = vrot.slane %v2221, 4
        %v2249 = vsel %vm1344, %v2233, %v2248
        %v2251 = vunpack.c.l.s4 1934713408
        %v2252 = vunpack.c.0.s8 %v2251
        %v2253 = vperm.slane %v2247, %v2252
        %v2255 = vunpack.c.l.s4 1934713408
        %v2256 = vunpack.c.0.s8 %v2255
        %v2257 = vperm.slane %v2249, %v2256
        %v2258 = vrot.slane %v2241, 4
        %v2259 = vsel %vm1344, 0.0, %v2258
        %v2260 = vrot.slane %v2245, 4
        %v2261 = vsel %vm1344, 0.0, %v2260
        %v2262 = vrot.slane %v2253, 4
        %v2263 = vsel %vm1344, 0.0, %v2262
        %v2264 = vrot.slane %v2257, 4
        %v2265 = vsel %vm1344, 0.0, %v2264
        %v2266 = vsel %vm1344, %v2260, %v2241
        %v2268 = vunpack.c.l.s4 1983009808
        %v2269 = vunpack.c.0.s8 %v2268
        %v2270 = vperm.slane %v2266, %v2269
        %v2271 = vrot.slane %v2261, 4
        %v2272 = vsel %vm1344, %v2271, %v2259
        %v2274 = vunpack.c.l.s4 1983009808
        %v2275 = vunpack.c.0.s8 %v2274
        %v2276 = vperm.slane %v2272, %v2275
        %v2277 = vsel %vm1344, %v2264, %v2253
        %v2279 = vunpack.c.l.s4 1983009808
        %v2280 = vunpack.c.0.s8 %v2279
        %v2281 = vperm.slane %v2277, %v2280
        %v2282 = vrot.slane %v2265, 4
        %v2283 = vsel %vm1344, %v2282, %v2263
        %v2285 = vunpack.c.l.s4 1983009808
        %v2286 = vunpack.c.0.s8 %v2285
        %v2287 = vperm.slane %v2283, %v2286
        %v2288 = vrot.slane %v2276, 4
        %v2289 = vsel %vm1344, %v2288, %v2270
        %v2290 = vrot.slane %v2270, 4
        %v2291 = vsel %vm1344, %v2276, %v2290
        %v2293 = vunpack.c.l.s4 1934713408
        %v2294 = vunpack.c.0.s8 %v2293
        %v2295 = vperm.slane %v2289, %v2294
        %v2297 = vunpack.c.l.s4 1934713408
        %v2298 = vunpack.c.0.s8 %v2297
        %v2299 = vperm.slane %v2291, %v2298
        %v2300 = vrot.slane %v2287, 4
        %v2301 = vsel %vm1344, %v2300, %v2281
        %v2302 = vrot.slane %v2281, 4
        %v2303 = vsel %vm1344, %v2287, %v2302
        %v2305 = vunpack.c.l.s4 1934713408
        %v2306 = vunpack.c.0.s8 %v2305
        %v2307 = vperm.slane %v2301, %v2306
        %v2309 = vunpack.c.l.s4 1934713408
        %v2310 = vunpack.c.0.s8 %v2309
        %v2311 = vperm.slane %v2303, %v2310
        %v2312 = vrot.slane %v2307, 4
        %v2313 = vsel %vm1344, %v2312, %v2295
        %v2314 = vrot.slane %v2295, 4
        %v2315 = vsel %vm1344, %v2307, %v2314
        %v2316 = vrot.slane %v2311, 4
        %v2317 = vsel %vm1344, %v2316, %v2299
        %v2318 = vrot.slane %v2299, 4
        %v2319 = vsel %vm1344, %v2311, %v2318
        %v2320 = vpack.c.bf16 %v2313, %v2313
        %v2321 = vpack.c.bf16 %v2315, %v2315
        %v2322 = vpack.c.bf16 %v2317, %v2317
        %v2323 = vpack.c.bf16 %v2319, %v2319
        %2325 = vrot.lane.b32.xlu0 %v2192, 120
        %v2326 = vpop.permute.xlu0 %2325
        %2328 = vrot.lane.b32.xlu0 %v2192, 112
        %v2329 = vpop.permute.xlu0 %2328
        %2331 = vrot.lane.b32.xlu0 %v2192, 104
        %v2332 = vpop.permute.xlu0 %2331
        %2334 = vrot.lane.b32.xlu0 %v2192, 96
        %v2335 = vpop.permute.xlu0 %2334
        %2337 = vrot.lane.b32.xlu0 %v2192, 88
        %v2338 = vpop.permute.xlu0 %2337
        %2340 = vrot.lane.b32.xlu0 %v2192, 80
        %v2341 = vpop.permute.xlu0 %2340
        %2343 = vrot.lane.b32.xlu0 %v2192, 72
        %v2344 = vpop.permute.xlu0 %2343
        %v2346 = vrot.slane %v2329, 4
        %v2347 = vsel %vm1344, %v2346, %v2192
        %v2348 = vrot.slane %v2192, 4
        %v2349 = vsel %vm1344, %v2329, %v2348
        %v2351 = vunpack.c.l.s4 1983009808
        %v2352 = vunpack.c.0.s8 %v2351
        %v2353 = vperm.slane %v2347, %v2352
        %v2355 = vunpack.c.l.s4 1983009808
        %v2356 = vunpack.c.0.s8 %v2355
        %v2357 = vperm.slane %v2349, %v2356
        %v2358 = vrot.slane %v2332, 4
        %v2359 = vsel %vm1344, %v2358, %v2326
        %v2360 = vrot.slane %v2326, 4
        %v2361 = vsel %vm1344, %v2332, %v2360
        %v2363 = vunpack.c.l.s4 1983009808
        %v2364 = vunpack.c.0.s8 %v2363
        %v2365 = vperm.slane %v2359, %v2364
        %v2367 = vunpack.c.l.s4 1983009808
        %v2368 = vunpack.c.0.s8 %v2367
        %v2369 = vperm.slane %v2361, %v2368
        %v2370 = vrot.slane %v2341, 4
        %v2371 = vsel %vm1344, %v2370, %v2335
        %v2372 = vrot.slane %v2335, 4
        %v2373 = vsel %vm1344, %v2341, %v2372
        %v2375 = vunpack.c.l.s4 1983009808
        %v2376 = vunpack.c.0.s8 %v2375
        %v2377 = vperm.slane %v2371, %v2376
        %v2379 = vunpack.c.l.s4 1983009808
        %v2380 = vunpack.c.0.s8 %v2379
        %v2381 = vperm.slane %v2373, %v2380
        %v2382 = vrot.slane %v2344, 4
        %v2383 = vsel %vm1344, %v2382, %v2338
        %v2384 = vrot.slane %v2338, 4
        %v2385 = vsel %vm1344, %v2344, %v2384
        %v2387 = vunpack.c.l.s4 1983009808
        %v2388 = vunpack.c.0.s8 %v2387
        %v2389 = vperm.slane %v2383, %v2388
        %v2391 = vunpack.c.l.s4 1983009808
        %v2392 = vunpack.c.0.s8 %v2391
        %v2393 = vperm.slane %v2385, %v2392
        %v2394 = vrot.slane %v2365, 4
        %v2395 = vsel %vm1344, %v2394, %v2353
        %v2396 = vrot.slane %v2353, 4
        %v2397 = vsel %vm1344, %v2365, %v2396
        %v2399 = vunpack.c.l.s4 1934713408
        %v2400 = vunpack.c.0.s8 %v2399
        %v2401 = vperm.slane %v2395, %v2400
        %v2403 = vunpack.c.l.s4 1934713408
        %v2404 = vunpack.c.0.s8 %v2403
        %v2405 = vperm.slane %v2397, %v2404
        %v2406 = vrot.slane %v2369, 4
        %v2407 = vsel %vm1344, %v2406, %v2357
        %v2408 = vrot.slane %v2357, 4
        %v2409 = vsel %vm1344, %v2369, %v2408
        %v2411 = vunpack.c.l.s4 1934713408
        %v2412 = vunpack.c.0.s8 %v2411
        %v2413 = vperm.slane %v2407, %v2412
        %v2415 = vunpack.c.l.s4 1934713408
        %v2416 = vunpack.c.0.s8 %v2415
        %v2417 = vperm.slane %v2409, %v2416
        %v2418 = vrot.slane %v2389, 4
        %v2419 = vsel %vm1344, %v2418, %v2377
        %v2420 = vrot.slane %v2377, 4
        %v2421 = vsel %vm1344, %v2389, %v2420
        %v2423 = vunpack.c.l.s4 1934713408
        %v2424 = vunpack.c.0.s8 %v2423
        %v2425 = vperm.slane %v2419, %v2424
        %v2427 = vunpack.c.l.s4 1934713408
        %v2428 = vunpack.c.0.s8 %v2427
        %v2429 = vperm.slane %v2421, %v2428
        %v2430 = vrot.slane %v2393, 4
        %v2431 = vsel %vm1344, %v2430, %v2381
        %v2432 = vrot.slane %v2381, 4
        %v2433 = vsel %vm1344, %v2393, %v2432
        %v2435 = vunpack.c.l.s4 1934713408
        %v2436 = vunpack.c.0.s8 %v2435
        %v2437 = vperm.slane %v2431, %v2436
        %v2439 = vunpack.c.l.s4 1934713408
        %v2440 = vunpack.c.0.s8 %v2439
        %v2441 = vperm.slane %v2433, %v2440
        %v2442 = vrot.slane %v2425, 4
        %v2443 = vsel %vm1344, %v2442, %v2401
        %v2444 = vrot.slane %v2401, 4
        %v2445 = vsel %vm1344, %v2425, %v2444
        %v2446 = vrot.slane %v2429, 4
        %v2447 = vsel %vm1344, %v2446, %v2405
        %v2448 = vrot.slane %v2405, 4
        %v2449 = vsel %vm1344, %v2429, %v2448
        %v2450 = vrot.slane %v2437, 4
        %v2451 = vsel %vm1344, %v2450, %v2413
        %v2452 = vrot.slane %v2413, 4
        %v2453 = vsel %vm1344, %v2437, %v2452
        %v2454 = vrot.slane %v2441, 4
        %v2455 = vsel %vm1344, %v2454, %v2417
        %v2456 = vrot.slane %v2417, 4
        %v2457 = vsel %vm1344, %v2441, %v2456
        %v2458 = vrot.slane %v2447, 4
        %v2459 = vsel %vm1344, %v2458, %v2443
        %v2460 = vrot.slane %v2443, 4
        %v2461 = vsel %vm1344, %v2447, %v2460
        %v2463 = vunpack.c.l.s4 1983009808
        %v2464 = vunpack.c.0.s8 %v2463
        %v2465 = vperm.slane %v2459, %v2464
        %v2467 = vunpack.c.l.s4 1983009808
        %v2468 = vunpack.c.0.s8 %v2467
        %v2469 = vperm.slane %v2461, %v2468
        %v2470 = vrot.slane %v2449, 4
        %v2471 = vsel %vm1344, %v2470, %v2445
        %v2472 = vrot.slane %v2445, 4
        %v2473 = vsel %vm1344, %v2449, %v2472
        %v2475 = vunpack.c.l.s4 1983009808
        %v2476 = vunpack.c.0.s8 %v2475
        %v2477 = vperm.slane %v2471, %v2476
        %v2479 = vunpack.c.l.s4 1983009808
        %v2480 = vunpack.c.0.s8 %v2479
        %v2481 = vperm.slane %v2473, %v2480
        %v2482 = vrot.slane %v2455, 4
        %v2483 = vsel %vm1344, %v2482, %v2451
        %v2484 = vrot.slane %v2451, 4
        %v2485 = vsel %vm1344, %v2455, %v2484
        %v2487 = vunpack.c.l.s4 1983009808
        %v2488 = vunpack.c.0.s8 %v2487
        %v2489 = vperm.slane %v2483, %v2488
        %v2491 = vunpack.c.l.s4 1983009808
        %v2492 = vunpack.c.0.s8 %v2491
        %v2493 = vperm.slane %v2485, %v2492
        %v2494 = vrot.slane %v2457, 4
        %v2495 = vsel %vm1344, %v2494, %v2453
        %v2496 = vrot.slane %v2453, 4
        %v2497 = vsel %vm1344, %v2457, %v2496
        %v2499 = vunpack.c.l.s4 1983009808
        %v2500 = vunpack.c.0.s8 %v2499
        %v2501 = vperm.slane %v2495, %v2500
        %v2503 = vunpack.c.l.s4 1983009808
        %v2504 = vunpack.c.0.s8 %v2503
        %v2505 = vperm.slane %v2497, %v2504
        %v2506 = vrot.slane %v2477, 4
        %v2507 = vsel %vm1344, %v2506, %v2465
        %v2508 = vrot.slane %v2465, 4
        %v2509 = vsel %vm1344, %v2477, %v2508
        %v2511 = vunpack.c.l.s4 1934713408
        %v2512 = vunpack.c.0.s8 %v2511
        %v2513 = vperm.slane %v2507, %v2512
        %v2515 = vunpack.c.l.s4 1934713408
        %v2516 = vunpack.c.0.s8 %v2515
        %v2517 = vperm.slane %v2509, %v2516
        %v2518 = vrot.slane %v2481, 4
        %v2519 = vsel %vm1344, %v2518, %v2469
        %v2520 = vrot.slane %v2469, 4
        %v2521 = vsel %vm1344, %v2481, %v2520
        %v2523 = vunpack.c.l.s4 1934713408
        %v2524 = vunpack.c.0.s8 %v2523
        %v2525 = vperm.slane %v2519, %v2524
        %v2527 = vunpack.c.l.s4 1934713408
        %v2528 = vunpack.c.0.s8 %v2527
        %v2529 = vperm.slane %v2521, %v2528
        %v2530 = vrot.slane %v2501, 4
        %v2531 = vsel %vm1344, %v2530, %v2489
        %v2532 = vrot.slane %v2489, 4
        %v2533 = vsel %vm1344, %v2501, %v2532
        %v2535 = vunpack.c.l.s4 1934713408
        %v2536 = vunpack.c.0.s8 %v2535
        %v2537 = vperm.slane %v2531, %v2536
        %v2539 = vunpack.c.l.s4 1934713408
        %v2540 = vunpack.c.0.s8 %v2539
        %v2541 = vperm.slane %v2533, %v2540
        %v2542 = vrot.slane %v2505, 4
        %v2543 = vsel %vm1344, %v2542, %v2493
        %v2544 = vrot.slane %v2493, 4
        %v2545 = vsel %vm1344, %v2505, %v2544
        %v2547 = vunpack.c.l.s4 1934713408
        %v2548 = vunpack.c.0.s8 %v2547
        %v2549 = vperm.slane %v2543, %v2548
        %v2551 = vunpack.c.l.s4 1934713408
        %v2552 = vunpack.c.0.s8 %v2551
        %v2553 = vperm.slane %v2545, %v2552
        %v2554 = vrot.slane %v2537, 4
        %v2555 = vsel %vm1344, %v2554, %v2513
        %v2556 = vrot.slane %v2513, 4
        %v2557 = vsel %vm1344, %v2537, %v2556
        %v2558 = vrot.slane %v2541, 4
        %v2559 = vsel %vm1344, %v2558, %v2517
        %v2560 = vrot.slane %v2517, 4
        %v2561 = vsel %vm1344, %v2541, %v2560
        %v2562 = vrot.slane %v2549, 4
        %v2563 = vsel %vm1344, %v2562, %v2525
        %v2564 = vrot.slane %v2525, 4
        %v2565 = vsel %vm1344, %v2549, %v2564
        %v2566 = vrot.slane %v2553, 4
        %v2567 = vsel %vm1344, %v2566, %v2529
        %v2568 = vrot.slane %v2529, 4
        %v2569 = vsel %vm1344, %v2553, %v2568
        %v2570 = vpack.c.bf16 %v2555, %v2555
        %v2571 = vpack.c.bf16 %v2557, %v2557
        %v2572 = vpack.c.bf16 %v2559, %v2559
        %v2573 = vpack.c.bf16 %v2561, %v2561
        %v2574 = vpack.c.bf16 %v2563, %v2563
        %v2575 = vpack.c.bf16 %v2565, %v2565
        %v2576 = vpack.c.bf16 %v2567, %v2567
        %v2577 = vpack.c.bf16 %v2569, %v2569
        %v2579 = vperm.slane %v1252, 0
        %v2582 = vsel %vm1712, %v2320, 0
        %v2585 = vsel %vm1712, %v2570, 0
        %2587 = vmatpush.bf16.xpose.msra.mxu0 0
        %2588 = vmatpush.bf16.xpose.msra.mxu0 0
        %2589 = vmatpush.bf16.xpose.msra.mxu0 0
        %2590 = vmatpush.bf16.xpose.msra.mxu0 0
        %2591 = vmatpush.bf16.xpose.msra.mxu0 0
        %2592 = vmatpush.bf16.xpose.msra.mxu0 0
        %2593 = vmatpush.bf16.xpose.msra.mxu0 0
        %2594 = vmatpush.bf16.xpose.msra.mxu0 %v2585
        %2595 = vmatmul.bf16.gmra.mxu0 %v2582
        %v2596 = vpop.f32.mrf.mxu0
        %v2597 = vadd.f32 %v2579, %v2596
        %v2598 = vpop.f32.mrf.mxu0
        %2599 = vdwg.mxu0
        %v2601 = vsel %vm1712, %v2321, 0
        %v2604 = vsel %vm1712, %v2571, 0
        %2606 = vmatpush.bf16.xpose.msra.mxu0 0
        %2607 = vmatpush.bf16.xpose.msra.mxu0 0
        %2608 = vmatpush.bf16.xpose.msra.mxu0 0
        %2609 = vmatpush.bf16.xpose.msra.mxu0 0
        %2610 = vmatpush.bf16.xpose.msra.mxu0 0
        %2611 = vmatpush.bf16.xpose.msra.mxu0 0
        %2612 = vmatpush.bf16.xpose.msra.mxu0 0
        %2613 = vmatpush.bf16.xpose.msra.mxu0 %v2604
        %2614 = vmatmul.bf16.gmra.mxu0 %v2601
        %v2615 = vpop.f32.mrf.mxu0
        %v2616 = vadd.f32 %v2579, %v2615
        %v2617 = vpop.f32.mrf.mxu0
        %2618 = vdwg.mxu0
        %v2620 = vsel %vm1712, %v2322, 0
        %v2623 = vsel %vm1712, %v2572, 0
        %2625 = vmatpush.bf16.xpose.msra.mxu0 0
        %2626 = vmatpush.bf16.xpose.msra.mxu0 0
        %2627 = vmatpush.bf16.xpose.msra.mxu0 0
        %2628 = vmatpush.bf16.xpose.msra.mxu0 0
        %2629 = vmatpush.bf16.xpose.msra.mxu0 0
        %2630 = vmatpush.bf16.xpose.msra.mxu0 0
        %2631 = vmatpush.bf16.xpose.msra.mxu0 0
        %2632 = vmatpush.bf16.xpose.msra.mxu0 %v2623
        %2633 = vmatmul.bf16.gmra.mxu0 %v2620
        %v2634 = vpop.f32.mrf.mxu0
        %v2635 = vadd.f32 %v2579, %v2634
        %v2636 = vpop.f32.mrf.mxu0
        %2637 = vdwg.mxu0
        %v2639 = vsel %vm1712, %v2323, 0
        %v2642 = vsel %vm1712, %v2573, 0
        %2644 = vmatpush.bf16.xpose.msra.mxu0 0
        %2645 = vmatpush.bf16.xpose.msra.mxu0 0
        %2646 = vmatpush.bf16.xpose.msra.mxu0 0
        %2647 = vmatpush.bf16.xpose.msra.mxu0 0
        %2648 = vmatpush.bf16.xpose.msra.mxu0 0
        %2649 = vmatpush.bf16.xpose.msra.mxu0 0
        %2650 = vmatpush.bf16.xpose.msra.mxu0 0
        %2651 = vmatpush.bf16.xpose.msra.mxu0 %v2642
        %2652 = vmatmul.bf16.gmra.mxu0 %v2639
        %v2653 = vpop.f32.mrf.mxu0
        %v2654 = vadd.f32 %v2579, %v2653
        %v2655 = vpop.f32.mrf.mxu0
        %2656 = vdwg.mxu0
        %v2657 = vsel %vm1712, %v2597, -inf
        %2658 = vmax.xlane.f32.xlu0 %v2657
        %v2659 = vpop.xlane.xlu0 %2658
        %v2660 = vsel %vm1712, %v2616, -inf
        %2661 = vmax.xlane.f32.xlu0 %v2660
        %v2662 = vpop.xlane.xlu0 %2661
        %v2663 = vsel %vm1712, %v2635, -inf
        %2664 = vmax.xlane.f32.xlu0 %v2663
        %v2665 = vpop.xlane.xlu0 %2664
        %v2666 = vsel %vm1712, %v2654, -inf
        %2667 = vmax.xlane.f32.xlu0 %v2666
        %v2668 = vpop.xlane.xlu0 %2667
        %v2669 = vsub.f32 %v2597, %v2659
        %v2670 = vsub.f32 %v2616, %v2662
        %v2671 = vsub.f32 %v2635, %v2665
        %v2672 = vsub.f32 %v2654, %v2668
        %v2673 = vmul.f32 %v2669, 1.442695
        %v2674 = vpow.pop %v2673
        %v2675 = vmul.f32 %v2670, 1.442695
        %v2676 = vpow.pop %v2675
        %v2677 = vmul.f32 %v2671, 1.442695
        %v2678 = vpow.pop %v2677
        %v2679 = vmul.f32 %v2672, 1.442695
        %v2680 = vpow.pop %v2679
        %v2681 = vsel %vm1712, %v2674, 0.0
        %2682 = vadd.xlane.f32.xlu0 %v2681
        %v2683 = vpop.xlane.xlu0 %2682
        %v2684 = vsel %vm1712, %v2676, 0.0
        %2685 = vadd.xlane.f32.xlu0 %v2684
        %v2686 = vpop.xlane.xlu0 %2685
        %v2687 = vsel %vm1712, %v2678, 0.0
        %2688 = vadd.xlane.f32.xlu0 %v2687
        %v2689 = vpop.xlane.xlu0 %2688
        %v2690 = vsel %vm1712, %v2680, 0.0
        %2691 = vadd.xlane.f32.xlu0 %v2690
        %v2692 = vpop.xlane.xlu0 %2691
        %v2693 = vrcp.pop %v2683
        %v2694 = vrcp.pop %v2686
        %v2695 = vrcp.pop %v2689
        %v2696 = vrcp.pop %v2692
        %v2697 = vmul.f32 %v2674, %v2693
        %v2698 = vmul.f32 %v2676, %v2694
        %v2699 = vmul.f32 %v2678, %v2695
        %v2700 = vmul.f32 %v2680, %v2696
        %v2701 = vsel %vm1712, %v2697, 0.0
        %v2702 = vsel %vm1712, %v2698, 0.0
        %v2703 = vadd.f32 %v2701, %v2702
        %v2704 = vsel %vm1712, %v2699, 0.0
        %v2705 = vadd.f32 %v2703, %v2704
        %v2706 = vsel %vm1712, %v2700, 0.0
        %v2707 = vadd.f32 %v2705, %v2706
        %v2708 = vmul.f32 %v2707, 0.25
        %v2709 = vpack.c.bf16 %v2697, %v2697
        %v2710 = vpack.c.bf16 %v2698, %v2698
        %v2711 = vpack.c.bf16 %v2699, %v2699
        %v2712 = vpack.c.bf16 %v2700, %v2700
        %v2714 = vsel %vm1712, %v2709, 0
        %v2717 = vsel %vm1848, %v2574, 0
        %2719 = vmatpush.bf16.msra.mxu0 0
        %2720 = vmatpush.bf16.msra.mxu0 0
        %2721 = vmatpush.bf16.msra.mxu0 0
        %2722 = vmatpush.bf16.msra.mxu0 0
        %2723 = vmatpush.bf16.msra.mxu0 0
        %2724 = vmatpush.bf16.msra.mxu0 0
        %2725 = vmatpush.bf16.msra.mxu0 0
        %2726 = vmatpush.bf16.msra.mxu0 %v2717
        %2727 = vmatmul.bf16.gmra.mxu0 %v2714
        %v2728 = vpop.f32.mrf.mxu0
        %v2729 = vadd.f32 0.0, %v2728
        %v2730 = vpop.f32.mrf.mxu0
        %2731 = vdwg.mxu0
        %v2733 = vsel %vm1712, %v2710, 0
        %v2736 = vsel %vm1848, %v2575, 0
        %2738 = vmatpush.bf16.msra.mxu0 0
        %2739 = vmatpush.bf16.msra.mxu0 0
        %2740 = vmatpush.bf16.msra.mxu0 0
        %2741 = vmatpush.bf16.msra.mxu0 0
        %2742 = vmatpush.bf16.msra.mxu0 0
        %2743 = vmatpush.bf16.msra.mxu0 0
        %2744 = vmatpush.bf16.msra.mxu0 0
        %2745 = vmatpush.bf16.msra.mxu0 %v2736
        %2746 = vmatmul.bf16.gmra.mxu0 %v2733
        %v2747 = vpop.f32.mrf.mxu0
        %v2748 = vadd.f32 0.0, %v2747
        %v2749 = vpop.f32.mrf.mxu0
        %2750 = vdwg.mxu0
        %v2752 = vsel %vm1712, %v2711, 0
        %v2755 = vsel %vm1848, %v2576, 0
        %2757 = vmatpush.bf16.msra.mxu0 0
        %2758 = vmatpush.bf16.msra.mxu0 0
        %2759 = vmatpush.bf16.msra.mxu0 0
        %2760 = vmatpush.bf16.msra.mxu0 0
        %2761 = vmatpush.bf16.msra.mxu0 0
        %2762 = vmatpush.bf16.msra.mxu0 0
        %2763 = vmatpush.bf16.msra.mxu0 0
        %2764 = vmatpush.bf16.msra.mxu0 %v2755
        %2765 = vmatmul.bf16.gmra.mxu0 %v2752
        %v2766 = vpop.f32.mrf.mxu0
        %v2767 = vadd.f32 0.0, %v2766
        %v2768 = vpop.f32.mrf.mxu0
        %2769 = vdwg.mxu0
        %v2771 = vsel %vm1712, %v2712, 0
        %v2774 = vsel %vm1848, %v2577, 0
        %2776 = vmatpush.bf16.msra.mxu0 0
        %2777 = vmatpush.bf16.msra.mxu0 0
        %2778 = vmatpush.bf16.msra.mxu0 0
        %2779 = vmatpush.bf16.msra.mxu0 0
        %2780 = vmatpush.bf16.msra.mxu0 0
        %2781 = vmatpush.bf16.msra.mxu0 0
        %2782 = vmatpush.bf16.msra.mxu0 0
        %2783 = vmatpush.bf16.msra.mxu0 %v2774
        %2784 = vmatmul.bf16.gmra.mxu0 %v2771
        %v2785 = vpop.f32.mrf.mxu0
        %v2786 = vadd.f32 0.0, %v2785
        %v2787 = vpop.f32.mrf.mxu0
        %2788 = vdwg.mxu0
        %v2789 = vrot.slane %v2767, 4
        %v2790 = vsel %vm1344, %v2789, %v2729
        %v2791 = vrot.slane %v2729, 4
        %v2792 = vsel %vm1344, %v2767, %v2791
        %v2794 = vunpack.c.l.s4 1983009808
        %v2795 = vunpack.c.0.s8 %v2794
        %v2796 = vperm.slane %v2790, %v2795
        %v2798 = vunpack.c.l.s4 1983009808
        %v2799 = vunpack.c.0.s8 %v2798
        %v2800 = vperm.slane %v2792, %v2799
        %v2801 = vrot.slane %v2786, 4
        %v2802 = vsel %vm1344, %v2801, %v2748
        %v2803 = vrot.slane %v2748, 4
        %v2804 = vsel %vm1344, %v2786, %v2803
        %v2806 = vunpack.c.l.s4 1983009808
        %v2807 = vunpack.c.0.s8 %v2806
        %v2808 = vperm.slane %v2802, %v2807
        %v2810 = vunpack.c.l.s4 1983009808
        %v2811 = vunpack.c.0.s8 %v2810
        %v2812 = vperm.slane %v2804, %v2811
        %v2813 = vrot.slane %v2808, 4
        %v2814 = vsel %vm1344, %v2813, %v2796
        %v2815 = vrot.slane %v2796, 4
        %v2816 = vsel %vm1344, %v2808, %v2815
        %v2818 = vunpack.c.l.s4 1934713408
        %v2819 = vunpack.c.0.s8 %v2818
        %v2820 = vperm.slane %v2814, %v2819
        %v2822 = vunpack.c.l.s4 1934713408
        %v2823 = vunpack.c.0.s8 %v2822
        %v2824 = vperm.slane %v2816, %v2823
        %v2825 = vrot.slane %v2812, 4
        %v2826 = vsel %vm1344, %v2825, %v2800
        %v2827 = vrot.slane %v2800, 4
        %v2828 = vsel %vm1344, %v2812, %v2827
        %v2830 = vunpack.c.l.s4 1934713408
        %v2831 = vunpack.c.0.s8 %v2830
        %v2832 = vperm.slane %v2826, %v2831
        %v2834 = vunpack.c.l.s4 1934713408
        %v2835 = vunpack.c.0.s8 %v2834
        %v2836 = vperm.slane %v2828, %v2835
        %v2837 = vrot.slane %v2820, 4
        %v2838 = vsel %vm1344, 0.0, %v2837
        %v2839 = vrot.slane %v2824, 4
        %v2840 = vsel %vm1344, 0.0, %v2839
        %v2841 = vrot.slane %v2832, 4
        %v2842 = vsel %vm1344, 0.0, %v2841
        %v2843 = vrot.slane %v2836, 4
        %v2844 = vsel %vm1344, 0.0, %v2843
        %v2845 = vsel %vm1344, %v2839, %v2820
        %v2847 = vunpack.c.l.s4 1983009808
        %v2848 = vunpack.c.0.s8 %v2847
        %v2849 = vperm.slane %v2845, %v2848
        %v2850 = vrot.slane %v2840, 4
        %v2851 = vsel %vm1344, %v2850, %v2838
        %v2853 = vunpack.c.l.s4 1983009808
        %v2854 = vunpack.c.0.s8 %v2853
        %v2855 = vperm.slane %v2851, %v2854
        %v2856 = vsel %vm1344, %v2843, %v2832
        %v2858 = vunpack.c.l.s4 1983009808
        %v2859 = vunpack.c.0.s8 %v2858
        %v2860 = vperm.slane %v2856, %v2859
        %v2861 = vrot.slane %v2844, 4
        %v2862 = vsel %vm1344, %v2861, %v2842
        %v2864 = vunpack.c.l.s4 1983009808
        %v2865 = vunpack.c.0.s8 %v2864
        %v2866 = vperm.slane %v2862, %v2865
        %v2867 = vrot.slane %v2855, 4
        %v2868 = vsel %vm1344, %v2867, %v2849
        %v2869 = vrot.slane %v2849, 4
        %v2870 = vsel %vm1344, %v2855, %v2869
        %v2872 = vunpack.c.l.s4 1934713408
        %v2873 = vunpack.c.0.s8 %v2872
        %v2874 = vperm.slane %v2868, %v2873
        %v2876 = vunpack.c.l.s4 1934713408
        %v2877 = vunpack.c.0.s8 %v2876
        %v2878 = vperm.slane %v2870, %v2877
        %v2879 = vrot.slane %v2866, 4
        %v2880 = vsel %vm1344, %v2879, %v2860
        %v2881 = vrot.slane %v2860, 4
        %v2882 = vsel %vm1344, %v2866, %v2881
        %v2884 = vunpack.c.l.s4 1934713408
        %v2885 = vunpack.c.0.s8 %v2884
        %v2886 = vperm.slane %v2880, %v2885
        %v2888 = vunpack.c.l.s4 1934713408
        %v2889 = vunpack.c.0.s8 %v2888
        %v2890 = vperm.slane %v2882, %v2889
        %v2891 = vrot.slane %v2886, 4
        %v2892 = vsel %vm1344, %v2891, %v2874
        %v2893 = vrot.slane %v2874, 4
        %v2894 = vsel %vm1344, %v2886, %v2893
        %v2895 = vrot.slane %v2890, 4
        %v2896 = vsel %vm1344, %v2895, %v2878
        %v2897 = vrot.slane %v2878, 4
        %v2898 = vsel %vm1344, %v2890, %v2897
        %2900 = vrot.lane.b32.xlu0 %v2894, 8
        %v2901 = vpop.permute.xlu0 %2900
        %2904 = vrot.lane.b32.xlu0 %v2896, 16
        %v2905 = vpop.permute.xlu0 %2904
        %2908 = vrot.lane.b32.xlu0 %v2898, 24
        %v2909 = vpop.permute.xlu0 %2908
        %v2911 = vsel %vm1712, %v2892, %v2901
        %v2912 = vsel %vm2045, %v2911, %v2905
        %v2913 = vsel %vm2047, %v2912, %v2909
        %v2914 = vpack.c.bf16 %v2913, %v2913
        %v2916 = vperm.slane %v2199, 0
        %v2922 = vunpack.c.l.b16 %v2195
        %v2923 = vunpack.c.l.b16 %v2196
        %v2924 = vunpack.c.l.b16 %v2197
        %v2925 = vunpack.c.l.b16 %v2198
        %v2926 = vpack.c.b16 %v2923, %v2922
        %v2927 = vpack.c.b16 %v2925, %v2924
        %v2931 = vsel %vm1274, %v2914, 0
        %2933 = vmatpush.bf16.msra.mxu0 0
        %2934 = vmatpush.bf16.msra.mxu0 0
        %2935 = vmatpush.bf16.msra.mxu0 0
        %2936 = vmatpush.bf16.msra.mxu0 0
        %2937 = vmatpush.bf16.msra.mxu0 0
        %2938 = vmatpush.bf16.msra.mxu0 0
        %2939 = vmatpush.bf16.msra.mxu0 %v2927
        %2940 = vmatpush.bf16.msra.mxu0 %v2926
        %2941 = vmatmul.bf16.gmra.mxu0 %v2931
        %v2942 = vpop.f32.mrf.mxu0
        %v2943 = vadd.f32 %v2916, %v2942
        %v2944 = vpop.f32.mrf.mxu0
        %2945 = vdwg.mxu0
        %v2946 = vadd.f32 %v2120, %v2943
        %v2947 = vld [vmem:[%s47] sm:$0x1]
        %v2948 = vld [vmem:[%s49] sm:$0x1]
        %v2949 = vsel %vm1274, %v2946, 0.0
        %2950 = vadd.xlane.f32.xlu0 %v2949
        %v2951 = vpop.xlane.xlu0 %2950
        %v2952 = vmul.f32 %v2951, %v2093
        %v2953 = vsub.f32 %v2946, %v2952
        %v2954 = vmul.f32 %v2953, %v2953
        %v2955 = vsel %vm1274, %v2954, 0.0
        %2956 = vadd.xlane.f32.xlu0 %v2955
        %v2957 = vpop.xlane.xlu0 %2956
        %v2958 = vmul.f32 %v2957, %v2093
        %v2959 = vadd.f32 %v2958, 1e-05
        %v2960 = vrsqrt.pop %v2959
        %v2961 = vmul.f32 %v2960, %v2959
        %v2962 = vmul.f32 %v2961, %v2960
        %v2963 = vmul.f32 0.5, %v2962
        %v2964 = vsub.f32 1.5, %v2963
        %v2965 = vmul.f32 %v2960, %v2964
        %vm2966 = vweird.f32 %v2959
        %vm2967 = vweird.f32 %v2960
        %vm2968 = vmor %vm2966, %vm2967
        %v2969 = vsel %vm2968, %v2960, %v2965
        %v2970 = vmul.f32 %v2953, %v2969
        %v2972 = vperm.slane %v2947, 0
        %v2974 = vmul.f32 %v2970, %v2972
        %v2976 = vperm.slane %v2948, 0
        %v2978 = vadd.f32 %v2974, %v2976
        %v2979 = vpack.c.bf16 %v2978, %v2978
        %v2980 = vld [vmem:[#allocation23] sm:$0xf]
        %v2981 = vld [vmem:[#allocation23 + $0x4] sm:$0xf]
        %v2982 = vld [vmem:[#allocation23 + $0x8] sm:$0xf]
        %v2983 = vld [vmem:[#allocation23 + $0xc] sm:$0xf]
        %v2984 = vld [vmem:[#allocation25] sm:$0x1]
        %v2986 = vperm.slane %v2984, 0
        %v2992 = vunpack.c.l.b16 %v2980
        %v2993 = vunpack.c.l.b16 %v2981
        %v2994 = vunpack.c.l.b16 %v2982
        %v2995 = vunpack.c.l.b16 %v2983
        %v2996 = vpack.c.b16 %v2993, %v2992
        %v2997 = vpack.c.b16 %v2995, %v2994
        %v3001 = vsel %vm1274, %v2979, 0
        %3003 = vmatpush.bf16.msra.mxu0 0
        %3004 = vmatpush.bf16.msra.mxu0 0
        %3005 = vmatpush.bf16.msra.mxu0 0
        %3006 = vmatpush.bf16.msra.mxu0 0
        %3007 = vmatpush.bf16.msra.mxu0 0
        %3008 = vmatpush.bf16.msra.mxu0 0
        %3009 = vmatpush.bf16.msra.mxu0 %v2997
        %3010 = vmatpush.bf16.msra.mxu0 %v2996
        %3011 = vmatmul.bf16.gmra.mxu0 %v3001
        %v3012 = vpop.f32.mrf.mxu0
        %v3013 = vadd.f32 %v2986, %v3012
        %v3014 = vpop.f32.mrf.mxu0
        %3015 = vdwg.mxu0
        %v3016 = vmax.f32 %v3013, 0.0
        %v3017 = vpack.c.bf16 %v3016, %v3016
        %v3018 = vld [vmem:[%s39] sm:$0xf]
        %v3019 = vld [vmem:[%s39 + $0x4] sm:$0xf]
        %v3020 = vld [vmem:[%s39 + $0x8] sm:$0xf]
        %v3021 = vld [vmem:[%s39 + $0xc] sm:$0xf]
        %v3022 = vld [vmem:[%s39 + $0x10] sm:$0xf]
        %v3023 = vld [vmem:[%s39 + $0x14] sm:$0xf]
        %v3024 = vld [vmem:[%s39 + $0x18] sm:$0xf]
        %v3025 = vld [vmem:[%s39 + $0x1c] sm:$0xf]
        %v3026 = vld [vmem:[%s41] sm:$0x1]
        %v3028 = vperm.slane %v3026, 0
        %v3038 = vunpack.c.l.b16 %v3018
        %v3039 = vunpack.c.l.b16 %v3019
        %v3040 = vunpack.c.l.b16 %v3020
        %v3041 = vunpack.c.l.b16 %v3021
        %v3042 = vunpack.c.l.b16 %v3022
        %v3043 = vunpack.c.l.b16 %v3023
        %v3044 = vunpack.c.l.b16 %v3024
        %v3045 = vunpack.c.l.b16 %v3025
        %v3046 = vpack.c.b16 %v3039, %v3038
        %v3047 = vpack.c.b16 %v3041, %v3040
        %v3048 = vpack.c.b16 %v3043, %v3042
        %v3049 = vpack.c.b16 %v3045, %v3044
        %vm3054 = vcmask 523264
        %v3056 = vsel %vm3054, %v3017, 0
        %3058 = vmatpush.bf16.msra.mxu0 0
        %3059 = vmatpush.bf16.msra.mxu0 0
        %3060 = vmatpush.bf16.msra.mxu0 0
        %3061 = vmatpush.bf16.msra.mxu0 0
        %3062 = vmatpush.bf16.msra.mxu0 %v3049
        %3063 = vmatpush.bf16.msra.mxu0 %v3048
        %3064 = vmatpush.bf16.msra.mxu0 %v3047
        %3065 = vmatpush.bf16.msra.mxu0 %v3046
        %3066 = vmatmul.bf16.gmra.mxu0 %v3056
        %v3067 = vpop.f32.mrf.mxu0
        %v3068 = vadd.f32 %v3028, %v3067
        %v3069 = vpop.f32.mrf.mxu0
        %3070 = vdwg.mxu0
        %v3071 = vadd.f32 %v2978, %v3068
        %v3072 = vld [vmem:[%s51] sm:$0x1]
        %v3073 = vld [vmem:[#allocation26] sm:$0x1]
        %v3074 = vsel %vm1274, %v3071, 0.0
        %3075 = vadd.xlane.f32.xlu0 %v3074
        %v3076 = vpop.xlane.xlu0 %3075
        %v3077 = vmul.f32 %v3076, %v2093
        %v3078 = vsub.f32 %v3071, %v3077
        %v3079 = vmul.f32 %v3078, %v3078
        %v3080 = vsel %vm1274, %v3079, 0.0
        %3081 = vadd.xlane.f32.xlu0 %v3080
        %v3082 = vpop.xlane.xlu0 %3081
        %v3083 = vmul.f32 %v3082, %v2093
        %v3084 = vadd.f32 %v3083, 1e-05
        %v3085 = vrsqrt.pop %v3084
        %v3086 = vmul.f32 %v3085, %v3084
        %v3087 = vmul.f32 %v3086, %v3085
        %v3088 = vmul.f32 0.5, %v3087
        %v3089 = vsub.f32 1.5, %v3088
        %v3090 = vmul.f32 %v3085, %v3089
        %vm3091 = vweird.f32 %v3084
        %vm3092 = vweird.f32 %v3085
        %vm3093 = vmor %vm3091, %vm3092
        %v3094 = vsel %vm3093, %v3085, %v3090
        %v3095 = vmul.f32 %v3078, %v3094
        %v3097 = vperm.slane %v3072, 0
        %v3099 = vmul.f32 %v3095, %v3097
        %v3101 = vperm.slane %v3073, 0
        %v3103 = vadd.f32 %v3099, %v3101
        %3104 = vst.msk [vmem:[%s1214] sm:$0xff] %vm1274, %v3103
        %3105 = vst.msk [vmem:[%s1221] sm:$0xff] %vm1712, %v1840
        %3106 = vst.msk [vmem:[%s1228] sm:$0xff] %vm1712, %v2708
        %s3107 = sand.u32 %s702, 1
        %s3108 = scalar_lea.sflag [#allocation4], %s3107
        %s3109 = sand.u32 %s702, 1
        %s3110 = smul.addr %s3109, 8
        %s3111 = scalar_lea.vmem [#allocation28], %s3110
        %s3112 = sand.u32 %s86, 1
        %s3113 = scalar_lea.sflag [#allocation30], %s3112
        %s3114 = sand.u32 %s730, 1
        %s3115 = smul.addr %s3114, 8
        %s3116 = scalar_lea.vmem [#allocation29], %s3115
        %s3117 = sand.u32 %s86, 1
        %s3118 = scalar_lea.sflag [#allocation30], %s3117
        %s3119 = sand.u32 %s758, 1
        %s3120 = smul.addr %s3119, 8
        %s3121 = scalar_lea.vmem [#allocation31], %s3120
        // Predicated region
        $region193: #{tpu_custom_call.1} parent=127 // pred_check
          %p3122 = pneg %p712
        $region194: #{tpu_custom_call.1} parent=127 // pred_check_branch
          %3124 = sbr.rel (%p3122) target = $region196
        $region195: #{tpu_custom_call.1} parent=127 // pred_region
          %3126 = vsyncadd %s3108, 0
          %s3127 = sadd.s32 %s91, %s90
          %s3128 = smul.addr %s3127, 8
          %s3129 = scalar_lea.hbm %s55, %s3128
          %s3131 = sshll.u32 %s3111, 4
          %s3132 = int_to_ptr.vmem [resolvable:$true] %s3131
          %s3133 = sshll.u32 %s3129, 4
          %s3134 = int_to_ptr.hbm [resolvable:$true] %s3133
          %3136 = dma.vmem_to_hbm [thread:$0]  %s3132, 128, %s3134, %s3108
        $region196: #{tpu_custom_call.1} parent=127 // pred_fallthru
          _
        // Predicated region
        $region197: #{tpu_custom_call.1} parent=127 // pred_check
          %p3137 = pneg %p740
        $region198: #{tpu_custom_call.1} parent=127 // pred_check_branch
          %3139 = sbr.rel (%p3137) target = $region200
        $region199: #{tpu_custom_call.1} parent=127 // pred_region
          %3141 = vsyncadd %s3113, 0
          %s3142 = sadd.s32 %s91, %s90
          %s3143 = smul.addr %s3142, 8
          %s3144 = scalar_lea.hbm %s57, %s3143
          %s3146 = sshll.u32 %s3116, 4
          %s3147 = int_to_ptr.vmem [resolvable:$true] %s3146
          %s3148 = sshll.u32 %s3144, 4
          %s3149 = int_to_ptr.hbm [resolvable:$true] %s3148
          %3151 = dma.vmem_to_hbm [thread:$0]  %s3147, 128, %s3149, %s3113
        $region200: #{tpu_custom_call.1} parent=127 // pred_fallthru
          _
        // Predicated region
        $region201: #{tpu_custom_call.1} parent=127 // pred_check
          %p3152 = pneg %p768
        $region202: #{tpu_custom_call.1} parent=127 // pred_check_branch
          %3154 = sbr.rel (%p3152) target = $region204
        $region203: #{tpu_custom_call.1} parent=127 // pred_region
          %3156 = vsyncadd %s3118, 0
          %s3157 = sadd.s32 %s91, %s90
          %s3158 = smul.addr %s3157, 8
          %s3159 = scalar_lea.hbm %s59, %s3158
          %s3161 = sshll.u32 %s3121, 4
          %s3162 = int_to_ptr.vmem [resolvable:$true] %s3161
          %s3163 = sshll.u32 %s3159, 4
          %s3164 = int_to_ptr.hbm [resolvable:$true] %s3163
          %3166 = dma.vmem_to_hbm [thread:$0]  %s3162, 128, %s3164, %s3118
        $region204: #{tpu_custom_call.1} parent=127 // pred_fallthru
          _
      $region128: #{tpu_custom_call.1} parent=5 // pred_fallthru
        _
      %p3167 = scmp.le.s32.totalorder 2, %s81
      // Predicated region
      $region205: #{tpu_custom_call.1} parent=5 // pred_check
        %p3168 = pneg %p3167
      $region206: #{tpu_custom_call.1} parent=5 // pred_check_branch
        %3170 = sbr.rel (%p3168) target = $region208
      $region207: #{tpu_custom_call.1} parent=5 // pred_region
        %s3171 = ssub.s32 %s81, 2
        // Predicated region
        $region209: #{tpu_custom_call.1} parent=207 // pred_check
          %p3172 = pneg %p718
        $region210: #{tpu_custom_call.1} parent=207 // pred_check_branch
          %3174 = sbr.rel (%p3172) target = $region212
        $region211: #{tpu_custom_call.1} parent=207 // pred_region
          %s3175 = sand.u32 %s703, 1
          %s3176 = scalar_lea.sflag [#allocation4], %s3175
          %s3177 = sand.u32 %s703, 1
          %s3178 = smul.addr %s3177, 8
          %s3179 = scalar_lea.vmem [#allocation28], %s3178
          %3181 = dma.done %s3176, 128
        $region212: #{tpu_custom_call.1} parent=207 // pred_fallthru
          _
        // Predicated region
        $region213: #{tpu_custom_call.1} parent=207 // pred_check
          %p3182 = pneg %p746
        $region214: #{tpu_custom_call.1} parent=207 // pred_check_branch
          %3184 = sbr.rel (%p3182) target = $region216
        $region215: #{tpu_custom_call.1} parent=207 // pred_region
          %s3185 = sand.u32 %s87, 1
          %s3186 = scalar_lea.sflag [#allocation30], %s3185
          %s3187 = sand.u32 %s731, 1
          %s3188 = smul.addr %s3187, 8
          %s3189 = scalar_lea.vmem [#allocation29], %s3188
          %3191 = dma.done %s3186, 128
        $region216: #{tpu_custom_call.1} parent=207 // pred_fallthru
          _
        // Predicated region
        $region217: #{tpu_custom_call.1} parent=207 // pred_check
          %p3192 = pneg %p774
        $region218: #{tpu_custom_call.1} parent=207 // pred_check_branch
          %3194 = sbr.rel (%p3192) target = $region220
        $region219: #{tpu_custom_call.1} parent=207 // pred_region
          %s3195 = sand.u32 %s87, 1
          %s3196 = scalar_lea.sflag [#allocation30], %s3195
          %s3197 = sand.u32 %s759, 1
          %s3198 = smul.addr %s3197, 8
          %s3199 = scalar_lea.vmem [#allocation31], %s3198
          %3201 = dma.done %s3196, 128
        $region220: #{tpu_custom_call.1} parent=207 // pred_fallthru
          _
      $region208: #{tpu_custom_call.1} parent=5 // pred_fallthru
        _
    $region6: #{tpu_custom_call.1} parent=1 // loop_footer
      %s85 = sadd.s32 1, %s81
    $region7: #{tpu_custom_call.1} parent=1 // loop_footer_branch
      %80 = sbr.rel target = $region3
    $region8: #{tpu_custom_call.1} parent=1 // loop_exit
      _
    %3202 = vsyncpa [#allocation3], 1
    %s3203 = scalar_lea.sflag [#allocation3], 1
    %3204 = vsyncpa %s3203, 1
    %3205 = vsyncpa [#allocation6], 1
    %3206 = vsyncpa [#allocation9], 1
    %3207 = vsyncpa [#allocation12], 1
    %3208 = vsyncpa [#allocation15], 1
    %3209 = vsyncpa [#allocation18], 1
    %3210 = vsyncpa [#allocation21], 1
    %3211 = vsyncpa [#allocation24], 1
    %3212 = vsyncpa [#allocation27], 1
    %3213 = vsyncpa [#allocation4], 1
    %s3214 = scalar_lea.sflag [#allocation4], 1
    %3215 = vsyncpa %s3214, 1
    %3216 = vsyncpa [#allocation30], 1
    %s3217 = scalar_lea.sflag [#allocation30], 1
    %3218 = vsyncpa %s3217, 1

// kernel: tpu_custom_call.1
$region0: #{tpu_custom_call.1}
  #allocation0 [shape = 'u32[]', space=smem, size = 0x4, offset = 0x4, fixed_abs, tag = 'smem constant byte address 0x4 - core index']
  #allocation1 [shape = 'u32[72,128]{1,0:T(1,128)}', space=vmem, size = 0x9000, scoped, tag = 'internal scratch']
  %s0 = inlined_call_operand.smem [shape: u32[30], index: -1, kind: input, shape index: {}]
  %s1 = sld [smem:[%s0]]
  %s2 = scalar_lea.smem %s0, 1
  %s3 = sld [smem:[%s2]]
  %s4 = scalar_lea.smem %s0, 2
  %s5 = sld [smem:[%s4]]
  %s6 = scalar_lea.smem %s0, 3
  %s7 = sld [smem:[%s6]]
  %s8 = scalar_lea.smem %s0, 4
  %s9 = sld [smem:[%s8]]
  %s10 = scalar_lea.smem %s0, 5
  %s11 = sld [smem:[%s10]]
  %s12 = scalar_lea.smem %s0, 6
  %s13 = sld [smem:[%s12]]
  %s14 = scalar_lea.smem %s0, 7
  %s15 = sld [smem:[%s14]]
  %s16 = scalar_lea.smem %s0, 8
  %s17 = sld [smem:[%s16]]
  %s18 = scalar_lea.smem %s0, 9
  %s19 = sld [smem:[%s18]]
  %s20 = scalar_lea.smem %s0, 10
  %s21 = sld [smem:[%s20]]
  %s22 = scalar_lea.smem %s0, 11
  %s23 = sld [smem:[%s22]]
  %s24 = scalar_lea.smem %s0, 12
  %s25 = sld [smem:[%s24]]
  %s26 = scalar_lea.smem %s0, 13
  %s27 = sld [smem:[%s26]]
  %s28 = scalar_lea.smem %s0, 14
  %s29 = sld [smem:[%s28]]
  %s30 = scalar_lea.smem %s0, 15
  %s31 = sld [smem:[%s30]]
  %s32 = scalar_lea.smem %s0, 16
  %s33 = sld [smem:[%s32]]
  %s34 = scalar_lea.smem %s0, 17
  %s35 = sld [smem:[%s34]]
  %s36 = scalar_lea.smem %s0, 18
  %s37 = sld [smem:[%s36]]
  %s38 = scalar_lea.smem %s0, 19
  %s39 = sld [smem:[%s38]]
  %s40 = scalar_lea.smem %s0, 20
  %s41 = sld [smem:[%s40]]
  %s42 = scalar_lea.smem %s0, 21
  %s43 = sld [smem:[%s42]]
  %s44 = scalar_lea.smem %s0, 22
  %s45 = sld [smem:[%s44]]
  %s46 = scalar_lea.smem %s0, 23
  %s47 = sld [smem:[%s46]]
  %s48 = scalar_lea.smem %s0, 24
  %s49 = sld [smem:[%s48]]
  %s50 = scalar_lea.smem %s0, 25
  %s51 = sld [smem:[%s50]]
  %s52 = scalar_lea.smem %s0, 26
  %s53 = sld [smem:[%s52]]
  %s54 = scalar_lea.smem %s0, 27
  %s55 = sld [smem:[%s54]]
  %s56 = scalar_lea.smem %s0, 28
  %s57 = sld [smem:[%s56]]
  %s58 = scalar_lea.smem %s0, 29
  %s59 = sld [smem:[%s58]]
  %60 = xla_tuple %s55, %s57, %s59
  %s61 = sld [smem:[#allocation0]]
  $region221: #{tpu_custom_call.1} parent=0
    _
  %s63 = ssub.s32 1, %s61
  %s64 = scalar_select 0, %s63, %s61
  $region1: #{tpu_custom_call.1} parent=0
    #allocation2 [shape = 'u8[4096]{0}', space=vmem, size = 0x1000, scoped, tag = 'input window, operand 3, single buffered']
    #allocation3 [shape = 's32[2]{0}', space=sflag, size = 0x8, scoped, tag = 'scoped memory for tpu_custom_call.1']
    #allocation4 [shape = 's32[2]{0}', space=sflag, size = 0x8, scoped, tag = 'scoped memory for tpu_custom_call.1']
    #allocation5 [shape = 'u8[8192]{0}', space=vmem, size = 0x2000, scoped, tag = 'input window, operand 5, single buffered']
    #allocation6 [shape = 's32[1]{0}', space=sflag, size = 0x4, scoped, tag = 'scoped memory for tpu_custom_call.1']
    #allocation7 [shape = 'u8[512]{0}', space=vmem, size = 0x400, scoped, tag = 'input window, operand 6, single buffered']
    #allocation8 [shape = 'u8[8192]{0}', space=vmem, size = 0x2000, scoped, tag = 'input window, operand 7, single buffered']
    #allocation9 [shape = 's32[1]{0}', space=sflag, size = 0x4, scoped, tag = 'scoped memory for tpu_custom_call.1']
    #allocation10 [shape = 'u8[512]{0}', space=vmem, size = 0x400, scoped, tag = 'input window, operand 8, single buffered']
    #allocation11 [shape = 'u8[8192]{0}', space=vmem, size = 0x2000, scoped, tag = 'input window, operand 9, single buffered']
    #allocation12 [shape = 's32[1]{0}', space=sflag, size = 0x4, scoped, tag = 'scoped memory for tpu_custom_call.1']
    #allocation13 [shape = 'u8[512]{0}', space=vmem, size = 0x400, scoped, tag = 'input window, operand 10, single buffered']
    #allocation14 [shape = 'u8[8192]{0}', space=vmem, size = 0x2000, scoped, tag = 'input window, operand 11, single buffered']
    #allocation15 [shape = 's32[1]{0}', space=sflag, size = 0x4, scoped, tag = 'scoped memory for tpu_custom_call.1']
    #allocation16 [shape = 'u8[512]{0}', space=vmem, size = 0x400, scoped, tag = 'input window, operand 12, single buffered']
    #allocation17 [shape = 'u8[8192]{0}', space=vmem, size = 0x2000, scoped, tag = 'input window, operand 13, single buffered']
    #allocation18 [shape = 's32[1]{0}', space=sflag, size = 0x4, scoped, tag = 'scoped memory for tpu_custom_call.1']
    #allocation19 [shape = 'u8[512]{0}', space=vmem, size = 0x400, scoped, tag = 'input window, operand 14, single buffered']
    #allocation20 [shape = 'u8[8192]{0}', space=vmem, size = 0x2000, scoped, tag = 'input window, operand 15, single buffered']
    #allocation21 [shape = 's32[1]{0}', space=sflag, size = 0x4, scoped, tag = 'scoped memory for tpu_custom_call.1']
    #allocation22 [shape = 'u8[512]{0}', space=vmem, size = 0x400, scoped, tag = 'input window, operand 16, single buffered']
    #allocation23 [shape = 'u8[8192]{0}', space=vmem, size = 0x2000, scoped, tag = 'input window, operand 17, single buffered']
    #allocation24 [shape = 's32[1]{0}', space=sflag, size = 0x4, scoped, tag = 'scoped memory for tpu_custom_call.1']
    #allocation25 [shape = 'u8[512]{0}', space=vmem, size = 0x400, scoped, tag = 'input window, operand 18, single buffered']
    #allocation26 [shape = 'u8[512]{0}', space=vmem, size = 0x400, scoped, tag = 'input window, operand 26, single buffered']
    #allocation27 [shape = 's32[1]{0}', space=sflag, size = 0x4, scoped, tag = 'scoped memory for tpu_custom_call.1']
    #allocation28 [shape = 'u8[8192]{0}', space=vmem, size = 0x2000, scoped, tag = 'output window, operand 0']
    #allocation29 [shape = 'u8[8192]{0}', space=vmem, size = 0x2000, scoped, tag = 'output window, operand 1']
    #allocation30 [shape = 's32[2]{0}', space=sflag, size = 0x8, scoped, tag = 'scoped memory for tpu_custom_call.1']
    #allocation31 [shape = 'u8[8192]{0}', space=vmem, size = 0x2000, scoped, tag = 'output window, operand 2']
    %65 = vsyncpa [#allocation3], 0
    %66 = vsyncpa [#allocation6], 0
    %67 = vsyncpa [#allocation9], 0
    %68 = vsyncpa [#allocation12], 0
    %69 = vsyncpa [#allocation15], 0
    %70 = vsyncpa [#allocation18], 0
    %71 = vsyncpa [#allocation21], 0
    %72 = vsyncpa [#allocation24], 0
    %73 = vsyncpa [#allocation27], 0
    %74 = vsyncpa [#allocation4], 0
    %s75 = scalar_lea.sflag [#allocation4], 1
    %76 = vsyncpa %s75, 0
    %77 = vsyncpa [#allocation30], 0
    %s78 = scalar_lea.sflag [#allocation30], 1
    %79 = vsyncpa %s78, 0
    loop: start=0, step=1, limit=4
    $region2: #{tpu_custom_call.1} parent=1 // loop_pre_header
      _
    $region3: #{tpu_custom_call.1} parent=1 // loop_header
      %s81 = sphi 0, %s85
      %p82 = scmp.ge.s32.totalorder %s81, 4
      %s88 = sphi 0, %s100
      %s89 = sphi 0, %s96
      %s90 = sphi 0, %s88
      %s91 = sphi 0, %s89
      %s92 = sphi 0, %s90
      %s93 = sphi 0, %s91
      %s105 = sphi 0, %s107
      %s108 = sphi 0, %s105
      %s109 = sphi 0, %s108
      %s125 = sphi 0, %s109
      %s131 = sphi 0, %s133
      %s134 = sphi 0, %s131
      %s135 = sphi 0, %s134
      %s151 = sphi 0, %s135
      %s157 = sphi 0, %s159
      %s160 = sphi 0, %s157
      %s161 = sphi 0, %s160
      %s177 = sphi 0, %s161
      %s183 = sphi 0, %s185
      %s186 = sphi 0, %s183
      %s187 = sphi 0, %s186
      %s203 = sphi 0, %s187
      %s209 = sphi 0, %s211
      %s212 = sphi 0, %s209
      %s213 = sphi 0, %s212
      %s229 = sphi 0, %s213
      %s233 = sphi 0, %s233
      %s235 = sphi 0, %s233
      %s236 = sphi 0, %s235
      %s250 = sphi 0, %s236
      %s254 = sphi 0, %s254
      %s256 = sphi 0, %s254
      %s257 = sphi 0, %s256
      %s271 = sphi 0, %s257
      %s275 = sphi 0, %s275
      %s277 = sphi 0, %s275
      %s278 = sphi 0, %s277
      %s292 = sphi 0, %s278
      %s296 = sphi 0, %s296
      %s298 = sphi 0, %s296
      %s299 = sphi 0, %s298
      %s313 = sphi 0, %s299
      %s317 = sphi 0, %s317
      %s319 = sphi 0, %s317
      %s320 = sphi 0, %s319
      %s334 = sphi 0, %s320
      %s338 = sphi 0, %s338
      %s340 = sphi 0, %s338
      %s341 = sphi 0, %s340
      %s355 = sphi 0, %s341
      %s359 = sphi 0, %s359
      %s361 = sphi 0, %s359
      %s362 = sphi 0, %s361
      %s376 = sphi 0, %s362
      %s380 = sphi 0, %s380
      %s382 = sphi 0, %s380
      %s383 = sphi 0, %s382
      %s397 = sphi 0, %s383
      %s401 = sphi 0, %s401
      %s403 = sphi 0, %s401
      %s404 = sphi 0, %s403
      %s418 = sphi 0, %s404
      %s422 = sphi 0, %s422
      %s424 = sphi 0, %s422
      %s425 = sphi 0, %s424
      %s439 = sphi 0, %s425
      %s443 = sphi 0, %s443
      %s445 = sphi 0, %s443
      %s446 = sphi 0, %s445
      %s460 = sphi 0, %s446
      %s464 = sphi 0, %s464
      %s466 = sphi 0, %s464
      %s467 = sphi 0, %s466
      %s481 = sphi 0, %s467
      %s485 = sphi 0, %s485
      %s487 = sphi 0, %s485
      %s488 = sphi 0, %s487
      %s502 = sphi 0, %s488
      %s506 = sphi 0, %s506
      %s508 = sphi 0, %s506
      %s509 = sphi 0, %s508
      %s523 = sphi 0, %s509
      %s527 = sphi 0, %s527
      %s529 = sphi 0, %s527
      %s530 = sphi 0, %s529
      %s544 = sphi 0, %s530
      %s548 = sphi 0, %s548
      %s550 = sphi 0, %s548
      %s551 = sphi 0, %s550
      %s565 = sphi 0, %s551
      %s569 = sphi 0, %s569
      %s571 = sphi 0, %s569
      %s572 = sphi 0, %s571
      %s586 = sphi 0, %s572
      %s590 = sphi 0, %s590
      %s592 = sphi 0, %s590
      %s593 = sphi 0, %s592
      %s607 = sphi 0, %s593
      %s611 = sphi 0, %s611
      %s613 = sphi 0, %s611
      %s614 = sphi 0, %s613
      %s628 = sphi 0, %s614
      %s632 = sphi 0, %s632
      %s634 = sphi 0, %s632
      %s635 = sphi 0, %s634
      %s649 = sphi 0, %s635
      %s653 = sphi 0, %s653
      %s655 = sphi 0, %s653
      %s656 = sphi 0, %s655
      %s670 = sphi 0, %s656
      %s674 = sphi 0, %s674
      %s676 = sphi 0, %s674
      %s677 = sphi 0, %s676
      %s691 = sphi 0, %s677
      %s699 = sphi 0, %s701
      %s702 = sphi 0, %s699
      %s703 = sphi 0, %s702
      %s719 = sphi 0, %s703
      %s727 = sphi 0, %s729
      %s730 = sphi 0, %s727
      %s731 = sphi 0, %s730
      %s747 = sphi 0, %s731
      %s755 = sphi 0, %s757
      %s758 = sphi 0, %s755
      %s759 = sphi 0, %s758
      %s775 = sphi 0, %s759
    $region4: #{tpu_custom_call.1} parent=1 // loop_header_branch
      %84 = sbr.rel (%p82) target = $region8
    $region5: #{tpu_custom_call.1} parent=1 // loop_body
      %s86 = ssub.s32 %s81, 1
      %s87 = ssub.s32 %s81, 2
      %s94 = sadd.s32 1, %s89
      %p95 = scmp.ge.s32.totalorder %s94, 1
      %s96 = scalar_select %p95, 0, %s94
      %s97 = sadd.s32 1, %s88
      %s98 = scalar_select %p95, %s97, %s88
      %p99 = scmp.ge.s32.totalorder %s98, 2
      %s100 = scalar_select %p99, 0, %s98
      %s101 = ssub.s32 %s88, %s100
      %s102 = ssub.s32 %s89, %s96
      %s103 = sor.u32 %s101, %s102
      %p104 = scmp.eq.s32.totalorder %s103, 0
      %s106 = sadd.s32 %s105, 1
      %s107 = scalar_select %p104, %s105, %s106
      %p110 = pneg %p104
      %p111 = scmp.eq.s32.totalorder %s81, 1
      %p112 = por %p110, %p111
      %p113 = scmp.ne.s32.totalorder %s105, %s108
      %p114 = scmp.eq.s32.totalorder %s81, 0
      %p115 = por %p113, %p114
      %p116 = scmp.ne.s32.totalorder %s105, %s108
      %p117 = scmp.eq.s32.totalorder %s86, 1
      %p118 = por %p116, %p117
      %p119 = scmp.ne.s32.totalorder %s108, %s109
      %p120 = scmp.eq.s32.totalorder %s86, 0
      %p121 = por %p119, %p120
      %p122 = scmp.ne.s32.totalorder %s108, %s109
      %p123 = scmp.eq.s32.totalorder %s87, 1
      %p124 = por %p122, %p123
      %p126 = scmp.ne.s32.totalorder %s109, %s125
      %p127 = scmp.eq.s32.totalorder %s87, 0
      %p128 = por %p126, %p127
      %s129 = ssub.s32 %s88, %s100
      %p130 = scmp.eq.s32.totalorder %s129, 0
      %s132 = sadd.s32 %s131, 1
      %s133 = scalar_select %p130, %s131, %s132
      %p136 = pneg %p130
      %p137 = scmp.eq.s32.totalorder %s81, 1
      %p138 = por %p136, %p137
      %p139 = scmp.ne.s32.totalorder %s131, %s134
      %p140 = scmp.eq.s32.totalorder %s81, 0
      %p141 = por %p139, %p140
      %p142 = scmp.ne.s32.totalorder %s131, %s134
      %p143 = scmp.eq.s32.totalorder %s86, 1
      %p144 = por %p142, %p143
      %p145 = scmp.ne.s32.totalorder %s134, %s135
      %p146 = scmp.eq.s32.totalorder %s86, 0
      %p147 = por %p145, %p146
      %p148 = scmp.ne.s32.totalorder %s134, %s135
      %p149 = scmp.eq.s32.totalorder %s87, 1
      %p150 = por %p148, %p149
      %p152 = scmp.ne.s32.totalorder %s135, %s151
      %p153 = scmp.eq.s32.totalorder %s87, 0
      %p154 = por %p152, %p153
      %s155 = ssub.s32 %s88, %s100
      %p156 = scmp.eq.s32.totalorder %s155, 0
      %s158 = sadd.s32 %s157, 1
      %s159 = scalar_select %p156, %s157, %s158
      %p162 = pneg %p156
      %p163 = scmp.eq.s32.totalorder %s81, 1
      %p164 = por %p162, %p163
      %p165 = scmp.ne.s32.totalorder %s157, %s160
      %p166 = scmp.eq.s32.totalorder %s81, 0
      %p167 = por %p165, %p166
      %p168 = scmp.ne.s32.totalorder %s157, %s160
      %p169 = scmp.eq.s32.totalorder %s86, 1
      %p170 = por %p168, %p169
      %p171 = scmp.ne.s32.totalorder %s160, %s161
      %p172 = scmp.eq.s32.totalorder %s86, 0
      %p173 = por %p171, %p172
      %p174 = scmp.ne.s32.totalorder %s160, %s161
      %p175 = scmp.eq.s32.totalorder %s87, 1
      %p176 = por %p174, %p175
      %p178 = scmp.ne.s32.totalorder %s161, %s177
      %p179 = scmp.eq.s32.totalorder %s87, 0
      %p180 = por %p178, %p179
      %s181 = ssub.s32 %s89, %s96
      %p182 = scmp.eq.s32.totalorder %s181, 0
      %s184 = sadd.s32 %s183, 1
      %s185 = scalar_select %p182, %s183, %s184
      %p188 = pneg %p182
      %p189 = scmp.eq.s32.totalorder %s81, 1
      %p190 = por %p188, %p189
      %p191 = scmp.ne.s32.totalorder %s183, %s186
      %p192 = scmp.eq.s32.totalorder %s81, 0
      %p193 = por %p191, %p192
      %p194 = scmp.ne.s32.totalorder %s183, %s186
      %p195 = scmp.eq.s32.totalorder %s86, 1
      %p196 = por %p194, %p195
      %p197 = scmp.ne.s32.totalorder %s186, %s187
      %p198 = scmp.eq.s32.totalorder %s86, 0
      %p199 = por %p197, %p198
      %p200 = scmp.ne.s32.totalorder %s186, %s187
      %p201 = scmp.eq.s32.totalorder %s87, 1
      %p202 = por %p200, %p201
      %p204 = scmp.ne.s32.totalorder %s187, %s203
      %p205 = scmp.eq.s32.totalorder %s87, 0
      %p206 = por %p204, %p205
      %s207 = ssub.s32 %s88, %s100
      %p208 = scmp.eq.s32.totalorder %s207, 0
      %s210 = sadd.s32 %s209, 1
      %s211 = scalar_select %p208, %s209, %s210
      %p214 = pneg %p208
      %p215 = scmp.eq.s32.totalorder %s81, 1
      %p216 = por %p214, %p215
      %p217 = scmp.ne.s32.totalorder %s209, %s212
      %p218 = scmp.eq.s32.totalorder %s81, 0
      %p219 = por %p217, %p218
      %p220 = scmp.ne.s32.totalorder %s209, %s212
      %p221 = scmp.eq.s32.totalorder %s86, 1
      %p222 = por %p220, %p221
      %p223 = scmp.ne.s32.totalorder %s212, %s213
      %p224 = scmp.eq.s32.totalorder %s86, 0
      %p225 = por %p223, %p224
      %p226 = scmp.ne.s32.totalorder %s212, %s213
      %p227 = scmp.eq.s32.totalorder %s87, 1
      %p228 = por %p226, %p227
      %p230 = scmp.ne.s32.totalorder %s213, %s229
      %p231 = scmp.eq.s32.totalorder %s87, 0
      %p232 = por %p230, %p231
      %s234 = sadd.s32 %s233, 1
      %p237 = scmp.eq.s32.totalorder %s81, 1
      %p238 = scmp.ne.s32.totalorder %s233, %s235
      %p239 = scmp.eq.s32.totalorder %s81, 0
      %p240 = por %p238, %p239
      %p241 = scmp.ne.s32.totalorder %s233, %s235
      %p242 = scmp.eq.s32.totalorder %s86, 1
      %p243 = por %p241, %p242
      %p244 = scmp.ne.s32.totalorder %s235, %s236
      %p245 = scmp.eq.s32.totalorder %s86, 0
      %p246 = por %p244, %p245
      %p247 = scmp.ne.s32.totalorder %s235, %s236
      %p248 = scmp.eq.s32.totalorder %s87, 1
      %p249 = por %p247, %p248
      %p251 = scmp.ne.s32.totalorder %s236, %s250
      %p252 = scmp.eq.s32.totalorder %s87, 0
      %p253 = por %p251, %p252
      %s255 = sadd.s32 %s254, 1
      %p258 = scmp.eq.s32.totalorder %s81, 1
      %p259 = scmp.ne.s32.totalorder %s254, %s256
      %p260 = scmp.eq.s32.totalorder %s81, 0
      %p261 = por %p259, %p260
      %p262 = scmp.ne.s32.totalorder %s254, %s256
      %p263 = scmp.eq.s32.totalorder %s86, 1
      %p264 = por %p262, %p263
      %p265 = scmp.ne.s32.totalorder %s256, %s257
      %p266 = scmp.eq.s32.totalorder %s86, 0
      %p267 = por %p265, %p266
      %p268 = scmp.ne.s32.totalorder %s256, %s257
      %p269 = scmp.eq.s32.totalorder %s87, 1
      %p270 = por %p268, %p269
      %p272 = scmp.ne.s32.totalorder %s257, %s271
      %p273 = scmp.eq.s32.totalorder %s87, 0
      %p274 = por %p272, %p273
      %s276 = sadd.s32 %s275, 1
      %p279 = scmp.eq.s32.totalorder %s81, 1
      %p280 = scmp.ne.s32.totalorder %s275, %s277
      %p281 = scmp.eq.s32.totalorder %s81, 0
      %p282 = por %p280, %p281
      %p283 = scmp.ne.s32.totalorder %s275, %s277
      %p284 = scmp.eq.s32.totalorder %s86, 1
      %p285 = por %p283, %p284
      %p286 = scmp.ne.s32.totalorder %s277, %s278
      %p287 = scmp.eq.s32.totalorder %s86, 0
      %p288 = por %p286, %p287
      %p289 = scmp.ne.s32.totalorder %s277, %s278
      %p290 = scmp.eq.s32.totalorder %s87, 1
      %p291 = por %p289, %p290
      %p293 = scmp.ne.s32.totalorder %s278, %s292
      %p294 = scmp.eq.s32.totalorder %s87, 0
      %p295 = por %p293, %p294
      %s297 = sadd.s32 %s296, 1
      %p300 = scmp.eq.s32.totalorder %s81, 1
      %p301 = scmp.ne.s32.totalorder %s296, %s298
      %p302 = scmp.eq.s32.totalorder %s81, 0
      %p303 = por %p301, %p302
      %p304 = scmp.ne.s32.totalorder %s296, %s298
      %p305 = scmp.eq.s32.totalorder %s86, 1
      %p306 = por %p304, %p305
      %p307 = scmp.ne.s32.totalorder %s298, %s299
      %p308 = scmp.eq.s32.totalorder %s86, 0
      %p309 = por %p307, %p308
      %p310 = scmp.ne.s32.totalorder %s298, %s299
      %p311 = scmp.eq.s32.totalorder %s87, 1
      %p312 = por %p310, %p311
      %p314 = scmp.ne.s32.totalorder %s299, %s313
      %p315 = scmp.eq.s32.totalorder %s87, 0
      %p316 = por %p314, %p315
      %s318 = sadd.s32 %s317, 1
      %p321 = scmp.eq.s32.totalorder %s81, 1
      %p322 = scmp.ne.s32.totalorder %s317, %s319
      %p323 = scmp.eq.s32.totalorder %s81, 0
      %p324 = por %p322, %p323
      %p325 = scmp.ne.s32.totalorder %s317, %s319
      %p326 = scmp.eq.s32.totalorder %s86, 1
      %p327 = por %p325, %p326
      %p328 = scmp.ne.s32.totalorder %s319, %s320
      %p329 = scmp.eq.s32.totalorder %s86, 0
      %p330 = por %p328, %p329
      %p331 = scmp.ne.s32.totalorder %s319, %s320
      %p332 = scmp.eq.s32.totalorder %s87, 1
      %p333 = por %p331, %p332
      %p335 = scmp.ne.s32.totalorder %s320, %s334
      %p336 = scmp.eq.s32.totalorder %s87, 0
      %p337 = por %p335, %p336
      %s339 = sadd.s32 %s338, 1
      %p342 = scmp.eq.s32.totalorder %s81, 1
      %p343 = scmp.ne.s32.totalorder %s338, %s340
      %p344 = scmp.eq.s32.totalorder %s81, 0
      %p345 = por %p343, %p344
      %p346 = scmp.ne.s32.totalorder %s338, %s340
      %p347 = scmp.eq.s32.totalorder %s86, 1
      %p348 = por %p346, %p347
      %p349 = scmp.ne.s32.totalorder %s340, %s341
      %p350 = scmp.eq.s32.totalorder %s86, 0
      %p351 = por %p349, %p350
      %p352 = scmp.ne.s32.totalorder %s340, %s341
      %p353 = scmp.eq.s32.totalorder %s87, 1
      %p354 = por %p352, %p353
      %p356 = scmp.ne.s32.totalorder %s341, %s355
      %p357 = scmp.eq.s32.totalorder %s87, 0
      %p358 = por %p356, %p357
      %s360 = sadd.s32 %s359, 1
      %p363 = scmp.eq.s32.totalorder %s81, 1
      %p364 = scmp.ne.s32.totalorder %s359, %s361
      %p365 = scmp.eq.s32.totalorder %s81, 0
      %p366 = por %p364, %p365
      %p367 = scmp.ne.s32.totalorder %s359, %s361
      %p368 = scmp.eq.s32.totalorder %s86, 1
      %p369 = por %p367, %p368
      %p370 = scmp.ne.s32.totalorder %s361, %s362
      %p371 = scmp.eq.s32.totalorder %s86, 0
      %p372 = por %p370, %p371
      %p373 = scmp.ne.s32.totalorder %s361, %s362
      %p374 = scmp.eq.s32.totalorder %s87, 1
      %p375 = por %p373, %p374
      %p377 = scmp.ne.s32.totalorder %s362, %s376
      %p378 = scmp.eq.s32.totalorder %s87, 0
      %p379 = por %p377, %p378
      %s381 = sadd.s32 %s380, 1
      %p384 = scmp.eq.s32.totalorder %s81, 1
      %p385 = scmp.ne.s32.totalorder %s380, %s382
      %p386 = scmp.eq.s32.totalorder %s81, 0
      %p387 = por %p385, %p386
      %p388 = scmp.ne.s32.totalorder %s380, %s382
      %p389 = scmp.eq.s32.totalorder %s86, 1
      %p390 = por %p388, %p389
      %p391 = scmp.ne.s32.totalorder %s382, %s383
      %p392 = scmp.eq.s32.totalorder %s86, 0
      %p393 = por %p391, %p392
      %p394 = scmp.ne.s32.totalorder %s382, %s383
      %p395 = scmp.eq.s32.totalorder %s87, 1
      %p396 = por %p394, %p395
      %p398 = scmp.ne.s32.totalorder %s383, %s397
      %p399 = scmp.eq.s32.totalorder %s87, 0
      %p400 = por %p398, %p399
      %s402 = sadd.s32 %s401, 1
      %p405 = scmp.eq.s32.totalorder %s81, 1
      %p406 = scmp.ne.s32.totalorder %s401, %s403
      %p407 = scmp.eq.s32.totalorder %s81, 0
      %p408 = por %p406, %p407
      %p409 = scmp.ne.s32.totalorder %s401, %s403
      %p410 = scmp.eq.s32.totalorder %s86, 1
      %p411 = por %p409, %p410
      %p412 = scmp.ne.s32.totalorder %s403, %s404
      %p413 = scmp.eq.s32.totalorder %s86, 0
      %p414 = por %p412, %p413
      %p415 = scmp.ne.s32.totalorder %s403, %s404
      %p416 = scmp.eq.s32.totalorder %s87, 1
      %p417 = por %p415, %p416
      %p419 = scmp.ne.s32.totalorder %s404, %s418
      %p420 = scmp.eq.s32.totalorder %s87, 0
      %p421 = por %p419, %p420
      %s423 = sadd.s32 %s422, 1
      %p426 = scmp.eq.s32.totalorder %s81, 1
      %p427 = scmp.ne.s32.totalorder %s422, %s424
      %p428 = scmp.eq.s32.totalorder %s81, 0
      %p429 = por %p427, %p428
      %p430 = scmp.ne.s32.totalorder %s422, %s424
      %p431 = scmp.eq.s32.totalorder %s86, 1
      %p432 = por %p430, %p431
      %p433 = scmp.ne.s32.totalorder %s424, %s425
      %p434 = scmp.eq.s32.totalorder %s86, 0
      %p435 = por %p433, %p434
      %p436 = scmp.ne.s32.totalorder %s424, %s425
      %p437 = scmp.eq.s32.totalorder %s87, 1
      %p438 = por %p436, %p437
      %p440 = scmp.ne.s32.totalorder %s425, %s439
      %p441 = scmp.eq.s32.totalorder %s87, 0
      %p442 = por %p440, %p441
      %s444 = sadd.s32 %s443, 1
      %p447 = scmp.eq.s32.totalorder %s81, 1
      %p448 = scmp.ne.s32.totalorder %s443, %s445
      %p449 = scmp.eq.s32.totalorder %s81, 0
      %p450 = por %p448, %p449
      %p451 = scmp.ne.s32.totalorder %s443, %s445
      %p452 = scmp.eq.s32.totalorder %s86, 1
      %p453 = por %p451, %p452
      %p454 = scmp.ne.s32.totalorder %s445, %s446
      %p455 = scmp.eq.s32.totalorder %s86, 0
      %p456 = por %p454, %p455
      %p457 = scmp.ne.s32.totalorder %s445, %s446
      %p458 = scmp.eq.s32.totalorder %s87, 1
      %p459 = por %p457, %p458
      %p461 = scmp.ne.s32.totalorder %s446, %s460
      %p462 = scmp.eq.s32.totalorder %s87, 0
      %p463 = por %p461, %p462
      %s465 = sadd.s32 %s464, 1
      %p468 = scmp.eq.s32.totalorder %s81, 1
      %p469 = scmp.ne.s32.totalorder %s464, %s466
      %p470 = scmp.eq.s32.totalorder %s81, 0
      %p471 = por %p469, %p470
      %p472 = scmp.ne.s32.totalorder %s464, %s466
      %p473 = scmp.eq.s32.totalorder %s86, 1
      %p474 = por %p472, %p473
      %p475 = scmp.ne.s32.totalorder %s466, %s467
      %p476 = scmp.eq.s32.totalorder %s86, 0
      %p477 = por %p475, %p476
      %p478 = scmp.ne.s32.totalorder %s466, %s467
      %p479 = scmp.eq.s32.totalorder %s87, 1
      %p480 = por %p478, %p479
      %p482 = scmp.ne.s32.totalorder %s467, %s481
      %p483 = scmp.eq.s32.totalorder %s87, 0
      %p484 = por %p482, %p483
      %s486 = sadd.s32 %s485, 1
      %p489 = scmp.eq.s32.totalorder %s81, 1
      %p490 = scmp.ne.s32.totalorder %s485, %s487
      %p491 = scmp.eq.s32.totalorder %s81, 0
      %p492 = por %p490, %p491
      %p493 = scmp.ne.s32.totalorder %s485, %s487
      %p494 = scmp.eq.s32.totalorder %s86, 1
      %p495 = por %p493, %p494
      %p496 = scmp.ne.s32.totalorder %s487, %s488
      %p497 = scmp.eq.s32.totalorder %s86, 0
      %p498 = por %p496, %p497
      %p499 = scmp.ne.s32.totalorder %s487, %s488
      %p500 = scmp.eq.s32.totalorder %s87, 1
      %p501 = por %p499, %p500
      %p503 = scmp.ne.s32.totalorder %s488, %s502
      %p504 = scmp.eq.s32.totalorder %s87, 0
      %p505 = por %p503, %p504
      %s507 = sadd.s32 %s506, 1
      %p510 = scmp.eq.s32.totalorder %s81, 1
      %p511 = scmp.ne.s32.totalorder %s506, %s508
      %p512 = scmp.eq.s32.totalorder %s81, 0
      %p513 = por %p511, %p512
      %p514 = scmp.ne.s32.totalorder %s506, %s508
      %p515 = scmp.eq.s32.totalorder %s86, 1
      %p516 = por %p514, %p515
      %p517 = scmp.ne.s32.totalorder %s508, %s509
      %p518 = scmp.eq.s32.totalorder %s86, 0
      %p519 = por %p517, %p518
      %p520 = scmp.ne.s32.totalorder %s508, %s509
      %p521 = scmp.eq.s32.totalorder %s87, 1
      %p522 = por %p520, %p521
      %p524 = scmp.ne.s32.totalorder %s509, %s523
      %p525 = scmp.eq.s32.totalorder %s87, 0
      %p526 = por %p524, %p525
      %s528 = sadd.s32 %s527, 1
      %p531 = scmp.eq.s32.totalorder %s81, 1
      %p532 = scmp.ne.s32.totalorder %s527, %s529
      %p533 = scmp.eq.s32.totalorder %s81, 0
      %p534 = por %p532, %p533
      %p535 = scmp.ne.s32.totalorder %s527, %s529
      %p536 = scmp.eq.s32.totalorder %s86, 1
      %p537 = por %p535, %p536
      %p538 = scmp.ne.s32.totalorder %s529, %s530
      %p539 = scmp.eq.s32.totalorder %s86, 0
      %p540 = por %p538, %p539
      %p541 = scmp.ne.s32.totalorder %s529, %s530
      %p542 = scmp.eq.s32.totalorder %s87, 1
      %p543 = por %p541, %p542
      %p545 = scmp.ne.s32.totalorder %s530, %s544
      %p546 = scmp.eq.s32.totalorder %s87, 0
      %p547 = por %p545, %p546
      %s549 = sadd.s32 %s548, 1
      %p552 = scmp.eq.s32.totalorder %s81, 1
      %p553 = scmp.ne.s32.totalorder %s548, %s550
      %p554 = scmp.eq.s32.totalorder %s81, 0
      %p555 = por %p553, %p554
      %p556 = scmp.ne.s32.totalorder %s548, %s550
      %p557 = scmp.eq.s32.totalorder %s86, 1
      %p558 = por %p556, %p557
      %p559 = scmp.ne.s32.totalorder %s550, %s551
      %p560 = scmp.eq.s32.totalorder %s86, 0
      %p561 = por %p559, %p560
      %p562 = scmp.ne.s32.totalorder %s550, %s551
      %p563 = scmp.eq.s32.totalorder %s87, 1
      %p564 = por %p562, %p563
      %p566 = scmp.ne.s32.totalorder %s551, %s565
      %p567 = scmp.eq.s32.totalorder %s87, 0
      %p568 = por %p566, %p567
      %s570 = sadd.s32 %s569, 1
      %p573 = scmp.eq.s32.totalorder %s81, 1
      %p574 = scmp.ne.s32.totalorder %s569, %s571
      %p575 = scmp.eq.s32.totalorder %s81, 0
      %p576 = por %p574, %p575
      %p577 = scmp.ne.s32.totalorder %s569, %s571
      %p578 = scmp.eq.s32.totalorder %s86, 1
      %p579 = por %p577, %p578
      %p580 = scmp.ne.s32.totalorder %s571, %s572
      %p581 = scmp.eq.s32.totalorder %s86, 0
      %p582 = por %p580, %p581
      %p583 = scmp.ne.s32.totalorder %s571, %s572
      %p584 = scmp.eq.s32.totalorder %s87, 1
      %p585 = por %p583, %p584
      %p587 = scmp.ne.s32.totalorder %s572, %s586
      %p588 = scmp.eq.s32.totalorder %s87, 0
      %p589 = por %p587, %p588
      %s591 = sadd.s32 %s590, 1
      %p594 = scmp.eq.s32.totalorder %s81, 1
      %p595 = scmp.ne.s32.totalorder %s590, %s592
      %p596 = scmp.eq.s32.totalorder %s81, 0
      %p597 = por %p595, %p596
      %p598 = scmp.ne.s32.totalorder %s590, %s592
      %p599 = scmp.eq.s32.totalorder %s86, 1
      %p600 = por %p598, %p599
      %p601 = scmp.ne.s32.totalorder %s592, %s593
      %p602 = scmp.eq.s32.totalorder %s86, 0
      %p603 = por %p601, %p602
      %p604 = scmp.ne.s32.totalorder %s592, %s593
      %p605 = scmp.eq.s32.totalorder %s87, 1
      %p606 = por %p604, %p605
      %p608 = scmp.ne.s32.totalorder %s593, %s607
      %p609 = scmp.eq.s32.totalorder %s87, 0
      %p610 = por %p608, %p609
      %s612 = sadd.s32 %s611, 1
      %p615 = scmp.eq.s32.totalorder %s81, 1
      %p616 = scmp.ne.s32.totalorder %s611, %s613
      %p617 = scmp.eq.s32.totalorder %s81, 0
      %p618 = por %p616, %p617
      %p619 = scmp.ne.s32.totalorder %s611, %s613
      %p620 = scmp.eq.s32.totalorder %s86, 1
      %p621 = por %p619, %p620
      %p622 = scmp.ne.s32.totalorder %s613, %s614
      %p623 = scmp.eq.s32.totalorder %s86, 0
      %p624 = por %p622, %p623
      %p625 = scmp.ne.s32.totalorder %s613, %s614
      %p626 = scmp.eq.s32.totalorder %s87, 1
      %p627 = por %p625, %p626
      %p629 = scmp.ne.s32.totalorder %s614, %s628
      %p630 = scmp.eq.s32.totalorder %s87, 0
      %p631 = por %p629, %p630
      %s633 = sadd.s32 %s632, 1
      %p636 = scmp.eq.s32.totalorder %s81, 1
      %p637 = scmp.ne.s32.totalorder %s632, %s634
      %p638 = scmp.eq.s32.totalorder %s81, 0
      %p639 = por %p637, %p638
      %p640 = scmp.ne.s32.totalorder %s632, %s634
      %p641 = scmp.eq.s32.totalorder %s86, 1
      %p642 = por %p640, %p641
      %p643 = scmp.ne.s32.totalorder %s634, %s635
      %p644 = scmp.eq.s32.totalorder %s86, 0
      %p645 = por %p643, %p644
      %p646 = scmp.ne.s32.totalorder %s634, %s635
      %p647 = scmp.eq.s32.totalorder %s87, 1
      %p648 = por %p646, %p647
      %p650 = scmp.ne.s32.totalorder %s635, %s649
      %p651 = scmp.eq.s32.totalorder %s87, 0
      %p652 = por %p650, %p651
      %s654 = sadd.s32 %s653, 1
      %p657 = scmp.eq.s32.totalorder %s81, 1
      %p658 = scmp.ne.s32.totalorder %s653, %s655
      %p659 = scmp.eq.s32.totalorder %s81, 0
      %p660 = por %p658, %p659
      %p661 = scmp.ne.s32.totalorder %s653, %s655
      %p662 = scmp.eq.s32.totalorder %s86, 1
      %p663 = por %p661, %p662
      %p664 = scmp.ne.s32.totalorder %s655, %s656
      %p665 = scmp.eq.s32.totalorder %s86, 0
      %p666 = por %p664, %p665
      %p667 = scmp.ne.s32.totalorder %s655, %s656
      %p668 = scmp.eq.s32.totalorder %s87, 1
      %p669 = por %p667, %p668
      %p671 = scmp.ne.s32.totalorder %s656, %s670
      %p672 = scmp.eq.s32.totalorder %s87, 0
      %p673 = por %p671, %p672
      %s675 = sadd.s32 %s674, 1
      %p678 = scmp.eq.s32.totalorder %s81, 1
      %p679 = scmp.ne.s32.totalorder %s674, %s676
      %p680 = scmp.eq.s32.totalorder %s81, 0
      %p681 = por %p679, %p680
      %p682 = scmp.ne.s32.totalorder %s674, %s676
      %p683 = scmp.eq.s32.totalorder %s86, 1
      %p684 = por %p682, %p683
      %p685 = scmp.ne.s32.totalorder %s676, %s677
      %p686 = scmp.eq.s32.totalorder %s86, 0
      %p687 = por %p685, %p686
      %p688 = scmp.ne.s32.totalorder %s676, %s677
      %p689 = scmp.eq.s32.totalorder %s87, 1
      %p690 = por %p688, %p689
      %p692 = scmp.ne.s32.totalorder %s677, %s691
      %p693 = scmp.eq.s32.totalorder %s87, 0
      %p694 = por %p692, %p693
      %s695 = ssub.s32 %s88, %s100
      %s696 = ssub.s32 %s89, %s96
      %s697 = sor.u32 %s695, %s696
      %p698 = scmp.eq.s32.totalorder %s697, 0
      %s700 = sadd.s32 %s699, 1
      %s701 = scalar_select %p698, %s699, %s700
      %p704 = pneg %p698
      %p705 = scmp.eq.s32.totalorder %s81, 1
      %p706 = por %p704, %p705
      %p707 = scmp.ne.s32.totalorder %s699, %s702
      %p708 = scmp.eq.s32.totalorder %s81, 0
      %p709 = por %p707, %p708
      %p710 = scmp.ne.s32.totalorder %s699, %s702
      %p711 = scmp.eq.s32.totalorder %s86, 1
      %p712 = por %p710, %p711
      %p713 = scmp.ne.s32.totalorder %s702, %s703
      %p714 = scmp.eq.s32.totalorder %s86, 0
      %p715 = por %p713, %p714
      %p716 = scmp.ne.s32.totalorder %s702, %s703
      %p717 = scmp.eq.s32.totalorder %s87, 1
      %p718 = por %p716, %p717
      %p720 = scmp.ne.s32.totalorder %s703, %s719
      %p721 = scmp.eq.s32.totalorder %s87, 0
      %p722 = por %p720, %p721
      %s723 = ssub.s32 %s88, %s100
      %s724 = ssub.s32 %s89, %s96
      %s725 = sor.u32 %s723, %s724
      %p726 = scmp.eq.s32.totalorder %s725, 0
      %s728 = sadd.s32 %s727, 1
      %s729 = scalar_select %p726, %s727, %s728
      %p732 = pneg %p726
      %p733 = scmp.eq.s32.totalorder %s81, 1
      %p734 = por %p732, %p733
      %p735 = scmp.ne.s32.totalorder %s727, %s730
      %p736 = scmp.eq.s32.totalorder %s81, 0
      %p737 = por %p735, %p736
      %p738 = scmp.ne.s32.totalorder %s727, %s730
      %p739 = scmp.eq.s32.totalorder %s86, 1
      %p740 = por %p738, %p739
      %p741 = scmp.ne.s32.totalorder %s730, %s731
      %p742 = scmp.eq.s32.totalorder %s86, 0
      %p743 = por %p741, %p742
      %p744 = scmp.ne.s32.totalorder %s730, %s731
      %p745 = scmp.eq.s32.totalorder %s87, 1
      %p746 = por %p744, %p745
      %p748 = scmp.ne.s32.totalorder %s731, %s747
      %p749 = scmp.eq.s32.totalorder %s87, 0
      %p750 = por %p748, %p749
      %s751 = ssub.s32 %s88, %s100
      %s752 = ssub.s32 %s89, %s96
      %s753 = sor.u32 %s751, %s752
      %p754 = scmp.eq.s32.totalorder %s753, 0
      %s756 = sadd.s32 %s755, 1
      %s757 = scalar_select %p754, %s755, %s756
      %p760 = pneg %p754
      %p761 = scmp.eq.s32.totalorder %s81, 1
      %p762 = por %p760, %p761
      %p763 = scmp.ne.s32.totalorder %s755, %s758
      %p764 = scmp.eq.s32.totalorder %s81, 0
      %p765 = por %p763, %p764
      %p766 = scmp.ne.s32.totalorder %s755, %s758
      %p767 = scmp.eq.s32.totalorder %s86, 1
      %p768 = por %p766, %p767
      %p769 = scmp.ne.s32.totalorder %s758, %s759
      %p770 = scmp.eq.s32.totalorder %s86, 0
      %p771 = por %p769, %p770
      %p772 = scmp.ne.s32.totalorder %s758, %s759
      %p773 = scmp.eq.s32.totalorder %s87, 1
      %p774 = por %p772, %p773
      %p776 = scmp.ne.s32.totalorder %s759, %s775
      %p777 = scmp.eq.s32.totalorder %s87, 0
      %p778 = por %p776, %p777
      %p779 = scmp.le.s32.totalorder 1, %s81
      %p780 = scmp.lt.s32.totalorder %s81, 3
      %p781 = pnand %p779, %p780
      %p782 = pneg %p781
      // Predicated region
      $region9: #{tpu_custom_call.1} parent=5 // pred_check
        _
      $region10: #{tpu_custom_call.1} parent=5 // pred_check_branch
        %784 = sbr.rel (%p781) target = $region12
      $region11: #{tpu_custom_call.1} parent=5 // pred_region
        %s785 = ssub.s32 %s81, 1
        // Predicated region
        $region13: #{tpu_custom_call.1} parent=11 // pred_check
          %p786 = pneg %p199
        $region14: #{tpu_custom_call.1} parent=11 // pred_check_branch
          %788 = sbr.rel (%p786) target = $region16
        $region15: #{tpu_custom_call.1} parent=11 // pred_region
          %790 = vsyncadd [#allocation3], 0
          %s791 = smul.addr %s91, 8
          %s792 = scalar_lea.hbm %s7, %s791
          %s794 = sshll.u32 %s792, 4
          %s795 = int_to_ptr.hbm [resolvable:$true] %s794
          %s796 = sshll.u32 [#allocation2], 4
          %s797 = int_to_ptr.vmem [resolvable:$true] %s796
          %799 = dma.hbm_to_vmem [thread:$0]  %s795, 128, %s797, [#allocation3]
        $region16: #{tpu_custom_call.1} parent=11 // pred_fallthru
          _
        // Predicated region
        $region17: #{tpu_custom_call.1} parent=11 // pred_check
          %p800 = pneg %p246
        $region18: #{tpu_custom_call.1} parent=11 // pred_check_branch
          %802 = sbr.rel (%p800) target = $region20
        $region19: #{tpu_custom_call.1} parent=11 // pred_region
          %804 = vsyncadd [#allocation6], 0
          %s805 = sshll.u32 %s11, 4
          %s806 = int_to_ptr.hbm [resolvable:$true] %s805
          %s807 = sshll.u32 [#allocation5], 4
          %s808 = int_to_ptr.vmem [resolvable:$true] %s807
          %813 = dma.hbm_to_vmem [thread:$0]  %s806, 256, %s808, [#allocation6], 64, 64, 4
        $region20: #{tpu_custom_call.1} parent=11 // pred_fallthru
          _
        // Predicated region
        $region21: #{tpu_custom_call.1} parent=11 // pred_check
          %p814 = pneg %p267
        $region22: #{tpu_custom_call.1} parent=11 // pred_check_branch
          %816 = sbr.rel (%p814) target = $region24
        $region23: #{tpu_custom_call.1} parent=11 // pred_region
          %818 = vsyncadd [#allocation6], 0
          %s820 = sshll.u32 %s13, 4
          %s821 = int_to_ptr.hbm [resolvable:$true] %s820
          %s822 = sshll.u32 [#allocation7], 4
          %s823 = int_to_ptr.vmem [resolvable:$true] %s822
          %825 = dma.hbm_to_vmem [thread:$0]  %s821, 16, %s823, [#allocation6]
        $region24: #{tpu_custom_call.1} parent=11 // pred_fallthru
          _
        // Predicated region
        $region25: #{tpu_custom_call.1} parent=11 // pred_check
          %p826 = pneg %p288
        $region26: #{tpu_custom_call.1} parent=11 // pred_check_branch
          %828 = sbr.rel (%p826) target = $region28
        $region27: #{tpu_custom_call.1} parent=11 // pred_region
          %830 = vsyncadd [#allocation9], 0
          %s831 = sshll.u32 %s15, 4
          %s832 = int_to_ptr.hbm [resolvable:$true] %s831
          %s833 = sshll.u32 [#allocation8], 4
          %s834 = int_to_ptr.vmem [resolvable:$true] %s833
          %839 = dma.hbm_to_vmem [thread:$0]  %s832, 256, %s834, [#allocation9], 64, 64, 4
        $region28: #{tpu_custom_call.1} parent=11 // pred_fallthru
          _
        // Predicated region
        $region29: #{tpu_custom_call.1} parent=11 // pred_check
          %p840 = pneg %p309
        $region30: #{tpu_custom_call.1} parent=11 // pred_check_branch
          %842 = sbr.rel (%p840) target = $region32
        $region31: #{tpu_custom_call.1} parent=11 // pred_region
          %844 = vsyncadd [#allocation9], 0
          %s846 = sshll.u32 %s17, 4
          %s847 = int_to_ptr.hbm [resolvable:$true] %s846
          %s848 = sshll.u32 [#allocation10], 4
          %s849 = int_to_ptr.vmem [resolvable:$true] %s848
          %851 = dma.hbm_to_vmem [thread:$0]  %s847, 16, %s849, [#allocation9]
        $region32: #{tpu_custom_call.1} parent=11 // pred_fallthru
          _
        // Predicated region
        $region33: #{tpu_custom_call.1} parent=11 // pred_check
          %p852 = pneg %p330
        $region34: #{tpu_custom_call.1} parent=11 // pred_check_branch
          %854 = sbr.rel (%p852) target = $region36
        $region35: #{tpu_custom_call.1} parent=11 // pred_region
          %856 = vsyncadd [#allocation12], 0
          %s857 = sshll.u32 %s19, 4
          %s858 = int_to_ptr.hbm [resolvable:$true] %s857
          %s859 = sshll.u32 [#allocation11], 4
          %s860 = int_to_ptr.vmem [resolvable:$true] %s859
          %865 = dma.hbm_to_vmem [thread:$0]  %s858, 256, %s860, [#allocation12], 64, 64, 4
        $region36: #{tpu_custom_call.1} parent=11 // pred_fallthru
          _
        // Predicated region
        $region37: #{tpu_custom_call.1} parent=11 // pred_check
          %p866 = pneg %p351
        $region38: #{tpu_custom_call.1} parent=11 // pred_check_branch
          %868 = sbr.rel (%p866) target = $region40
        $region39: #{tpu_custom_call.1} parent=11 // pred_region
          %870 = vsyncadd [#allocation12], 0
          %s872 = sshll.u32 %s21, 4
          %s873 = int_to_ptr.hbm [resolvable:$true] %s872
          %s874 = sshll.u32 [#allocation13], 4
          %s875 = int_to_ptr.vmem [resolvable:$true] %s874
          %877 = dma.hbm_to_vmem [thread:$0]  %s873, 16, %s875, [#allocation12]
        $region40: #{tpu_custom_call.1} parent=11 // pred_fallthru
          _
        // Predicated region
        $region41: #{tpu_custom_call.1} parent=11 // pred_check
          %p878 = pneg %p372
        $region42: #{tpu_custom_call.1} parent=11 // pred_check_branch
          %880 = sbr.rel (%p878) target = $region44
        $region43: #{tpu_custom_call.1} parent=11 // pred_region
          %882 = vsyncadd [#allocation15], 0
          %s883 = sshll.u32 %s23, 4
          %s884 = int_to_ptr.hbm [resolvable:$true] %s883
          %s885 = sshll.u32 [#allocation14], 4
          %s886 = int_to_ptr.vmem [resolvable:$true] %s885
          %891 = dma.hbm_to_vmem [thread:$0]  %s884, 256, %s886, [#allocation15], 64, 64, 4
        $region44: #{tpu_custom_call.1} parent=11 // pred_fallthru
          _
        // Predicated region
        $region45: #{tpu_custom_call.1} parent=11 // pred_check
          %p892 = pneg %p393
        $region46: #{tpu_custom_call.1} parent=11 // pred_check_branch
          %894 = sbr.rel (%p892) target = $region48
        $region47: #{tpu_custom_call.1} parent=11 // pred_region
          %896 = vsyncadd [#allocation15], 0
          %s898 = sshll.u32 %s25, 4
          %s899 = int_to_ptr.hbm [resolvable:$true] %s898
          %s900 = sshll.u32 [#allocation16], 4
          %s901 = int_to_ptr.vmem [resolvable:$true] %s900
          %903 = dma.hbm_to_vmem [thread:$0]  %s899, 16, %s901, [#allocation15]
        $region48: #{tpu_custom_call.1} parent=11 // pred_fallthru
          _
        // Predicated region
        $region49: #{tpu_custom_call.1} parent=11 // pred_check
          %p904 = pneg %p414
        $region50: #{tpu_custom_call.1} parent=11 // pred_check_branch
          %906 = sbr.rel (%p904) target = $region52
        $region51: #{tpu_custom_call.1} parent=11 // pred_region
          %908 = vsyncadd [#allocation18], 0
          %s909 = sshll.u32 %s27, 4
          %s910 = int_to_ptr.hbm [resolvable:$true] %s909
          %s911 = sshll.u32 [#allocation17], 4
          %s912 = int_to_ptr.vmem [resolvable:$true] %s911
          %917 = dma.hbm_to_vmem [thread:$0]  %s910, 256, %s912, [#allocation18], 64, 64, 4
        $region52: #{tpu_custom_call.1} parent=11 // pred_fallthru
          _
        // Predicated region
        $region53: #{tpu_custom_call.1} parent=11 // pred_check
          %p918 = pneg %p435
        $region54: #{tpu_custom_call.1} parent=11 // pred_check_branch
          %920 = sbr.rel (%p918) target = $region56
        $region55: #{tpu_custom_call.1} parent=11 // pred_region
          %922 = vsyncadd [#allocation18], 0
          %s924 = sshll.u32 %s29, 4
          %s925 = int_to_ptr.hbm [resolvable:$true] %s924
          %s926 = sshll.u32 [#allocation19], 4
          %s927 = int_to_ptr.vmem [resolvable:$true] %s926
          %929 = dma.hbm_to_vmem [thread:$0]  %s925, 16, %s927, [#allocation18]
        $region56: #{tpu_custom_call.1} parent=11 // pred_fallthru
          _
        // Predicated region
        $region57: #{tpu_custom_call.1} parent=11 // pred_check
          %p930 = pneg %p456
        $region58: #{tpu_custom_call.1} parent=11 // pred_check_branch
          %932 = sbr.rel (%p930) target = $region60
        $region59: #{tpu_custom_call.1} parent=11 // pred_region
          %934 = vsyncadd [#allocation21], 0
          %s935 = sshll.u32 %s31, 4
          %s936 = int_to_ptr.hbm [resolvable:$true] %s935
          %s937 = sshll.u32 [#allocation20], 4
          %s938 = int_to_ptr.vmem [resolvable:$true] %s937
          %943 = dma.hbm_to_vmem [thread:$0]  %s936, 256, %s938, [#allocation21], 64, 64, 4
        $region60: #{tpu_custom_call.1} parent=11 // pred_fallthru
          _
        // Predicated region
        $region61: #{tpu_custom_call.1} parent=11 // pred_check
          %p944 = pneg %p477
        $region62: #{tpu_custom_call.1} parent=11 // pred_check_branch
          %946 = sbr.rel (%p944) target = $region64
        $region63: #{tpu_custom_call.1} parent=11 // pred_region
          %948 = vsyncadd [#allocation21], 0
          %s950 = sshll.u32 %s33, 4
          %s951 = int_to_ptr.hbm [resolvable:$true] %s950
          %s952 = sshll.u32 [#allocation22], 4
          %s953 = int_to_ptr.vmem [resolvable:$true] %s952
          %955 = dma.hbm_to_vmem [thread:$0]  %s951, 16, %s953, [#allocation21]
        $region64: #{tpu_custom_call.1} parent=11 // pred_fallthru
          _
        // Predicated region
        $region65: #{tpu_custom_call.1} parent=11 // pred_check
          %p956 = pneg %p498
        $region66: #{tpu_custom_call.1} parent=11 // pred_check_branch
          %958 = sbr.rel (%p956) target = $region68
        $region67: #{tpu_custom_call.1} parent=11 // pred_region
          %960 = vsyncadd [#allocation24], 0
          %s961 = sshll.u32 %s35, 4
          %s962 = int_to_ptr.hbm [resolvable:$true] %s961
          %s963 = sshll.u32 [#allocation23], 4
          %s964 = int_to_ptr.vmem [resolvable:$true] %s963
          %969 = dma.hbm_to_vmem [thread:$0]  %s962, 256, %s964, [#allocation24], 64, 64, 4
        $region68: #{tpu_custom_call.1} parent=11 // pred_fallthru
          _
        // Predicated region
        $region69: #{tpu_custom_call.1} parent=11 // pred_check
          %p970 = pneg %p519
        $region70: #{tpu_custom_call.1} parent=11 // pred_check_branch
          %972 = sbr.rel (%p970) target = $region72
        $region71: #{tpu_custom_call.1} parent=11 // pred_region
          %974 = vsyncadd [#allocation24], 0
          %s976 = sshll.u32 %s37, 4
          %s977 = int_to_ptr.hbm [resolvable:$true] %s976
          %s978 = sshll.u32 [#allocation25], 4
          %s979 = int_to_ptr.vmem [resolvable:$true] %s978
          %981 = dma.hbm_to_vmem [thread:$0]  %s977, 16, %s979, [#allocation24]
        $region72: #{tpu_custom_call.1} parent=11 // pred_fallthru
          _
        // Predicated region
        $region73: #{tpu_custom_call.1} parent=11 // pred_check
          %p982 = pneg %p540
        $region74: #{tpu_custom_call.1} parent=11 // pred_check_branch
          %984 = sbr.rel (%p982) target = $region76
        $region75: #{tpu_custom_call.1} parent=11 // pred_region
          _
        $region76: #{tpu_custom_call.1} parent=11 // pred_fallthru
          _
        // Predicated region
        $region77: #{tpu_custom_call.1} parent=11 // pred_check
          %p985 = pneg %p561
        $region78: #{tpu_custom_call.1} parent=11 // pred_check_branch
          %987 = sbr.rel (%p985) target = $region80
        $region79: #{tpu_custom_call.1} parent=11 // pred_region
          _
        $region80: #{tpu_custom_call.1} parent=11 // pred_fallthru
          _
        // Predicated region
        $region81: #{tpu_custom_call.1} parent=11 // pred_check
          %p988 = pneg %p582
        $region82: #{tpu_custom_call.1} parent=11 // pred_check_branch
          %990 = sbr.rel (%p988) target = $region84
        $region83: #{tpu_custom_call.1} parent=11 // pred_region
          _
        $region84: #{tpu_custom_call.1} parent=11 // pred_fallthru
          _
        // Predicated region
        $region85: #{tpu_custom_call.1} parent=11 // pred_check
          %p991 = pneg %p603
        $region86: #{tpu_custom_call.1} parent=11 // pred_check_branch
          %993 = sbr.rel (%p991) target = $region88
        $region87: #{tpu_custom_call.1} parent=11 // pred_region
          _
        $region88: #{tpu_custom_call.1} parent=11 // pred_fallthru
          _
        // Predicated region
        $region89: #{tpu_custom_call.1} parent=11 // pred_check
          %p994 = pneg %p624
        $region90: #{tpu_custom_call.1} parent=11 // pred_check_branch
          %996 = sbr.rel (%p994) target = $region92
        $region91: #{tpu_custom_call.1} parent=11 // pred_region
          _
        $region92: #{tpu_custom_call.1} parent=11 // pred_fallthru
          _
        // Predicated region
        $region93: #{tpu_custom_call.1} parent=11 // pred_check
          %p997 = pneg %p645
        $region94: #{tpu_custom_call.1} parent=11 // pred_check_branch
          %999 = sbr.rel (%p997) target = $region96
        $region95: #{tpu_custom_call.1} parent=11 // pred_region
          _
        $region96: #{tpu_custom_call.1} parent=11 // pred_fallthru
          _
        // Predicated region
        $region97: #{tpu_custom_call.1} parent=11 // pred_check
          %p1000 = pneg %p666
        $region98: #{tpu_custom_call.1} parent=11 // pred_check_branch
          %1002 = sbr.rel (%p1000) target = $region100
        $region99: #{tpu_custom_call.1} parent=11 // pred_region
          _
        $region100: #{tpu_custom_call.1} parent=11 // pred_fallthru
          _
        // Predicated region
        $region101: #{tpu_custom_call.1} parent=11 // pred_check
          %p1003 = pneg %p687
        $region102: #{tpu_custom_call.1} parent=11 // pred_check_branch
          %1005 = sbr.rel (%p1003) target = $region104
        $region103: #{tpu_custom_call.1} parent=11 // pred_region
          %1007 = vsyncadd [#allocation27], 0
          %s1009 = sshll.u32 %s53, 4
          %s1010 = int_to_ptr.hbm [resolvable:$true] %s1009
          %s1011 = sshll.u32 [#allocation26], 4
          %s1012 = int_to_ptr.vmem [resolvable:$true] %s1011
          %1014 = dma.hbm_to_vmem [thread:$0]  %s1010, 16, %s1012, [#allocation27]
        $region104: #{tpu_custom_call.1} parent=11 // pred_fallthru
          _
      $region12: #{tpu_custom_call.1} parent=5 // pred_fallthru
        _
      %p1015 = scmp.lt.s32.totalorder %s81, 2
      // Predicated region
      $region105: #{tpu_custom_call.1} parent=5 // pred_check
        %p1016 = pneg %p1015
      $region106: #{tpu_custom_call.1} parent=5 // pred_check_branch
        %1018 = sbr.rel (%p1016) target = $region108
      $region107: #{tpu_custom_call.1} parent=5 // pred_region
        // Predicated region
        $region109: #{tpu_custom_call.1} parent=107 // pred_check
          %p1019 = pneg %p115
        $region110: #{tpu_custom_call.1} parent=107 // pred_check_branch
          %1021 = sbr.rel (%p1019) target = $region112
        $region111: #{tpu_custom_call.1} parent=107 // pred_region
          %p1022 = scmp.lt.s32.totalorder %s88, 1
          %s1023 = scalar_select %p1022, %s88, 1
          %p1024 = scmp.lt.s32.totalorder %s89, 0
          %s1025 = scalar_select %p1024, %s89, 0
          %s1026 = sadd.s32 %s1025, %s1023
          %s1027 = smul.addr %s1026, 8
          %s1028 = scalar_lea.vmem %s1, %s1027
        $region112: #{tpu_custom_call.1} parent=107 // pred_fallthru
          _
        // Predicated region
        $region113: #{tpu_custom_call.1} parent=107 // pred_check
          %p1029 = pneg %p141
        $region114: #{tpu_custom_call.1} parent=107 // pred_check_branch
          %1031 = sbr.rel (%p1029) target = $region116
        $region115: #{tpu_custom_call.1} parent=107 // pred_region
          %p1032 = scmp.lt.s32.totalorder %s88, 1
          %s1033 = scalar_select %p1032, %s88, 1
          %s1034 = smul.addr %s1033, 8
          %s1035 = scalar_lea.vmem %s3, %s1034
        $region116: #{tpu_custom_call.1} parent=107 // pred_fallthru
          _
        // Predicated region
        $region117: #{tpu_custom_call.1} parent=107 // pred_check
          %p1036 = pneg %p167
        $region118: #{tpu_custom_call.1} parent=107 // pred_check_branch
          %1038 = sbr.rel (%p1036) target = $region120
        $region119: #{tpu_custom_call.1} parent=107 // pred_region
          %p1039 = scmp.lt.s32.totalorder %s88, 1
          %s1040 = scalar_select %p1039, %s88, 1
          %s1041 = smul.addr %s1040, 8
          %s1042 = scalar_lea.vmem %s5, %s1041
        $region120: #{tpu_custom_call.1} parent=107 // pred_fallthru
          _
        // Predicated region
        $region121: #{tpu_custom_call.1} parent=107 // pred_check
          %p1043 = pneg %p219
        $region122: #{tpu_custom_call.1} parent=107 // pred_check_branch
          %1045 = sbr.rel (%p1043) target = $region124
        $region123: #{tpu_custom_call.1} parent=107 // pred_region
          %p1046 = scmp.lt.s32.totalorder %s88, 1
          %s1047 = scalar_select %p1046, %s88, 1
          %s1048 = scalar_lea.vmem %s9, %s1047
        $region124: #{tpu_custom_call.1} parent=107 // pred_fallthru
          _
      $region108: #{tpu_custom_call.1} parent=5 // pred_fallthru
        _
      %p1049 = scmp.le.s32.totalorder 1, %s81
      %p1050 = scmp.lt.s32.totalorder %s81, 3
      %p1051 = pnand %p1049, %p1050
      %p1052 = pneg %p1051
      // Predicated region
      $region125: #{tpu_custom_call.1} parent=5 // pred_check
        _
      $region126: #{tpu_custom_call.1} parent=5 // pred_check_branch
        %1054 = sbr.rel (%p1051) target = $region128
      $region127: #{tpu_custom_call.1} parent=5 // pred_region
        %s1055 = ssub.s32 %s81, 1
        // Predicated region
        $region129: #{tpu_custom_call.1} parent=127 // pred_check
          %p1056 = pneg %p199
        $region130: #{tpu_custom_call.1} parent=127 // pred_check_branch
          %1058 = sbr.rel (%p1056) target = $region132
        $region131: #{tpu_custom_call.1} parent=127 // pred_region
          %1060 = dma.done [#allocation3], 128
        $region132: #{tpu_custom_call.1} parent=127 // pred_fallthru
          _
        // Predicated region
        $region133: #{tpu_custom_call.1} parent=127 // pred_check
          %p1061 = pneg %p246
        $region134: #{tpu_custom_call.1} parent=127 // pred_check_branch
          %1063 = sbr.rel (%p1061) target = $region136
        $region135: #{tpu_custom_call.1} parent=127 // pred_region
          %1065 = dma.done [#allocation6], 256
        $region136: #{tpu_custom_call.1} parent=127 // pred_fallthru
          _
        // Predicated region
        $region137: #{tpu_custom_call.1} parent=127 // pred_check
          %p1066 = pneg %p267
        $region138: #{tpu_custom_call.1} parent=127 // pred_check_branch
          %1068 = sbr.rel (%p1066) target = $region140
        $region139: #{tpu_custom_call.1} parent=127 // pred_region
          %1070 = dma.done [#allocation6], 16
        $region140: #{tpu_custom_call.1} parent=127 // pred_fallthru
          _
        // Predicated region
        $region141: #{tpu_custom_call.1} parent=127 // pred_check
          %p1071 = pneg %p288
        $region142: #{tpu_custom_call.1} parent=127 // pred_check_branch
          %1073 = sbr.rel (%p1071) target = $region144
        $region143: #{tpu_custom_call.1} parent=127 // pred_region
          %1075 = dma.done [#allocation9], 256
        $region144: #{tpu_custom_call.1} parent=127 // pred_fallthru
          _
        // Predicated region
        $region145: #{tpu_custom_call.1} parent=127 // pred_check
          %p1076 = pneg %p309
        $region146: #{tpu_custom_call.1} parent=127 // pred_check_branch
          %1078 = sbr.rel (%p1076) target = $region148
        $region147: #{tpu_custom_call.1} parent=127 // pred_region
          %1080 = dma.done [#allocation9], 16
        $region148: #{tpu_custom_call.1} parent=127 // pred_fallthru
          _
        // Predicated region
        $region149: #{tpu_custom_call.1} parent=127 // pred_check
          %p1081 = pneg %p330
        $region150: #{tpu_custom_call.1} parent=127 // pred_check_branch
          %1083 = sbr.rel (%p1081) target = $region152
        $region151: #{tpu_custom_call.1} parent=127 // pred_region
          %1085 = dma.done [#allocation12], 256
        $region152: #{tpu_custom_call.1} parent=127 // pred_fallthru
          _
        // Predicated region
        $region153: #{tpu_custom_call.1} parent=127 // pred_check
          %p1086 = pneg %p351
        $region154: #{tpu_custom_call.1} parent=127 // pred_check_branch
          %1088 = sbr.rel (%p1086) target = $region156
        $region155: #{tpu_custom_call.1} parent=127 // pred_region
          %1090 = dma.done [#allocation12], 16
        $region156: #{tpu_custom_call.1} parent=127 // pred_fallthru
          _
        // Predicated region
        $region157: #{tpu_custom_call.1} parent=127 // pred_check
          %p1091 = pneg %p372
        $region158: #{tpu_custom_call.1} parent=127 // pred_check_branch
          %1093 = sbr.rel (%p1091) target = $region160
        $region159: #{tpu_custom_call.1} parent=127 // pred_region
          %1095 = dma.done [#allocation15], 256
        $region160: #{tpu_custom_call.1} parent=127 // pred_fallthru
          _
        // Predicated region
        $region161: #{tpu_custom_call.1} parent=127 // pred_check
          %p1096 = pneg %p393
        $region162: #{tpu_custom_call.1} parent=127 // pred_check_branch
          %1098 = sbr.rel (%p1096) target = $region164
        $region163: #{tpu_custom_call.1} parent=127 // pred_region
          %1100 = dma.done [#allocation15], 16
        $region164: #{tpu_custom_call.1} parent=127 // pred_fallthru
          _
        // Predicated region
        $region165: #{tpu_custom_call.1} parent=127 // pred_check
          %p1101 = pneg %p414
        $region166: #{tpu_custom_call.1} parent=127 // pred_check_branch
          %1103 = sbr.rel (%p1101) target = $region168
        $region167: #{tpu_custom_call.1} parent=127 // pred_region
          %1105 = dma.done [#allocation18], 256
        $region168: #{tpu_custom_call.1} parent=127 // pred_fallthru
          _
        // Predicated region
        $region169: #{tpu_custom_call.1} parent=127 // pred_check
          %p1106 = pneg %p435
        $region170: #{tpu_custom_call.1} parent=127 // pred_check_branch
          %1108 = sbr.rel (%p1106) target = $region172
        $region171: #{tpu_custom_call.1} parent=127 // pred_region
          %1110 = dma.done [#allocation18], 16
        $region172: #{tpu_custom_call.1} parent=127 // pred_fallthru
          _
        // Predicated region
        $region173: #{tpu_custom_call.1} parent=127 // pred_check
          %p1111 = pneg %p456
        $region174: #{tpu_custom_call.1} parent=127 // pred_check_branch
          %1113 = sbr.rel (%p1111) target = $region176
        $region175: #{tpu_custom_call.1} parent=127 // pred_region
          %1115 = dma.done [#allocation21], 256
        $region176: #{tpu_custom_call.1} parent=127 // pred_fallthru
          _
        // Predicated region
        $region177: #{tpu_custom_call.1} parent=127 // pred_check
          %p1116 = pneg %p477
        $region178: #{tpu_custom_call.1} parent=127 // pred_check_branch
          %1118 = sbr.rel (%p1116) target = $region180
        $region179: #{tpu_custom_call.1} parent=127 // pred_region
          %1120 = dma.done [#allocation21], 16
        $region180: #{tpu_custom_call.1} parent=127 // pred_fallthru
          _
        // Predicated region
        $region181: #{tpu_custom_call.1} parent=127 // pred_check
          %p1121 = pneg %p498
        $region182: #{tpu_custom_call.1} parent=127 // pred_check_branch
          %1123 = sbr.rel (%p1121) target = $region184
        $region183: #{tpu_custom_call.1} parent=127 // pred_region
          %1125 = dma.done [#allocation24], 256
        $region184: #{tpu_custom_call.1} parent=127 // pred_fallthru
          _
        // Predicated region
        $region185: #{tpu_custom_call.1} parent=127 // pred_check
          %p1126 = pneg %p519
        $region186: #{tpu_custom_call.1} parent=127 // pred_check_branch
          %1128 = sbr.rel (%p1126) target = $region188
        $region187: #{tpu_custom_call.1} parent=127 // pred_region
          %1130 = dma.done [#allocation24], 16
        $region188: #{tpu_custom_call.1} parent=127 // pred_fallthru
          _
        // Predicated region
        $region189: #{tpu_custom_call.1} parent=127 // pred_check
          %p1131 = pneg %p687
        $region190: #{tpu_custom_call.1} parent=127 // pred_check_branch
          %1133 = sbr.rel (%p1131) target = $region192
        $region191: #{tpu_custom_call.1} parent=127 // pred_region
          %1135 = dma.done [#allocation27], 16
        $region192: #{tpu_custom_call.1} parent=127 // pred_fallthru
          _
        %p1136 = scmp.lt.s32.totalorder %s90, 1
        %s1137 = scalar_select %p1136, %s90, 1
        %p1138 = scmp.lt.s32.totalorder %s91, 0
        %s1139 = scalar_select %p1138, %s91, 0
        %s1140 = sadd.s32 %s1139, %s1137
        %s1141 = smul.addr %s1140, 8
        %s1142 = scalar_lea.vmem %s1, %s1141
        %p1143 = pneg %p121
        %p1144 = pneg %p118
        %p1145 = scmp.lt.s32.totalorder %s90, 1
        %s1146 = scalar_select %p1145, %s90, 1
        %s1147 = smul.addr %s1146, 8
        %s1148 = scalar_lea.vmem %s3, %s1147
        %p1149 = pneg %p147
        %p1150 = pneg %p144
        %p1151 = scmp.lt.s32.totalorder %s90, 1
        %s1152 = scalar_select %p1151, %s90, 1
        %s1153 = smul.addr %s1152, 8
        %s1154 = scalar_lea.vmem %s5, %s1153
        %p1155 = pneg %p173
        %p1156 = pneg %p170
        %p1157 = pneg %p199
        %p1158 = pneg %p196
        %p1159 = scmp.lt.s32.totalorder %s90, 1
        %s1160 = scalar_select %p1159, %s90, 1
        %s1161 = scalar_lea.vmem %s9, %s1160
        %p1162 = pneg %p225
        %p1163 = pneg %p222
        %p1164 = pneg %p246
        %p1165 = pneg %p243
        %p1166 = pneg %p267
        %p1167 = pneg %p264
        %p1168 = pneg %p288
        %p1169 = pneg %p285
        %p1170 = pneg %p309
        %p1171 = pneg %p306
        %p1172 = pneg %p330
        %p1173 = pneg %p327
        %p1174 = pneg %p351
        %p1175 = pneg %p348
        %p1176 = pneg %p372
        %p1177 = pneg %p369
        %p1178 = pneg %p393
        %p1179 = pneg %p390
        %p1180 = pneg %p414
        %p1181 = pneg %p411
        %p1182 = pneg %p435
        %p1183 = pneg %p432
        %p1184 = pneg %p456
        %p1185 = pneg %p453
        %p1186 = pneg %p477
        %p1187 = pneg %p474
        %p1188 = pneg %p498
        %p1189 = pneg %p495
        %p1190 = pneg %p519
        %p1191 = pneg %p516
        %p1192 = pneg %p540
        %p1193 = pneg %p537
        %p1194 = pneg %p561
        %p1195 = pneg %p558
        %p1196 = pneg %p582
        %p1197 = pneg %p579
        %p1198 = pneg %p603
        %p1199 = pneg %p600
        %p1200 = pneg %p624
        %p1201 = pneg %p621
        %p1202 = pneg %p645
        %p1203 = pneg %p642
        %p1204 = pneg %p666
        %p1205 = pneg %p663
        %p1206 = pneg %p687
        %p1207 = pneg %p684
        %p1208 = pneg %p715
        %p1209 = pneg %p712
        %s1210 = sand.u32 %s702, 1
        %s1211 = scalar_lea.sflag [#allocation4], %s1210
        %s1212 = sand.u32 %s702, 1
        %s1213 = smul.addr %s1212, 8
        %s1214 = scalar_lea.vmem [#allocation28], %s1213
        %p1215 = pneg %p743
        %p1216 = pneg %p740
        %s1217 = sand.u32 %s86, 1
        %s1218 = scalar_lea.sflag [#allocation30], %s1217
        %s1219 = sand.u32 %s730, 1
        %s1220 = smul.addr %s1219, 8
        %s1221 = scalar_lea.vmem [#allocation29], %s1220
        %p1222 = pneg %p771
        %p1223 = pneg %p768
        %s1224 = sand.u32 %s86, 1
        %s1225 = scalar_lea.sflag [#allocation30], %s1224
        %s1226 = sand.u32 %s758, 1
        %s1227 = smul.addr %s1226, 8
        %s1228 = scalar_lea.vmem [#allocation31], %s1227
        %p1229 = scmp.lt.s32.totalorder %s90, 1
        %s1230 = scalar_select %p1229, %s90, 1
        %p1231 = scmp.lt.s32.totalorder %s91, 0
        %s1232 = scalar_select %p1231, %s91, 0
        %s1233 = sadd.s32 %s1232, %s1230
        %s1234 = smul.addr %s1233, 8
        %s1235 = scalar_lea.vmem %s1, %s1234
        %p1236 = scmp.lt.s32.totalorder %s90, 1
        %s1237 = scalar_select %p1236, %s90, 1
        %s1238 = smul.addr %s1237, 8
        %s1239 = scalar_lea.vmem %s3, %s1238
        %p1240 = scmp.lt.s32.totalorder %s90, 1
        %s1241 = scalar_select %p1240, %s90, 1
        %s1242 = smul.addr %s1241, 8
        %s1243 = scalar_lea.vmem %s5, %s1242
        %p1244 = scmp.lt.s32.totalorder %s90, 1
        %s1245 = scalar_select %p1244, %s90, 1
        %s1246 = scalar_lea.vmem %s9, %s1245
        %v1248 = vld [vmem:[%s1235] sm:$0xff]
        %v1249 = vld [vmem:[%s1239] sm:$0xff]
        %v1250 = vld [vmem:[%s1243] sm:$0xff]
        %v1251 = vld [vmem:[#allocation2] sm:$0xff]
        %v1252 = vld [vmem:[%s1246] sm:$0x1]
        %v1253 = vpack.c.bf16 %v1248, %v1248
        %v1254 = vld [vmem:[#allocation5] sm:$0xf]
        %v1255 = vld [vmem:[#allocation5 + $0x4] sm:$0xf]
        %v1256 = vld [vmem:[#allocation5 + $0x8] sm:$0xf]
        %v1257 = vld [vmem:[#allocation5 + $0xc] sm:$0xf]
        %v1258 = vld [vmem:[#allocation7] sm:$0x1]
        %v1260 = vperm.slane %v1258, 0
        %v1266 = vunpack.c.l.b16 %v1254
        %v1267 = vunpack.c.l.b16 %v1255
        %v1268 = vunpack.c.l.b16 %v1256
        %v1269 = vunpack.c.l.b16 %v1257
        %v1270 = vpack.c.b16 %v1267, %v1266
        %v1271 = vpack.c.b16 %v1269, %v1268
        %vm1274 = vcmask 261120
        %v1276 = vsel %vm1274, %v1253, 0
        %1278 = vmatpush.bf16.msra.mxu0 0
        %1279 = vmatpush.bf16.msra.mxu0 0
        %1280 = vmatpush.bf16.msra.mxu0 0
        %1281 = vmatpush.bf16.msra.mxu0 0
        %1282 = vmatpush.bf16.msra.mxu0 0
        %1283 = vmatpush.bf16.msra.mxu0 0
        %1284 = vmatpush.bf16.msra.mxu0 %v1271
        %1285 = vmatpush.bf16.msra.mxu0 %v1270
        %1286 = vmatmul.bf16.gmra.mxu0 %v1276
        %v1287 = vpop.f32.mrf.mxu0
        %v1288 = vadd.f32 %v1260, %v1287
        %v1289 = vpop.f32.mrf.mxu0
        %1290 = vdwg.mxu0
        %v1291 = vpack.c.bf16 %v1249, %v1249
        %v1292 = vld [vmem:[#allocation8] sm:$0xf]
        %v1293 = vld [vmem:[#allocation8 + $0x4] sm:$0xf]
        %v1294 = vld [vmem:[#allocation8 + $0x8] sm:$0xf]
        %v1295 = vld [vmem:[#allocation8 + $0xc] sm:$0xf]
        %v1296 = vld [vmem:[#allocation10] sm:$0x1]
        %v1298 = vperm.slane %v1296, 0
        %v1304 = vunpack.c.l.b16 %v1292
        %v1305 = vunpack.c.l.b16 %v1293
        %v1306 = vunpack.c.l.b16 %v1294
        %v1307 = vunpack.c.l.b16 %v1295
        %v1308 = vpack.c.b16 %v1305, %v1304
        %v1309 = vpack.c.b16 %v1307, %v1306
        %v1313 = vsel %vm1274, %v1291, 0
        %1315 = vmatpush.bf16.msra.mxu0 0
        %1316 = vmatpush.bf16.msra.mxu0 0
        %1317 = vmatpush.bf16.msra.mxu0 0
        %1318 = vmatpush.bf16.msra.mxu0 0
        %1319 = vmatpush.bf16.msra.mxu0 0
        %1320 = vmatpush.bf16.msra.mxu0 0
        %1321 = vmatpush.bf16.msra.mxu0 %v1309
        %1322 = vmatpush.bf16.msra.mxu0 %v1308
        %1323 = vmatmul.bf16.gmra.mxu0 %v1313
        %v1324 = vpop.f32.mrf.mxu0
        %v1325 = vadd.f32 %v1298, %v1324
        %v1326 = vpop.f32.mrf.mxu0
        %1327 = vdwg.mxu0
        %v1328 = vld [vmem:[#allocation11] sm:$0xf]
        %v1329 = vld [vmem:[#allocation11 + $0x4] sm:$0xf]
        %v1330 = vld [vmem:[#allocation11 + $0x8] sm:$0xf]
        %v1331 = vld [vmem:[#allocation11 + $0xc] sm:$0xf]
        %v1332 = vld [vmem:[#allocation13] sm:$0x1]
        %1334 = vrot.lane.b32.xlu0 %v1288, 120
        %v1335 = vpop.permute.xlu0 %1334
        %1337 = vrot.lane.b32.xlu0 %v1288, 112
        %v1338 = vpop.permute.xlu0 %1337
        %1340 = vrot.lane.b32.xlu0 %v1288, 104
        %v1341 = vpop.permute.xlu0 %1340
        %v1343 = vrot.slane %v1338, 4
        %vm1344 = vcmask 1047556
        %v1345 = vsel %vm1344, %v1343, %v1288
        %v1346 = vrot.slane %v1288, 4
        %v1347 = vsel %vm1344, %v1338, %v1346
        %v1349 = vunpack.c.l.s4 1983009808
        %v1350 = vunpack.c.0.s8 %v1349
        %v1351 = vperm.slane %v1345, %v1350
        %v1353 = vunpack.c.l.s4 1983009808
        %v1354 = vunpack.c.0.s8 %v1353
        %v1355 = vperm.slane %v1347, %v1354
        %v1356 = vrot.slane %v1341, 4
        %v1357 = vsel %vm1344, %v1356, %v1335
        %v1358 = vrot.slane %v1335, 4
        %v1359 = vsel %vm1344, %v1341, %v1358
        %v1361 = vunpack.c.l.s4 1983009808
        %v1362 = vunpack.c.0.s8 %v1361
        %v1363 = vperm.slane %v1357, %v1362
        %v1365 = vunpack.c.l.s4 1983009808
        %v1366 = vunpack.c.0.s8 %v1365
        %v1367 = vperm.slane %v1359, %v1366
        %v1368 = vrot.slane %v1363, 4
        %v1369 = vsel %vm1344, %v1368, %v1351
        %v1370 = vrot.slane %v1351, 4
        %v1371 = vsel %vm1344, %v1363, %v1370
        %v1373 = vunpack.c.l.s4 1934713408
        %v1374 = vunpack.c.0.s8 %v1373
        %v1375 = vperm.slane %v1369, %v1374
        %v1377 = vunpack.c.l.s4 1934713408
        %v1378 = vunpack.c.0.s8 %v1377
        %v1379 = vperm.slane %v1371, %v1378
        %v1380 = vrot.slane %v1367, 4
        %v1381 = vsel %vm1344, %v1380, %v1355
        %v1382 = vrot.slane %v1355, 4
        %v1383 = vsel %vm1344, %v1367, %v1382
        %v1385 = vunpack.c.l.s4 1934713408
        %v1386 = vunpack.c.0.s8 %v1385
        %v1387 = vperm.slane %v1381, %v1386
        %v1389 = vunpack.c.l.s4 1934713408
        %v1390 = vunpack.c.0.s8 %v1389
        %v1391 = vperm.slane %v1383, %v1390
        %v1392 = vrot.slane %v1375, 4
        %v1393 = vsel %vm1344, 0.0, %v1392
        %v1394 = vrot.slane %v1379, 4
        %v1395 = vsel %vm1344, 0.0, %v1394
        %v1396 = vrot.slane %v1387, 4
        %v1397 = vsel %vm1344, 0.0, %v1396
        %v1398 = vrot.slane %v1391, 4
        %v1399 = vsel %vm1344, 0.0, %v1398
        %v1400 = vsel %vm1344, %v1394, %v1375
        %v1402 = vunpack.c.l.s4 1983009808
        %v1403 = vunpack.c.0.s8 %v1402
        %v1404 = vperm.slane %v1400, %v1403
        %v1405 = vrot.slane %v1395, 4
        %v1406 = vsel %vm1344, %v1405, %v1393
        %v1408 = vunpack.c.l.s4 1983009808
        %v1409 = vunpack.c.0.s8 %v1408
        %v1410 = vperm.slane %v1406, %v1409
        %v1411 = vsel %vm1344, %v1398, %v1387
        %v1413 = vunpack.c.l.s4 1983009808
        %v1414 = vunpack.c.0.s8 %v1413
        %v1415 = vperm.slane %v1411, %v1414
        %v1416 = vrot.slane %v1399, 4
        %v1417 = vsel %vm1344, %v1416, %v1397
        %v1419 = vunpack.c.l.s4 1983009808
        %v1420 = vunpack.c.0.s8 %v1419
        %v1421 = vperm.slane %v1417, %v1420
        %v1422 = vrot.slane %v1410, 4
        %v1423 = vsel %vm1344, %v1422, %v1404
        %v1424 = vrot.slane %v1404, 4
        %v1425 = vsel %vm1344, %v1410, %v1424
        %v1427 = vunpack.c.l.s4 1934713408
        %v1428 = vunpack.c.0.s8 %v1427
        %v1429 = vperm.slane %v1423, %v1428
        %v1431 = vunpack.c.l.s4 1934713408
        %v1432 = vunpack.c.0.s8 %v1431
        %v1433 = vperm.slane %v1425, %v1432
        %v1434 = vrot.slane %v1421, 4
        %v1435 = vsel %vm1344, %v1434, %v1415
        %v1436 = vrot.slane %v1415, 4
        %v1437 = vsel %vm1344, %v1421, %v1436
        %v1439 = vunpack.c.l.s4 1934713408
        %v1440 = vunpack.c.0.s8 %v1439
        %v1441 = vperm.slane %v1435, %v1440
        %v1443 = vunpack.c.l.s4 1934713408
        %v1444 = vunpack.c.0.s8 %v1443
        %v1445 = vperm.slane %v1437, %v1444
        %v1446 = vrot.slane %v1441, 4
        %v1447 = vsel %vm1344, %v1446, %v1429
        %v1448 = vrot.slane %v1429, 4
        %v1449 = vsel %vm1344, %v1441, %v1448
        %v1450 = vrot.slane %v1445, 4
        %v1451 = vsel %vm1344, %v1450, %v1433
        %v1452 = vrot.slane %v1433, 4
        %v1453 = vsel %vm1344, %v1445, %v1452
        %v1454 = vpack.c.bf16 %v1447, %v1447
        %v1455 = vpack.c.bf16 %v1449, %v1449
        %v1456 = vpack.c.bf16 %v1451, %v1451
        %v1457 = vpack.c.bf16 %v1453, %v1453
        %1459 = vrot.lane.b32.xlu0 %v1325, 120
        %v1460 = vpop.permute.xlu0 %1459
        %1462 = vrot.lane.b32.xlu0 %v1325, 112
        %v1463 = vpop.permute.xlu0 %1462
        %1465 = vrot.lane.b32.xlu0 %v1325, 104
        %v1466 = vpop.permute.xlu0 %1465
        %1468 = vrot.lane.b32.xlu0 %v1325, 96
        %v1469 = vpop.permute.xlu0 %1468
        %1471 = vrot.lane.b32.xlu0 %v1325, 88
        %v1472 = vpop.permute.xlu0 %1471
        %1474 = vrot.lane.b32.xlu0 %v1325, 80
        %v1475 = vpop.permute.xlu0 %1474
        %1477 = vrot.lane.b32.xlu0 %v1325, 72
        %v1478 = vpop.permute.xlu0 %1477
        %v1480 = vrot.slane %v1463, 4
        %v1481 = vsel %vm1344, %v1480, %v1325
        %v1482 = vrot.slane %v1325, 4
        %v1483 = vsel %vm1344, %v1463, %v1482
        %v1485 = vunpack.c.l.s4 1983009808
        %v1486 = vunpack.c.0.s8 %v1485
        %v1487 = vperm.slane %v1481, %v1486
        %v1489 = vunpack.c.l.s4 1983009808
        %v1490 = vunpack.c.0.s8 %v1489
        %v1491 = vperm.slane %v1483, %v1490
        %v1492 = vrot.slane %v1466, 4
        %v1493 = vsel %vm1344, %v1492, %v1460
        %v1494 = vrot.slane %v1460, 4
        %v1495 = vsel %vm1344, %v1466, %v1494
        %v1497 = vunpack.c.l.s4 1983009808
        %v1498 = vunpack.c.0.s8 %v1497
        %v1499 = vperm.slane %v1493, %v1498
        %v1501 = vunpack.c.l.s4 1983009808
        %v1502 = vunpack.c.0.s8 %v1501
        %v1503 = vperm.slane %v1495, %v1502
        %v1504 = vrot.slane %v1475, 4
        %v1505 = vsel %vm1344, %v1504, %v1469
        %v1506 = vrot.slane %v1469, 4
        %v1507 = vsel %vm1344, %v1475, %v1506
        %v1509 = vunpack.c.l.s4 1983009808
        %v1510 = vunpack.c.0.s8 %v1509
        %v1511 = vperm.slane %v1505, %v1510
        %v1513 = vunpack.c.l.s4 1983009808
        %v1514 = vunpack.c.0.s8 %v1513
        %v1515 = vperm.slane %v1507, %v1514
        %v1516 = vrot.slane %v1478, 4
        %v1517 = vsel %vm1344, %v1516, %v1472
        %v1518 = vrot.slane %v1472, 4
        %v1519 = vsel %vm1344, %v1478, %v1518
        %v1521 = vunpack.c.l.s4 1983009808
        %v1522 = vunpack.c.0.s8 %v1521
        %v1523 = vperm.slane %v1517, %v1522
        %v1525 = vunpack.c.l.s4 1983009808
        %v1526 = vunpack.c.0.s8 %v1525
        %v1527 = vperm.slane %v1519, %v1526
        %v1528 = vrot.slane %v1499, 4
        %v1529 = vsel %vm1344, %v1528, %v1487
        %v1530 = vrot.slane %v1487, 4
        %v1531 = vsel %vm1344, %v1499, %v1530
        %v1533 = vunpack.c.l.s4 1934713408
        %v1534 = vunpack.c.0.s8 %v1533
        %v1535 = vperm.slane %v1529, %v1534
        %v1537 = vunpack.c.l.s4 1934713408
        %v1538 = vunpack.c.0.s8 %v1537
        %v1539 = vperm.slane %v1531, %v1538
        %v1540 = vrot.slane %v1503, 4
        %v1541 = vsel %vm1344, %v1540, %v1491
        %v1542 = vrot.slane %v1491, 4
        %v1543 = vsel %vm1344, %v1503, %v1542
        %v1545 = vunpack.c.l.s4 1934713408
        %v1546 = vunpack.c.0.s8 %v1545
        %v1547 = vperm.slane %v1541, %v1546
        %v1549 = vunpack.c.l.s4 1934713408
        %v1550 = vunpack.c.0.s8 %v1549
        %v1551 = vperm.slane %v1543, %v1550
        %v1552 = vrot.slane %v1523, 4
        %v1553 = vsel %vm1344, %v1552, %v1511
        %v1554 = vrot.slane %v1511, 4
        %v1555 = vsel %vm1344, %v1523, %v1554
        %v1557 = vunpack.c.l.s4 1934713408
        %v1558 = vunpack.c.0.s8 %v1557
        %v1559 = vperm.slane %v1553, %v1558
        %v1561 = vunpack.c.l.s4 1934713408
        %v1562 = vunpack.c.0.s8 %v1561
        %v1563 = vperm.slane %v1555, %v1562
        %v1564 = vrot.slane %v1527, 4
        %v1565 = vsel %vm1344, %v1564, %v1515
        %v1566 = vrot.slane %v1515, 4
        %v1567 = vsel %vm1344, %v1527, %v1566
        %v1569 = vunpack.c.l.s4 1934713408
        %v1570 = vunpack.c.0.s8 %v1569
        %v1571 = vperm.slane %v1565, %v1570
        %v1573 = vunpack.c.l.s4 1934713408
        %v1574 = vunpack.c.0.s8 %v1573
        %v1575 = vperm.slane %v1567, %v1574
        %v1576 = vrot.slane %v1559, 4
        %v1577 = vsel %vm1344, %v1576, %v1535
        %v1578 = vrot.slane %v1535, 4
        %v1579 = vsel %vm1344, %v1559, %v1578
        %v1580 = vrot.slane %v1563, 4
        %v1581 = vsel %vm1344, %v1580, %v1539
        %v1582 = vrot.slane %v1539, 4
        %v1583 = vsel %vm1344, %v1563, %v1582
        %v1584 = vrot.slane %v1571, 4
        %v1585 = vsel %vm1344, %v1584, %v1547
        %v1586 = vrot.slane %v1547, 4
        %v1587 = vsel %vm1344, %v1571, %v1586
        %v1588 = vrot.slane %v1575, 4
        %v1589 = vsel %vm1344, %v1588, %v1551
        %v1590 = vrot.slane %v1551, 4
        %v1591 = vsel %vm1344, %v1575, %v1590
        %v1592 = vrot.slane %v1581, 4
        %v1593 = vsel %vm1344, %v1592, %v1577
        %v1594 = vrot.slane %v1577, 4
        %v1595 = vsel %vm1344, %v1581, %v1594
        %v1597 = vunpack.c.l.s4 1983009808
        %v1598 = vunpack.c.0.s8 %v1597
        %v1599 = vperm.slane %v1593, %v1598
        %v1601 = vunpack.c.l.s4 1983009808
        %v1602 = vunpack.c.0.s8 %v1601
        %v1603 = vperm.slane %v1595, %v1602
        %v1604 = vrot.slane %v1583, 4
        %v1605 = vsel %vm1344, %v1604, %v1579
        %v1606 = vrot.slane %v1579, 4
        %v1607 = vsel %vm1344, %v1583, %v1606
        %v1609 = vunpack.c.l.s4 1983009808
        %v1610 = vunpack.c.0.s8 %v1609
        %v1611 = vperm.slane %v1605, %v1610
        %v1613 = vunpack.c.l.s4 1983009808
        %v1614 = vunpack.c.0.s8 %v1613
        %v1615 = vperm.slane %v1607, %v1614
        %v1616 = vrot.slane %v1589, 4
        %v1617 = vsel %vm1344, %v1616, %v1585
        %v1618 = vrot.slane %v1585, 4
        %v1619 = vsel %vm1344, %v1589, %v1618
        %v1621 = vunpack.c.l.s4 1983009808
        %v1622 = vunpack.c.0.s8 %v1621
        %v1623 = vperm.slane %v1617, %v1622
        %v1625 = vunpack.c.l.s4 1983009808
        %v1626 = vunpack.c.0.s8 %v1625
        %v1627 = vperm.slane %v1619, %v1626
        %v1628 = vrot.slane %v1591, 4
        %v1629 = vsel %vm1344, %v1628, %v1587
        %v1630 = vrot.slane %v1587, 4
        %v1631 = vsel %vm1344, %v1591, %v1630
        %v1633 = vunpack.c.l.s4 1983009808
        %v1634 = vunpack.c.0.s8 %v1633
        %v1635 = vperm.slane %v1629, %v1634
        %v1637 = vunpack.c.l.s4 1983009808
        %v1638 = vunpack.c.0.s8 %v1637
        %v1639 = vperm.slane %v1631, %v1638
        %v1640 = vrot.slane %v1611, 4
        %v1641 = vsel %vm1344, %v1640, %v1599
        %v1642 = vrot.slane %v1599, 4
        %v1643 = vsel %vm1344, %v1611, %v1642
        %v1645 = vunpack.c.l.s4 1934713408
        %v1646 = vunpack.c.0.s8 %v1645
        %v1647 = vperm.slane %v1641, %v1646
        %v1649 = vunpack.c.l.s4 1934713408
        %v1650 = vunpack.c.0.s8 %v1649
        %v1651 = vperm.slane %v1643, %v1650
        %v1652 = vrot.slane %v1615, 4
        %v1653 = vsel %vm1344, %v1652, %v1603
        %v1654 = vrot.slane %v1603, 4
        %v1655 = vsel %vm1344, %v1615, %v1654
        %v1657 = vunpack.c.l.s4 1934713408
        %v1658 = vunpack.c.0.s8 %v1657
        %v1659 = vperm.slane %v1653, %v1658
        %v1661 = vunpack.c.l.s4 1934713408
        %v1662 = vunpack.c.0.s8 %v1661
        %v1663 = vperm.slane %v1655, %v1662
        %v1664 = vrot.slane %v1635, 4
        %v1665 = vsel %vm1344, %v1664, %v1623
        %v1666 = vrot.slane %v1623, 4
        %v1667 = vsel %vm1344, %v1635, %v1666
        %v1669 = vunpack.c.l.s4 1934713408
        %v1670 = vunpack.c.0.s8 %v1669
        %v1671 = vperm.slane %v1665, %v1670
        %v1673 = vunpack.c.l.s4 1934713408
        %v1674 = vunpack.c.0.s8 %v1673
        %v1675 = vperm.slane %v1667, %v1674
        %v1676 = vrot.slane %v1639, 4
        %v1677 = vsel %vm1344, %v1676, %v1627
        %v1678 = vrot.slane %v1627, 4
        %v1679 = vsel %vm1344, %v1639, %v1678
        %v1681 = vunpack.c.l.s4 1934713408
        %v1682 = vunpack.c.0.s8 %v1681
        %v1683 = vperm.slane %v1677, %v1682
        %v1685 = vunpack.c.l.s4 1934713408
        %v1686 = vunpack.c.0.s8 %v1685
        %v1687 = vperm.slane %v1679, %v1686
        %v1688 = vrot.slane %v1671, 4
        %v1689 = vsel %vm1344, %v1688, %v1647
        %v1690 = vrot.slane %v1647, 4
        %v1691 = vsel %vm1344, %v1671, %v1690
        %v1692 = vrot.slane %v1675, 4
        %v1693 = vsel %vm1344, %v1692, %v1651
        %v1694 = vrot.slane %v1651, 4
        %v1695 = vsel %vm1344, %v1675, %v1694
        %v1696 = vrot.slane %v1683, 4
        %v1697 = vsel %vm1344, %v1696, %v1659
        %v1698 = vrot.slane %v1659, 4
        %v1699 = vsel %vm1344, %v1683, %v1698
        %v1700 = vrot.slane %v1687, 4
        %v1701 = vsel %vm1344, %v1700, %v1663
        %v1702 = vrot.slane %v1663, 4
        %v1703 = vsel %vm1344, %v1687, %v1702
        %v1704 = vpack.c.bf16 %v1689, %v1689
        %v1705 = vpack.c.bf16 %v1691, %v1691
        %v1706 = vpack.c.bf16 %v1693, %v1693
        %v1707 = vpack.c.bf16 %v1695, %v1695
        %v1708 = vpack.c.bf16 %v1697, %v1697
        %v1709 = vpack.c.bf16 %v1699, %v1699
        %v1710 = vpack.c.bf16 %v1701, %v1701
        %v1711 = vpack.c.bf16 %v1703, %v1703
        %vm1712 = vcmask 64512
        %v1714 = vsel %vm1712, %v1454, 0
        %v1717 = vsel %vm1712, %v1704, 0
        %1719 = vmatpush.bf16.xpose.msra.mxu0 0
        %1720 = vmatpush.bf16.xpose.msra.mxu0 0
        %1721 = vmatpush.bf16.xpose.msra.mxu0 0
        %1722 = vmatpush.bf16.xpose.msra.mxu0 0
        %1723 = vmatpush.bf16.xpose.msra.mxu0 0
        %1724 = vmatpush.bf16.xpose.msra.mxu0 0
        %1725 = vmatpush.bf16.xpose.msra.mxu0 0
        %1726 = vmatpush.bf16.xpose.msra.mxu0 %v1717
        %1727 = vmatmul.bf16.gmra.mxu0 %v1714
        %v1728 = vpop.f32.mrf.mxu0
        %v1729 = vadd.f32 %v1251, %v1728
        %v1730 = vpop.f32.mrf.mxu0
        %1731 = vdwg.mxu0
        %v1733 = vsel %vm1712, %v1455, 0
        %v1736 = vsel %vm1712, %v1705, 0
        %1738 = vmatpush.bf16.xpose.msra.mxu0 0
        %1739 = vmatpush.bf16.xpose.msra.mxu0 0
        %1740 = vmatpush.bf16.xpose.msra.mxu0 0
        %1741 = vmatpush.bf16.xpose.msra.mxu0 0
        %1742 = vmatpush.bf16.xpose.msra.mxu0 0
        %1743 = vmatpush.bf16.xpose.msra.mxu0 0
        %1744 = vmatpush.bf16.xpose.msra.mxu0 0
        %1745 = vmatpush.bf16.xpose.msra.mxu0 %v1736
        %1746 = vmatmul.bf16.gmra.mxu0 %v1733
        %v1747 = vpop.f32.mrf.mxu0
        %v1748 = vadd.f32 %v1251, %v1747
        %v1749 = vpop.f32.mrf.mxu0
        %1750 = vdwg.mxu0
        %v1752 = vsel %vm1712, %v1456, 0
        %v1755 = vsel %vm1712, %v1706, 0
        %1757 = vmatpush.bf16.xpose.msra.mxu0 0
        %1758 = vmatpush.bf16.xpose.msra.mxu0 0
        %1759 = vmatpush.bf16.xpose.msra.mxu0 0
        %1760 = vmatpush.bf16.xpose.msra.mxu0 0
        %1761 = vmatpush.bf16.xpose.msra.mxu0 0
        %1762 = vmatpush.bf16.xpose.msra.mxu0 0
        %1763 = vmatpush.bf16.xpose.msra.mxu0 0
        %1764 = vmatpush.bf16.xpose.msra.mxu0 %v1755
        %1765 = vmatmul.bf16.gmra.mxu0 %v1752
        %v1766 = vpop.f32.mrf.mxu0
        %v1767 = vadd.f32 %v1251, %v1766
        %v1768 = vpop.f32.mrf.mxu0
        %1769 = vdwg.mxu0
        %v1771 = vsel %vm1712, %v1457, 0
        %v1774 = vsel %vm1712, %v1707, 0
        %1776 = vmatpush.bf16.xpose.msra.mxu0 0
        %1777 = vmatpush.bf16.xpose.msra.mxu0 0
        %1778 = vmatpush.bf16.xpose.msra.mxu0 0
        %1779 = vmatpush.bf16.xpose.msra.mxu0 0
        %1780 = vmatpush.bf16.xpose.msra.mxu0 0
        %1781 = vmatpush.bf16.xpose.msra.mxu0 0
        %1782 = vmatpush.bf16.xpose.msra.mxu0 0
        %1783 = vmatpush.bf16.xpose.msra.mxu0 %v1774
        %1784 = vmatmul.bf16.gmra.mxu0 %v1771
        %v1785 = vpop.f32.mrf.mxu0
        %v1786 = vadd.f32 %v1251, %v1785
        %v1787 = vpop.f32.mrf.mxu0
        %1788 = vdwg.mxu0
        %v1789 = vsel %vm1712, %v1729, -inf
        %1790 = vmax.xlane.f32.xlu0 %v1789
        %v1791 = vpop.xlane.xlu0 %1790
        %v1792 = vsel %vm1712, %v1748, -inf
        %1793 = vmax.xlane.f32.xlu0 %v1792
        %v1794 = vpop.xlane.xlu0 %1793
        %v1795 = vsel %vm1712, %v1767, -inf
        %1796 = vmax.xlane.f32.xlu0 %v1795
        %v1797 = vpop.xlane.xlu0 %1796
        %v1798 = vsel %vm1712, %v1786, -inf
        %1799 = vmax.xlane.f32.xlu0 %v1798
        %v1800 = vpop.xlane.xlu0 %1799
        %v1801 = vsub.f32 %v1729, %v1791
        %v1802 = vsub.f32 %v1748, %v1794
        %v1803 = vsub.f32 %v1767, %v1797
        %v1804 = vsub.f32 %v1786, %v1800
        %v1805 = vmul.f32 %v1801, 1.442695
        %v1806 = vpow.pop %v1805
        %v1807 = vmul.f32 %v1802, 1.442695
        %v1808 = vpow.pop %v1807
        %v1809 = vmul.f32 %v1803, 1.442695
        %v1810 = vpow.pop %v1809
        %v1811 = vmul.f32 %v1804, 1.442695
        %v1812 = vpow.pop %v1811
        %v1813 = vsel %vm1712, %v1806, 0.0
        %1814 = vadd.xlane.f32.xlu0 %v1813
        %v1815 = vpop.xlane.xlu0 %1814
        %v1816 = vsel %vm1712, %v1808, 0.0
        %1817 = vadd.xlane.f32.xlu0 %v1816
        %v1818 = vpop.xlane.xlu0 %1817
        %v1819 = vsel %vm1712, %v1810, 0.0
        %1820 = vadd.xlane.f32.xlu0 %v1819
        %v1821 = vpop.xlane.xlu0 %1820
        %v1822 = vsel %vm1712, %v1812, 0.0
        %1823 = vadd.xlane.f32.xlu0 %v1822
        %v1824 = vpop.xlane.xlu0 %1823
        %v1825 = vrcp.pop %v1815
        %v1826 = vrcp.pop %v1818
        %v1827 = vrcp.pop %v1821
        %v1828 = vrcp.pop %v1824
        %v1829 = vmul.f32 %v1806, %v1825
        %v1830 = vmul.f32 %v1808, %v1826
        %v1831 = vmul.f32 %v1810, %v1827
        %v1832 = vmul.f32 %v1812, %v1828
        %v1833 = vsel %vm1712, %v1829, 0.0
        %v1834 = vsel %vm1712, %v1830, 0.0
        %v1835 = vadd.f32 %v1833, %v1834
        %v1836 = vsel %vm1712, %v1831, 0.0
        %v1837 = vadd.f32 %v1835, %v1836
        %v1838 = vsel %vm1712, %v1832, 0.0
        %v1839 = vadd.f32 %v1837, %v1838
        %v1840 = vmul.f32 %v1839, 0.25
        %v1841 = vpack.c.bf16 %v1829, %v1829
        %v1842 = vpack.c.bf16 %v1830, %v1830
        %v1843 = vpack.c.bf16 %v1831, %v1831
        %v1844 = vpack.c.bf16 %v1832, %v1832
        %v1846 = vsel %vm1712, %v1841, 0
        %vm1848 = vcmask 1043456
        %v1850 = vsel %vm1848, %v1708, 0
        %1852 = vmatpush.bf16.msra.mxu0 0
        %1853 = vmatpush.bf16.msra.mxu0 0
        %1854 = vmatpush.bf16.msra.mxu0 0
        %1855 = vmatpush.bf16.msra.mxu0 0
        %1856 = vmatpush.bf16.msra.mxu0 0
        %1857 = vmatpush.bf16.msra.mxu0 0
        %1858 = vmatpush.bf16.msra.mxu0 0
        %1859 = vmatpush.bf16.msra.mxu0 %v1850
        %1860 = vmatmul.bf16.gmra.mxu0 %v1846
        %v1861 = vpop.f32.mrf.mxu0
        %v1862 = vadd.f32 0.0, %v1861
        %v1863 = vpop.f32.mrf.mxu0
        %1864 = vdwg.mxu0
        %v1866 = vsel %vm1712, %v1842, 0
        %v1869 = vsel %vm1848, %v1709, 0
        %1871 = vmatpush.bf16.msra.mxu0 0
        %1872 = vmatpush.bf16.msra.mxu0 0
        %1873 = vmatpush.bf16.msra.mxu0 0
        %1874 = vmatpush.bf16.msra.mxu0 0
        %1875 = vmatpush.bf16.msra.mxu0 0
        %1876 = vmatpush.bf16.msra.mxu0 0
        %1877 = vmatpush.bf16.msra.mxu0 0
        %1878 = vmatpush.bf16.msra.mxu0 %v1869
        %1879 = vmatmul.bf16.gmra.mxu0 %v1866
        %v1880 = vpop.f32.mrf.mxu0
        %v1881 = vadd.f32 0.0, %v1880
        %v1882 = vpop.f32.mrf.mxu0
        %1883 = vdwg.mxu0
        %v1885 = vsel %vm1712, %v1843, 0
        %v1888 = vsel %vm1848, %v1710, 0
        %1890 = vmatpush.bf16.msra.mxu0 0
        %1891 = vmatpush.bf16.msra.mxu0 0
        %1892 = vmatpush.bf16.msra.mxu0 0
        %1893 = vmatpush.bf16.msra.mxu0 0
        %1894 = vmatpush.bf16.msra.mxu0 0
        %1895 = vmatpush.bf16.msra.mxu0 0
        %1896 = vmatpush.bf16.msra.mxu0 0
        %1897 = vmatpush.bf16.msra.mxu0 %v1888
        %1898 = vmatmul.bf16.gmra.mxu0 %v1885
        %v1899 = vpop.f32.mrf.mxu0
        %v1900 = vadd.f32 0.0, %v1899
        %v1901 = vpop.f32.mrf.mxu0
        %1902 = vdwg.mxu0
        %v1904 = vsel %vm1712, %v1844, 0
        %v1907 = vsel %vm1848, %v1711, 0
        %1909 = vmatpush.bf16.msra.mxu0 0
        %1910 = vmatpush.bf16.msra.mxu0 0
        %1911 = vmatpush.bf16.msra.mxu0 0
        %1912 = vmatpush.bf16.msra.mxu0 0
        %1913 = vmatpush.bf16.msra.mxu0 0
        %1914 = vmatpush.bf16.msra.mxu0 0
        %1915 = vmatpush.bf16.msra.mxu0 0
        %1916 = vmatpush.bf16.msra.mxu0 %v1907
        %1917 = vmatmul.bf16.gmra.mxu0 %v1904
        %v1918 = vpop.f32.mrf.mxu0
        %v1919 = vadd.f32 0.0, %v1918
        %v1920 = vpop.f32.mrf.mxu0
        %1921 = vdwg.mxu0
        %v1922 = vrot.slane %v1900, 4
        %v1923 = vsel %vm1344, %v1922, %v1862
        %v1924 = vrot.slane %v1862, 4
        %v1925 = vsel %vm1344, %v1900, %v1924
        %v1927 = vunpack.c.l.s4 1983009808
        %v1928 = vunpack.c.0.s8 %v1927
        %v1929 = vperm.slane %v1923, %v1928
        %v1931 = vunpack.c.l.s4 1983009808
        %v1932 = vunpack.c.0.s8 %v1931
        %v1933 = vperm.slane %v1925, %v1932
        %v1934 = vrot.slane %v1919, 4
        %v1935 = vsel %vm1344, %v1934, %v1881
        %v1936 = vrot.slane %v1881, 4
        %v1937 = vsel %vm1344, %v1919, %v1936
        %v1939 = vunpack.c.l.s4 1983009808
        %v1940 = vunpack.c.0.s8 %v1939
        %v1941 = vperm.slane %v1935, %v1940
        %v1943 = vunpack.c.l.s4 1983009808
        %v1944 = vunpack.c.0.s8 %v1943
        %v1945 = vperm.slane %v1937, %v1944
        %v1946 = vrot.slane %v1941, 4
        %v1947 = vsel %vm1344, %v1946, %v1929
        %v1948 = vrot.slane %v1929, 4
        %v1949 = vsel %vm1344, %v1941, %v1948
        %v1951 = vunpack.c.l.s4 1934713408
        %v1952 = vunpack.c.0.s8 %v1951
        %v1953 = vperm.slane %v1947, %v1952
        %v1955 = vunpack.c.l.s4 1934713408
        %v1956 = vunpack.c.0.s8 %v1955
        %v1957 = vperm.slane %v1949, %v1956
        %v1958 = vrot.slane %v1945, 4
        %v1959 = vsel %vm1344, %v1958, %v1933
        %v1960 = vrot.slane %v1933, 4
        %v1961 = vsel %vm1344, %v1945, %v1960
        %v1963 = vunpack.c.l.s4 1934713408
        %v1964 = vunpack.c.0.s8 %v1963
        %v1965 = vperm.slane %v1959, %v1964
        %v1967 = vunpack.c.l.s4 1934713408
        %v1968 = vunpack.c.0.s8 %v1967
        %v1969 = vperm.slane %v1961, %v1968
        %v1970 = vrot.slane %v1953, 4
        %v1971 = vsel %vm1344, 0.0, %v1970
        %v1972 = vrot.slane %v1957, 4
        %v1973 = vsel %vm1344, 0.0, %v1972
        %v1974 = vrot.slane %v1965, 4
        %v1975 = vsel %vm1344, 0.0, %v1974
        %v1976 = vrot.slane %v1969, 4
        %v1977 = vsel %vm1344, 0.0, %v1976
        %v1978 = vsel %vm1344, %v1972, %v1953
        %v1980 = vunpack.c.l.s4 1983009808
        %v1981 = vunpack.c.0.s8 %v1980
        %v1982 = vperm.slane %v1978, %v1981
        %v1983 = vrot.slane %v1973, 4
        %v1984 = vsel %vm1344, %v1983, %v1971
        %v1986 = vunpack.c.l.s4 1983009808
        %v1987 = vunpack.c.0.s8 %v1986
        %v1988 = vperm.slane %v1984, %v1987
        %v1989 = vsel %vm1344, %v1976, %v1965
        %v1991 = vunpack.c.l.s4 1983009808
        %v1992 = vunpack.c.0.s8 %v1991
        %v1993 = vperm.slane %v1989, %v1992
        %v1994 = vrot.slane %v1977, 4
        %v1995 = vsel %vm1344, %v1994, %v1975
        %v1997 = vunpack.c.l.s4 1983009808
        %v1998 = vunpack.c.0.s8 %v1997
        %v1999 = vperm.slane %v1995, %v1998
        %v2000 = vrot.slane %v1988, 4
        %v2001 = vsel %vm1344, %v2000, %v1982
        %v2002 = vrot.slane %v1982, 4
        %v2003 = vsel %vm1344, %v1988, %v2002
        %v2005 = vunpack.c.l.s4 1934713408
        %v2006 = vunpack.c.0.s8 %v2005
        %v2007 = vperm.slane %v2001, %v2006
        %v2009 = vunpack.c.l.s4 1934713408
        %v2010 = vunpack.c.0.s8 %v2009
        %v2011 = vperm.slane %v2003, %v2010
        %v2012 = vrot.slane %v1999, 4
        %v2013 = vsel %vm1344, %v2012, %v1993
        %v2014 = vrot.slane %v1993, 4
        %v2015 = vsel %vm1344, %v1999, %v2014
        %v2017 = vunpack.c.l.s4 1934713408
        %v2018 = vunpack.c.0.s8 %v2017
        %v2019 = vperm.slane %v2013, %v2018
        %v2021 = vunpack.c.l.s4 1934713408
        %v2022 = vunpack.c.0.s8 %v2021
        %v2023 = vperm.slane %v2015, %v2022
        %v2024 = vrot.slane %v2019, 4
        %v2025 = vsel %vm1344, %v2024, %v2007
        %v2026 = vrot.slane %v2007, 4
        %v2027 = vsel %vm1344, %v2019, %v2026
        %v2028 = vrot.slane %v2023, 4
        %v2029 = vsel %vm1344, %v2028, %v2011
        %v2030 = vrot.slane %v2011, 4
        %v2031 = vsel %vm1344, %v2023, %v2030
        %2033 = vrot.lane.b32.xlu0 %v2027, 8
        %v2034 = vpop.permute.xlu0 %2033
        %2037 = vrot.lane.b32.xlu0 %v2029, 16
        %v2038 = vpop.permute.xlu0 %2037
        %2041 = vrot.lane.b32.xlu0 %v2031, 24
        %v2042 = vpop.permute.xlu0 %2041
        %v2044 = vsel %vm1712, %v2025, %v2034
        %vm2045 = vcmask 130048
        %v2046 = vsel %vm2045, %v2044, %v2038
        %vm2047 = vcmask 195584
        %v2048 = vsel %vm2047, %v2046, %v2042
        %v2049 = vpack.c.bf16 %v2048, %v2048
        %v2051 = vperm.slane %v1332, 0
        %v2057 = vunpack.c.l.b16 %v1328
        %v2058 = vunpack.c.l.b16 %v1329
        %v2059 = vunpack.c.l.b16 %v1330
        %v2060 = vunpack.c.l.b16 %v1331
        %v2061 = vpack.c.b16 %v2058, %v2057
        %v2062 = vpack.c.b16 %v2060, %v2059
        %v2066 = vsel %vm1274, %v2049, 0
        %2068 = vmatpush.bf16.msra.mxu0 0
        %2069 = vmatpush.bf16.msra.mxu0 0
        %2070 = vmatpush.bf16.msra.mxu0 0
        %2071 = vmatpush.bf16.msra.mxu0 0
        %2072 = vmatpush.bf16.msra.mxu0 0
        %2073 = vmatpush.bf16.msra.mxu0 0
        %2074 = vmatpush.bf16.msra.mxu0 %v2062
        %2075 = vmatpush.bf16.msra.mxu0 %v2061
        %2076 = vmatmul.bf16.gmra.mxu0 %v2066
        %v2077 = vpop.f32.mrf.mxu0
        %v2078 = vadd.f32 %v2051, %v2077
        %v2079 = vpop.f32.mrf.mxu0
        %2080 = vdwg.mxu0
        %v2081 = vadd.f32 %v1248, %v2078
        %v2082 = vld [vmem:[%s43] sm:$0x1]
        %v2083 = vld [vmem:[%s45] sm:$0x1]
        %v2084 = vsel %vm1274, %v2081, 0.0
        %2085 = vadd.xlane.f32.xlu0 %v2084
        %v2086 = vpop.xlane.xlu0 %2085
        %v2087 = vrcp.pop 32.0
        %v2088 = vmul.f32 32.0, %v2087
        %v2089 = vsub.f32 1.0, %v2088
        %v2090 = vmul.f32 %v2087, %v2089
        %v2091 = vadd.f32 %v2087, %v2090
        %vm2092 = vweird.f32 %v2087
        %v2093 = vsel %vm2092, %v2087, %v2091
        %v2094 = vmul.f32 %v2086, %v2093
        %v2095 = vsub.f32 %v2081, %v2094
        %v2096 = vmul.f32 %v2095, %v2095
        %v2097 = vsel %vm1274, %v2096, 0.0
        %2098 = vadd.xlane.f32.xlu0 %v2097
        %v2099 = vpop.xlane.xlu0 %2098
        %v2100 = vmul.f32 %v2099, %v2093
        %v2101 = vadd.f32 %v2100, 1e-05
        %v2102 = vrsqrt.pop %v2101
        %v2103 = vmul.f32 %v2102, %v2101
        %v2104 = vmul.f32 %v2103, %v2102
        %v2105 = vmul.f32 0.5, %v2104
        %v2106 = vsub.f32 1.5, %v2105
        %v2107 = vmul.f32 %v2102, %v2106
        %vm2108 = vweird.f32 %v2101
        %vm2109 = vweird.f32 %v2102
        %vm2110 = vmor %vm2108, %vm2109
        %v2111 = vsel %vm2110, %v2102, %v2107
        %v2112 = vmul.f32 %v2095, %v2111
        %v2114 = vperm.slane %v2082, 0
        %v2116 = vmul.f32 %v2112, %v2114
        %v2118 = vperm.slane %v2083, 0
        %v2120 = vadd.f32 %v2116, %v2118
        %v2121 = vpack.c.bf16 %v2120, %v2120
        %v2122 = vld [vmem:[#allocation14] sm:$0xf]
        %v2123 = vld [vmem:[#allocation14 + $0x4] sm:$0xf]
        %v2124 = vld [vmem:[#allocation14 + $0x8] sm:$0xf]
        %v2125 = vld [vmem:[#allocation14 + $0xc] sm:$0xf]
        %v2126 = vld [vmem:[#allocation16] sm:$0x1]
        %v2128 = vperm.slane %v2126, 0
        %v2134 = vunpack.c.l.b16 %v2122
        %v2135 = vunpack.c.l.b16 %v2123
        %v2136 = vunpack.c.l.b16 %v2124
        %v2137 = vunpack.c.l.b16 %v2125
        %v2138 = vpack.c.b16 %v2135, %v2134
        %v2139 = vpack.c.b16 %v2137, %v2136
        %v2143 = vsel %vm1274, %v2121, 0
        %2145 = vmatpush.bf16.msra.mxu0 0
        %2146 = vmatpush.bf16.msra.mxu0 0
        %2147 = vmatpush.bf16.msra.mxu0 0
        %2148 = vmatpush.bf16.msra.mxu0 0
        %2149 = vmatpush.bf16.msra.mxu0 0
        %2150 = vmatpush.bf16.msra.mxu0 0
        %2151 = vmatpush.bf16.msra.mxu0 %v2139
        %2152 = vmatpush.bf16.msra.mxu0 %v2138
        %2153 = vmatmul.bf16.gmra.mxu0 %v2143
        %v2154 = vpop.f32.mrf.mxu0
        %v2155 = vadd.f32 %v2128, %v2154
        %v2156 = vpop.f32.mrf.mxu0
        %2157 = vdwg.mxu0
        %v2158 = vpack.c.bf16 %v1250, %v1250
        %v2159 = vld [vmem:[#allocation17] sm:$0xf]
        %v2160 = vld [vmem:[#allocation17 + $0x4] sm:$0xf]
        %v2161 = vld [vmem:[#allocation17 + $0x8] sm:$0xf]
        %v2162 = vld [vmem:[#allocation17 + $0xc] sm:$0xf]
        %v2163 = vld [vmem:[#allocation19] sm:$0x1]
        %v2165 = vperm.slane %v2163, 0
        %v2171 = vunpack.c.l.b16 %v2159
        %v2172 = vunpack.c.l.b16 %v2160
        %v2173 = vunpack.c.l.b16 %v2161
        %v2174 = vunpack.c.l.b16 %v2162
        %v2175 = vpack.c.b16 %v2172, %v2171
        %v2176 = vpack.c.b16 %v2174, %v2173
        %v2180 = vsel %vm1274, %v2158, 0
        %2182 = vmatpush.bf16.msra.mxu0 0
        %2183 = vmatpush.bf16.msra.mxu0 0
        %2184 = vmatpush.bf16.msra.mxu0 0
        %2185 = vmatpush.bf16.msra.mxu0 0
        %2186 = vmatpush.bf16.msra.mxu0 0
        %2187 = vmatpush.bf16.msra.mxu0 0
        %2188 = vmatpush.bf16.msra.mxu0 %v2176
        %2189 = vmatpush.bf16.msra.mxu0 %v2175
        %2190 = vmatmul.bf16.gmra.mxu0 %v2180
        %v2191 = vpop.f32.mrf.mxu0
        %v2192 = vadd.f32 %v2165, %v2191
        %v2193 = vpop.f32.mrf.mxu0
        %2194 = vdwg.mxu0
        %v2195 = vld [vmem:[#allocation20] sm:$0xf]
        %v2196 = vld [vmem:[#allocation20 + $0x4] sm:$0xf]
        %v2197 = vld [vmem:[#allocation20 + $0x8] sm:$0xf]
        %v2198 = vld [vmem:[#allocation20 + $0xc] sm:$0xf]
        %v2199 = vld [vmem:[#allocation22] sm:$0x1]
        %2201 = vrot.lane.b32.xlu0 %v2155, 120
        %v2202 = vpop.permute.xlu0 %2201
        %2204 = vrot.lane.b32.xlu0 %v2155, 112
        %v2205 = vpop.permute.xlu0 %2204
        %2207 = vrot.lane.b32.xlu0 %v2155, 104
        %v2208 = vpop.permute.xlu0 %2207
        %v2210 = vrot.slane %v2205, 4
        %v2211 = vsel %vm1344, %v2210, %v2155
        %v2212 = vrot.slane %v2155, 4
        %v2213 = vsel %vm1344, %v2205, %v2212
        %v2215 = vunpack.c.l.s4 1983009808
        %v2216 = vunpack.c.0.s8 %v2215
        %v2217 = vperm.slane %v2211, %v2216
        %v2219 = vunpack.c.l.s4 1983009808
        %v2220 = vunpack.c.0.s8 %v2219
        %v2221 = vperm.slane %v2213, %v2220
        %v2222 = vrot.slane %v2208, 4
        %v2223 = vsel %vm1344, %v2222, %v2202
        %v2224 = vrot.slane %v2202, 4
        %v2225 = vsel %vm1344, %v2208, %v2224
        %v2227 = vunpack.c.l.s4 1983009808
        %v2228 = vunpack.c.0.s8 %v2227
        %v2229 = vperm.slane %v2223, %v2228
        %v2231 = vunpack.c.l.s4 1983009808
        %v2232 = vunpack.c.0.s8 %v2231
        %v2233 = vperm.slane %v2225, %v2232
        %v2234 = vrot.slane %v2229, 4
        %v2235 = vsel %vm1344, %v2234, %v2217
        %v2236 = vrot.slane %v2217, 4
        %v2237 = vsel %vm1344, %v2229, %v2236
        %v2239 = vunpack.c.l.s4 1934713408
        %v2240 = vunpack.c.0.s8 %v2239
        %v2241 = vperm.slane %v2235, %v2240
        %v2243 = vunpack.c.l.s4 1934713408
        %v2244 = vunpack.c.0.s8 %v2243
        %v2245 = vperm.slane %v2237, %v2244
        %v2246 = vrot.slane %v2233, 4
        %v2247 = vsel %vm1344, %v2246, %v2221
        %v2248 = vrot.slane %v2221, 4
        %v2249 = vsel %vm1344, %v2233, %v2248
        %v2251 = vunpack.c.l.s4 1934713408
        %v2252 = vunpack.c.0.s8 %v2251
        %v2253 = vperm.slane %v2247, %v2252
        %v2255 = vunpack.c.l.s4 1934713408
        %v2256 = vunpack.c.0.s8 %v2255
        %v2257 = vperm.slane %v2249, %v2256
        %v2258 = vrot.slane %v2241, 4
        %v2259 = vsel %vm1344, 0.0, %v2258
        %v2260 = vrot.slane %v2245, 4
        %v2261 = vsel %vm1344, 0.0, %v2260
        %v2262 = vrot.slane %v2253, 4
        %v2263 = vsel %vm1344, 0.0, %v2262
        %v2264 = vrot.slane %v2257, 4
        %v2265 = vsel %vm1344, 0.0, %v2264
        %v2266 = vsel %vm1344, %v2260, %v2241
        %v2268 = vunpack.c.l.s4 1983009808
        %v2269 = vunpack.c.0.s8 %v2268
        %v2270 = vperm.slane %v2266, %v2269
        %v2271 = vrot.slane %v2261, 4
        %v2272 = vsel %vm1344, %v2271, %v2259
        %v2274 = vunpack.c.l.s4 1983009808
        %v2275 = vunpack.c.0.s8 %v2274
        %v2276 = vperm.slane %v2272, %v2275
        %v2277 = vsel %vm1344, %v2264, %v2253
        %v2279 = vunpack.c.l.s4 1983009808
        %v2280 = vunpack.c.0.s8 %v2279
        %v2281 = vperm.slane %v2277, %v2280
        %v2282 = vrot.slane %v2265, 4
        %v2283 = vsel %vm1344, %v2282, %v2263
        %v2285 = vunpack.c.l.s4 1983009808
        %v2286 = vunpack.c.0.s8 %v2285
        %v2287 = vperm.slane %v2283, %v2286
        %v2288 = vrot.slane %v2276, 4
        %v2289 = vsel %vm1344, %v2288, %v2270
        %v2290 = vrot.slane %v2270, 4
        %v2291 = vsel %vm1344, %v2276, %v2290
        %v2293 = vunpack.c.l.s4 1934713408
        %v2294 = vunpack.c.0.s8 %v2293
        %v2295 = vperm.slane %v2289, %v2294
        %v2297 = vunpack.c.l.s4 1934713408
        %v2298 = vunpack.c.0.s8 %v2297
        %v2299 = vperm.slane %v2291, %v2298
        %v2300 = vrot.slane %v2287, 4
        %v2301 = vsel %vm1344, %v2300, %v2281
        %v2302 = vrot.slane %v2281, 4
        %v2303 = vsel %vm1344, %v2287, %v2302
        %v2305 = vunpack.c.l.s4 1934713408
        %v2306 = vunpack.c.0.s8 %v2305
        %v2307 = vperm.slane %v2301, %v2306
        %v2309 = vunpack.c.l.s4 1934713408
        %v2310 = vunpack.c.0.s8 %v2309
        %v2311 = vperm.slane %v2303, %v2310
        %v2312 = vrot.slane %v2307, 4
        %v2313 = vsel %vm1344, %v2312, %v2295
        %v2314 = vrot.slane %v2295, 4
        %v2315 = vsel %vm1344, %v2307, %v2314
        %v2316 = vrot.slane %v2311, 4
        %v2317 = vsel %vm1344, %v2316, %v2299
        %v2318 = vrot.slane %v2299, 4
        %v2319 = vsel %vm1344, %v2311, %v2318
        %v2320 = vpack.c.bf16 %v2313, %v2313
        %v2321 = vpack.c.bf16 %v2315, %v2315
        %v2322 = vpack.c.bf16 %v2317, %v2317
        %v2323 = vpack.c.bf16 %v2319, %v2319
        %2325 = vrot.lane.b32.xlu0 %v2192, 120
        %v2326 = vpop.permute.xlu0 %2325
        %2328 = vrot.lane.b32.xlu0 %v2192, 112
        %v2329 = vpop.permute.xlu0 %2328
        %2331 = vrot.lane.b32.xlu0 %v2192, 104
        %v2332 = vpop.permute.xlu0 %2331
        %2334 = vrot.lane.b32.xlu0 %v2192, 96
        %v2335 = vpop.permute.xlu0 %2334
        %2337 = vrot.lane.b32.xlu0 %v2192, 88
        %v2338 = vpop.permute.xlu0 %2337
        %2340 = vrot.lane.b32.xlu0 %v2192, 80
        %v2341 = vpop.permute.xlu0 %2340
        %2343 = vrot.lane.b32.xlu0 %v2192, 72
        %v2344 = vpop.permute.xlu0 %2343
        %v2346 = vrot.slane %v2329, 4
        %v2347 = vsel %vm1344, %v2346, %v2192
        %v2348 = vrot.slane %v2192, 4
        %v2349 = vsel %vm1344, %v2329, %v2348
        %v2351 = vunpack.c.l.s4 1983009808
        %v2352 = vunpack.c.0.s8 %v2351
        %v2353 = vperm.slane %v2347, %v2352
        %v2355 = vunpack.c.l.s4 1983009808
        %v2356 = vunpack.c.0.s8 %v2355
        %v2357 = vperm.slane %v2349, %v2356
        %v2358 = vrot.slane %v2332, 4
        %v2359 = vsel %vm1344, %v2358, %v2326
        %v2360 = vrot.slane %v2326, 4
        %v2361 = vsel %vm1344, %v2332, %v2360
        %v2363 = vunpack.c.l.s4 1983009808
        %v2364 = vunpack.c.0.s8 %v2363
        %v2365 = vperm.slane %v2359, %v2364
        %v2367 = vunpack.c.l.s4 1983009808
        %v2368 = vunpack.c.0.s8 %v2367
        %v2369 = vperm.slane %v2361, %v2368
        %v2370 = vrot.slane %v2341, 4
        %v2371 = vsel %vm1344, %v2370, %v2335
        %v2372 = vrot.slane %v2335, 4
        %v2373 = vsel %vm1344, %v2341, %v2372
        %v2375 = vunpack.c.l.s4 1983009808
        %v2376 = vunpack.c.0.s8 %v2375
        %v2377 = vperm.slane %v2371, %v2376
        %v2379 = vunpack.c.l.s4 1983009808
        %v2380 = vunpack.c.0.s8 %v2379
        %v2381 = vperm.slane %v2373, %v2380
        %v2382 = vrot.slane %v2344, 4
        %v2383 = vsel %vm1344, %v2382, %v2338
        %v2384 = vrot.slane %v2338, 4
        %v2385 = vsel %vm1344, %v2344, %v2384
        %v2387 = vunpack.c.l.s4 1983009808
        %v2388 = vunpack.c.0.s8 %v2387
        %v2389 = vperm.slane %v2383, %v2388
        %v2391 = vunpack.c.l.s4 1983009808
        %v2392 = vunpack.c.0.s8 %v2391
        %v2393 = vperm.slane %v2385, %v2392
        %v2394 = vrot.slane %v2365, 4
        %v2395 = vsel %vm1344, %v2394, %v2353
        %v2396 = vrot.slane %v2353, 4
        %v2397 = vsel %vm1344, %v2365, %v2396
        %v2399 = vunpack.c.l.s4 1934713408
        %v2400 = vunpack.c.0.s8 %v2399
        %v2401 = vperm.slane %v2395, %v2400
        %v2403 = vunpack.c.l.s4 1934713408
        %v2404 = vunpack.c.0.s8 %v2403
        %v2405 = vperm.slane %v2397, %v2404
        %v2406 = vrot.slane %v2369, 4
        %v2407 = vsel %vm1344, %v2406, %v2357
        %v2408 = vrot.slane %v2357, 4
        %v2409 = vsel %vm1344, %v2369, %v2408
        %v2411 = vunpack.c.l.s4 1934713408
        %v2412 = vunpack.c.0.s8 %v2411
        %v2413 = vperm.slane %v2407, %v2412
        %v2415 = vunpack.c.l.s4 1934713408
        %v2416 = vunpack.c.0.s8 %v2415
        %v2417 = vperm.slane %v2409, %v2416
        %v2418 = vrot.slane %v2389, 4
        %v2419 = vsel %vm1344, %v2418, %v2377
        %v2420 = vrot.slane %v2377, 4
        %v2421 = vsel %vm1344, %v2389, %v2420
        %v2423 = vunpack.c.l.s4 1934713408
        %v2424 = vunpack.c.0.s8 %v2423
        %v2425 = vperm.slane %v2419, %v2424
        %v2427 = vunpack.c.l.s4 1934713408
        %v2428 = vunpack.c.0.s8 %v2427
        %v2429 = vperm.slane %v2421, %v2428
        %v2430 = vrot.slane %v2393, 4
        %v2431 = vsel %vm1344, %v2430, %v2381
        %v2432 = vrot.slane %v2381, 4
        %v2433 = vsel %vm1344, %v2393, %v2432
        %v2435 = vunpack.c.l.s4 1934713408
        %v2436 = vunpack.c.0.s8 %v2435
        %v2437 = vperm.slane %v2431, %v2436
        %v2439 = vunpack.c.l.s4 1934713408
        %v2440 = vunpack.c.0.s8 %v2439
        %v2441 = vperm.slane %v2433, %v2440
        %v2442 = vrot.slane %v2425, 4
        %v2443 = vsel %vm1344, %v2442, %v2401
        %v2444 = vrot.slane %v2401, 4
        %v2445 = vsel %vm1344, %v2425, %v2444
        %v2446 = vrot.slane %v2429, 4
        %v2447 = vsel %vm1344, %v2446, %v2405
        %v2448 = vrot.slane %v2405, 4
        %v2449 = vsel %vm1344, %v2429, %v2448
        %v2450 = vrot.slane %v2437, 4
        %v2451 = vsel %vm1344, %v2450, %v2413
        %v2452 = vrot.slane %v2413, 4
        %v2453 = vsel %vm1344, %v2437, %v2452
        %v2454 = vrot.slane %v2441, 4
        %v2455 = vsel %vm1344, %v2454, %v2417
        %v2456 = vrot.slane %v2417, 4
        %v2457 = vsel %vm1344, %v2441, %v2456
        %v2458 = vrot.slane %v2447, 4
        %v2459 = vsel %vm1344, %v2458, %v2443
        %v2460 = vrot.slane %v2443, 4
        %v2461 = vsel %vm1344, %v2447, %v2460
        %v2463 = vunpack.c.l.s4 1983009808
        %v2464 = vunpack.c.0.s8 %v2463
        %v2465 = vperm.slane %v2459, %v2464
        %v2467 = vunpack.c.l.s4 1983009808
        %v2468 = vunpack.c.0.s8 %v2467
        %v2469 = vperm.slane %v2461, %v2468
        %v2470 = vrot.slane %v2449, 4
        %v2471 = vsel %vm1344, %v2470, %v2445
        %v2472 = vrot.slane %v2445, 4
        %v2473 = vsel %vm1344, %v2449, %v2472
        %v2475 = vunpack.c.l.s4 1983009808
        %v2476 = vunpack.c.0.s8 %v2475
        %v2477 = vperm.slane %v2471, %v2476
        %v2479 = vunpack.c.l.s4 1983009808
        %v2480 = vunpack.c.0.s8 %v2479
        %v2481 = vperm.slane %v2473, %v2480
        %v2482 = vrot.slane %v2455, 4
        %v2483 = vsel %vm1344, %v2482, %v2451
        %v2484 = vrot.slane %v2451, 4
        %v2485 = vsel %vm1344, %v2455, %v2484
        %v2487 = vunpack.c.l.s4 1983009808
        %v2488 = vunpack.c.0.s8 %v2487
        %v2489 = vperm.slane %v2483, %v2488
        %v2491 = vunpack.c.l.s4 1983009808
        %v2492 = vunpack.c.0.s8 %v2491
        %v2493 = vperm.slane %v2485, %v2492
        %v2494 = vrot.slane %v2457, 4
        %v2495 = vsel %vm1344, %v2494, %v2453
        %v2496 = vrot.slane %v2453, 4
        %v2497 = vsel %vm1344, %v2457, %v2496
        %v2499 = vunpack.c.l.s4 1983009808
        %v2500 = vunpack.c.0.s8 %v2499
        %v2501 = vperm.slane %v2495, %v2500
        %v2503 = vunpack.c.l.s4 1983009808
        %v2504 = vunpack.c.0.s8 %v2503
        %v2505 = vperm.slane %v2497, %v2504
        %v2506 = vrot.slane %v2477, 4
        %v2507 = vsel %vm1344, %v2506, %v2465
        %v2508 = vrot.slane %v2465, 4
        %v2509 = vsel %vm1344, %v2477, %v2508
        %v2511 = vunpack.c.l.s4 1934713408
        %v2512 = vunpack.c.0.s8 %v2511
        %v2513 = vperm.slane %v2507, %v2512
        %v2515 = vunpack.c.l.s4 1934713408
        %v2516 = vunpack.c.0.s8 %v2515
        %v2517 = vperm.slane %v2509, %v2516
        %v2518 = vrot.slane %v2481, 4
        %v2519 = vsel %vm1344, %v2518, %v2469
        %v2520 = vrot.slane %v2469, 4
        %v2521 = vsel %vm1344, %v2481, %v2520
        %v2523 = vunpack.c.l.s4 1934713408
        %v2524 = vunpack.c.0.s8 %v2523
        %v2525 = vperm.slane %v2519, %v2524
        %v2527 = vunpack.c.l.s4 1934713408
        %v2528 = vunpack.c.0.s8 %v2527
        %v2529 = vperm.slane %v2521, %v2528
        %v2530 = vrot.slane %v2501, 4
        %v2531 = vsel %vm1344, %v2530, %v2489
        %v2532 = vrot.slane %v2489, 4
        %v2533 = vsel %vm1344, %v2501, %v2532
        %v2535 = vunpack.c.l.s4 1934713408
        %v2536 = vunpack.c.0.s8 %v2535
        %v2537 = vperm.slane %v2531, %v2536
        %v2539 = vunpack.c.l.s4 1934713408
        %v2540 = vunpack.c.0.s8 %v2539
        %v2541 = vperm.slane %v2533, %v2540
        %v2542 = vrot.slane %v2505, 4
        %v2543 = vsel %vm1344, %v2542, %v2493
        %v2544 = vrot.slane %v2493, 4
        %v2545 = vsel %vm1344, %v2505, %v2544
        %v2547 = vunpack.c.l.s4 1934713408
        %v2548 = vunpack.c.0.s8 %v2547
        %v2549 = vperm.slane %v2543, %v2548
        %v2551 = vunpack.c.l.s4 1934713408
        %v2552 = vunpack.c.0.s8 %v2551
        %v2553 = vperm.slane %v2545, %v2552
        %v2554 = vrot.slane %v2537, 4
        %v2555 = vsel %vm1344, %v2554, %v2513
        %v2556 = vrot.slane %v2513, 4
        %v2557 = vsel %vm1344, %v2537, %v2556
        %v2558 = vrot.slane %v2541, 4
        %v2559 = vsel %vm1344, %v2558, %v2517
        %v2560 = vrot.slane %v2517, 4
        %v2561 = vsel %vm1344, %v2541, %v2560
        %v2562 = vrot.slane %v2549, 4
        %v2563 = vsel %vm1344, %v2562, %v2525
        %v2564 = vrot.slane %v2525, 4
        %v2565 = vsel %vm1344, %v2549, %v2564
        %v2566 = vrot.slane %v2553, 4
        %v2567 = vsel %vm1344, %v2566, %v2529
        %v2568 = vrot.slane %v2529, 4
        %v2569 = vsel %vm1344, %v2553, %v2568
        %v2570 = vpack.c.bf16 %v2555, %v2555
        %v2571 = vpack.c.bf16 %v2557, %v2557
        %v2572 = vpack.c.bf16 %v2559, %v2559
        %v2573 = vpack.c.bf16 %v2561, %v2561
        %v2574 = vpack.c.bf16 %v2563, %v2563
        %v2575 = vpack.c.bf16 %v2565, %v2565
        %v2576 = vpack.c.bf16 %v2567, %v2567
        %v2577 = vpack.c.bf16 %v2569, %v2569
        %v2579 = vperm.slane %v1252, 0
        %v2582 = vsel %vm1712, %v2320, 0
        %v2585 = vsel %vm1712, %v2570, 0
        %2587 = vmatpush.bf16.xpose.msra.mxu0 0
        %2588 = vmatpush.bf16.xpose.msra.mxu0 0
        %2589 = vmatpush.bf16.xpose.msra.mxu0 0
        %2590 = vmatpush.bf16.xpose.msra.mxu0 0
        %2591 = vmatpush.bf16.xpose.msra.mxu0 0
        %2592 = vmatpush.bf16.xpose.msra.mxu0 0
        %2593 = vmatpush.bf16.xpose.msra.mxu0 0
        %2594 = vmatpush.bf16.xpose.msra.mxu0 %v2585
        %2595 = vmatmul.bf16.gmra.mxu0 %v2582
        %v2596 = vpop.f32.mrf.mxu0
        %v2597 = vadd.f32 %v2579, %v2596
        %v2598 = vpop.f32.mrf.mxu0
        %2599 = vdwg.mxu0
        %v2601 = vsel %vm1712, %v2321, 0
        %v2604 = vsel %vm1712, %v2571, 0
        %2606 = vmatpush.bf16.xpose.msra.mxu0 0
        %2607 = vmatpush.bf16.xpose.msra.mxu0 0
        %2608 = vmatpush.bf16.xpose.msra.mxu0 0
        %2609 = vmatpush.bf16.xpose.msra.mxu0 0
        %2610 = vmatpush.bf16.xpose.msra.mxu0 0
        %2611 = vmatpush.bf16.xpose.msra.mxu0 0
        %2612 = vmatpush.bf16.xpose.msra.mxu0 0
        %2613 = vmatpush.bf16.xpose.msra.mxu0 %v2604
        %2614 = vmatmul.bf16.gmra.mxu0 %v2601
        %v2615 = vpop.f32.mrf.mxu0
        %v2616 = vadd.f32 %v2579, %v2615
        %v2617 = vpop.f32.mrf.mxu0
        %2618 = vdwg.mxu0
        %v2620 = vsel %vm1712, %v2322, 0
        %v2623 = vsel %vm1712, %v2572, 0
        %2625 = vmatpush.bf16.xpose.msra.mxu0 0
        %2626 = vmatpush.bf16.xpose.msra.mxu0 0
        %2627 = vmatpush.bf16.xpose.msra.mxu0 0
        %2628 = vmatpush.bf16.xpose.msra.mxu0 0
        %2629 = vmatpush.bf16.xpose.msra.mxu0 0
        %2630 = vmatpush.bf16.xpose.msra.mxu0 0
        %2631 = vmatpush.bf16.xpose.msra.mxu0 0
        %2632 = vmatpush.bf16.xpose.msra.mxu0 %v2623
        %2633 = vmatmul.bf16.gmra.mxu0 %v2620
        %v2634 = vpop.f32.mrf.mxu0
        %v2635 = vadd.f32 %v2579, %v2634
        %v2636 = vpop.f32.mrf.mxu0
        %2637 = vdwg.mxu0
        %v2639 = vsel %vm1712, %v2323, 0
        %v2642 = vsel %vm1712, %v2573, 0
        %2644 = vmatpush.bf16.xpose.msra.mxu0 0
        %2645 = vmatpush.bf16.xpose.msra.mxu0 0
        %2646 = vmatpush.bf16.xpose.msra.mxu0 0
        %2647 = vmatpush.bf16.xpose.msra.mxu0 0
        %2648 = vmatpush.bf16.xpose.msra.mxu0 0
        %2649 = vmatpush.bf16.xpose.msra.mxu0 0
        %2650 = vmatpush.bf16.xpose.msra.mxu0 0
        %2651 = vmatpush.bf16.xpose.msra.mxu0 %v2642
        %2652 = vmatmul.bf16.gmra.mxu0 %v2639
        %v2653 = vpop.f32.mrf.mxu0
        %v2654 = vadd.f32 %v2579, %v2653
        %v2655 = vpop.f32.mrf.mxu0
        %2656 = vdwg.mxu0
        %v2657 = vsel %vm1712, %v2597, -inf
        %2658 = vmax.xlane.f32.xlu0 %v2657
        %v2659 = vpop.xlane.xlu0 %2658
        %v2660 = vsel %vm1712, %v2616, -inf
        %2661 = vmax.xlane.f32.xlu0 %v2660
        %v2662 = vpop.xlane.xlu0 %2661
        %v2663 = vsel %vm1712, %v2635, -inf
        %2664 = vmax.xlane.f32.xlu0 %v2663
        %v2665 = vpop.xlane.xlu0 %2664
        %v2666 = vsel %vm1712, %v2654, -inf
        %2667 = vmax.xlane.f32.xlu0 %v2666
        %v2668 = vpop.xlane.xlu0 %2667
        %v2669 = vsub.f32 %v2597, %v2659
        %v2670 = vsub.f32 %v2616, %v2662
        %v2671 = vsub.f32 %v2635, %v2665
        %v2672 = vsub.f32 %v2654, %v2668
        %v2673 = vmul.f32 %v2669, 1.442695
        %v2674 = vpow.pop %v2673
        %v2675 = vmul.f32 %v2670, 1.442695
        %v2676 = vpow.pop %v2675
        %v2677 = vmul.f32 %v2671, 1.442695
        %v2678 = vpow.pop %v2677
        %v2679 = vmul.f32 %v2672, 1.442695
        %v2680 = vpow.pop %v2679
        %v2681 = vsel %vm1712, %v2674, 0.0
        %2682 = vadd.xlane.f32.xlu0 %v2681
        %v2683 = vpop.xlane.xlu0 %2682
        %v2684 = vsel %vm1712, %v2676, 0.0
        %2685 = vadd.xlane.f32.xlu0 %v2684
        %v2686 = vpop.xlane.xlu0 %2685
        %v2687 = vsel %vm1712, %v2678, 0.0
        %2688 = vadd.xlane.f32.xlu0 %v2687
        %v2689 = vpop.xlane.xlu0 %2688
        %v2690 = vsel %vm1712, %v2680, 0.0
        %2691 = vadd.xlane.f32.xlu0 %v2690
        %v2692 = vpop.xlane.xlu0 %2691
        %v2693 = vrcp.pop %v2683
        %v2694 = vrcp.pop %v2686
        %v2695 = vrcp.pop %v2689
        %v2696 = vrcp.pop %v2692
        %v2697 = vmul.f32 %v2674, %v2693
        %v2698 = vmul.f32 %v2676, %v2694
        %v2699 = vmul.f32 %v2678, %v2695
        %v2700 = vmul.f32 %v2680, %v2696
        %v2701 = vsel %vm1712, %v2697, 0.0
        %v2702 = vsel %vm1712, %v2698, 0.0
        %v2703 = vadd.f32 %v2701, %v2702
        %v2704 = vsel %vm1712, %v2699, 0.0
        %v2705 = vadd.f32 %v2703, %v2704
        %v2706 = vsel %vm1712, %v2700, 0.0
        %v2707 = vadd.f32 %v2705, %v2706
        %v2708 = vmul.f32 %v2707, 0.25
        %v2709 = vpack.c.bf16 %v2697, %v2697
        %v2710 = vpack.c.bf16 %v2698, %v2698
        %v2711 = vpack.c.bf16 %v2699, %v2699
        %v2712 = vpack.c.bf16 %v2700, %v2700
        %v2714 = vsel %vm1712, %v2709, 0
        %v2717 = vsel %vm1848, %v2574, 0
        %2719 = vmatpush.bf16.msra.mxu0 0
        %2720 = vmatpush.bf16.msra.mxu0 0
        %2721 = vmatpush.bf16.msra.mxu0 0
        %2722 = vmatpush.bf16.msra.mxu0 0
        %2723 = vmatpush.bf16.msra.mxu0 0
        %2724 = vmatpush.bf16.msra.mxu0 0
        %2725 = vmatpush.bf16.msra.mxu0 0
        %2726 = vmatpush.bf16.msra.mxu0 %v2717
        %2727 = vmatmul.bf16.gmra.mxu0 %v2714
        %v2728 = vpop.f32.mrf.mxu0
        %v2729 = vadd.f32 0.0, %v2728
        %v2730 = vpop.f32.mrf.mxu0
        %2731 = vdwg.mxu0
        %v2733 = vsel %vm1712, %v2710, 0
        %v2736 = vsel %vm1848, %v2575, 0
        %2738 = vmatpush.bf16.msra.mxu0 0
        %2739 = vmatpush.bf16.msra.mxu0 0
        %2740 = vmatpush.bf16.msra.mxu0 0
        %2741 = vmatpush.bf16.msra.mxu0 0
        %2742 = vmatpush.bf16.msra.mxu0 0
        %2743 = vmatpush.bf16.msra.mxu0 0
        %2744 = vmatpush.bf16.msra.mxu0 0
        %2745 = vmatpush.bf16.msra.mxu0 %v2736
        %2746 = vmatmul.bf16.gmra.mxu0 %v2733
        %v2747 = vpop.f32.mrf.mxu0
        %v2748 = vadd.f32 0.0, %v2747
        %v2749 = vpop.f32.mrf.mxu0
        %2750 = vdwg.mxu0
        %v2752 = vsel %vm1712, %v2711, 0
        %v2755 = vsel %vm1848, %v2576, 0
        %2757 = vmatpush.bf16.msra.mxu0 0
        %2758 = vmatpush.bf16.msra.mxu0 0
        %2759 = vmatpush.bf16.msra.mxu0 0
        %2760 = vmatpush.bf16.msra.mxu0 0
        %2761 = vmatpush.bf16.msra.mxu0 0
        %2762 = vmatpush.bf16.msra.mxu0 0
        %2763 = vmatpush.bf16.msra.mxu0 0
        %2764 = vmatpush.bf16.msra.mxu0 %v2755
        %2765 = vmatmul.bf16.gmra.mxu0 %v2752
        %v2766 = vpop.f32.mrf.mxu0
        %v2767 = vadd.f32 0.0, %v2766
        %v2768 = vpop.f32.mrf.mxu0
        %2769 = vdwg.mxu0
        %v2771 = vsel %vm1712, %v2712, 0
        %v2774 = vsel %vm1848, %v2577, 0
        %2776 = vmatpush.bf16.msra.mxu0 0
        %2777 = vmatpush.bf16.msra.mxu0 0
        %2778 = vmatpush.bf16.msra.mxu0 0
        %2779 = vmatpush.bf16.msra.mxu0 0
        %2780 = vmatpush.bf16.msra.mxu0 0
        %2781 = vmatpush.bf16.msra.mxu0 0
        %2782 = vmatpush.bf16.msra.mxu0 0
        %2783 = vmatpush.bf16.msra.mxu0 %v2774
        %2784 = vmatmul.bf16.gmra.mxu0 %v2771
        %v2785 = vpop.f32.mrf.mxu0
        %v2786 = vadd.f32 0.0, %v2785
        %v2787 = vpop.f32.mrf.mxu0
        %2788 = vdwg.mxu0
        %v2789 = vrot.slane %v2767, 4
        %v2790 = vsel %vm1344, %v2789, %v2729
        %v2791 = vrot.slane %v2729, 4
        %v2792 = vsel %vm1344, %v2767, %v2791
        %v2794 = vunpack.c.l.s4 1983009808
        %v2795 = vunpack.c.0.s8 %v2794
        %v2796 = vperm.slane %v2790, %v2795
        %v2798 = vunpack.c.l.s4 1983009808
        %v2799 = vunpack.c.0.s8 %v2798
        %v2800 = vperm.slane %v2792, %v2799
        %v2801 = vrot.slane %v2786, 4
        %v2802 = vsel %vm1344, %v2801, %v2748
        %v2803 = vrot.slane %v2748, 4
        %v2804 = vsel %vm1344, %v2786, %v2803
        %v2806 = vunpack.c.l.s4 1983009808
        %v2807 = vunpack.c.0.s8 %v2806
        %v2808 = vperm.slane %v2802, %v2807
        %v2810 = vunpack.c.l.s4 1983009808
        %v2811 = vunpack.c.0.s8 %v2810
        %v2812 = vperm.slane %v2804, %v2811
        %v2813 = vrot.slane %v2808, 4
        %v2814 = vsel %vm1344, %v2813, %v2796
        %v2815 = vrot.slane %v2796, 4
        %v2816 = vsel %vm1344, %v2808, %v2815
        %v2818 = vunpack.c.l.s4 1934713408
        %v2819 = vunpack.c.0.s8 %v2818
        %v2820 = vperm.slane %v2814, %v2819
        %v2822 = vunpack.c.l.s4 1934713408
        %v2823 = vunpack.c.0.s8 %v2822
        %v2824 = vperm.slane %v2816, %v2823
        %v2825 = vrot.slane %v2812, 4
        %v2826 = vsel %vm1344, %v2825, %v2800
        %v2827 = vrot.slane %v2800, 4
        %v2828 = vsel %vm1344, %v2812, %v2827
        %v2830 = vunpack.c.l.s4 1934713408
        %v2831 = vunpack.c.0.s8 %v2830
        %v2832 = vperm.slane %v2826, %v2831
        %v2834 = vunpack.c.l.s4 1934713408
        %v2835 = vunpack.c.0.s8 %v2834
        %v2836 = vperm.slane %v2828, %v2835
        %v2837 = vrot.slane %v2820, 4
        %v2838 = vsel %vm1344, 0.0, %v2837
        %v2839 = vrot.slane %v2824, 4
        %v2840 = vsel %vm1344, 0.0, %v2839
        %v2841 = vrot.slane %v2832, 4
        %v2842 = vsel %vm1344, 0.0, %v2841
        %v2843 = vrot.slane %v2836, 4
        %v2844 = vsel %vm1344, 0.0, %v2843
        %v2845 = vsel %vm1344, %v2839, %v2820
        %v2847 = vunpack.c.l.s4 1983009808
        %v2848 = vunpack.c.0.s8 %v2847
        %v2849 = vperm.slane %v2845, %v2848
        %v2850 = vrot.slane %v2840, 4
        %v2851 = vsel %vm1344, %v2850, %v2838
        %v2853 = vunpack.c.l.s4 1983009808
        %v2854 = vunpack.c.0.s8 %v2853
        %v2855 = vperm.slane %v2851, %v2854
        %v2856 = vsel %vm1344, %v2843, %v2832
        %v2858 = vunpack.c.l.s4 1983009808
        %v2859 = vunpack.c.0.s8 %v2858
        %v2860 = vperm.slane %v2856, %v2859
        %v2861 = vrot.slane %v2844, 4
        %v2862 = vsel %vm1344, %v2861, %v2842
        %v2864 = vunpack.c.l.s4 1983009808
        %v2865 = vunpack.c.0.s8 %v2864
        %v2866 = vperm.slane %v2862, %v2865
        %v2867 = vrot.slane %v2855, 4
        %v2868 = vsel %vm1344, %v2867, %v2849
        %v2869 = vrot.slane %v2849, 4
        %v2870 = vsel %vm1344, %v2855, %v2869
        %v2872 = vunpack.c.l.s4 1934713408
        %v2873 = vunpack.c.0.s8 %v2872
        %v2874 = vperm.slane %v2868, %v2873
        %v2876 = vunpack.c.l.s4 1934713408
        %v2877 = vunpack.c.0.s8 %v2876
        %v2878 = vperm.slane %v2870, %v2877
        %v2879 = vrot.slane %v2866, 4
        %v2880 = vsel %vm1344, %v2879, %v2860
        %v2881 = vrot.slane %v2860, 4
        %v2882 = vsel %vm1344, %v2866, %v2881
        %v2884 = vunpack.c.l.s4 1934713408
        %v2885 = vunpack.c.0.s8 %v2884
        %v2886 = vperm.slane %v2880, %v2885
        %v2888 = vunpack.c.l.s4 1934713408
        %v2889 = vunpack.c.0.s8 %v2888
        %v2890 = vperm.slane %v2882, %v2889
        %v2891 = vrot.slane %v2886, 4
        %v2892 = vsel %vm1344, %v2891, %v2874
        %v2893 = vrot.slane %v2874, 4
        %v2894 = vsel %vm1344, %v2886, %v2893
        %v2895 = vrot.slane %v2890, 4
        %v2896 = vsel %vm1344, %v2895, %v2878
        %v2897 = vrot.slane %v2878, 4
        %v2898 = vsel %vm1344, %v2890, %v2897
        %2900 = vrot.lane.b32.xlu0 %v2894, 8
        %v2901 = vpop.permute.xlu0 %2900
        %2904 = vrot.lane.b32.xlu0 %v2896, 16
        %v2905 = vpop.permute.xlu0 %2904
        %2908 = vrot.lane.b32.xlu0 %v2898, 24
        %v2909 = vpop.permute.xlu0 %2908
        %v2911 = vsel %vm1712, %v2892, %v2901
        %v2912 = vsel %vm2045, %v2911, %v2905
        %v2913 = vsel %vm2047, %v2912, %v2909
        %v2914 = vpack.c.bf16 %v2913, %v2913
        %v2916 = vperm.slane %v2199, 0
        %v2922 = vunpack.c.l.b16 %v2195
        %v2923 = vunpack.c.l.b16 %v2196
        %v2924 = vunpack.c.l.b16 %v2197
        %v2925 = vunpack.c.l.b16 %v2198
        %v2926 = vpack.c.b16 %v2923, %v2922
        %v2927 = vpack.c.b16 %v2925, %v2924
        %v2931 = vsel %vm1274, %v2914, 0
        %2933 = vmatpush.bf16.msra.mxu0 0
        %2934 = vmatpush.bf16.msra.mxu0 0
        %2935 = vmatpush.bf16.msra.mxu0 0
        %2936 = vmatpush.bf16.msra.mxu0 0
        %2937 = vmatpush.bf16.msra.mxu0 0
        %2938 = vmatpush.bf16.msra.mxu0 0
        %2939 = vmatpush.bf16.msra.mxu0 %v2927
        %2940 = vmatpush.bf16.msra.mxu0 %v2926
        %2941 = vmatmul.bf16.gmra.mxu0 %v2931
        %v2942 = vpop.f32.mrf.mxu0
        %v2943 = vadd.f32 %v2916, %v2942
        %v2944 = vpop.f32.mrf.mxu0
        %2945 = vdwg.mxu0
        %v2946 = vadd.f32 %v2120, %v2943
        %v2947 = vld [vmem:[%s47] sm:$0x1]
        %v2948 = vld [vmem:[%s49] sm:$0x1]
        %v2949 = vsel %vm1274, %v2946, 0.0
        %2950 = vadd.xlane.f32.xlu0 %v2949
        %v2951 = vpop.xlane.xlu0 %2950
        %v2952 = vmul.f32 %v2951, %v2093
        %v2953 = vsub.f32 %v2946, %v2952
        %v2954 = vmul.f32 %v2953, %v2953
        %v2955 = vsel %vm1274, %v2954, 0.0
        %2956 = vadd.xlane.f32.xlu0 %v2955
        %v2957 = vpop.xlane.xlu0 %2956
        %v2958 = vmul.f32 %v2957, %v2093
        %v2959 = vadd.f32 %v2958, 1e-05
        %v2960 = vrsqrt.pop %v2959
        %v2961 = vmul.f32 %v2960, %v2959
        %v2962 = vmul.f32 %v2961, %v2960
        %v2963 = vmul.f32 0.5, %v2962
        %v2964 = vsub.f32 1.5, %v2963
        %v2965 = vmul.f32 %v2960, %v2964
        %vm2966 = vweird.f32 %v2959
        %vm2967 = vweird.f32 %v2960
        %vm2968 = vmor %vm2966, %vm2967
        %v2969 = vsel %vm2968, %v2960, %v2965
        %v2970 = vmul.f32 %v2953, %v2969
        %v2972 = vperm.slane %v2947, 0
        %v2974 = vmul.f32 %v2970, %v2972
        %v2976 = vperm.slane %v2948, 0
        %v2978 = vadd.f32 %v2974, %v2976
        %v2979 = vpack.c.bf16 %v2978, %v2978
        %v2980 = vld [vmem:[#allocation23] sm:$0xf]
        %v2981 = vld [vmem:[#allocation23 + $0x4] sm:$0xf]
        %v2982 = vld [vmem:[#allocation23 + $0x8] sm:$0xf]
        %v2983 = vld [vmem:[#allocation23 + $0xc] sm:$0xf]
        %v2984 = vld [vmem:[#allocation25] sm:$0x1]
        %v2986 = vperm.slane %v2984, 0
        %v2992 = vunpack.c.l.b16 %v2980
        %v2993 = vunpack.c.l.b16 %v2981
        %v2994 = vunpack.c.l.b16 %v2982
        %v2995 = vunpack.c.l.b16 %v2983
        %v2996 = vpack.c.b16 %v2993, %v2992
        %v2997 = vpack.c.b16 %v2995, %v2994
        %v3001 = vsel %vm1274, %v2979, 0
        %3003 = vmatpush.bf16.msra.mxu0 0
        %3004 = vmatpush.bf16.msra.mxu0 0
        %3005 = vmatpush.bf16.msra.mxu0 0
        %3006 = vmatpush.bf16.msra.mxu0 0
        %3007 = vmatpush.bf16.msra.mxu0 0
        %3008 = vmatpush.bf16.msra.mxu0 0
        %3009 = vmatpush.bf16.msra.mxu0 %v2997
        %3010 = vmatpush.bf16.msra.mxu0 %v2996
        %3011 = vmatmul.bf16.gmra.mxu0 %v3001
        %v3012 = vpop.f32.mrf.mxu0
        %v3013 = vadd.f32 %v2986, %v3012
        %v3014 = vpop.f32.mrf.mxu0
        %3015 = vdwg.mxu0
        %v3016 = vmax.f32 %v3013, 0.0
        %v3017 = vpack.c.bf16 %v3016, %v3016
        %v3018 = vld [vmem:[%s39] sm:$0xf]
        %v3019 = vld [vmem:[%s39 + $0x4] sm:$0xf]
        %v3020 = vld [vmem:[%s39 + $0x8] sm:$0xf]
        %v3021 = vld [vmem:[%s39 + $0xc] sm:$0xf]
        %v3022 = vld [vmem:[%s39 + $0x10] sm:$0xf]
        %v3023 = vld [vmem:[%s39 + $0x14] sm:$0xf]
        %v3024 = vld [vmem:[%s39 + $0x18] sm:$0xf]
        %v3025 = vld [vmem:[%s39 + $0x1c] sm:$0xf]
        %v3026 = vld [vmem:[%s41] sm:$0x1]
        %v3028 = vperm.slane %v3026, 0
        %v3038 = vunpack.c.l.b16 %v3018
        %v3039 = vunpack.c.l.b16 %v3019
        %v3040 = vunpack.c.l.b16 %v3020
        %v3041 = vunpack.c.l.b16 %v3021
        %v3042 = vunpack.c.l.b16 %v3022
        %v3043 = vunpack.c.l.b16 %v3023
        %v3044 = vunpack.c.l.b16 %v3024
        %v3045 = vunpack.c.l.b16 %v3025
        %v3046 = vpack.c.b16 %v3039, %v3038
        %v3047 = vpack.c.b16 %v3041, %v3040
        %v3048 = vpack.c.b16 %v3043, %v3042
        %v3049 = vpack.c.b16 %v3045, %v3044
        %vm3054 = vcmask 523264
        %v3056 = vsel %vm3054, %v3017, 0
        %3058 = vmatpush.bf16.msra.mxu0 0
        %3059 = vmatpush.bf16.msra.mxu0 0
        %3060 = vmatpush.bf16.msra.mxu0 0
        %3061 = vmatpush.bf16.msra.mxu0 0
        %3062 = vmatpush.bf16.msra.mxu0 %v3049
        %3063 = vmatpush.bf16.msra.mxu0 %v3048
        %3064 = vmatpush.bf16.msra.mxu0 %v3047
        %3065 = vmatpush.bf16.msra.mxu0 %v3046
        %3066 = vmatmul.bf16.gmra.mxu0 %v3056
        %v3067 = vpop.f32.mrf.mxu0
        %v3068 = vadd.f32 %v3028, %v3067
        %v3069 = vpop.f32.mrf.mxu0
        %3070 = vdwg.mxu0
        %v3071 = vadd.f32 %v2978, %v3068
        %v3072 = vld [vmem:[%s51] sm:$0x1]
        %v3073 = vld [vmem:[#allocation26] sm:$0x1]
        %v3074 = vsel %vm1274, %v3071, 0.0
        %3075 = vadd.xlane.f32.xlu0 %v3074
        %v3076 = vpop.xlane.xlu0 %3075
        %v3077 = vmul.f32 %v3076, %v2093
        %v3078 = vsub.f32 %v3071, %v3077
        %v3079 = vmul.f32 %v3078, %v3078
        %v3080 = vsel %vm1274, %v3079, 0.0
        %3081 = vadd.xlane.f32.xlu0 %v3080
        %v3082 = vpop.xlane.xlu0 %3081
        %v3083 = vmul.f32 %v3082, %v2093
        %v3084 = vadd.f32 %v3083, 1e-05
        %v3085 = vrsqrt.pop %v3084
        %v3086 = vmul.f32 %v3085, %v3084
        %v3087 = vmul.f32 %v3086, %v3085
        %v3088 = vmul.f32 0.5, %v3087
        %v3089 = vsub.f32 1.5, %v3088
        %v3090 = vmul.f32 %v3085, %v3089
        %vm3091 = vweird.f32 %v3084
        %vm3092 = vweird.f32 %v3085
        %vm3093 = vmor %vm3091, %vm3092
        %v3094 = vsel %vm3093, %v3085, %v3090
        %v3095 = vmul.f32 %v3078, %v3094
        %v3097 = vperm.slane %v3072, 0
        %v3099 = vmul.f32 %v3095, %v3097
        %v3101 = vperm.slane %v3073, 0
        %v3103 = vadd.f32 %v3099, %v3101
        %3104 = vst.msk [vmem:[%s1214] sm:$0xff] %vm1274, %v3103
        %3105 = vst.msk [vmem:[%s1221] sm:$0xff] %vm1712, %v1840
        %3106 = vst.msk [vmem:[%s1228] sm:$0xff] %vm1712, %v2708
        %s3107 = sand.u32 %s702, 1
        %s3108 = scalar_lea.sflag [#allocation4], %s3107
        %s3109 = sand.u32 %s702, 1
        %s3110 = smul.addr %s3109, 8
        %s3111 = scalar_lea.vmem [#allocation28], %s3110
        %s3112 = sand.u32 %s86, 1
        %s3113 = scalar_lea.sflag [#allocation30], %s3112
        %s3114 = sand.u32 %s730, 1
        %s3115 = smul.addr %s3114, 8
        %s3116 = scalar_lea.vmem [#allocation29], %s3115
        %s3117 = sand.u32 %s86, 1
        %s3118 = scalar_lea.sflag [#allocation30], %s3117
        %s3119 = sand.u32 %s758, 1
        %s3120 = smul.addr %s3119, 8
        %s3121 = scalar_lea.vmem [#allocation31], %s3120
        // Predicated region
        $region193: #{tpu_custom_call.1} parent=127 // pred_check
          %p3122 = pneg %p712
        $region194: #{tpu_custom_call.1} parent=127 // pred_check_branch
          %3124 = sbr.rel (%p3122) target = $region196
        $region195: #{tpu_custom_call.1} parent=127 // pred_region
          %3126 = vsyncadd %s3108, 0
          %s3127 = sadd.s32 %s91, %s90
          %s3128 = smul.addr %s3127, 8
          %s3129 = scalar_lea.hbm %s55, %s3128
          %s3131 = sshll.u32 %s3111, 4
          %s3132 = int_to_ptr.vmem [resolvable:$true] %s3131
          %s3133 = sshll.u32 %s3129, 4
          %s3134 = int_to_ptr.hbm [resolvable:$true] %s3133
          %3136 = dma.vmem_to_hbm [thread:$0]  %s3132, 128, %s3134, %s3108
        $region196: #{tpu_custom_call.1} parent=127 // pred_fallthru
          _
        // Predicated region
        $region197: #{tpu_custom_call.1} parent=127 // pred_check
          %p3137 = pneg %p740
        $region198: #{tpu_custom_call.1} parent=127 // pred_check_branch
          %3139 = sbr.rel (%p3137) target = $region200
        $region199: #{tpu_custom_call.1} parent=127 // pred_region
          %3141 = vsyncadd %s3113, 0
          %s3142 = sadd.s32 %s91, %s90
          %s3143 = smul.addr %s3142, 8
          %s3144 = scalar_lea.hbm %s57, %s3143
          %s3146 = sshll.u32 %s3116, 4
          %s3147 = int_to_ptr.vmem [resolvable:$true] %s3146
          %s3148 = sshll.u32 %s3144, 4
          %s3149 = int_to_ptr.hbm [resolvable:$true] %s3148
          %3151 = dma.vmem_to_hbm [thread:$0]  %s3147, 128, %s3149, %s3113
        $region200: #{tpu_custom_call.1} parent=127 // pred_fallthru
          _
        // Predicated region
        $region201: #{tpu_custom_call.1} parent=127 // pred_check
          %p3152 = pneg %p768
        $region202: #{tpu_custom_call.1} parent=127 // pred_check_branch
          %3154 = sbr.rel (%p3152) target = $region204
        $region203: #{tpu_custom_call.1} parent=127 // pred_region
          %3156 = vsyncadd %s3118, 0
          %s3157 = sadd.s32 %s91, %s90
          %s3158 = smul.addr %s3157, 8
          %s3159 = scalar_lea.hbm %s59, %s3158
          %s3161 = sshll.u32 %s3121, 4
          %s3162 = int_to_ptr.vmem [resolvable:$true] %s3161
          %s3163 = sshll.u32 %s3159, 4
          %s3164 = int_to_ptr.hbm [resolvable:$true] %s3163
          %3166 = dma.vmem_to_hbm [thread:$0]  %s3162, 128, %s3164, %s3118
        $region204: #{tpu_custom_call.1} parent=127 // pred_fallthru
          _
      $region128: #{tpu_custom_call.1} parent=5 // pred_fallthru
        _
      %p3167 = scmp.le.s32.totalorder 2, %s81
      // Predicated region
      $region205: #{tpu_custom_call.1} parent=5 // pred_check
        %p3168 = pneg %p3167
      $region206: #{tpu_custom_call.1} parent=5 // pred_check_branch
        %3170 = sbr.rel (%p3168) target = $region208
      $region207: #{tpu_custom_call.1} parent=5 // pred_region
        %s3171 = ssub.s32 %s81, 2
        // Predicated region
        $region209: #{tpu_custom_call.1} parent=207 // pred_check
          %p3172 = pneg %p718
        $region210: #{tpu_custom_call.1} parent=207 // pred_check_branch
          %3174 = sbr.rel (%p3172) target = $region212
        $region211: #{tpu_custom_call.1} parent=207 // pred_region
          %s3175 = sand.u32 %s703, 1
          %s3176 = scalar_lea.sflag [#allocation4], %s3175
          %s3177 = sand.u32 %s703, 1
          %s3178 = smul.addr %s3177, 8
          %s3179 = scalar_lea.vmem [#allocation28], %s3178
          %3181 = dma.done %s3176, 128
        $region212: #{tpu_custom_call.1} parent=207 // pred_fallthru
          _
        // Predicated region
        $region213: #{tpu_custom_call.1} parent=207 // pred_check
          %p3182 = pneg %p746
        $region214: #{tpu_custom_call.1} parent=207 // pred_check_branch
          %3184 = sbr.rel (%p3182) target = $region216
        $region215: #{tpu_custom_call.1} parent=207 // pred_region
          %s3185 = sand.u32 %s87, 1
          %s3186 = scalar_lea.sflag [#allocation30], %s3185
          %s3187 = sand.u32 %s731, 1
          %s3188 = smul.addr %s3187, 8
          %s3189 = scalar_lea.vmem [#allocation29], %s3188
          %3191 = dma.done %s3186, 128
        $region216: #{tpu_custom_call.1} parent=207 // pred_fallthru
          _
        // Predicated region
        $region217: #{tpu_custom_call.1} parent=207 // pred_check
          %p3192 = pneg %p774
        $region218: #{tpu_custom_call.1} parent=207 // pred_check_branch
          %3194 = sbr.rel (%p3192) target = $region220
        $region219: #{tpu_custom_call.1} parent=207 // pred_region
          %s3195 = sand.u32 %s87, 1
          %s3196 = scalar_lea.sflag [#allocation30], %s3195
          %s3197 = sand.u32 %s759, 1
          %s3198 = smul.addr %s3197, 8
          %s3199 = scalar_lea.vmem [#allocation31], %s3198
          %3201 = dma.done %s3196, 128
        $region220: #{tpu_custom_call.1} parent=207 // pred_fallthru
          _
      $region208: #{tpu_custom_call.1} parent=5 // pred_fallthru
        _
    $region6: #{tpu_custom_call.1} parent=1 // loop_footer
      %s85 = sadd.s32 1, %s81
    $region7: #{tpu_custom_call.1} parent=1 // loop_footer_branch
      %80 = sbr.rel target = $region3
    $region8: #{tpu_custom_call.1} parent=1 // loop_exit
      _
    %3202 = vsyncpa [#allocation3], 1
    %s3203 = scalar_lea.sflag [#allocation3], 1
    %3204 = vsyncpa %s3203, 1
    %3205 = vsyncpa [#allocation6], 1
    %3206 = vsyncpa [#allocation9], 1
    %3207 = vsyncpa [#allocation12], 1
    %3208 = vsyncpa [#allocation15], 1
    %3209 = vsyncpa [#allocation18], 1
    %3210 = vsyncpa [#allocation21], 1
    %3211 = vsyncpa [#allocation24], 1
    %3212 = vsyncpa [#allocation27], 1
    %3213 = vsyncpa [#allocation4], 1
    %s3214 = scalar_lea.sflag [#allocation4], 1
    %3215 = vsyncpa %s3214, 1
    %3216 = vsyncpa [#allocation30], 1
    %s3217 = scalar_lea.sflag [#allocation30], 1
    %3218 = vsyncpa %s3217, 1

// kernel: tpu_custom_call.1
$region0: #{tpu_custom_call.1}
  #allocation0 [shape = 'u32[]', space=smem, size = 0x4, offset = 0x4, fixed_abs, tag = 'smem constant byte address 0x4 - core index']
  #allocation1 [shape = 'u32[72,128]{1,0:T(1,128)}', space=vmem, size = 0x9000, scoped, tag = 'internal scratch']
  %s0 = inlined_call_operand.smem [shape: u32[30], index: -1, kind: input, shape index: {}]
  %s1 = sld [smem:[%s0]]
  %s2 = scalar_lea.smem %s0, 1
  %s3 = sld [smem:[%s2]]
  %s4 = scalar_lea.smem %s0, 2
  %s5 = sld [smem:[%s4]]
  %s6 = scalar_lea.smem %s0, 3
  %s7 = sld [smem:[%s6]]
  %s8 = scalar_lea.smem %s0, 4
  %s9 = sld [smem:[%s8]]
  %s10 = scalar_lea.smem %s0, 5
  %s11 = sld [smem:[%s10]]
  %s12 = scalar_lea.smem %s0, 6
  %s13 = sld [smem:[%s12]]
  %s14 = scalar_lea.smem %s0, 7
  %s15 = sld [smem:[%s14]]
  %s16 = scalar_lea.smem %s0, 8
  %s17 = sld [smem:[%s16]]
  %s18 = scalar_lea.smem %s0, 9
  %s19 = sld [smem:[%s18]]
  %s20 = scalar_lea.smem %s0, 10
  %s21 = sld [smem:[%s20]]
  %s22 = scalar_lea.smem %s0, 11
  %s23 = sld [smem:[%s22]]
  %s24 = scalar_lea.smem %s0, 12
  %s25 = sld [smem:[%s24]]
  %s26 = scalar_lea.smem %s0, 13
  %s27 = sld [smem:[%s26]]
  %s28 = scalar_lea.smem %s0, 14
  %s29 = sld [smem:[%s28]]
  %s30 = scalar_lea.smem %s0, 15
  %s31 = sld [smem:[%s30]]
  %s32 = scalar_lea.smem %s0, 16
  %s33 = sld [smem:[%s32]]
  %s34 = scalar_lea.smem %s0, 17
  %s35 = sld [smem:[%s34]]
  %s36 = scalar_lea.smem %s0, 18
  %s37 = sld [smem:[%s36]]
  %s38 = scalar_lea.smem %s0, 19
  %s39 = sld [smem:[%s38]]
  %s40 = scalar_lea.smem %s0, 20
  %s41 = sld [smem:[%s40]]
  %s42 = scalar_lea.smem %s0, 21
  %s43 = sld [smem:[%s42]]
  %s44 = scalar_lea.smem %s0, 22
  %s45 = sld [smem:[%s44]]
  %s46 = scalar_lea.smem %s0, 23
  %s47 = sld [smem:[%s46]]
  %s48 = scalar_lea.smem %s0, 24
  %s49 = sld [smem:[%s48]]
  %s50 = scalar_lea.smem %s0, 25
  %s51 = sld [smem:[%s50]]
  %s52 = scalar_lea.smem %s0, 26
  %s53 = sld [smem:[%s52]]
  %s54 = scalar_lea.smem %s0, 27
  %s55 = sld [smem:[%s54]]
  %s56 = scalar_lea.smem %s0, 28
  %s57 = sld [smem:[%s56]]
  %s58 = scalar_lea.smem %s0, 29
  %s59 = sld [smem:[%s58]]
  %60 = xla_tuple %s55, %s57, %s59
  %s61 = sld [smem:[#allocation0]]
  $region221: #{tpu_custom_call.1} parent=0
    _
  %s63 = ssub.s32 1, %s61
  %s64 = scalar_select 0, %s63, %s61
  $region1: #{tpu_custom_call.1} parent=0
    #allocation2 [shape = 'u8[4096]{0}', space=vmem, size = 0x1000, scoped, tag = 'input window, operand 3, single buffered']
    #allocation3 [shape = 's32[2]{0}', space=sflag, size = 0x8, scoped, tag = 'scoped memory for tpu_custom_call.1']
    #allocation4 [shape = 's32[2]{0}', space=sflag, size = 0x8, scoped, tag = 'scoped memory for tpu_custom_call.1']
    #allocation5 [shape = 'u8[8192]{0}', space=vmem, size = 0x2000, scoped, tag = 'input window, operand 5, single buffered']
    #allocation6 [shape = 's32[1]{0}', space=sflag, size = 0x4, scoped, tag = 'scoped memory for tpu_custom_call.1']
    #allocation7 [shape = 'u8[512]{0}', space=vmem, size = 0x400, scoped, tag = 'input window, operand 6, single buffered']
    #allocation8 [shape = 'u8[8192]{0}', space=vmem, size = 0x2000, scoped, tag = 'input window, operand 7, single buffered']
    #allocation9 [shape = 's32[1]{0}', space=sflag, size = 0x4, scoped, tag = 'scoped memory for tpu_custom_call.1']
    #allocation10 [shape = 'u8[512]{0}', space=vmem, size = 0x400, scoped, tag = 'input window, operand 8, single buffered']
    #allocation11 [shape = 'u8[8192]{0}', space=vmem, size = 0x2000, scoped, tag = 'input window, operand 9, single buffered']
    #allocation12 [shape = 's32[1]{0}', space=sflag, size = 0x4, scoped, tag = 'scoped memory for tpu_custom_call.1']
    #allocation13 [shape = 'u8[512]{0}', space=vmem, size = 0x400, scoped, tag = 'input window, operand 10, single buffered']
    #allocation14 [shape = 'u8[8192]{0}', space=vmem, size = 0x2000, scoped, tag = 'input window, operand 11, single buffered']
    #allocation15 [shape = 's32[1]{0}', space=sflag, size = 0x4, scoped, tag = 'scoped memory for tpu_custom_call.1']
    #allocation16 [shape = 'u8[512]{0}', space=vmem, size = 0x400, scoped, tag = 'input window, operand 12, single buffered']
    #allocation17 [shape = 'u8[8192]{0}', space=vmem, size = 0x2000, scoped, tag = 'input window, operand 13, single buffered']
    #allocation18 [shape = 's32[1]{0}', space=sflag, size = 0x4, scoped, tag = 'scoped memory for tpu_custom_call.1']
    #allocation19 [shape = 'u8[512]{0}', space=vmem, size = 0x400, scoped, tag = 'input window, operand 14, single buffered']
    #allocation20 [shape = 'u8[8192]{0}', space=vmem, size = 0x2000, scoped, tag = 'input window, operand 15, single buffered']
    #allocation21 [shape = 's32[1]{0}', space=sflag, size = 0x4, scoped, tag = 'scoped memory for tpu_custom_call.1']
    #allocation22 [shape = 'u8[512]{0}', space=vmem, size = 0x400, scoped, tag = 'input window, operand 16, single buffered']
    #allocation23 [shape = 'u8[8192]{0}', space=vmem, size = 0x2000, scoped, tag = 'input window, operand 17, single buffered']
    #allocation24 [shape = 's32[1]{0}', space=sflag, size = 0x4, scoped, tag = 'scoped memory for tpu_custom_call.1']
    #allocation25 [shape = 'u8[512]{0}', space=vmem, size = 0x400, scoped, tag = 'input window, operand 18, single buffered']
    #allocation26 [shape = 'u8[512]{0}', space=vmem, size = 0x400, scoped, tag = 'input window, operand 26, single buffered']
    #allocation27 [shape = 's32[1]{0}', space=sflag, size = 0x4, scoped, tag = 'scoped memory for tpu_custom_call.1']
    #allocation28 [shape = 'u8[8192]{0}', space=vmem, size = 0x2000, scoped, tag = 'output window, operand 0']
    #allocation29 [shape = 'u8[8192]{0}', space=vmem, size = 0x2000, scoped, tag = 'output window, operand 1']
    #allocation30 [shape = 's32[2]{0}', space=sflag, size = 0x8, scoped, tag = 'scoped memory for tpu_custom_call.1']
    #allocation31 [shape = 'u8[8192]{0}', space=vmem, size = 0x2000, scoped, tag = 'output window, operand 2']
    %65 = vsyncpa [#allocation3], 0
    %66 = vsyncpa [#allocation6], 0
    %67 = vsyncpa [#allocation9], 0
    %68 = vsyncpa [#allocation12], 0
    %69 = vsyncpa [#allocation15], 0
    %70 = vsyncpa [#allocation18], 0
    %71 = vsyncpa [#allocation21], 0
    %72 = vsyncpa [#allocation24], 0
    %73 = vsyncpa [#allocation27], 0
    %74 = vsyncpa [#allocation4], 0
    %s75 = scalar_lea.sflag [#allocation4], 1
    %76 = vsyncpa %s75, 0
    %77 = vsyncpa [#allocation30], 0
    %s78 = scalar_lea.sflag [#allocation30], 1
    %79 = vsyncpa %s78, 0
    loop: start=0, step=1, limit=4
    $region2: #{tpu_custom_call.1} parent=1 // loop_pre_header
      _
    $region3: #{tpu_custom_call.1} parent=1 // loop_header
      %s81 = sphi 0, %s85
      %p82 = scmp.ge.s32.totalorder %s81, 4
      %s88 = sphi 0, %s100
      %s89 = sphi 0, %s96
      %s90 = sphi 0, %s88
      %s91 = sphi 0, %s89
      %s92 = sphi 0, %s90
      %s93 = sphi 0, %s91
      %s105 = sphi 0, %s107
      %s108 = sphi 0, %s105
      %s109 = sphi 0, %s108
      %s125 = sphi 0, %s109
      %s131 = sphi 0, %s133
      %s134 = sphi 0, %s131
      %s135 = sphi 0, %s134
      %s151 = sphi 0, %s135
      %s157 = sphi 0, %s159
      %s160 = sphi 0, %s157
      %s161 = sphi 0, %s160
      %s177 = sphi 0, %s161
      %s183 = sphi 0, %s185
      %s186 = sphi 0, %s183
      %s187 = sphi 0, %s186
      %s203 = sphi 0, %s187
      %s209 = sphi 0, %s211
      %s212 = sphi 0, %s209
      %s213 = sphi 0, %s212
      %s229 = sphi 0, %s213
      %s233 = sphi 0, %s233
      %s235 = sphi 0, %s233
      %s236 = sphi 0, %s235
      %s250 = sphi 0, %s236
      %s254 = sphi 0, %s254
      %s256 = sphi 0, %s254
      %s257 = sphi 0, %s256
      %s271 = sphi 0, %s257
      %s275 = sphi 0, %s275
      %s277 = sphi 0, %s275
      %s278 = sphi 0, %s277
      %s292 = sphi 0, %s278
      %s296 = sphi 0, %s296
      %s298 = sphi 0, %s296
      %s299 = sphi 0, %s298
      %s313 = sphi 0, %s299
      %s317 = sphi 0, %s317
      %s319 = sphi 0, %s317
      %s320 = sphi 0, %s319
      %s334 = sphi 0, %s320
      %s338 = sphi 0, %s338
      %s340 = sphi 0, %s338
      %s341 = sphi 0, %s340
      %s355 = sphi 0, %s341
      %s359 = sphi 0, %s359
      %s361 = sphi 0, %s359
      %s362 = sphi 0, %s361
      %s376 = sphi 0, %s362
      %s380 = sphi 0, %s380
      %s382 = sphi 0, %s380
      %s383 = sphi 0, %s382
      %s397 = sphi 0, %s383
      %s401 = sphi 0, %s401
      %s403 = sphi 0, %s401
      %s404 = sphi 0, %s403
      %s418 = sphi 0, %s404
      %s422 = sphi 0, %s422
      %s424 = sphi 0, %s422
      %s425 = sphi 0, %s424
      %s439 = sphi 0, %s425
      %s443 = sphi 0, %s443
      %s445 = sphi 0, %s443
      %s446 = sphi 0, %s445
      %s460 = sphi 0, %s446
      %s464 = sphi 0, %s464
      %s466 = sphi 0, %s464
      %s467 = sphi 0, %s466
      %s481 = sphi 0, %s467
      %s485 = sphi 0, %s485
      %s487 = sphi 0, %s485
      %s488 = sphi 0, %s487
      %s502 = sphi 0, %s488
      %s506 = sphi 0, %s506
      %s508 = sphi 0, %s506
      %s509 = sphi 0, %s508
      %s523 = sphi 0, %s509
      %s527 = sphi 0, %s527
      %s529 = sphi 0, %s527
      %s530 = sphi 0, %s529
      %s544 = sphi 0, %s530
      %s548 = sphi 0, %s548
      %s550 = sphi 0, %s548
      %s551 = sphi 0, %s550
      %s565 = sphi 0, %s551
      %s569 = sphi 0, %s569
      %s571 = sphi 0, %s569
      %s572 = sphi 0, %s571
      %s586 = sphi 0, %s572
      %s590 = sphi 0, %s590
      %s592 = sphi 0, %s590
      %s593 = sphi 0, %s592
      %s607 = sphi 0, %s593
      %s611 = sphi 0, %s611
      %s613 = sphi 0, %s611
      %s614 = sphi 0, %s613
      %s628 = sphi 0, %s614
      %s632 = sphi 0, %s632
      %s634 = sphi 0, %s632
      %s635 = sphi 0, %s634
      %s649 = sphi 0, %s635
      %s653 = sphi 0, %s653
      %s655 = sphi 0, %s653
      %s656 = sphi 0, %s655
      %s670 = sphi 0, %s656
      %s674 = sphi 0, %s674
      %s676 = sphi 0, %s674
      %s677 = sphi 0, %s676
      %s691 = sphi 0, %s677
      %s699 = sphi 0, %s701
      %s702 = sphi 0, %s699
      %s703 = sphi 0, %s702
      %s719 = sphi 0, %s703
      %s727 = sphi 0, %s729
      %s730 = sphi 0, %s727
      %s731 = sphi 0, %s730
      %s747 = sphi 0, %s731
      %s755 = sphi 0, %s757
      %s758 = sphi 0, %s755
      %s759 = sphi 0, %s758
      %s775 = sphi 0, %s759
    $region4: #{tpu_custom_call.1} parent=1 // loop_header_branch
      %84 = sbr.rel (%p82) target = $region8
    $region5: #{tpu_custom_call.1} parent=1 // loop_body
      %s86 = ssub.s32 %s81, 1
      %s87 = ssub.s32 %s81, 2
      %s94 = sadd.s32 1, %s89
      %p95 = scmp.ge.s32.totalorder %s94, 1
      %s96 = scalar_select %p95, 0, %s94
      %s97 = sadd.s32 1, %s88
      %s98 = scalar_select %p95, %s97, %s88
      %p99 = scmp.ge.s32.totalorder %s98, 2
      %s100 = scalar_select %p99, 0, %s98
      %s101 = ssub.s32 %s88, %s100
      %s102 = ssub.s32 %s89, %s96
      %s103 = sor.u32 %s101, %s102
      %p104 = scmp.eq.s32.totalorder %s103, 0
      %s106 = sadd.s32 %s105, 1
      %s107 = scalar_select %p104, %s105, %s106
      %p110 = pneg %p104
      %p111 = scmp.eq.s32.totalorder %s81, 1
      %p112 = por %p110, %p111
      %p113 = scmp.ne.s32.totalorder %s105, %s108
      %p114 = scmp.eq.s32.totalorder %s81, 0
      %p115 = por %p113, %p114
      %p116 = scmp.ne.s32.totalorder %s105, %s108
      %p117 = scmp.eq.s32.totalorder %s86, 1
      %p118 = por %p116, %p117
      %p119 = scmp.ne.s32.totalorder %s108, %s109
      %p120 = scmp.eq.s32.totalorder %s86, 0
      %p121 = por %p119, %p120
      %p122 = scmp.ne.s32.totalorder %s108, %s109
      %p123 = scmp.eq.s32.totalorder %s87, 1
      %p124 = por %p122, %p123
      %p126 = scmp.ne.s32.totalorder %s109, %s125
      %p127 = scmp.eq.s32.totalorder %s87, 0
      %p128 = por %p126, %p127
      %s129 = ssub.s32 %s88, %s100
      %p130 = scmp.eq.s32.totalorder %s129, 0
      %s132 = sadd.s32 %s131, 1
      %s133 = scalar_select %p130, %s131, %s132
      %p136 = pneg %p130
      %p137 = scmp.eq.s32.totalorder %s81, 1
      %p138 = por %p136, %p137
      %p139 = scmp.ne.s32.totalorder %s131, %s134
      %p140 = scmp.eq.s32.totalorder %s81, 0
      %p141 = por %p139, %p140
      %p142 = scmp.ne.s32.totalorder %s131, %s134
      %p143 = scmp.eq.s32.totalorder %s86, 1
      %p144 = por %p142, %p143
      %p145 = scmp.ne.s32.totalorder %s134, %s135
      %p146 = scmp.eq.s32.totalorder %s86, 0
      %p147 = por %p145, %p146
      %p148 = scmp.ne.s32.totalorder %s134, %s135
      %p149 = scmp.eq.s32.totalorder %s87, 1
      %p150 = por %p148, %p149
      %p152 = scmp.ne.s32.totalorder %s135, %s151
      %p153 = scmp.eq.s32.totalorder %s87, 0
      %p154 = por %p152, %p153
      %s155 = ssub.s32 %s88, %s100
      %p156 = scmp.eq.s32.totalorder %s155, 0
      %s158 = sadd.s32 %s157, 1
      %s159 = scalar_select %p156, %s157, %s158
      %p162 = pneg %p156
      %p163 = scmp.eq.s32.totalorder %s81, 1
      %p164 = por %p162, %p163
      %p165 = scmp.ne.s32.totalorder %s157, %s160
      %p166 = scmp.eq.s32.totalorder %s81, 0
      %p167 = por %p165, %p166
      %p168 = scmp.ne.s32.totalorder %s157, %s160
      %p169 = scmp.eq.s32.totalorder %s86, 1
      %p170 = por %p168, %p169
      %p171 = scmp.ne.s32.totalorder %s160, %s161
      %p172 = scmp.eq.s32.totalorder %s86, 0
      %p173 = por %p171, %p172
      %p174 = scmp.ne.s32.totalorder %s160, %s161
      %p175 = scmp.eq.s32.totalorder %s87, 1
      %p176 = por %p174, %p175
      %p178 = scmp.ne.s32.totalorder %s161, %s177
      %p179 = scmp.eq.s32.totalorder %s87, 0
      %p180 = por %p178, %p179
      %s181 = ssub.s32 %s89, %s96
      %p182 = scmp.eq.s32.totalorder %s181, 0
      %s184 = sadd.s32 %s183, 1
      %s185 = scalar_select %p182, %s183, %s184
      %p188 = pneg %p182
      %p189 = scmp.eq.s32.totalorder %s81, 1
      %p190 = por %p188, %p189
      %p191 = scmp.ne.s32.totalorder %s183, %s186
      %p192 = scmp.eq.s32.totalorder %s81, 0
      %p193 = por %p191, %p192
      %p194 = scmp.ne.s32.totalorder %s183, %s186
      %p195 = scmp.eq.s32.totalorder %s86, 1
      %p196 = por %p194, %p195
      %p197 = scmp.ne.s32.totalorder %s186, %s187
      %p198 = scmp.eq.s32.totalorder %s86, 0
      %p199 = por %p197, %p198
      %p200 = scmp.ne.s32.totalorder %s186, %s187
      %p201 = scmp.eq.s32.totalorder %s87, 1
      %p202 = por %p200, %p201
      %p204 = scmp.ne.s32.totalorder %s187, %s203
      %p205 = scmp.eq.s32.totalorder %s87, 0
      %p206 = por %p204, %p205
      %s207 = ssub.s32 %s88, %s100
      %p208 = scmp.eq.s32.totalorder %s207, 0
      %s210 = sadd.s32 %s209, 1
      %s211 = scalar_select %p208, %s209, %s210
      %p214 = pneg %p208
      %p215 = scmp.eq.s32.totalorder %s81, 1
      %p216 = por %p214, %p215
      %p217 = scmp.ne.s32.totalorder %s209, %s212
      %p218 = scmp.eq.s32.totalorder %s81, 0
      %p219 = por %p217, %p218
      %p220 = scmp.ne.s32.totalorder %s209, %s212
      %p221 = scmp.eq.s32.totalorder %s86, 1
      %p222 = por %p220, %p221
      %p223 = scmp.ne.s32.totalorder %s212, %s213
      %p224 = scmp.eq.s32.totalorder %s86, 0
      %p225 = por %p223, %p224
      %p226 = scmp.ne.s32.totalorder %s212, %s213
      %p227 = scmp.eq.s32.totalorder %s87, 1
      %p228 = por %p226, %p227
      %p230 = scmp.ne.s32.totalorder %s213, %s229
      %p231 = scmp.eq.s32.totalorder %s87, 0
      %p232 = por %p230, %p231
      %s234 = sadd.s32 %s233, 1
      %p237 = scmp.eq.s32.totalorder %s81, 1
      %p238 = scmp.ne.s32.totalorder %s233, %s235
      %p239 = scmp.eq.s32.totalorder %s81, 0
      %p240 = por %p238, %p239
      %p241 = scmp.ne.s32.totalorder %s233, %s235
      %p242 = scmp.eq.s32.totalorder %s86, 1
      %p243 = por %p241, %p242
      %p244 = scmp.ne.s32.totalorder %s235, %s236
      %p245 = scmp.eq.s32.totalorder %s86, 0
      %p246 = por %p244, %p245
      %p247 = scmp.ne.s32.totalorder %s235, %s236
      %p248 = scmp.eq.s32.totalorder %s87, 1
      %p249 = por %p247, %p248
      %p251 = scmp.ne.s32.totalorder %s236, %s250
      %p252 = scmp.eq.s32.totalorder %s87, 0
      %p253 = por %p251, %p252
      %s255 = sadd.s32 %s254, 1
      %p258 = scmp.eq.s32.totalorder %s81, 1
      %p259 = scmp.ne.s32.totalorder %s254, %s256
      %p260 = scmp.eq.s32.totalorder %s81, 0
      %p261 = por %p259, %p260
      %p262 = scmp.ne.s32.totalorder %s254, %s256
      %p263 = scmp.eq.s32.totalorder %s86, 1
      %p264 = por %p262, %p263
      %p265 = scmp.ne.s32.totalorder %s256, %s257
      %p266 = scmp.eq.s32.totalorder %s86, 0
      %p267 = por %p265, %p266
      %p268 = scmp.ne.s32.totalorder %s256, %s257
      %p269 = scmp.eq.s32.totalorder %s87, 1
      %p270 = por %p268, %p269
      %p272 = scmp.ne.s32.totalorder %s257, %s271
      %p273 = scmp.eq.s32.totalorder %s87, 0
      %p274 = por %p272, %p273
      %s276 = sadd.s32 %s275, 1
      %p279 = scmp.eq.s32.totalorder %s81, 1
      %p280 = scmp.ne.s32.totalorder %s275, %s277
      %p281 = scmp.eq.s32.totalorder %s81, 0
      %p282 = por %p280, %p281
      %p283 = scmp.ne.s32.totalorder %s275, %s277
      %p284 = scmp.eq.s32.totalorder %s86, 1
      %p285 = por %p283, %p284
      %p286 = scmp.ne.s32.totalorder %s277, %s278
      %p287 = scmp.eq.s32.totalorder %s86, 0
      %p288 = por %p286, %p287
      %p289 = scmp.ne.s32.totalorder %s277, %s278
      %p290 = scmp.eq.s32.totalorder %s87, 1
      %p291 = por %p289, %p290
      %p293 = scmp.ne.s32.totalorder %s278, %s292
      %p294 = scmp.eq.s32.totalorder %s87, 0
      %p295 = por %p293, %p294
      %s297 = sadd.s32 %s296, 1
      %p300 = scmp.eq.s32.totalorder %s81, 1
      %p301 = scmp.ne.s32.totalorder %s296, %s298
      %p302 = scmp.eq.s32.totalorder %s81, 0
      %p303 = por %p301, %p302
      %p304 = scmp.ne.s32.totalorder %s296, %s298
      %p305 = scmp.eq.s32.totalorder %s86, 1
      %p306 = por %p304, %p305
      %p307 = scmp.ne.s32.totalorder %s298, %s299
      %p308 = scmp.eq.s32.totalorder %s86, 0
      %p309 = por %p307, %p308
      %p310 = scmp.ne.s32.totalorder %s298, %s299
      %p311 = scmp.eq.s32.totalorder %s87, 1
      %p312 = por %p310, %p311
      %p314 = scmp.ne.s32.totalorder %s299, %s313
      %p315 = scmp.eq.s32.totalorder %s87, 0
      %p316 = por %p314, %p315
      %s318 = sadd.s32 %s317, 1
      %p321 = scmp.eq.s32.totalorder %s81, 1
      %p322 = scmp.ne.s32.totalorder %s317, %s319
      %p323 = scmp.eq.s32.totalorder %s81, 0
      %p324 = por %p322, %p323
      %p325 = scmp.ne.s32.totalorder %s317, %s319
      %p326 = scmp.eq.s32.totalorder %s86, 1
      %p327 = por %p325, %p326
      %p328 = scmp.ne.s32.totalorder %s319, %s320
      %p329 = scmp.eq.s32.totalorder %s86, 0
      %p330 = por %p328, %p329
      %p331 = scmp.ne.s32.totalorder %s319, %s320
      %p332 = scmp.eq.s32.totalorder %s87, 1
      %p333 = por %p331, %p332
      %p335 = scmp.ne.s32.totalorder %s320, %s334
      %p336 = scmp.eq.s32.totalorder %s87, 0
      %p337 = por %p335, %p336
      %s339 = sadd.s32 %s338, 1
      %p342 = scmp.eq.s32.totalorder %s81, 1
      %p343 = scmp.ne.s32.totalorder %s338, %s340
      %p344 = scmp.eq.s32.totalorder %s81, 0
      %p345 = por %p343, %p344
      %p346 = scmp.ne.s32.totalorder %s338, %s340
      %p347 = scmp.eq.s32.totalorder %s86, 1
      %p348 = por %p346, %p347
      %p349 = scmp.ne.s32.totalorder %s340, %s341
      %p350 = scmp.eq.s32.totalorder %s86, 0
      %p351 = por %p349, %p350
      %p352 = scmp.ne.s32.totalorder %s340, %s341
      %p353 = scmp.eq.s32.totalorder %s87, 1
      %p354 = por %p352, %p353
      %p356 = scmp.ne.s32.totalorder %s341, %s355
      %p357 = scmp.eq.s32.totalorder %s87, 0
      %p358 = por %p356, %p357
      %s360 = sadd.s32 %s359, 1
      %p363 = scmp.eq.s32.totalorder %s81, 1
      %p364 = scmp.ne.s32.totalorder %s359, %s361
      %p365 = scmp.eq.s32.totalorder %s81, 0
      %p366 = por %p364, %p365
      %p367 = scmp.ne.s32.totalorder %s359, %s361
      %p368 = scmp.eq.s32.totalorder %s86, 1
      %p369 = por %p367, %p368
      %p370 = scmp.ne.s32.totalorder %s361, %s362
      %p371 = scmp.eq.s32.totalorder %s86, 0
      %p372 = por %p370, %p371
      %p373 = scmp.ne.s32.totalorder %s361, %s362
      %p374 = scmp.eq.s32.totalorder %s87, 1
      %p375 = por %p373, %p374
      %p377 = scmp.ne.s32.totalorder %s362, %s376
      %p378 = scmp.eq.s32.totalorder %s87, 0
      %p379 = por %p377, %p378
      %s381 = sadd.s32 %s380, 1
      %p384 = scmp.eq.s32.totalorder %s81, 1
      %p385 = scmp.ne.s32.totalorder %s380, %s382
      %p386 = scmp.eq.s32.totalorder %s81, 0
      %p387 = por %p385, %p386
      %p388 = scmp.ne.s32.totalorder %s380, %s382
      %p389 = scmp.eq.s32.totalorder %s86, 1
      %p390 = por %p388, %p389
      %p391 = scmp.ne.s32.totalorder %s382, %s383
      %p392 = scmp.eq.s32.totalorder %s86, 0
      %p393 = por %p391, %p392
      %p394 = scmp.ne.s32.totalorder %s382, %s383
      %p395 = scmp.eq.s32.totalorder %s87, 1
      %p396 = por %p394, %p395
      %p398 = scmp.ne.s32.totalorder %s383, %s397
      %p399 = scmp.eq.s32.totalorder %s87, 0
      %p400 = por %p398, %p399
      %s402 = sadd.s32 %s401, 1
      %p405 = scmp.eq.s32.totalorder %s81, 1
      %p406 = scmp.ne.s32.totalorder %s401, %s403
      %p407 = scmp.eq.s32.totalorder %s81, 0
      %p408 = por %p406, %p407
      %p409 = scmp.ne.s32.totalorder %s401, %s403
      %p410 = scmp.eq.s32.totalorder %s86, 1
      %p411 = por %p409, %p410
      %p412 = scmp.ne.s32.totalorder %s403, %s404
      %p413 = scmp.eq.s32.totalorder %s86, 0
      %p414 = por %p412, %p413
      %p415 = scmp.ne.s32.totalorder %s403, %s404
      %p416 = scmp.eq.s32.totalorder %s87, 1
      %p417 = por %p415, %p416
      %p419 = scmp.ne.s32.totalorder %s404, %s418
      %p420 = scmp.eq.s32.totalorder %s87, 0
      %p421 = por %p419, %p420
      %s423 = sadd.s32 %s422, 1
      %p426 = scmp.eq.s32.totalorder %s81, 1
      %p427 = scmp.ne.s32.totalorder %s422, %s424
      %p428 = scmp.eq.s32.totalorder %s81, 0
      %p429 = por %p427, %p428
      %p430 = scmp.ne.s32.totalorder %s422, %s424
      %p431 = scmp.eq.s32.totalorder %s86, 1
      %p432 = por %p430, %p431
      %p433 = scmp.ne.s32.totalorder %s424, %s425
      %p434 = scmp.eq.s32.totalorder %s86, 0
      %p435 = por %p433, %p434
      %p436 = scmp.ne.s32.totalorder %s424, %s425
      %p437 = scmp.eq.s32.totalorder %s87, 1
      %p438 = por %p436, %p437
      %p440 = scmp.ne.s32.totalorder %s425, %s439
      %p441 = scmp.eq.s32.totalorder %s87, 0
      %p442 = por %p440, %p441
      %s444 = sadd.s32 %s443, 1
      %p447 = scmp.eq.s32.totalorder %s81, 1
      %p448 = scmp.ne.s32.totalorder %s443, %s445
      %p449 = scmp.eq.s32.totalorder %s81, 0
      %p450 = por %p448, %p449
      %p451 = scmp.ne.s32.totalorder %s443, %s445
      %p452 = scmp.eq.s32.totalorder %s86, 1
      %p453 = por %p451, %p452
      %p454 = scmp.ne.s32.totalorder %s445, %s446
      %p455 = scmp.eq.s32.totalorder %s86, 0
      %p456 = por %p454, %p455
      %p457 = scmp.ne.s32.totalorder %s445, %s446
      %p458 = scmp.eq.s32.totalorder %s87, 1
      %p459 = por %p457, %p458
      %p461 = scmp.ne.s32.totalorder %s446, %s460
      %p462 = scmp.eq.s32.totalorder %s87, 0
      %p463 = por %p461, %p462
      %s465 = sadd.s32 %s464, 1
      %p468 = scmp.eq.s32.totalorder %s81, 1
      %p469 = scmp.ne.s32.totalorder %s464, %s466
      %p470 = scmp.eq.s32.totalorder %s81, 0
      %p471 = por %p469, %p470
      %p472 = scmp.ne.s32.totalorder %s464, %s466
      %p473 = scmp.eq.s32.totalorder %s86, 1
      %p474 = por %p472, %p473
      %p475 = scmp.ne.s32.totalorder %s466, %s467
      %p476 = scmp.eq.s32.totalorder %s86, 0
      %p477 = por %p475, %p476
      %p478 = scmp.ne.s32.totalorder %s466, %s467
      %p479 = scmp.eq.s32.totalorder %s87, 1
      %p480 = por %p478, %p479
      %p482 = scmp.ne.s32.totalorder %s467, %s481
      %p483 = scmp.eq.s32.totalorder %s87, 0
      %p484 = por %p482, %p483
      %s486 = sadd.s32 %s485, 1
      %p489 = scmp.eq.s32.totalorder %s81, 1
      %p490 = scmp.ne.s32.totalorder %s485, %s487
      %p491 = scmp.eq.s32.totalorder %s81, 0
      %p492 = por %p490, %p491
      %p493 = scmp.ne.s32.totalorder %s485, %s487
      %p494 = scmp.eq.s32.totalorder %s86, 1
      %p495 = por %p493, %p494
      %p496 = scmp.ne.s32.totalorder %s487, %s488
      %p497 = scmp.eq.s32.totalorder %s86, 0
      %p498 = por %p496, %p497
      %p499 = scmp.ne.s32.totalorder %s487, %s488
      %p500 = scmp.eq.s32.totalorder %s87, 1
      %p501 = por %p499, %p500
      %p503 = scmp.ne.s32.totalorder %s488, %s502
      %p504 = scmp.eq.s32.totalorder %s87, 0
      %p505 = por %p503, %p504
      %s507 = sadd.s32 %s506, 1
      %p510 = scmp.eq.s32.totalorder %s81, 1
      %p511 = scmp.ne.s32.totalorder %s506, %s508
      %p512 = scmp.eq.s32.totalorder %s81, 0
      %p513 = por %p511, %p512
      %p514 = scmp.ne.s32.totalorder %s506, %s508
      %p515 = scmp.eq.s32.totalorder %s86, 1
      %p516 = por %p514, %p515
      %p517 = scmp.ne.s32.totalorder %s508, %s509
      %p518 = scmp.eq.s32.totalorder %s86, 0
      %p519 = por %p517, %p518
      %p520 = scmp.ne.s32.totalorder %s508, %s509
      %p521 = scmp.eq.s32.totalorder %s87, 1
      %p522 = por %p520, %p521
      %p524 = scmp.ne.s32.totalorder %s509, %s523
      %p525 = scmp.eq.s32.totalorder %s87, 0
      %p526 = por %p524, %p525
      %s528 = sadd.s32 %s527, 1
      %p531 = scmp.eq.s32.totalorder %s81, 1
      %p532 = scmp.ne.s32.totalorder %s527, %s529
      %p533 = scmp.eq.s32.totalorder %s81, 0
      %p534 = por %p532, %p533
      %p535 = scmp.ne.s32.totalorder %s527, %s529
      %p536 = scmp.eq.s32.totalorder %s86, 1
      %p537 = por %p535, %p536
      %p538 = scmp.ne.s32.totalorder %s529, %s530
      %p539 = scmp.eq.s32.totalorder %s86, 0
      %p540 = por %p538, %p539
      %p541 = scmp.ne.s32.totalorder %s529, %s530
      %p542 = scmp.eq.s32.totalorder %s87, 1
      %p543 = por %p541, %p542
      %p545 = scmp.ne.s32.totalorder %s530, %s544
      %p546 = scmp.eq.s32.totalorder %s87, 0
      %p547 = por %p545, %p546
      %s549 = sadd.s32 %s548, 1
      %p552 = scmp.eq.s32.totalorder %s81, 1
      %p553 = scmp.ne.s32.totalorder %s548, %s550
      %p554 = scmp.eq.s32.totalorder %s81, 0
      %p555 = por %p553, %p554
      %p556 = scmp.ne.s32.totalorder %s548, %s550
      %p557 = scmp.eq.s32.totalorder %s86, 1
      %p558 = por %p556, %p557
      %p559 = scmp.ne.s32.totalorder %s550, %s551
      %p560 = scmp.eq.s32.totalorder %s86, 0
      %p561 = por %p559, %p560
      %p562 = scmp.ne.s32.totalorder %s550, %s551
      %p563 = scmp.eq.s32.totalorder %s87, 1
      %p564 = por %p562, %p563
      %p566 = scmp.ne.s32.totalorder %s551, %s565
      %p567 = scmp.eq.s32.totalorder %s87, 0
      %p568 = por %p566, %p567
      %s570 = sadd.s32 %s569, 1
      %p573 = scmp.eq.s32.totalorder %s81, 1
      %p574 = scmp.ne.s32.totalorder %s569, %s571
      %p575 = scmp.eq.s32.totalorder %s81, 0
      %p576 = por %p574, %p575
      %p577 = scmp.ne.s32.totalorder %s569, %s571
      %p578 = scmp.eq.s32.totalorder %s86, 1
      %p579 = por %p577, %p578
      %p580 = scmp.ne.s32.totalorder %s571, %s572
      %p581 = scmp.eq.s32.totalorder %s86, 0
      %p582 = por %p580, %p581
      %p583 = scmp.ne.s32.totalorder %s571, %s572
      %p584 = scmp.eq.s32.totalorder %s87, 1
      %p585 = por %p583, %p584
      %p587 = scmp.ne.s32.totalorder %s572, %s586
      %p588 = scmp.eq.s32.totalorder %s87, 0
      %p589 = por %p587, %p588
      %s591 = sadd.s32 %s590, 1
      %p594 = scmp.eq.s32.totalorder %s81, 1
      %p595 = scmp.ne.s32.totalorder %s590, %s592
      %p596 = scmp.eq.s32.totalorder %s81, 0
      %p597 = por %p595, %p596
      %p598 = scmp.ne.s32.totalorder %s590, %s592
      %p599 = scmp.eq.s32.totalorder %s86, 1
      %p600 = por %p598, %p599
      %p601 = scmp.ne.s32.totalorder %s592, %s593
      %p602 = scmp.eq.s32.totalorder %s86, 0
      %p603 = por %p601, %p602
      %p604 = scmp.ne.s32.totalorder %s592, %s593
      %p605 = scmp.eq.s32.totalorder %s87, 1
      %p606 = por %p604, %p605
      %p608 = scmp.ne.s32.totalorder %s593, %s607
      %p609 = scmp.eq.s32.totalorder %s87, 0
      %p610 = por %p608, %p609
      %s612 = sadd.s32 %s611, 1
      %p615 = scmp.eq.s32.totalorder %s81, 1
      %p616 = scmp.ne.s32.totalorder %s611, %s613
      %p617 = scmp.eq.s32.totalorder %s81, 0
      %p618 = por %p616, %p617
      %p619 = scmp.ne.s32.totalorder %s611, %s613
      %p620 = scmp.eq.s32.totalorder %s86, 1
      %p621 = por %p619, %p620
      %p622 = scmp.ne.s32.totalorder %s613, %s614
      %p623 = scmp.eq.s32.totalorder %s86, 0
      %p624 = por %p622, %p623
      %p625 = scmp.ne.s32.totalorder %s613, %s614
      %p626 = scmp.eq.s32.totalorder %s87, 1
      %p627 = por %p625, %p626
      %p629 = scmp.ne.s32.totalorder %s614, %s628
      %p630 = scmp.eq.s32.totalorder %s87, 0
      %p631 = por %p629, %p630
      %s633 = sadd.s32 %s632, 1
      %p636 = scmp.eq.s32.totalorder %s81, 1
      %p637 = scmp.ne.s32.totalorder %s632, %s634
      %p638 = scmp.eq.s32.totalorder %s81, 0
      %p639 = por %p637, %p638
      %p640 = scmp.ne.s32.totalorder %s632, %s634
      %p641 = scmp.eq.s32.totalorder %s86, 1
      %p642 = por %p640, %p641
      %p643 = scmp.ne.s32.totalorder %s634, %s635
      %p644 = scmp.eq.s32.totalorder %s86, 0
      %p645 = por %p643, %p644
      %p646 = scmp.ne.s32.totalorder %s634, %s635
      %p647 = scmp.eq.s32.totalorder %s87, 1
      %p648 = por %p646, %p647
      %p650 = scmp.ne.s32.totalorder %s635, %s649
      %p651 = scmp.eq.s32.totalorder %s87, 0
      %p652 = por %p650, %p651
      %s654 = sadd.s32 %s653, 1
      %p657 = scmp.eq.s32.totalorder %s81, 1
      %p658 = scmp.ne.s32.totalorder %s653, %s655
      %p659 = scmp.eq.s32.totalorder %s81, 0
      %p660 = por %p658, %p659
      %p661 = scmp.ne.s32.totalorder %s653, %s655
      %p662 = scmp.eq.s32.totalorder %s86, 1
      %p663 = por %p661, %p662
      %p664 = scmp.ne.s32.totalorder %s655, %s656
      %p665 = scmp.eq.s32.totalorder %s86, 0
      %p666 = por %p664, %p665
      %p667 = scmp.ne.s32.totalorder %s655, %s656
      %p668 = scmp.eq.s32.totalorder %s87, 1
      %p669 = por %p667, %p668
      %p671 = scmp.ne.s32.totalorder %s656, %s670
      %p672 = scmp.eq.s32.totalorder %s87, 0
      %p673 = por %p671, %p672
      %s675 = sadd.s32 %s674, 1
      %p678 = scmp.eq.s32.totalorder %s81, 1
      %p679 = scmp.ne.s32.totalorder %s674, %s676
      %p680 = scmp.eq.s32.totalorder %s81, 0
      %p681 = por %p679, %p680
      %p682 = scmp.ne.s32.totalorder %s674, %s676
      %p683 = scmp.eq.s32.totalorder %s86, 1
      %p684 = por %p682, %p683
      %p685 = scmp.ne.s32.totalorder %s676, %s677
      %p686 = scmp.eq.s32.totalorder %s86, 0
      %p687 = por %p685, %p686
      %p688 = scmp.ne.s32.totalorder %s676, %s677
      %p689 = scmp.eq.s32.totalorder %s87, 1
      %p690 = por %p688, %p689
      %p692 = scmp.ne.s32.totalorder %s677, %s691
      %p693 = scmp.eq.s32.totalorder %s87, 0
      %p694 = por %p692, %p693
      %s695 = ssub.s32 %s88, %s100
      %s696 = ssub.s32 %s89, %s96
      %s697 = sor.u32 %s695, %s696
      %p698 = scmp.eq.s32.totalorder %s697, 0
      %s700 = sadd.s32 %s699, 1
      %s701 = scalar_select %p698, %s699, %s700
      %p704 = pneg %p698
      %p705 = scmp.eq.s32.totalorder %s81, 1
      %p706 = por %p704, %p705
      %p707 = scmp.ne.s32.totalorder %s699, %s702
      %p708 = scmp.eq.s32.totalorder %s81, 0
      %p709 = por %p707, %p708
      %p710 = scmp.ne.s32.totalorder %s699, %s702
      %p711 = scmp.eq.s32.totalorder %s86, 1
      %p712 = por %p710, %p711
      %p713 = scmp.ne.s32.totalorder %s702, %s703
      %p714 = scmp.eq.s32.totalorder %s86, 0
      %p715 = por %p713, %p714
      %p716 = scmp.ne.s32.totalorder %s702, %s703
      %p717 = scmp.eq.s32.totalorder %s87, 1
      %p718 = por %p716, %p717
      %p720 = scmp.ne.s32.totalorder %s703, %s719
      %p721 = scmp.eq.s32.totalorder %s87, 0
      %p722 = por %p720, %p721
      %s723 = ssub.s32 %s88, %s100
      %s724 = ssub.s32 %s89, %s96
      %s725 = sor.u32 %s723, %s724
      %p726 = scmp.eq.s32.totalorder %s725, 0
      %s728 = sadd.s32 %s727, 1
      %s729 = scalar_select %p726, %s727, %s728
      %p732 = pneg %p726
      %p733 = scmp.eq.s32.totalorder %s81, 1
      %p734 = por %p732, %p733
      %p735 = scmp.ne.s32.totalorder %s727, %s730
      %p736 = scmp.eq.s32.totalorder %s81, 0
      %p737 = por %p735, %p736
      %p738 = scmp.ne.s32.totalorder %s727, %s730
      %p739 = scmp.eq.s32.totalorder %s86, 1
      %p740 = por %p738, %p739
      %p741 = scmp.ne.s32.totalorder %s730, %s731
      %p742 = scmp.eq.s32.totalorder %s86, 0
      %p743 = por %p741, %p742
      %p744 = scmp.ne.s32.totalorder %s730, %s731
      %p745 = scmp.eq.s32.totalorder %s87, 1
      %p746 = por %p744, %p745
      %p748 = scmp.ne.s32.totalorder %s731, %s747
      %p749 = scmp.eq.s32.totalorder %s87, 0
      %p750 = por %p748, %p749
      %s751 = ssub.s32 %s88, %s100
      %s752 = ssub.s32 %s89, %s96
      %s753 = sor.u32 %s751, %s752
      %p754 = scmp.eq.s32.totalorder %s753, 0
      %s756 = sadd.s32 %s755, 1
      %s757 = scalar_select %p754, %s755, %s756
      %p760 = pneg %p754
      %p761 = scmp.eq.s32.totalorder %s81, 1
      %p762 = por %p760, %p761
      %p763 = scmp.ne.s32.totalorder %s755, %s758
      %p764 = scmp.eq.s32.totalorder %s81, 0
      %p765 = por %p763, %p764
      %p766 = scmp.ne.s32.totalorder %s755, %s758
      %p767 = scmp.eq.s32.totalorder %s86, 1
      %p768 = por %p766, %p767
      %p769 = scmp.ne.s32.totalorder %s758, %s759
      %p770 = scmp.eq.s32.totalorder %s86, 0
      %p771 = por %p769, %p770
      %p772 = scmp.ne.s32.totalorder %s758, %s759
      %p773 = scmp.eq.s32.totalorder %s87, 1
      %p774 = por %p772, %p773
      %p776 = scmp.ne.s32.totalorder %s759, %s775
      %p777 = scmp.eq.s32.totalorder %s87, 0
      %p778 = por %p776, %p777
      %p779 = scmp.le.s32.totalorder 1, %s81
      %p780 = scmp.lt.s32.totalorder %s81, 3
      %p781 = pnand %p779, %p780
      %p782 = pneg %p781
      // Predicated region
      $region9: #{tpu_custom_call.1} parent=5 // pred_check
        _
      $region10: #{tpu_custom_call.1} parent=5 // pred_check_branch
        %784 = sbr.rel (%p781) target = $region12
      $region11: #{tpu_custom_call.1} parent=5 // pred_region
        %s785 = ssub.s32 %s81, 1
        // Predicated region
        $region13: #{tpu_custom_call.1} parent=11 // pred_check
          %p786 = pneg %p199
        $region14: #{tpu_custom_call.1} parent=11 // pred_check_branch
          %788 = sbr.rel (%p786) target = $region16
        $region15: #{tpu_custom_call.1} parent=11 // pred_region
          %790 = vsyncadd [#allocation3], 0
          %s791 = smul.addr %s91, 8
          %s792 = scalar_lea.hbm %s7, %s791
          %s794 = sshll.u32 %s792, 4
          %s795 = int_to_ptr.hbm [resolvable:$true] %s794
          %s796 = sshll.u32 [#allocation2], 4
          %s797 = int_to_ptr.vmem [resolvable:$true] %s796
          %799 = dma.hbm_to_vmem [thread:$0]  %s795, 128, %s797, [#allocation3]
        $region16: #{tpu_custom_call.1} parent=11 // pred_fallthru
          _
        // Predicated region
        $region17: #{tpu_custom_call.1} parent=11 // pred_check
          %p800 = pneg %p246
        $region18: #{tpu_custom_call.1} parent=11 // pred_check_branch
          %802 = sbr.rel (%p800) target = $region20
        $region19: #{tpu_custom_call.1} parent=11 // pred_region
          %804 = vsyncadd [#allocation6], 0
          %s805 = sshll.u32 %s11, 4
          %s806 = int_to_ptr.hbm [resolvable:$true] %s805
          %s807 = sshll.u32 [#allocation5], 4
          %s808 = int_to_ptr.vmem [resolvable:$true] %s807
          %813 = dma.hbm_to_vmem [thread:$0]  %s806, 256, %s808, [#allocation6], 64, 64, 4
        $region20: #{tpu_custom_call.1} parent=11 // pred_fallthru
          _
        // Predicated region
        $region21: #{tpu_custom_call.1} parent=11 // pred_check
          %p814 = pneg %p267
        $region22: #{tpu_custom_call.1} parent=11 // pred_check_branch
          %816 = sbr.rel (%p814) target = $region24
        $region23: #{tpu_custom_call.1} parent=11 // pred_region
          %818 = vsyncadd [#allocation6], 0
          %s820 = sshll.u32 %s13, 4
          %s821 = int_to_ptr.hbm [resolvable:$true] %s820
          %s822 = sshll.u32 [#allocation7], 4
          %s823 = int_to_ptr.vmem [resolvable:$true] %s822
          %825 = dma.hbm_to_vmem [thread:$0]  %s821, 16, %s823, [#allocation6]
        $region24: #{tpu_custom_call.1} parent=11 // pred_fallthru
          _
        // Predicated region
        $region25: #{tpu_custom_call.1} parent=11 // pred_check
          %p826 = pneg %p288
        $region26: #{tpu_custom_call.1} parent=11 // pred_check_branch
          %828 = sbr.rel (%p826) target = $region28
        $region27: #{tpu_custom_call.1} parent=11 // pred_region
          %830 = vsyncadd [#allocation9], 0
          %s831 = sshll.u32 %s15, 4
          %s832 = int_to_ptr.hbm [resolvable:$true] %s831
          %s833 = sshll.u32 [#allocation8], 4
          %s834 = int_to_ptr.vmem [resolvable:$true] %s833
          %839 = dma.hbm_to_vmem [thread:$0]  %s832, 256, %s834, [#allocation9], 64, 64, 4
        $region28: #{tpu_custom_call.1} parent=11 // pred_fallthru
          _
        // Predicated region
        $region29: #{tpu_custom_call.1} parent=11 // pred_check
          %p840 = pneg %p309
        $region30: #{tpu_custom_call.1} parent=11 // pred_check_branch
          %842 = sbr.rel (%p840) target = $region32
        $region31: #{tpu_custom_call.1} parent=11 // pred_region
          %844 = vsyncadd [#allocation9], 0
          %s846 = sshll.u32 %s17, 4
          %s847 = int_to_ptr.hbm [resolvable:$true] %s846
          %s848 = sshll.u32 [#allocation10], 4
          %s849 = int_to_ptr.vmem [resolvable:$true] %s848
          %851 = dma.hbm_to_vmem [thread:$0]  %s847, 16, %s849, [#allocation9]
        $region32: #{tpu_custom_call.1} parent=11 // pred_fallthru
          _
        // Predicated region
        $region33: #{tpu_custom_call.1} parent=11 // pred_check
          %p852 = pneg %p330
        $region34: #{tpu_custom_call.1} parent=11 // pred_check_branch
          %854 = sbr.rel (%p852) target = $region36
        $region35: #{tpu_custom_call.1} parent=11 // pred_region
          %856 = vsyncadd [#allocation12], 0
          %s857 = sshll.u32 %s19, 4
          %s858 = int_to_ptr.hbm [resolvable:$true] %s857
          %s859 = sshll.u32 [#allocation11], 4
          %s860 = int_to_ptr.vmem [resolvable:$true] %s859
          %865 = dma.hbm_to_vmem [thread:$0]  %s858, 256, %s860, [#allocation12], 64, 64, 4
        $region36: #{tpu_custom_call.1} parent=11 // pred_fallthru
          _
        // Predicated region
        $region37: #{tpu_custom_call.1} parent=11 // pred_check
          %p866 = pneg %p351
        $region38: #{tpu_custom_call.1} parent=11 // pred_check_branch
          %868 = sbr.rel (%p866) target = $region40
        $region39: #{tpu_custom_call.1} parent=11 // pred_region
          %870 = vsyncadd [#allocation12], 0
          %s872 = sshll.u32 %s21, 4
          %s873 = int_to_ptr.hbm [resolvable:$true] %s872
          %s874 = sshll.u32 [#allocation13], 4
          %s875 = int_to_ptr.vmem [resolvable:$true] %s874
          %877 = dma.hbm_to_vmem [thread:$0]  %s873, 16, %s875, [#allocation12]
        $region40: #{tpu_custom_call.1} parent=11 // pred_fallthru
          _
        // Predicated region
        $region41: #{tpu_custom_call.1} parent=11 // pred_check
          %p878 = pneg %p372
        $region42: #{tpu_custom_call.1} parent=11 // pred_check_branch
          %880 = sbr.rel (%p878) target = $region44
        $region43: #{tpu_custom_call.1} parent=11 // pred_region
          %882 = vsyncadd [#allocation15], 0
          %s883 = sshll.u32 %s23, 4
          %s884 = int_to_ptr.hbm [resolvable:$true] %s883
          %s885 = sshll.u32 [#allocation14], 4
          %s886 = int_to_ptr.vmem [resolvable:$true] %s885
          %891 = dma.hbm_to_vmem [thread:$0]  %s884, 256, %s886, [#allocation15], 64, 64, 4
        $region44: #{tpu_custom_call.1} parent=11 // pred_fallthru
          _
        // Predicated region
        $region45: #{tpu_custom_call.1} parent=11 // pred_check
          %p892 = pneg %p393
        $region46: #{tpu_custom_call.1} parent=11 // pred_check_branch
          %894 = sbr.rel (%p892) target = $region48
        $region47: #{tpu_custom_call.1} parent=11 // pred_region
          %896 = vsyncadd [#allocation15], 0
          %s898 = sshll.u32 %s25, 4
          %s899 = int_to_ptr.hbm [resolvable:$true] %s898
          %s900 = sshll.u32 [#allocation16], 4
          %s901 = int_to_ptr.vmem [resolvable:$true] %s900
          %903 = dma.hbm_to_vmem [thread:$0]  %s899, 16, %s901, [#allocation15]
        $region48: #{tpu_custom_call.1} parent=11 // pred_fallthru
          _
        // Predicated region
        $region49: #{tpu_custom_call.1} parent=11 // pred_check
          %p904 = pneg %p414
        $region50: #{tpu_custom_call.1} parent=11 // pred_check_branch
          %906 = sbr.rel (%p904) target = $region52
        $region51: #{tpu_custom_call.1} parent=11 // pred_region
          %908 = vsyncadd [#allocation18], 0
          %s909 = sshll.u32 %s27, 4
          %s910 = int_to_ptr.hbm [resolvable:$true] %s909
          %s911 = sshll.u32 [#allocation17], 4
          %s912 = int_to_ptr.vmem [resolvable:$true] %s911
          %917 = dma.hbm_to_vmem [thread:$0]  %s910, 256, %s912, [#allocation18], 64, 64, 4
        $region52: #{tpu_custom_call.1} parent=11 // pred_fallthru
          _
        // Predicated region
        $region53: #{tpu_custom_call.1} parent=11 // pred_check
          %p918 = pneg %p435
        $region54: #{tpu_custom_call.1} parent=11 // pred_check_branch
          %920 = sbr.rel (%p918) target = $region56
        $region55: #{tpu_custom_call.1} parent=11 // pred_region
          %922 = vsyncadd [#allocation18], 0
          %s924 = sshll.u32 %s29, 4
          %s925 = int_to_ptr.hbm [resolvable:$true] %s924
          %s926 = sshll.u32 [#allocation19], 4
          %s927 = int_to_ptr.vmem [resolvable:$true] %s926
          %929 = dma.hbm_to_vmem [thread:$0]  %s925, 16, %s927, [#allocation18]
        $region56: #{tpu_custom_call.1} parent=11 // pred_fallthru
          _
        // Predicated region
        $region57: #{tpu_custom_call.1} parent=11 // pred_check
          %p930 = pneg %p456
        $region58: #{tpu_custom_call.1} parent=11 // pred_check_branch
          %932 = sbr.rel (%p930) target = $region60
        $region59: #{tpu_custom_call.1} parent=11 // pred_region
          %934 = vsyncadd [#allocation21], 0
          %s935 = sshll.u32 %s31, 4
          %s936 = int_to_ptr.hbm [resolvable:$true] %s935
          %s937 = sshll.u32 [#allocation20], 4
          %s938 = int_to_ptr.vmem [resolvable:$true] %s937
          %943 = dma.hbm_to_vmem [thread:$0]  %s936, 256, %s938, [#allocation21], 64, 64, 4
        $region60: #{tpu_custom_call.1} parent=11 // pred_fallthru
          _
        // Predicated region
        $region61: #{tpu_custom_call.1} parent=11 // pred_check
          %p944 = pneg %p477
        $region62: #{tpu_custom_call.1} parent=11 // pred_check_branch
          %946 = sbr.rel (%p944) target = $region64
        $region63: #{tpu_custom_call.1} parent=11 // pred_region
          %948 = vsyncadd [#allocation21], 0
          %s950 = sshll.u32 %s33, 4
          %s951 = int_to_ptr.hbm [resolvable:$true] %s950
          %s952 = sshll.u32 [#allocation22], 4
          %s953 = int_to_ptr.vmem [resolvable:$true] %s952
          %955 = dma.hbm_to_vmem [thread:$0]  %s951, 16, %s953, [#allocation21]
        $region64: #{tpu_custom_call.1} parent=11 // pred_fallthru
          _
        // Predicated region
        $region65: #{tpu_custom_call.1} parent=11 // pred_check
          %p956 = pneg %p498
        $region66: #{tpu_custom_call.1} parent=11 // pred_check_branch
          %958 = sbr.rel (%p956) target = $region68
        $region67: #{tpu_custom_call.1} parent=11 // pred_region
          %960 = vsyncadd [#allocation24], 0
          %s961 = sshll.u32 %s35, 4
          %s962 = int_to_ptr.hbm [resolvable:$true] %s961
          %s963 = sshll.u32 [#allocation23], 4
          %s964 = int_to_ptr.vmem [resolvable:$true] %s963
          %969 = dma.hbm_to_vmem [thread:$0]  %s962, 256, %s964, [#allocation24], 64, 64, 4
        $region68: #{tpu_custom_call.1} parent=11 // pred_fallthru
          _
        // Predicated region
        $region69: #{tpu_custom_call.1} parent=11 // pred_check
          %p970 = pneg %p519
        $region70: #{tpu_custom_call.1} parent=11 // pred_check_branch
          %972 = sbr.rel (%p970) target = $region72
        $region71: #{tpu_custom_call.1} parent=11 // pred_region
          %974 = vsyncadd [#allocation24], 0
          %s976 = sshll.u32 %s37, 4
          %s977 = int_to_ptr.hbm [resolvable:$true] %s976
          %s978 = sshll.u32 [#allocation25], 4
          %s979 = int_to_ptr.vmem [resolvable:$true] %s978
          %981 = dma.hbm_to_vmem [thread:$0]  %s977, 16, %s979, [#allocation24]
        $region72: #{tpu_custom_call.1} parent=11 // pred_fallthru
          _
        // Predicated region
        $region73: #{tpu_custom_call.1} parent=11 // pred_check
          %p982 = pneg %p540
        $region74: #{tpu_custom_call.1} parent=11 // pred_check_branch
          %984 = sbr.rel (%p982) target = $region76
        $region75: #{tpu_custom_call.1} parent=11 // pred_region
          _
        $region76: #{tpu_custom_call.1} parent=11 // pred_fallthru
          _
        // Predicated region
        $region77: #{tpu_custom_call.1} parent=11 // pred_check
          %p985 = pneg %p561
        $region78: #{tpu_custom_call.1} parent=11 // pred_check_branch
          %987 = sbr.rel (%p985) target = $region80
        $region79: #{tpu_custom_call.1} parent=11 // pred_region
          _
        $region80: #{tpu_custom_call.1} parent=11 // pred_fallthru
          _
        // Predicated region
        $region81: #{tpu_custom_call.1} parent=11 // pred_check
          %p988 = pneg %p582
        $region82: #{tpu_custom_call.1} parent=11 // pred_check_branch
          %990 = sbr.rel (%p988) target = $region84
        $region83: #{tpu_custom_call.1} parent=11 // pred_region
          _
        $region84: #{tpu_custom_call.1} parent=11 // pred_fallthru
          _
        // Predicated region
        $region85: #{tpu_custom_call.1} parent=11 // pred_check
          %p991 = pneg %p603
        $region86: #{tpu_custom_call.1} parent=11 // pred_check_branch
          %993 = sbr.rel (%p991) target = $region88
        $region87: #{tpu_custom_call.1} parent=11 // pred_region
          _
        $region88: #{tpu_custom_call.1} parent=11 // pred_fallthru
          _
        // Predicated region
        $region89: #{tpu_custom_call.1} parent=11 // pred_check
          %p994 = pneg %p624
        $region90: #{tpu_custom_call.1} parent=11 // pred_check_branch
          %996 = sbr.rel (%p994) target = $region92
        $region91: #{tpu_custom_call.1} parent=11 // pred_region
          _
        $region92: #{tpu_custom_call.1} parent=11 // pred_fallthru
          _
        // Predicated region
        $region93: #{tpu_custom_call.1} parent=11 // pred_check
          %p997 = pneg %p645
        $region94: #{tpu_custom_call.1} parent=11 // pred_check_branch
          %999 = sbr.rel (%p997) target = $region96
        $region95: #{tpu_custom_call.1} parent=11 // pred_region
          _
        $region96: #{tpu_custom_call.1} parent=11 // pred_fallthru
          _
        // Predicated region
        $region97: #{tpu_custom_call.1} parent=11 // pred_check
          %p1000 = pneg %p666
        $region98: #{tpu_custom_call.1} parent=11 // pred_check_branch
          %1002 = sbr.rel (%p1000) target = $region100
        $region99: #{tpu_custom_call.1} parent=11 // pred_region
          _
        $region100: #{tpu_custom_call.1} parent=11 // pred_fallthru
          _
        // Predicated region
        $region101: #{tpu_custom_call.1} parent=11 // pred_check
          %p1003 = pneg %p687
        $region102: #{tpu_custom_call.1} parent=11 // pred_check_branch
          %1005 = sbr.rel (%p1003) target = $region104
        $region103: #{tpu_custom_call.1} parent=11 // pred_region
          %1007 = vsyncadd [#allocation27], 0
          %s1009 = sshll.u32 %s53, 4
          %s1010 = int_to_ptr.hbm [resolvable:$true] %s1009
          %s1011 = sshll.u32 [#allocation26], 4
          %s1012 = int_to_ptr.vmem [resolvable:$true] %s1011
          %1014 = dma.hbm_to_vmem [thread:$0]  %s1010, 16, %s1012, [#allocation27]
        $region104: #{tpu_custom_call.1} parent=11 // pred_fallthru
          _
      $region12: #{tpu_custom_call.1} parent=5 // pred_fallthru
        _
      %p1015 = scmp.lt.s32.totalorder %s81, 2
      // Predicated region
      $region105: #{tpu_custom_call.1} parent=5 // pred_check
        %p1016 = pneg %p1015
      $region106: #{tpu_custom_call.1} parent=5 // pred_check_branch
        %1018 = sbr.rel (%p1016) target = $region108
      $region107: #{tpu_custom_call.1} parent=5 // pred_region
        // Predicated region
        $region109: #{tpu_custom_call.1} parent=107 // pred_check
          %p1019 = pneg %p115
        $region110: #{tpu_custom_call.1} parent=107 // pred_check_branch
          %1021 = sbr.rel (%p1019) target = $region112
        $region111: #{tpu_custom_call.1} parent=107 // pred_region
          %p1022 = scmp.lt.s32.totalorder %s88, 1
          %s1023 = scalar_select %p1022, %s88, 1
          %p1024 = scmp.lt.s32.totalorder %s89, 0
          %s1025 = scalar_select %p1024, %s89, 0
          %s1026 = sadd.s32 %s1025, %s1023
          %s1027 = smul.addr %s1026, 8
          %s1028 = scalar_lea.vmem %s1, %s1027
        $region112: #{tpu_custom_call.1} parent=107 // pred_fallthru
          _
        // Predicated region
        $region113: #{tpu_custom_call.1} parent=107 // pred_check
          %p1029 = pneg %p141
        $region114: #{tpu_custom_call.1} parent=107 // pred_check_branch
          %1031 = sbr.rel (%p1029) target = $region116
        $region115: #{tpu_custom_call.1} parent=107 // pred_region
          %p1032 = scmp.lt.s32.totalorder %s88, 1
          %s1033 = scalar_select %p1032, %s88, 1
          %s1034 = smul.addr %s1033, 8
          %s1035 = scalar_lea.vmem %s3, %s1034
        $region116: #{tpu_custom_call.1} parent=107 // pred_fallthru
          _
        // Predicated region
        $region117: #{tpu_custom_call.1} parent=107 // pred_check
          %p1036 = pneg %p167
        $region118: #{tpu_custom_call.1} parent=107 // pred_check_branch
          %1038 = sbr.rel (%p1036) target = $region120
        $region119: #{tpu_custom_call.1} parent=107 // pred_region
          %p1039 = scmp.lt.s32.totalorder %s88, 1
          %s1040 = scalar_select %p1039, %s88, 1
          %s1041 = smul.addr %s1040, 8
          %s1042 = scalar_lea.vmem %s5, %s1041
        $region120: #{tpu_custom_call.1} parent=107 // pred_fallthru
          _
        // Predicated region
        $region121: #{tpu_custom_call.1} parent=107 // pred_check
          %p1043 = pneg %p219
        $region122: #{tpu_custom_call.1} parent=107 // pred_check_branch
          %1045 = sbr.rel (%p1043) target = $region124
        $region123: #{tpu_custom_call.1} parent=107 // pred_region
          %p1046 = scmp.lt.s32.totalorder %s88, 1
          %s1047 = scalar_select %p1046, %s88, 1
          %s1048 = scalar_lea.vmem %s9, %s1047
        $region124: #{tpu_custom_call.1} parent=107 // pred_fallthru
          _
      $region108: #{tpu_custom_call.1} parent=5 // pred_fallthru
        _
      %p1049 = scmp.le.s32.totalorder 1, %s81
      %p1050 = scmp.lt.s32.totalorder %s81, 3
      %p1051 = pnand %p1049, %p1050
      %p1052 = pneg %p1051
      // Predicated region
      $region125: #{tpu_custom_call.1} parent=5 // pred_check
        _
      $region126: #{tpu_custom_call.1} parent=5 // pred_check_branch
        %1054 = sbr.rel (%p1051) target = $region128
      $region127: #{tpu_custom_call.1} parent=5 // pred_region
        %s1055 = ssub.s32 %s81, 1
        // Predicated region
        $region129: #{tpu_custom_call.1} parent=127 // pred_check
          %p1056 = pneg %p199
        $region130: #{tpu_custom_call.1} parent=127 // pred_check_branch
          %1058 = sbr.rel (%p1056) target = $region132
        $region131: #{tpu_custom_call.1} parent=127 // pred_region
          %1060 = dma.done [#allocation3], 128
        $region132: #{tpu_custom_call.1} parent=127 // pred_fallthru
          _
        // Predicated region
        $region133: #{tpu_custom_call.1} parent=127 // pred_check
          %p1061 = pneg %p246
        $region134: #{tpu_custom_call.1} parent=127 // pred_check_branch
          %1063 = sbr.rel (%p1061) target = $region136
        $region135: #{tpu_custom_call.1} parent=127 // pred_region
          %1065 = dma.done [#allocation6], 256
        $region136: #{tpu_custom_call.1} parent=127 // pred_fallthru
          _
        // Predicated region
        $region137: #{tpu_custom_call.1} parent=127 // pred_check
          %p1066 = pneg %p267
        $region138: #{tpu_custom_call.1} parent=127 // pred_check_branch
          %1068 = sbr.rel (%p1066) target = $region140
        $region139: #{tpu_custom_call.1} parent=127 // pred_region
          %1070 = dma.done [#allocation6], 16
        $region140: #{tpu_custom_call.1} parent=127 // pred_fallthru
          _
        // Predicated region
        $region141: #{tpu_custom_call.1} parent=127 // pred_check
          %p1071 = pneg %p288
        $region142: #{tpu_custom_call.1} parent=127 // pred_check_branch
          %1073 = sbr.rel (%p1071) target = $region144
        $region143: #{tpu_custom_call.1} parent=127 // pred_region
          %1075 = dma.done [#allocation9], 256
        $region144: #{tpu_custom_call.1} parent=127 // pred_fallthru
          _
        // Predicated region
        $region145: #{tpu_custom_call.1} parent=127 // pred_check
          %p1076 = pneg %p309
        $region146: #{tpu_custom_call.1} parent=127 // pred_check_branch
          %1078 = sbr.rel (%p1076) target = $region148
        $region147: #{tpu_custom_call.1} parent=127 // pred_region
          %1080 = dma.done [#allocation9], 16
        $region148: #{tpu_custom_call.1} parent=127 // pred_fallthru
          _
        // Predicated region
        $region149: #{tpu_custom_call.1} parent=127 // pred_check
          %p1081 = pneg %p330
        $region150: #{tpu_custom_call.1} parent=127 // pred_check_branch
          %1083 = sbr.rel (%p1081) target = $region152
        $region151: #{tpu_custom_call.1} parent=127 // pred_region
          %1085 = dma.done [#allocation12], 256
        $region152: #{tpu_custom_call.1} parent=127 // pred_fallthru
          _
        // Predicated region
        $region153: #{tpu_custom_call.1} parent=127 // pred_check
          %p1086 = pneg %p351
        $region154: #{tpu_custom_call.1} parent=127 // pred_check_branch
          %1088 = sbr.rel (%p1086) target = $region156
        $region155: #{tpu_custom_call.1} parent=127 // pred_region
          %1090 = dma.done [#allocation12], 16
        $region156: #{tpu_custom_call.1} parent=127 // pred_fallthru
          _
        // Predicated region
        $region157: #{tpu_custom_call.1} parent=127 // pred_check
          %p1091 = pneg %p372
        $region158: #{tpu_custom_call.1} parent=127 // pred_check_branch
          %1093 = sbr.rel (%p1091) target = $region160
        $region159: #{tpu_custom_call.1} parent=127 // pred_region
          %1095 = dma.done [#allocation15], 256
        $region160: #{tpu_custom_call.1} parent=127 // pred_fallthru
          _
        // Predicated region
        $region161: #{tpu_custom_call.1} parent=127 // pred_check
          %p1096 = pneg %p393
        $region162: #{tpu_custom_call.1} parent=127 // pred_check_branch
          %1098 = sbr.rel (%p1096) target = $region164
        $region163: #{tpu_custom_call.1} parent=127 // pred_region
          %1100 = dma.done [#allocation15], 16
        $region164: #{tpu_custom_call.1} parent=127 // pred_fallthru
          _
        // Predicated region
        $region165: #{tpu_custom_call.1} parent=127 // pred_check
          %p1101 = pneg %p414
        $region166: #{tpu_custom_call.1} parent=127 // pred_check_branch
          %1103 = sbr.rel (%p1101) target = $region168
        $region167: #{tpu_custom_call.1} parent=127 // pred_region
          %1105 = dma.done [#allocation18], 256
        $region168: #{tpu_custom_call.1} parent=127 // pred_fallthru
          _
        // Predicated region
        $region169: #{tpu_custom_call.1} parent=127 // pred_check
          %p1106 = pneg %p435
        $region170: #{tpu_custom_call.1} parent=127 // pred_check_branch
          %1108 = sbr.rel (%p1106) target = $region172
        $region171: #{tpu_custom_call.1} parent=127 // pred_region
          %1110 = dma.done [#allocation18], 16
        $region172: #{tpu_custom_call.1} parent=127 // pred_fallthru
          _
        // Predicated region
        $region173: #{tpu_custom_call.1} parent=127 // pred_check
          %p1111 = pneg %p456
        $region174: #{tpu_custom_call.1} parent=127 // pred_check_branch
          %1113 = sbr.rel (%p1111) target = $region176
        $region175: #{tpu_custom_call.1} parent=127 // pred_region
          %1115 = dma.done [#allocation21], 256
        $region176: #{tpu_custom_call.1} parent=127 // pred_fallthru
          _
        // Predicated region
        $region177: #{tpu_custom_call.1} parent=127 // pred_check
          %p1116 = pneg %p477
        $region178: #{tpu_custom_call.1} parent=127 // pred_check_branch
          %1118 = sbr.rel (%p1116) target = $region180
        $region179: #{tpu_custom_call.1} parent=127 // pred_region
          %1120 = dma.done [#allocation21], 16
        $region180: #{tpu_custom_call.1} parent=127 // pred_fallthru
          _
        // Predicated region
        $region181: #{tpu_custom_call.1} parent=127 // pred_check
          %p1121 = pneg %p498
        $region182: #{tpu_custom_call.1} parent=127 // pred_check_branch
          %1123 = sbr.rel (%p1121) target = $region184
        $region183: #{tpu_custom_call.1} parent=127 // pred_region
          %1125 = dma.done [#allocation24], 256
        $region184: #{tpu_custom_call.1} parent=127 // pred_fallthru
          _
        // Predicated region
        $region185: #{tpu_custom_call.1} parent=127 // pred_check
          %p1126 = pneg %p519
        $region186: #{tpu_custom_call.1} parent=127 // pred_check_branch
          %1128 = sbr.rel (%p1126) target = $region188
        $region187: #{tpu_custom_call.1} parent=127 // pred_region
          %1130 = dma.done [#allocation24], 16
        $region188: #{tpu_custom_call.1} parent=127 // pred_fallthru
          _
        // Predicated region
        $region189: #{tpu_custom_call.1} parent=127 // pred_check
          %p1131 = pneg %p687
        $region190: #{tpu_custom_call.1} parent=127 // pred_check_branch
          %1133 = sbr.rel (%p1131) target = $region192
        $region191: #{tpu_custom_call.1} parent=127 // pred_region
          %1135 = dma.done [#allocation27], 16
        $region192: #{tpu_custom_call.1} parent=127 // pred_fallthru
          _
        %p1136 = scmp.lt.s32.totalorder %s90, 1
        %s1137 = scalar_select %p1136, %s90, 1
        %p1138 = scmp.lt.s32.totalorder %s91, 0
        %s1139 = scalar_select %p1138, %s91, 0
        %s1140 = sadd.s32 %s1139, %s1137
        %s1141 = smul.addr %s1140, 8
        %s1142 = scalar_lea.vmem %s1, %s1141
        %p1143 = pneg %p121
        %p1144 = pneg %p118
        %p1145 = scmp.lt.s32.totalorder %s90, 1
        %s1146 = scalar_select %p1145, %s90, 1
        %s1147 = smul.addr %s1146, 8
        %s1148 = scalar_lea.vmem %s3, %s1147
        %p1149 = pneg %p147
        %p1150 = pneg %p144
        %p1151 = scmp.lt.s32.totalorder %s90, 1
        %s1152 = scalar_select %p1151, %s90, 1
        %s1153 = smul.addr %s1152, 8
        %s1154 = scalar_lea.vmem %s5, %s1153
        %p1155 = pneg %p173
        %p1156 = pneg %p170
        %p1157 = pneg %p199
        %p1158 = pneg %p196
        %p1159 = scmp.lt.s32.totalorder %s90, 1
        %s1160 = scalar_select %p1159, %s90, 1
        %s1161 = scalar_lea.vmem %s9, %s1160
        %p1162 = pneg %p225
        %p1163 = pneg %p222
        %p1164 = pneg %p246
        %p1165 = pneg %p243
        %p1166 = pneg %p267
        %p1167 = pneg %p264
        %p1168 = pneg %p288
        %p1169 = pneg %p285
        %p1170 = pneg %p309
        %p1171 = pneg %p306
        %p1172 = pneg %p330
        %p1173 = pneg %p327
        %p1174 = pneg %p351
        %p1175 = pneg %p348
        %p1176 = pneg %p372
        %p1177 = pneg %p369
        %p1178 = pneg %p393
        %p1179 = pneg %p390
        %p1180 = pneg %p414
        %p1181 = pneg %p411
        %p1182 = pneg %p435
        %p1183 = pneg %p432
        %p1184 = pneg %p456
        %p1185 = pneg %p453
        %p1186 = pneg %p477
        %p1187 = pneg %p474
        %p1188 = pneg %p498
        %p1189 = pneg %p495
        %p1190 = pneg %p519
        %p1191 = pneg %p516
        %p1192 = pneg %p540
        %p1193 = pneg %p537
        %p1194 = pneg %p561
        %p1195 = pneg %p558
        %p1196 = pneg %p582
        %p1197 = pneg %p579
        %p1198 = pneg %p603
        %p1199 = pneg %p600
        %p1200 = pneg %p624
        %p1201 = pneg %p621
        %p1202 = pneg %p645
        %p1203 = pneg %p642
        %p1204 = pneg %p666
        %p1205 = pneg %p663
        %p1206 = pneg %p687
        %p1207 = pneg %p684
        %p1208 = pneg %p715
        %p1209 = pneg %p712
        %s1210 = sand.u32 %s702, 1
        %s1211 = scalar_lea.sflag [#allocation4], %s1210
        %s1212 = sand.u32 %s702, 1
        %s1213 = smul.addr %s1212, 8
        %s1214 = scalar_lea.vmem [#allocation28], %s1213
        %p1215 = pneg %p743
        %p1216 = pneg %p740
        %s1217 = sand.u32 %s86, 1
        %s1218 = scalar_lea.sflag [#allocation30], %s1217
        %s1219 = sand.u32 %s730, 1
        %s1220 = smul.addr %s1219, 8
        %s1221 = scalar_lea.vmem [#allocation29], %s1220
        %p1222 = pneg %p771
        %p1223 = pneg %p768
        %s1224 = sand.u32 %s86, 1
        %s1225 = scalar_lea.sflag [#allocation30], %s1224
        %s1226 = sand.u32 %s758, 1
        %s1227 = smul.addr %s1226, 8
        %s1228 = scalar_lea.vmem [#allocation31], %s1227
        %p1229 = scmp.lt.s32.totalorder %s90, 1
        %s1230 = scalar_select %p1229, %s90, 1
        %p1231 = scmp.lt.s32.totalorder %s91, 0
        %s1232 = scalar_select %p1231, %s91, 0
        %s1233 = sadd.s32 %s1232, %s1230
        %s1234 = smul.addr %s1233, 8
        %s1235 = scalar_lea.vmem %s1, %s1234
        %p1236 = scmp.lt.s32.totalorder %s90, 1
        %s1237 = scalar_select %p1236, %s90, 1
        %s1238 = smul.addr %s1237, 8
        %s1239 = scalar_lea.vmem %s3, %s1238
        %p1240 = scmp.lt.s32.totalorder %s90, 1
        %s1241 = scalar_select %p1240, %s90, 1
        %s1242 = smul.addr %s1241, 8
        %s1243 = scalar_lea.vmem %s5, %s1242
        %p1244 = scmp.lt.s32.totalorder %s90, 1
        %s1245 = scalar_select %p1244, %s90, 1
        %s1246 = scalar_lea.vmem %s9, %s1245
        %v1248 = vld [vmem:[%s1235] sm:$0xff]
        %v1249 = vld [vmem:[%s1239] sm:$0xff]
        %v1250 = vld [vmem:[%s1243] sm:$0xff]
        %v1251 = vld [vmem:[#allocation2] sm:$0xff]
        %v1252 = vld [vmem:[%s1246] sm:$0x1]
        %v1253 = vpack.c.bf16 %v1248, %v1248
        %v1254 = vld [vmem:[#allocation5] sm:$0xf]
        %v1255 = vld [vmem:[#allocation5 + $0x4] sm:$0xf]
        %v1256 = vld [vmem:[#allocation5 + $0x8] sm:$0xf]
        %v1257 = vld [vmem:[#allocation5 + $0xc] sm:$0xf]
        %v1258 = vld [vmem:[#allocation7] sm:$0x1]
        %v1260 = vperm.slane %v1258, 0
        %v1266 = vunpack.c.l.b16 %v1254
        %v1267 = vunpack.c.l.b16 %v1255
        %v1268 = vunpack.c.l.b16 %v1256
        %v1269 = vunpack.c.l.b16 %v1257
        %v1270 = vpack.c.b16 %v1267, %v1266
        %v1271 = vpack.c.b16 %v1269, %v1268
        %vm1274 = vcmask 261120
        %v1276 = vsel %vm1274, %v1253, 0
        %1278 = vmatpush.bf16.msra.mxu0 0
        %1279 = vmatpush.bf16.msra.mxu0 0
        %1280 = vmatpush.bf16.msra.mxu0 0
        %1281 = vmatpush.bf16.msra.mxu0 0
        %1282 = vmatpush.bf16.msra.mxu0 0
        %1283 = vmatpush.bf16.msra.mxu0 0
        %1284 = vmatpush.bf16.msra.mxu0 %v1271
        %1285 = vmatpush.bf16.msra.mxu0 %v1270
        %1286 = vmatmul.bf16.gmra.mxu0 %v1276
        %v1287 = vpop.f32.mrf.mxu0
        %v1288 = vadd.f32 %v1260, %v1287
        %v1289 = vpop.f32.mrf.mxu0
        %1290 = vdwg.mxu0
        %v1291 = vpack.c.bf16 %v1249, %v1249
        %v1292 = vld [vmem:[#allocation8] sm:$0xf]
        %v1293 = vld [vmem:[#allocation8 + $0x4] sm:$0xf]
        %v1294 = vld [vmem:[#allocation8 + $0x8] sm:$0xf]
        %v1295 = vld [vmem:[#allocation8 + $0xc] sm:$0xf]
        %v1296 = vld [vmem:[#allocation10] sm:$0x1]
        %v1298 = vperm.slane %v1296, 0
        %v1304 = vunpack.c.l.b16 %v1292
        %v1305 = vunpack.c.l.b16 %v1293
        %v1306 = vunpack.c.l.b16 %v1294
        %v1307 = vunpack.c.l.b16 %v1295
        %v1308 = vpack.c.b16 %v1305, %v1304
        %v1309 = vpack.c.b16 %v1307, %v1306
        %v1313 = vsel %vm1274, %v1291, 0
        %1315 = vmatpush.bf16.msra.mxu0 0
        %1316 = vmatpush.bf16.msra.mxu0 0
        %1317 = vmatpush.bf16.msra.mxu0 0
        %1318 = vmatpush.bf16.msra.mxu0 0
        %1319 = vmatpush.bf16.msra.mxu0 0
        %1320 = vmatpush.bf16.msra.mxu0 0
        %1321 = vmatpush.bf16.msra.mxu0 %v1309
        %1322 = vmatpush.bf16.msra.mxu0 %v1308
        %1323 = vmatmul.bf16.gmra.mxu0 %v1313
        %v1324 = vpop.f32.mrf.mxu0
        %v1325 = vadd.f32 %v1298, %v1324
        %v1326 = vpop.f32.mrf.mxu0
        %1327 = vdwg.mxu0
        %v1328 = vld [vmem:[#allocation11] sm:$0xf]
        %v1329 = vld [vmem:[#allocation11 + $0x4] sm:$0xf]
        %v1330 = vld [vmem:[#allocation11 + $0x8] sm:$0xf]
        %v1331 = vld [vmem:[#allocation11 + $0xc] sm:$0xf]
        %v1332 = vld [vmem:[#allocation13] sm:$0x1]
        %1334 = vrot.lane.b32.xlu0 %v1288, 120
        %v1335 = vpop.permute.xlu0 %1334
        %1337 = vrot.lane.b32.xlu0 %v1288, 112
        %v1338 = vpop.permute.xlu0 %1337
        %1340 = vrot.lane.b32.xlu0 %v1288, 104
        %v1341 = vpop.permute.xlu0 %1340
        %v1343 = vpack.c.bf16 %v1288, %v1288
        %v1344 = vpack.c.bf16 %v1335, %v1335
        %v1345 = vpack.c.bf16 %v1338, %v1338
        %v1346 = vpack.c.bf16 %v1341, %v1341
        %1348 = vrot.lane.b32.xlu0 %v1325, 120
        %v1349 = vpop.permute.xlu0 %1348
        %1351 = vrot.lane.b32.xlu0 %v1325, 112
        %v1352 = vpop.permute.xlu0 %1351
        %1354 = vrot.lane.b32.xlu0 %v1325, 104
        %v1355 = vpop.permute.xlu0 %1354
        %1357 = vrot.lane.b32.xlu0 %v1325, 96
        %v1358 = vpop.permute.xlu0 %1357
        %1360 = vrot.lane.b32.xlu0 %v1325, 88
        %v1361 = vpop.permute.xlu0 %1360
        %1363 = vrot.lane.b32.xlu0 %v1325, 80
        %v1364 = vpop.permute.xlu0 %1363
        %1366 = vrot.lane.b32.xlu0 %v1325, 72
        %v1367 = vpop.permute.xlu0 %1366
        %v1369 = vpack.c.bf16 %v1325, %v1325
        %v1370 = vpack.c.bf16 %v1349, %v1349
        %v1371 = vpack.c.bf16 %v1352, %v1352
        %v1372 = vpack.c.bf16 %v1355, %v1355
        %v1373 = vpack.c.bf16 %v1358, %v1358
        %v1374 = vpack.c.bf16 %v1361, %v1361
        %v1375 = vpack.c.bf16 %v1364, %v1364
        %v1376 = vpack.c.bf16 %v1367, %v1367
        %vm1377 = vcmask 64512
        %v1379 = vsel %vm1377, %v1343, 0
        %v1382 = vsel %vm1377, %v1369, 0
        %1384 = vmatpush.bf16.xpose.msra.mxu0 0
        %1385 = vmatpush.bf16.xpose.msra.mxu0 0
        %1386 = vmatpush.bf16.xpose.msra.mxu0 0
        %1387 = vmatpush.bf16.xpose.msra.mxu0 0
        %1388 = vmatpush.bf16.xpose.msra.mxu0 0
        %1389 = vmatpush.bf16.xpose.msra.mxu0 0
        %1390 = vmatpush.bf16.xpose.msra.mxu0 0
        %1391 = vmatpush.bf16.xpose.msra.mxu0 %v1382
        %1392 = vmatmul.bf16.gmra.mxu0 %v1379
        %v1393 = vpop.f32.mrf.mxu0
        %v1394 = vadd.f32 %v1251, %v1393
        %v1395 = vpop.f32.mrf.mxu0
        %1396 = vdwg.mxu0
        %v1398 = vsel %vm1377, %v1344, 0
        %v1401 = vsel %vm1377, %v1370, 0
        %1403 = vmatpush.bf16.xpose.msra.mxu0 0
        %1404 = vmatpush.bf16.xpose.msra.mxu0 0
        %1405 = vmatpush.bf16.xpose.msra.mxu0 0
        %1406 = vmatpush.bf16.xpose.msra.mxu0 0
        %1407 = vmatpush.bf16.xpose.msra.mxu0 0
        %1408 = vmatpush.bf16.xpose.msra.mxu0 0
        %1409 = vmatpush.bf16.xpose.msra.mxu0 0
        %1410 = vmatpush.bf16.xpose.msra.mxu0 %v1401
        %1411 = vmatmul.bf16.gmra.mxu0 %v1398
        %v1412 = vpop.f32.mrf.mxu0
        %v1413 = vadd.f32 %v1251, %v1412
        %v1414 = vpop.f32.mrf.mxu0
        %1415 = vdwg.mxu0
        %v1417 = vsel %vm1377, %v1345, 0
        %v1420 = vsel %vm1377, %v1371, 0
        %1422 = vmatpush.bf16.xpose.msra.mxu0 0
        %1423 = vmatpush.bf16.xpose.msra.mxu0 0
        %1424 = vmatpush.bf16.xpose.msra.mxu0 0
        %1425 = vmatpush.bf16.xpose.msra.mxu0 0
        %1426 = vmatpush.bf16.xpose.msra.mxu0 0
        %1427 = vmatpush.bf16.xpose.msra.mxu0 0
        %1428 = vmatpush.bf16.xpose.msra.mxu0 0
        %1429 = vmatpush.bf16.xpose.msra.mxu0 %v1420
        %1430 = vmatmul.bf16.gmra.mxu0 %v1417
        %v1431 = vpop.f32.mrf.mxu0
        %v1432 = vadd.f32 %v1251, %v1431
        %v1433 = vpop.f32.mrf.mxu0
        %1434 = vdwg.mxu0
        %v1436 = vsel %vm1377, %v1346, 0
        %v1439 = vsel %vm1377, %v1372, 0
        %1441 = vmatpush.bf16.xpose.msra.mxu0 0
        %1442 = vmatpush.bf16.xpose.msra.mxu0 0
        %1443 = vmatpush.bf16.xpose.msra.mxu0 0
        %1444 = vmatpush.bf16.xpose.msra.mxu0 0
        %1445 = vmatpush.bf16.xpose.msra.mxu0 0
        %1446 = vmatpush.bf16.xpose.msra.mxu0 0
        %1447 = vmatpush.bf16.xpose.msra.mxu0 0
        %1448 = vmatpush.bf16.xpose.msra.mxu0 %v1439
        %1449 = vmatmul.bf16.gmra.mxu0 %v1436
        %v1450 = vpop.f32.mrf.mxu0
        %v1451 = vadd.f32 %v1251, %v1450
        %v1452 = vpop.f32.mrf.mxu0
        %1453 = vdwg.mxu0
        %v1454 = vsel %vm1377, %v1394, -inf
        %1455 = vmax.xlane.f32.xlu0 %v1454
        %v1456 = vpop.xlane.xlu0 %1455
        %v1457 = vsel %vm1377, %v1413, -inf
        %1458 = vmax.xlane.f32.xlu0 %v1457
        %v1459 = vpop.xlane.xlu0 %1458
        %v1460 = vsel %vm1377, %v1432, -inf
        %1461 = vmax.xlane.f32.xlu0 %v1460
        %v1462 = vpop.xlane.xlu0 %1461
        %v1463 = vsel %vm1377, %v1451, -inf
        %1464 = vmax.xlane.f32.xlu0 %v1463
        %v1465 = vpop.xlane.xlu0 %1464
        %v1466 = vsub.f32 %v1394, %v1456
        %v1467 = vsub.f32 %v1413, %v1459
        %v1468 = vsub.f32 %v1432, %v1462
        %v1469 = vsub.f32 %v1451, %v1465
        %v1470 = vmul.f32 %v1466, 1.442695
        %v1471 = vpow.pop %v1470
        %v1472 = vmul.f32 %v1467, 1.442695
        %v1473 = vpow.pop %v1472
        %v1474 = vmul.f32 %v1468, 1.442695
        %v1475 = vpow.pop %v1474
        %v1476 = vmul.f32 %v1469, 1.442695
        %v1477 = vpow.pop %v1476
        %v1478 = vsel %vm1377, %v1471, 0.0
        %1479 = vadd.xlane.f32.xlu0 %v1478
        %v1480 = vpop.xlane.xlu0 %1479
        %v1481 = vsel %vm1377, %v1473, 0.0
        %1482 = vadd.xlane.f32.xlu0 %v1481
        %v1483 = vpop.xlane.xlu0 %1482
        %v1484 = vsel %vm1377, %v1475, 0.0
        %1485 = vadd.xlane.f32.xlu0 %v1484
        %v1486 = vpop.xlane.xlu0 %1485
        %v1487 = vsel %vm1377, %v1477, 0.0
        %1488 = vadd.xlane.f32.xlu0 %v1487
        %v1489 = vpop.xlane.xlu0 %1488
        %v1490 = vrcp.pop %v1480
        %v1491 = vrcp.pop %v1483
        %v1492 = vrcp.pop %v1486
        %v1493 = vrcp.pop %v1489
        %v1494 = vmul.f32 %v1471, %v1490
        %v1495 = vmul.f32 %v1473, %v1491
        %v1496 = vmul.f32 %v1475, %v1492
        %v1497 = vmul.f32 %v1477, %v1493
        %v1498 = vsel %vm1377, %v1494, 0.0
        %v1499 = vsel %vm1377, %v1495, 0.0
        %v1500 = vadd.f32 %v1498, %v1499
        %v1501 = vsel %vm1377, %v1496, 0.0
        %v1502 = vadd.f32 %v1500, %v1501
        %v1503 = vsel %vm1377, %v1497, 0.0
        %v1504 = vadd.f32 %v1502, %v1503
        %v1505 = vmul.f32 %v1504, 0.25
        %v1506 = vpack.c.bf16 %v1494, %v1494
        %v1507 = vpack.c.bf16 %v1495, %v1495
        %v1508 = vpack.c.bf16 %v1496, %v1496
        %v1509 = vpack.c.bf16 %v1497, %v1497
        %v1511 = vsel %vm1377, %v1506, 0
        %vm1513 = vcmask 1043456
        %v1515 = vsel %vm1513, %v1373, 0
        %1517 = vmatpush.bf16.msra.mxu0 0
        %1518 = vmatpush.bf16.msra.mxu0 0
        %1519 = vmatpush.bf16.msra.mxu0 0
        %1520 = vmatpush.bf16.msra.mxu0 0
        %1521 = vmatpush.bf16.msra.mxu0 0
        %1522 = vmatpush.bf16.msra.mxu0 0
        %1523 = vmatpush.bf16.msra.mxu0 0
        %1524 = vmatpush.bf16.msra.mxu0 %v1515
        %1525 = vmatmul.bf16.gmra.mxu0 %v1511
        %v1526 = vpop.f32.mrf.mxu0
        %v1527 = vadd.f32 0.0, %v1526
        %v1528 = vpop.f32.mrf.mxu0
        %1529 = vdwg.mxu0
        %v1531 = vsel %vm1377, %v1507, 0
        %v1534 = vsel %vm1513, %v1374, 0
        %1536 = vmatpush.bf16.msra.mxu0 0
        %1537 = vmatpush.bf16.msra.mxu0 0
        %1538 = vmatpush.bf16.msra.mxu0 0
        %1539 = vmatpush.bf16.msra.mxu0 0
        %1540 = vmatpush.bf16.msra.mxu0 0
        %1541 = vmatpush.bf16.msra.mxu0 0
        %1542 = vmatpush.bf16.msra.mxu0 0
        %1543 = vmatpush.bf16.msra.mxu0 %v1534
        %1544 = vmatmul.bf16.gmra.mxu0 %v1531
        %v1545 = vpop.f32.mrf.mxu0
        %v1546 = vadd.f32 0.0, %v1545
        %v1547 = vpop.f32.mrf.mxu0
        %1548 = vdwg.mxu0
        %v1550 = vsel %vm1377, %v1508, 0
        %v1553 = vsel %vm1513, %v1375, 0
        %1555 = vmatpush.bf16.msra.mxu0 0
        %1556 = vmatpush.bf16.msra.mxu0 0
        %1557 = vmatpush.bf16.msra.mxu0 0
        %1558 = vmatpush.bf16.msra.mxu0 0
        %1559 = vmatpush.bf16.msra.mxu0 0
        %1560 = vmatpush.bf16.msra.mxu0 0
        %1561 = vmatpush.bf16.msra.mxu0 0
        %1562 = vmatpush.bf16.msra.mxu0 %v1553
        %1563 = vmatmul.bf16.gmra.mxu0 %v1550
        %v1564 = vpop.f32.mrf.mxu0
        %v1565 = vadd.f32 0.0, %v1564
        %v1566 = vpop.f32.mrf.mxu0
        %1567 = vdwg.mxu0
        %v1569 = vsel %vm1377, %v1509, 0
        %v1572 = vsel %vm1513, %v1376, 0
        %1574 = vmatpush.bf16.msra.mxu0 0
        %1575 = vmatpush.bf16.msra.mxu0 0
        %1576 = vmatpush.bf16.msra.mxu0 0
        %1577 = vmatpush.bf16.msra.mxu0 0
        %1578 = vmatpush.bf16.msra.mxu0 0
        %1579 = vmatpush.bf16.msra.mxu0 0
        %1580 = vmatpush.bf16.msra.mxu0 0
        %1581 = vmatpush.bf16.msra.mxu0 %v1572
        %1582 = vmatmul.bf16.gmra.mxu0 %v1569
        %v1583 = vpop.f32.mrf.mxu0
        %v1584 = vadd.f32 0.0, %v1583
        %v1585 = vpop.f32.mrf.mxu0
        %1586 = vdwg.mxu0
        %1588 = vrot.lane.b32.xlu0 %v1546, 8
        %v1589 = vpop.permute.xlu0 %1588
        %1592 = vrot.lane.b32.xlu0 %v1565, 16
        %v1593 = vpop.permute.xlu0 %1592
        %1596 = vrot.lane.b32.xlu0 %v1584, 24
        %v1597 = vpop.permute.xlu0 %1596
        %v1599 = vsel %vm1377, %v1527, %v1589
        %vm1600 = vcmask 130048
        %v1601 = vsel %vm1600, %v1599, %v1593
        %vm1602 = vcmask 195584
        %v1603 = vsel %vm1602, %v1601, %v1597
        %v1604 = vpack.c.bf16 %v1603, %v1603
        %v1606 = vperm.slane %v1332, 0
        %v1612 = vunpack.c.l.b16 %v1328
        %v1613 = vunpack.c.l.b16 %v1329
        %v1614 = vunpack.c.l.b16 %v1330
        %v1615 = vunpack.c.l.b16 %v1331
        %v1616 = vpack.c.b16 %v1613, %v1612
        %v1617 = vpack.c.b16 %v1615, %v1614
        %v1621 = vsel %vm1274, %v1604, 0
        %1623 = vmatpush.bf16.msra.mxu0 0
        %1624 = vmatpush.bf16.msra.mxu0 0
        %1625 = vmatpush.bf16.msra.mxu0 0
        %1626 = vmatpush.bf16.msra.mxu0 0
        %1627 = vmatpush.bf16.msra.mxu0 0
        %1628 = vmatpush.bf16.msra.mxu0 0
        %1629 = vmatpush.bf16.msra.mxu0 %v1617
        %1630 = vmatpush.bf16.msra.mxu0 %v1616
        %1631 = vmatmul.bf16.gmra.mxu0 %v1621
        %v1632 = vpop.f32.mrf.mxu0
        %v1633 = vadd.f32 %v1606, %v1632
        %v1634 = vpop.f32.mrf.mxu0
        %1635 = vdwg.mxu0
        %v1636 = vadd.f32 %v1248, %v1633
        %v1637 = vld [vmem:[%s43] sm:$0x1]
        %v1638 = vld [vmem:[%s45] sm:$0x1]
        %v1639 = vsel %vm1274, %v1636, 0.0
        %1640 = vadd.xlane.f32.xlu0 %v1639
        %v1641 = vpop.xlane.xlu0 %1640
        %v1642 = vrcp.pop 32.0
        %v1643 = vmul.f32 32.0, %v1642
        %v1644 = vsub.f32 1.0, %v1643
        %v1645 = vmul.f32 %v1642, %v1644
        %v1646 = vadd.f32 %v1642, %v1645
        %vm1647 = vweird.f32 %v1642
        %v1648 = vsel %vm1647, %v1642, %v1646
        %v1649 = vmul.f32 %v1641, %v1648
        %v1650 = vsub.f32 %v1636, %v1649
        %v1651 = vmul.f32 %v1650, %v1650
        %v1652 = vsel %vm1274, %v1651, 0.0
        %1653 = vadd.xlane.f32.xlu0 %v1652
        %v1654 = vpop.xlane.xlu0 %1653
        %v1655 = vmul.f32 %v1654, %v1648
        %v1656 = vadd.f32 %v1655, 1e-05
        %v1657 = vrsqrt.pop %v1656
        %v1658 = vmul.f32 %v1657, %v1656
        %v1659 = vmul.f32 %v1658, %v1657
        %v1660 = vmul.f32 0.5, %v1659
        %v1661 = vsub.f32 1.5, %v1660
        %v1662 = vmul.f32 %v1657, %v1661
        %vm1663 = vweird.f32 %v1656
        %vm1664 = vweird.f32 %v1657
        %vm1665 = vmor %vm1663, %vm1664
        %v1666 = vsel %vm1665, %v1657, %v1662
        %v1667 = vmul.f32 %v1650, %v1666
        %v1669 = vperm.slane %v1637, 0
        %v1671 = vmul.f32 %v1667, %v1669
        %v1673 = vperm.slane %v1638, 0
        %v1675 = vadd.f32 %v1671, %v1673
        %v1676 = vpack.c.bf16 %v1675, %v1675
        %v1677 = vld [vmem:[#allocation14] sm:$0xf]
        %v1678 = vld [vmem:[#allocation14 + $0x4] sm:$0xf]
        %v1679 = vld [vmem:[#allocation14 + $0x8] sm:$0xf]
        %v1680 = vld [vmem:[#allocation14 + $0xc] sm:$0xf]
        %v1681 = vld [vmem:[#allocation16] sm:$0x1]
        %v1683 = vperm.slane %v1681, 0
        %v1689 = vunpack.c.l.b16 %v1677
        %v1690 = vunpack.c.l.b16 %v1678
        %v1691 = vunpack.c.l.b16 %v1679
        %v1692 = vunpack.c.l.b16 %v1680
        %v1693 = vpack.c.b16 %v1690, %v1689
        %v1694 = vpack.c.b16 %v1692, %v1691
        %v1698 = vsel %vm1274, %v1676, 0
        %1700 = vmatpush.bf16.msra.mxu0 0
        %1701 = vmatpush.bf16.msra.mxu0 0
        %1702 = vmatpush.bf16.msra.mxu0 0
        %1703 = vmatpush.bf16.msra.mxu0 0
        %1704 = vmatpush.bf16.msra.mxu0 0
        %1705 = vmatpush.bf16.msra.mxu0 0
        %1706 = vmatpush.bf16.msra.mxu0 %v1694
        %1707 = vmatpush.bf16.msra.mxu0 %v1693
        %1708 = vmatmul.bf16.gmra.mxu0 %v1698
        %v1709 = vpop.f32.mrf.mxu0
        %v1710 = vadd.f32 %v1683, %v1709
        %v1711 = vpop.f32.mrf.mxu0
        %1712 = vdwg.mxu0
        %v1713 = vpack.c.bf16 %v1250, %v1250
        %v1714 = vld [vmem:[#allocation17] sm:$0xf]
        %v1715 = vld [vmem:[#allocation17 + $0x4] sm:$0xf]
        %v1716 = vld [vmem:[#allocation17 + $0x8] sm:$0xf]
        %v1717 = vld [vmem:[#allocation17 + $0xc] sm:$0xf]
        %v1718 = vld [vmem:[#allocation19] sm:$0x1]
        %v1720 = vperm.slane %v1718, 0
        %v1726 = vunpack.c.l.b16 %v1714
        %v1727 = vunpack.c.l.b16 %v1715
        %v1728 = vunpack.c.l.b16 %v1716
        %v1729 = vunpack.c.l.b16 %v1717
        %v1730 = vpack.c.b16 %v1727, %v1726
        %v1731 = vpack.c.b16 %v1729, %v1728
        %v1735 = vsel %vm1274, %v1713, 0
        %1737 = vmatpush.bf16.msra.mxu0 0
        %1738 = vmatpush.bf16.msra.mxu0 0
        %1739 = vmatpush.bf16.msra.mxu0 0
        %1740 = vmatpush.bf16.msra.mxu0 0
        %1741 = vmatpush.bf16.msra.mxu0 0
        %1742 = vmatpush.bf16.msra.mxu0 0
        %1743 = vmatpush.bf16.msra.mxu0 %v1731
        %1744 = vmatpush.bf16.msra.mxu0 %v1730
        %1745 = vmatmul.bf16.gmra.mxu0 %v1735
        %v1746 = vpop.f32.mrf.mxu0
        %v1747 = vadd.f32 %v1720, %v1746
        %v1748 = vpop.f32.mrf.mxu0
        %1749 = vdwg.mxu0
        %v1750 = vld [vmem:[#allocation20] sm:$0xf]
        %v1751 = vld [vmem:[#allocation20 + $0x4] sm:$0xf]
        %v1752 = vld [vmem:[#allocation20 + $0x8] sm:$0xf]
        %v1753 = vld [vmem:[#allocation20 + $0xc] sm:$0xf]
        %v1754 = vld [vmem:[#allocation22] sm:$0x1]
        %1756 = vrot.lane.b32.xlu0 %v1710, 120
        %v1757 = vpop.permute.xlu0 %1756
        %1759 = vrot.lane.b32.xlu0 %v1710, 112
        %v1760 = vpop.permute.xlu0 %1759
        %1762 = vrot.lane.b32.xlu0 %v1710, 104
        %v1763 = vpop.permute.xlu0 %1762
        %v1765 = vpack.c.bf16 %v1710, %v1710
        %v1766 = vpack.c.bf16 %v1757, %v1757
        %v1767 = vpack.c.bf16 %v1760, %v1760
        %v1768 = vpack.c.bf16 %v1763, %v1763
        %1770 = vrot.lane.b32.xlu0 %v1747, 120
        %v1771 = vpop.permute.xlu0 %1770
        %1773 = vrot.lane.b32.xlu0 %v1747, 112
        %v1774 = vpop.permute.xlu0 %1773
        %1776 = vrot.lane.b32.xlu0 %v1747, 104
        %v1777 = vpop.permute.xlu0 %1776
        %1779 = vrot.lane.b32.xlu0 %v1747, 96
        %v1780 = vpop.permute.xlu0 %1779
        %1782 = vrot.lane.b32.xlu0 %v1747, 88
        %v1783 = vpop.permute.xlu0 %1782
        %1785 = vrot.lane.b32.xlu0 %v1747, 80
        %v1786 = vpop.permute.xlu0 %1785
        %1788 = vrot.lane.b32.xlu0 %v1747, 72
        %v1789 = vpop.permute.xlu0 %1788
        %v1791 = vpack.c.bf16 %v1747, %v1747
        %v1792 = vpack.c.bf16 %v1771, %v1771
        %v1793 = vpack.c.bf16 %v1774, %v1774
        %v1794 = vpack.c.bf16 %v1777, %v1777
        %v1795 = vpack.c.bf16 %v1780, %v1780
        %v1796 = vpack.c.bf16 %v1783, %v1783
        %v1797 = vpack.c.bf16 %v1786, %v1786
        %v1798 = vpack.c.bf16 %v1789, %v1789
        %v1800 = vperm.slane %v1252, 0
        %v1803 = vsel %vm1377, %v1765, 0
        %v1806 = vsel %vm1377, %v1791, 0
        %1808 = vmatpush.bf16.xpose.msra.mxu0 0
        %1809 = vmatpush.bf16.xpose.msra.mxu0 0
        %1810 = vmatpush.bf16.xpose.msra.mxu0 0
        %1811 = vmatpush.bf16.xpose.msra.mxu0 0
        %1812 = vmatpush.bf16.xpose.msra.mxu0 0
        %1813 = vmatpush.bf16.xpose.msra.mxu0 0
        %1814 = vmatpush.bf16.xpose.msra.mxu0 0
        %1815 = vmatpush.bf16.xpose.msra.mxu0 %v1806
        %1816 = vmatmul.bf16.gmra.mxu0 %v1803
        %v1817 = vpop.f32.mrf.mxu0
        %v1818 = vadd.f32 %v1800, %v1817
        %v1819 = vpop.f32.mrf.mxu0
        %1820 = vdwg.mxu0
        %v1822 = vsel %vm1377, %v1766, 0
        %v1825 = vsel %vm1377, %v1792, 0
        %1827 = vmatpush.bf16.xpose.msra.mxu0 0
        %1828 = vmatpush.bf16.xpose.msra.mxu0 0
        %1829 = vmatpush.bf16.xpose.msra.mxu0 0
        %1830 = vmatpush.bf16.xpose.msra.mxu0 0
        %1831 = vmatpush.bf16.xpose.msra.mxu0 0
        %1832 = vmatpush.bf16.xpose.msra.mxu0 0
        %1833 = vmatpush.bf16.xpose.msra.mxu0 0
        %1834 = vmatpush.bf16.xpose.msra.mxu0 %v1825
        %1835 = vmatmul.bf16.gmra.mxu0 %v1822
        %v1836 = vpop.f32.mrf.mxu0
        %v1837 = vadd.f32 %v1800, %v1836
        %v1838 = vpop.f32.mrf.mxu0
        %1839 = vdwg.mxu0
        %v1841 = vsel %vm1377, %v1767, 0
        %v1844 = vsel %vm1377, %v1793, 0
        %1846 = vmatpush.bf16.xpose.msra.mxu0 0
        %1847 = vmatpush.bf16.xpose.msra.mxu0 0
        %1848 = vmatpush.bf16.xpose.msra.mxu0 0
        %1849 = vmatpush.bf16.xpose.msra.mxu0 0
        %1850 = vmatpush.bf16.xpose.msra.mxu0 0
        %1851 = vmatpush.bf16.xpose.msra.mxu0 0
        %1852 = vmatpush.bf16.xpose.msra.mxu0 0
        %1853 = vmatpush.bf16.xpose.msra.mxu0 %v1844
        %1854 = vmatmul.bf16.gmra.mxu0 %v1841
        %v1855 = vpop.f32.mrf.mxu0
        %v1856 = vadd.f32 %v1800, %v1855
        %v1857 = vpop.f32.mrf.mxu0
        %1858 = vdwg.mxu0
        %v1860 = vsel %vm1377, %v1768, 0
        %v1863 = vsel %vm1377, %v1794, 0
        %1865 = vmatpush.bf16.xpose.msra.mxu0 0
        %1866 = vmatpush.bf16.xpose.msra.mxu0 0
        %1867 = vmatpush.bf16.xpose.msra.mxu0 0
        %1868 = vmatpush.bf16.xpose.msra.mxu0 0
        %1869 = vmatpush.bf16.xpose.msra.mxu0 0
        %1870 = vmatpush.bf16.xpose.msra.mxu0 0
        %1871 = vmatpush.bf16.xpose.msra.mxu0 0
        %1872 = vmatpush.bf16.xpose.msra.mxu0 %v1863
        %1873 = vmatmul.bf16.gmra.mxu0 %v1860
        %v1874 = vpop.f32.mrf.mxu0
        %v1875 = vadd.f32 %v1800, %v1874
        %v1876 = vpop.f32.mrf.mxu0
        %1877 = vdwg.mxu0
        %v1878 = vsel %vm1377, %v1818, -inf
        %1879 = vmax.xlane.f32.xlu0 %v1878
        %v1880 = vpop.xlane.xlu0 %1879
        %v1881 = vsel %vm1377, %v1837, -inf
        %1882 = vmax.xlane.f32.xlu0 %v1881
        %v1883 = vpop.xlane.xlu0 %1882
        %v1884 = vsel %vm1377, %v1856, -inf
        %1885 = vmax.xlane.f32.xlu0 %v1884
        %v1886 = vpop.xlane.xlu0 %1885
        %v1887 = vsel %vm1377, %v1875, -inf
        %1888 = vmax.xlane.f32.xlu0 %v1887
        %v1889 = vpop.xlane.xlu0 %1888
        %v1890 = vsub.f32 %v1818, %v1880
        %v1891 = vsub.f32 %v1837, %v1883
        %v1892 = vsub.f32 %v1856, %v1886
        %v1893 = vsub.f32 %v1875, %v1889
        %v1894 = vmul.f32 %v1890, 1.442695
        %v1895 = vpow.pop %v1894
        %v1896 = vmul.f32 %v1891, 1.442695
        %v1897 = vpow.pop %v1896
        %v1898 = vmul.f32 %v1892, 1.442695
        %v1899 = vpow.pop %v1898
        %v1900 = vmul.f32 %v1893, 1.442695
        %v1901 = vpow.pop %v1900
        %v1902 = vsel %vm1377, %v1895, 0.0
        %1903 = vadd.xlane.f32.xlu0 %v1902
        %v1904 = vpop.xlane.xlu0 %1903
        %v1905 = vsel %vm1377, %v1897, 0.0
        %1906 = vadd.xlane.f32.xlu0 %v1905
        %v1907 = vpop.xlane.xlu0 %1906
        %v1908 = vsel %vm1377, %v1899, 0.0
        %1909 = vadd.xlane.f32.xlu0 %v1908
        %v1910 = vpop.xlane.xlu0 %1909
        %v1911 = vsel %vm1377, %v1901, 0.0
        %1912 = vadd.xlane.f32.xlu0 %v1911
        %v1913 = vpop.xlane.xlu0 %1912
        %v1914 = vrcp.pop %v1904
        %v1915 = vrcp.pop %v1907
        %v1916 = vrcp.pop %v1910
        %v1917 = vrcp.pop %v1913
        %v1918 = vmul.f32 %v1895, %v1914
        %v1919 = vmul.f32 %v1897, %v1915
        %v1920 = vmul.f32 %v1899, %v1916
        %v1921 = vmul.f32 %v1901, %v1917
        %v1922 = vsel %vm1377, %v1918, 0.0
        %v1923 = vsel %vm1377, %v1919, 0.0
        %v1924 = vadd.f32 %v1922, %v1923
        %v1925 = vsel %vm1377, %v1920, 0.0
        %v1926 = vadd.f32 %v1924, %v1925
        %v1927 = vsel %vm1377, %v1921, 0.0
        %v1928 = vadd.f32 %v1926, %v1927
        %v1929 = vmul.f32 %v1928, 0.25
        %v1930 = vpack.c.bf16 %v1918, %v1918
        %v1931 = vpack.c.bf16 %v1919, %v1919
        %v1932 = vpack.c.bf16 %v1920, %v1920
        %v1933 = vpack.c.bf16 %v1921, %v1921
        %v1935 = vsel %vm1377, %v1930, 0
        %v1938 = vsel %vm1513, %v1795, 0
        %1940 = vmatpush.bf16.msra.mxu0 0
        %1941 = vmatpush.bf16.msra.mxu0 0
        %1942 = vmatpush.bf16.msra.mxu0 0
        %1943 = vmatpush.bf16.msra.mxu0 0
        %1944 = vmatpush.bf16.msra.mxu0 0
        %1945 = vmatpush.bf16.msra.mxu0 0
        %1946 = vmatpush.bf16.msra.mxu0 0
        %1947 = vmatpush.bf16.msra.mxu0 %v1938
        %1948 = vmatmul.bf16.gmra.mxu0 %v1935
        %v1949 = vpop.f32.mrf.mxu0
        %v1950 = vadd.f32 0.0, %v1949
        %v1951 = vpop.f32.mrf.mxu0
        %1952 = vdwg.mxu0
        %v1954 = vsel %vm1377, %v1931, 0
        %v1957 = vsel %vm1513, %v1796, 0
        %1959 = vmatpush.bf16.msra.mxu0 0
        %1960 = vmatpush.bf16.msra.mxu0 0
        %1961 = vmatpush.bf16.msra.mxu0 0
        %1962 = vmatpush.bf16.msra.mxu0 0
        %1963 = vmatpush.bf16.msra.mxu0 0
        %1964 = vmatpush.bf16.msra.mxu0 0
        %1965 = vmatpush.bf16.msra.mxu0 0
        %1966 = vmatpush.bf16.msra.mxu0 %v1957
        %1967 = vmatmul.bf16.gmra.mxu0 %v1954
        %v1968 = vpop.f32.mrf.mxu0
        %v1969 = vadd.f32 0.0, %v1968
        %v1970 = vpop.f32.mrf.mxu0
        %1971 = vdwg.mxu0
        %v1973 = vsel %vm1377, %v1932, 0
        %v1976 = vsel %vm1513, %v1797, 0
        %1978 = vmatpush.bf16.msra.mxu0 0
        %1979 = vmatpush.bf16.msra.mxu0 0
        %1980 = vmatpush.bf16.msra.mxu0 0
        %1981 = vmatpush.bf16.msra.mxu0 0
        %1982 = vmatpush.bf16.msra.mxu0 0
        %1983 = vmatpush.bf16.msra.mxu0 0
        %1984 = vmatpush.bf16.msra.mxu0 0
        %1985 = vmatpush.bf16.msra.mxu0 %v1976
        %1986 = vmatmul.bf16.gmra.mxu0 %v1973
        %v1987 = vpop.f32.mrf.mxu0
        %v1988 = vadd.f32 0.0, %v1987
        %v1989 = vpop.f32.mrf.mxu0
        %1990 = vdwg.mxu0
        %v1992 = vsel %vm1377, %v1933, 0
        %v1995 = vsel %vm1513, %v1798, 0
        %1997 = vmatpush.bf16.msra.mxu0 0
        %1998 = vmatpush.bf16.msra.mxu0 0
        %1999 = vmatpush.bf16.msra.mxu0 0
        %2000 = vmatpush.bf16.msra.mxu0 0
        %2001 = vmatpush.bf16.msra.mxu0 0
        %2002 = vmatpush.bf16.msra.mxu0 0
        %2003 = vmatpush.bf16.msra.mxu0 0
        %2004 = vmatpush.bf16.msra.mxu0 %v1995
        %2005 = vmatmul.bf16.gmra.mxu0 %v1992
        %v2006 = vpop.f32.mrf.mxu0
        %v2007 = vadd.f32 0.0, %v2006
        %v2008 = vpop.f32.mrf.mxu0
        %2009 = vdwg.mxu0
        %2011 = vrot.lane.b32.xlu0 %v1969, 8
        %v2012 = vpop.permute.xlu0 %2011
        %2015 = vrot.lane.b32.xlu0 %v1988, 16
        %v2016 = vpop.permute.xlu0 %2015
        %2019 = vrot.lane.b32.xlu0 %v2007, 24
        %v2020 = vpop.permute.xlu0 %2019
        %v2022 = vsel %vm1377, %v1950, %v2012
        %v2023 = vsel %vm1600, %v2022, %v2016
        %v2024 = vsel %vm1602, %v2023, %v2020
        %v2025 = vpack.c.bf16 %v2024, %v2024
        %v2027 = vperm.slane %v1754, 0
        %v2033 = vunpack.c.l.b16 %v1750
        %v2034 = vunpack.c.l.b16 %v1751
        %v2035 = vunpack.c.l.b16 %v1752
        %v2036 = vunpack.c.l.b16 %v1753
        %v2037 = vpack.c.b16 %v2034, %v2033
        %v2038 = vpack.c.b16 %v2036, %v2035
        %v2042 = vsel %vm1274, %v2025, 0
        %2044 = vmatpush.bf16.msra.mxu0 0
        %2045 = vmatpush.bf16.msra.mxu0 0
        %2046 = vmatpush.bf16.msra.mxu0 0
        %2047 = vmatpush.bf16.msra.mxu0 0
        %2048 = vmatpush.bf16.msra.mxu0 0
        %2049 = vmatpush.bf16.msra.mxu0 0
        %2050 = vmatpush.bf16.msra.mxu0 %v2038
        %2051 = vmatpush.bf16.msra.mxu0 %v2037
        %2052 = vmatmul.bf16.gmra.mxu0 %v2042
        %v2053 = vpop.f32.mrf.mxu0
        %v2054 = vadd.f32 %v2027, %v2053
        %v2055 = vpop.f32.mrf.mxu0
        %2056 = vdwg.mxu0
        %v2057 = vadd.f32 %v1675, %v2054
        %v2058 = vld [vmem:[%s47] sm:$0x1]
        %v2059 = vld [vmem:[%s49] sm:$0x1]
        %v2060 = vsel %vm1274, %v2057, 0.0
        %2061 = vadd.xlane.f32.xlu0 %v2060
        %v2062 = vpop.xlane.xlu0 %2061
        %v2063 = vmul.f32 %v2062, %v1648
        %v2064 = vsub.f32 %v2057, %v2063
        %v2065 = vmul.f32 %v2064, %v2064
        %v2066 = vsel %vm1274, %v2065, 0.0
        %2067 = vadd.xlane.f32.xlu0 %v2066
        %v2068 = vpop.xlane.xlu0 %2067
        %v2069 = vmul.f32 %v2068, %v1648
        %v2070 = vadd.f32 %v2069, 1e-05
        %v2071 = vrsqrt.pop %v2070
        %v2072 = vmul.f32 %v2071, %v2070
        %v2073 = vmul.f32 %v2072, %v2071
        %v2074 = vmul.f32 0.5, %v2073
        %v2075 = vsub.f32 1.5, %v2074
        %v2076 = vmul.f32 %v2071, %v2075
        %vm2077 = vweird.f32 %v2070
        %vm2078 = vweird.f32 %v2071
        %vm2079 = vmor %vm2077, %vm2078
        %v2080 = vsel %vm2079, %v2071, %v2076
        %v2081 = vmul.f32 %v2064, %v2080
        %v2083 = vperm.slane %v2058, 0
        %v2085 = vmul.f32 %v2081, %v2083
        %v2087 = vperm.slane %v2059, 0
        %v2089 = vadd.f32 %v2085, %v2087
        %v2090 = vpack.c.bf16 %v2089, %v2089
        %v2091 = vld [vmem:[#allocation23] sm:$0xf]
        %v2092 = vld [vmem:[#allocation23 + $0x4] sm:$0xf]
        %v2093 = vld [vmem:[#allocation23 + $0x8] sm:$0xf]
        %v2094 = vld [vmem:[#allocation23 + $0xc] sm:$0xf]
        %v2095 = vld [vmem:[#allocation25] sm:$0x1]
        %v2097 = vperm.slane %v2095, 0
        %v2103 = vunpack.c.l.b16 %v2091
        %v2104 = vunpack.c.l.b16 %v2092
        %v2105 = vunpack.c.l.b16 %v2093
        %v2106 = vunpack.c.l.b16 %v2094
        %v2107 = vpack.c.b16 %v2104, %v2103
        %v2108 = vpack.c.b16 %v2106, %v2105
        %v2112 = vsel %vm1274, %v2090, 0
        %2114 = vmatpush.bf16.msra.mxu0 0
        %2115 = vmatpush.bf16.msra.mxu0 0
        %2116 = vmatpush.bf16.msra.mxu0 0
        %2117 = vmatpush.bf16.msra.mxu0 0
        %2118 = vmatpush.bf16.msra.mxu0 0
        %2119 = vmatpush.bf16.msra.mxu0 0
        %2120 = vmatpush.bf16.msra.mxu0 %v2108
        %2121 = vmatpush.bf16.msra.mxu0 %v2107
        %2122 = vmatmul.bf16.gmra.mxu0 %v2112
        %v2123 = vpop.f32.mrf.mxu0
        %v2124 = vadd.f32 %v2097, %v2123
        %v2125 = vpop.f32.mrf.mxu0
        %2126 = vdwg.mxu0
        %v2127 = vmax.f32 %v2124, 0.0
        %v2128 = vpack.c.bf16 %v2127, %v2127
        %v2129 = vld [vmem:[%s39] sm:$0xf]
        %v2130 = vld [vmem:[%s39 + $0x4] sm:$0xf]
        %v2131 = vld [vmem:[%s39 + $0x8] sm:$0xf]
        %v2132 = vld [vmem:[%s39 + $0xc] sm:$0xf]
        %v2133 = vld [vmem:[%s39 + $0x10] sm:$0xf]
        %v2134 = vld [vmem:[%s39 + $0x14] sm:$0xf]
        %v2135 = vld [vmem:[%s39 + $0x18] sm:$0xf]
        %v2136 = vld [vmem:[%s39 + $0x1c] sm:$0xf]
        %v2137 = vld [vmem:[%s41] sm:$0x1]
        %v2139 = vperm.slane %v2137, 0
        %v2149 = vunpack.c.l.b16 %v2129
        %v2150 = vunpack.c.l.b16 %v2130
        %v2151 = vunpack.c.l.b16 %v2131
        %v2152 = vunpack.c.l.b16 %v2132
        %v2153 = vunpack.c.l.b16 %v2133
        %v2154 = vunpack.c.l.b16 %v2134
        %v2155 = vunpack.c.l.b16 %v2135
        %v2156 = vunpack.c.l.b16 %v2136
        %v2157 = vpack.c.b16 %v2150, %v2149
        %v2158 = vpack.c.b16 %v2152, %v2151
        %v2159 = vpack.c.b16 %v2154, %v2153
        %v2160 = vpack.c.b16 %v2156, %v2155
        %vm2165 = vcmask 523264
        %v2167 = vsel %vm2165, %v2128, 0
        %2169 = vmatpush.bf16.msra.mxu0 0
        %2170 = vmatpush.bf16.msra.mxu0 0
        %2171 = vmatpush.bf16.msra.mxu0 0
        %2172 = vmatpush.bf16.msra.mxu0 0
        %2173 = vmatpush.bf16.msra.mxu0 %v2160
        %2174 = vmatpush.bf16.msra.mxu0 %v2159
        %2175 = vmatpush.bf16.msra.mxu0 %v2158
        %2176 = vmatpush.bf16.msra.mxu0 %v2157
        %2177 = vmatmul.bf16.gmra.mxu0 %v2167
        %v2178 = vpop.f32.mrf.mxu0
        %v2179 = vadd.f32 %v2139, %v2178
        %v2180 = vpop.f32.mrf.mxu0
        %2181 = vdwg.mxu0
        %v2182 = vadd.f32 %v2089, %v2179
        %v2183 = vld [vmem:[%s51] sm:$0x1]
        %v2184 = vld [vmem:[#allocation26] sm:$0x1]
        %v2185 = vsel %vm1274, %v2182, 0.0
        %2186 = vadd.xlane.f32.xlu0 %v2185
        %v2187 = vpop.xlane.xlu0 %2186
        %v2188 = vmul.f32 %v2187, %v1648
        %v2189 = vsub.f32 %v2182, %v2188
        %v2190 = vmul.f32 %v2189, %v2189
        %v2191 = vsel %vm1274, %v2190, 0.0
        %2192 = vadd.xlane.f32.xlu0 %v2191
        %v2193 = vpop.xlane.xlu0 %2192
        %v2194 = vmul.f32 %v2193, %v1648
        %v2195 = vadd.f32 %v2194, 1e-05
        %v2196 = vrsqrt.pop %v2195
        %v2197 = vmul.f32 %v2196, %v2195
        %v2198 = vmul.f32 %v2197, %v2196
        %v2199 = vmul.f32 0.5, %v2198
        %v2200 = vsub.f32 1.5, %v2199
        %v2201 = vmul.f32 %v2196, %v2200
        %vm2202 = vweird.f32 %v2195
        %vm2203 = vweird.f32 %v2196
        %vm2204 = vmor %vm2202, %vm2203
        %v2205 = vsel %vm2204, %v2196, %v2201
        %v2206 = vmul.f32 %v2189, %v2205
        %v2208 = vperm.slane %v2183, 0
        %v2210 = vmul.f32 %v2206, %v2208
        %v2212 = vperm.slane %v2184, 0
        %v2214 = vadd.f32 %v2210, %v2212
        %2215 = vst.msk [vmem:[%s1214] sm:$0xff] %vm1274, %v2214
        %2216 = vst.msk [vmem:[%s1221] sm:$0xff] %vm1377, %v1505
        %2217 = vst.msk [vmem:[%s1228] sm:$0xff] %vm1377, %v1929
        %s2218 = sand.u32 %s702, 1
        %s2219 = scalar_lea.sflag [#allocation4], %s2218
        %s2220 = sand.u32 %s702, 1
        %s2221 = smul.addr %s2220, 8
        %s2222 = scalar_lea.vmem [#allocation28], %s2221
        %s2223 = sand.u32 %s86, 1
        %s2224 = scalar_lea.sflag [#allocation30], %s2223
        %s2225 = sand.u32 %s730, 1
        %s2226 = smul.addr %s2225, 8
        %s2227 = scalar_lea.vmem [#allocation29], %s2226
        %s2228 = sand.u32 %s86, 1
        %s2229 = scalar_lea.sflag [#allocation30], %s2228
        %s2230 = sand.u32 %s758, 1
        %s2231 = smul.addr %s2230, 8
        %s2232 = scalar_lea.vmem [#allocation31], %s2231
        // Predicated region
        $region193: #{tpu_custom_call.1} parent=127 // pred_check
          %p2233 = pneg %p712
        $region194: #{tpu_custom_call.1} parent=127 // pred_check_branch
          %2235 = sbr.rel (%p2233) target = $region196
        $region195: #{tpu_custom_call.1} parent=127 // pred_region
          %2237 = vsyncadd %s2219, 0
          %s2238 = sadd.s32 %s91, %s90
          %s2239 = smul.addr %s2238, 8
          %s2240 = scalar_lea.hbm %s55, %s2239
          %s2242 = sshll.u32 %s2222, 4
          %s2243 = int_to_ptr.vmem [resolvable:$true] %s2242
          %s2244 = sshll.u32 %s2240, 4
          %s2245 = int_to_ptr.hbm [resolvable:$true] %s2244
          %2247 = dma.vmem_to_hbm [thread:$0]  %s2243, 128, %s2245, %s2219
        $region196: #{tpu_custom_call.1} parent=127 // pred_fallthru
          _
        // Predicated region
        $region197: #{tpu_custom_call.1} parent=127 // pred_check
          %p2248 = pneg %p740
        $region198: #{tpu_custom_call.1} parent=127 // pred_check_branch
          %2250 = sbr.rel (%p2248) target = $region200
        $region199: #{tpu_custom_call.1} parent=127 // pred_region
          %2252 = vsyncadd %s2224, 0
          %s2253 = sadd.s32 %s91, %s90
          %s2254 = smul.addr %s2253, 8
          %s2255 = scalar_lea.hbm %s57, %s2254
          %s2257 = sshll.u32 %s2227, 4
          %s2258 = int_to_ptr.vmem [resolvable:$true] %s2257
          %s2259 = sshll.u32 %s2255, 4
          %s2260 = int_to_ptr.hbm [resolvable:$true] %s2259
          %2262 = dma.vmem_to_hbm [thread:$0]  %s2258, 128, %s2260, %s2224
        $region200: #{tpu_custom_call.1} parent=127 // pred_fallthru
          _
        // Predicated region
        $region201: #{tpu_custom_call.1} parent=127 // pred_check
          %p2263 = pneg %p768
        $region202: #{tpu_custom_call.1} parent=127 // pred_check_branch
          %2265 = sbr.rel (%p2263) target = $region204
        $region203: #{tpu_custom_call.1} parent=127 // pred_region
          %2267 = vsyncadd %s2229, 0
          %s2268 = sadd.s32 %s91, %s90
          %s2269 = smul.addr %s2268, 8
          %s2270 = scalar_lea.hbm %s59, %s2269
          %s2272 = sshll.u32 %s2232, 4
          %s2273 = int_to_ptr.vmem [resolvable:$true] %s2272
          %s2274 = sshll.u32 %s2270, 4
          %s2275 = int_to_ptr.hbm [resolvable:$true] %s2274
          %2277 = dma.vmem_to_hbm [thread:$0]  %s2273, 128, %s2275, %s2229
        $region204: #{tpu_custom_call.1} parent=127 // pred_fallthru
          _
      $region128: #{tpu_custom_call.1} parent=5 // pred_fallthru
        _
      %p2278 = scmp.le.s32.totalorder 2, %s81
      // Predicated region
      $region205: #{tpu_custom_call.1} parent=5 // pred_check
        %p2279 = pneg %p2278
      $region206: #{tpu_custom_call.1} parent=5 // pred_check_branch
        %2281 = sbr.rel (%p2279) target = $region208
      $region207: #{tpu_custom_call.1} parent=5 // pred_region
        %s2282 = ssub.s32 %s81, 2
        // Predicated region
        $region209: #{tpu_custom_call.1} parent=207 // pred_check
          %p2283 = pneg %p718
        $region210: #{tpu_custom_call.1} parent=207 // pred_check_branch
          %2285 = sbr.rel (%p2283) target = $region212
        $region211: #{tpu_custom_call.1} parent=207 // pred_region
          %s2286 = sand.u32 %s703, 1
          %s2287 = scalar_lea.sflag [#allocation4], %s2286
          %s2288 = sand.u32 %s703, 1
          %s2289 = smul.addr %s2288, 8
          %s2290 = scalar_lea.vmem [#allocation28], %s2289
          %2292 = dma.done %s2287, 128
        $region212: #{tpu_custom_call.1} parent=207 // pred_fallthru
          _
        // Predicated region
        $region213: #{tpu_custom_call.1} parent=207 // pred_check
          %p2293 = pneg %p746
        $region214: #{tpu_custom_call.1} parent=207 // pred_check_branch
          %2295 = sbr.rel (%p2293) target = $region216
        $region215: #{tpu_custom_call.1} parent=207 // pred_region
          %s2296 = sand.u32 %s87, 1
          %s2297 = scalar_lea.sflag [#allocation30], %s2296
          %s2298 = sand.u32 %s731, 1
          %s2299 = smul.addr %s2298, 8
          %s2300 = scalar_lea.vmem [#allocation29], %s2299
          %2302 = dma.done %s2297, 128
        $region216: #{tpu_custom_call.1} parent=207 // pred_fallthru
          _
        // Predicated region
        $region217: #{tpu_custom_call.1} parent=207 // pred_check
          %p2303 = pneg %p774
        $region218: #{tpu_custom_call.1} parent=207 // pred_check_branch
          %2305 = sbr.rel (%p2303) target = $region220
        $region219: #{tpu_custom_call.1} parent=207 // pred_region
          %s2306 = sand.u32 %s87, 1
          %s2307 = scalar_lea.sflag [#allocation30], %s2306
          %s2308 = sand.u32 %s759, 1
          %s2309 = smul.addr %s2308, 8
          %s2310 = scalar_lea.vmem [#allocation31], %s2309
          %2312 = dma.done %s2307, 128
        $region220: #{tpu_custom_call.1} parent=207 // pred_fallthru
          _
      $region208: #{tpu_custom_call.1} parent=5 // pred_fallthru
        _
    $region6: #{tpu_custom_call.1} parent=1 // loop_footer
      %s85 = sadd.s32 1, %s81
    $region7: #{tpu_custom_call.1} parent=1 // loop_footer_branch
      %80 = sbr.rel target = $region3
    $region8: #{tpu_custom_call.1} parent=1 // loop_exit
      _
    %2313 = vsyncpa [#allocation3], 1
    %s2314 = scalar_lea.sflag [#allocation3], 1
    %2315 = vsyncpa %s2314, 1
    %2316 = vsyncpa [#allocation6], 1
    %2317 = vsyncpa [#allocation9], 1
    %2318 = vsyncpa [#allocation12], 1
    %2319 = vsyncpa [#allocation15], 1
    %2320 = vsyncpa [#allocation18], 1
    %2321 = vsyncpa [#allocation21], 1
    %2322 = vsyncpa [#allocation24], 1
    %2323 = vsyncpa [#allocation27], 1
    %2324 = vsyncpa [#allocation4], 1
    %s2325 = scalar_lea.sflag [#allocation4], 1
    %2326 = vsyncpa %s2325, 1
    %2327 = vsyncpa [#allocation30], 1
    %s2328 = scalar_lea.sflag [#allocation30], 1
    %2329 = vsyncpa %s2328, 1

</llo_original>
